<compile_context>
chip_gen: v7x
topology: tpu7x:2x2x1
jax: 0.10.0
libtpu: 0.0.40
codegen_flags: <defaults>
</compile_context>

<pallas_src>
import numpy as np
import jax
import jax.numpy as jnp
from jax.experimental import pallas as pl
from jax.experimental.pallas import tpu as pltpu

EPS = 1e-5              # BatchNorm2d default eps
H_IN = W_IN = 24        # input spatial (implied by fc1 = 64*11*11)
C_IN = 3
C1 = 64                 # conv1 out channels
K = 3                   # conv kernel size
H_C = W_C = H_IN - 2    # 22: valid 3x3 conv output
H_P = W_P = H_C // 2    # 11: after 2x2 max-pool
FEAT = C1 * H_P * W_P   # 7744
H1, H2, H3 = 100, 10, 2
H1P = 128               # fc1 outputs zero-padded 100 -> 128 (lane-aligned)

CONV_ROWS = H_C * W_IN          # 528: conv rows on a 24-wide pitch (cols 22,23 are junk)
XROWS = H_IN * W_IN + 2         # 578: flattened image rows + 2 pad rows (keeps taps in-bounds)
HP_ROWS = CONV_ROWS // 2        # 264: after horizontal (width) pooling
M_CHUNK = 176                   # 528/3, multiple of 8: aligned matmul row chunks


# ------------- kernel 1: conv1 (BN-folded) + ReLU-floor + 2x2 max-pool -------------

def _conv_pool_bn_kernel(x_ref, w_ref, b_ref, f_ref, out_ref, patch_ref, conv_ref, hp_ref):
    # x_ref:   (B, 578, 3)   B spatially-flattened NHWC images (+2 zero pad rows)
    # w_ref:   (27, 64)      conv1 weight * scale^2, rows ordered (ky, kx, c)
    # b_ref:   (1, 64)       folded bias:  conv_b*scale^2 + (shift*scale + shift)
    # f_ref:   (1, 64)       per-channel ReLU floor:        shift*scale + shift
    # out_ref: (B, 121, 64)  pooled + double-BN activations, row = 11*h + w
    # patch_ref scratch: (528, 27)  im2col, flat row R = 24*ho + wo
    # conv_ref  scratch: (528, 64)  raw conv matmul output
    # hp_ref    scratch: (264, 64)  width-pooled rows, row = 12*ho + (wo//2)
    w = w_ref[...]          # stays resident across the image loop
    bias = b_ref[...]
    floor = f_ref[...]
    B = out_ref.shape[0]

    for b in range(B):
        # ---- im2col in VMEM: 9 shifted block copies (flat source offset = 24*ky + kx) ----
        for ky in range(K):
            for kx in range(K):
                t = 3 * ky + kx
                patch_ref[:, 3 * t:3 * t + 3] = x_ref[b, pl.ds(24 * ky + kx, CONV_ROWS), :]

        # ---- conv1: 3 aligned M=176 MXU matmuls (weight-stationary RHS, no masked epilogue) ----
        for mi in range(CONV_ROWS // M_CHUNK):
            rows = pl.ds(M_CHUNK * mi, M_CHUNK)
            conv_ref[rows, :] = jnp.dot(patch_ref[rows, :], w,
                                        preferred_element_type=jnp.float32)

        # ---- 2x2 max-pool, width direction first: one whole-block max of even vs odd
        #      flat rows (row pitch 24 is even, so flat parity == column parity) ----
        hp_ref[...] = jnp.maximum(conv_ref[pl.ds(0, HP_ROWS, stride=2), :],
                                  conv_ref[pl.ds(1, HP_ROWS, stride=2), :])

        # ---- height direction + folded bias / ReLU-floor (== ReLU + double BatchNorm) ----
        for i in range(H_P):
            m = jnp.maximum(hp_ref[pl.ds(24 * i, W_P), :],
                            hp_ref[pl.ds(24 * i + 12, W_P), :])
            out_ref[b, pl.ds(W_P * i, W_P), :] = jnp.maximum(m + bias, floor)


def conv_pool_bn(x_flat, w_mat, bias, floor, block_n):
    N = x_flat.shape[0]
    vec = lambda n: (0, 0)
    return pl.pallas_call(
        _conv_pool_bn_kernel,
        out_shape=jax.ShapeDtypeStruct((N, H_P * W_P, C1), jnp.float32),
        grid=(N // block_n,),
        in_specs=[
            pl.BlockSpec((block_n, XROWS, C_IN), lambda n: (n, 0, 0)),
            pl.BlockSpec((C_IN * K * K, C1), vec),
            pl.BlockSpec((1, C1), vec),
            pl.BlockSpec((1, C1), vec),
        ],
        out_specs=pl.BlockSpec((block_n, H_P * W_P, C1), lambda n: (n, 0, 0)),
        scratch_shapes=[
            pltpu.VMEM((CONV_ROWS, C_IN * K * K), jnp.float32),   # im2col patches
            pltpu.VMEM((CONV_ROWS, C1), jnp.float32),             # raw conv rows
            pltpu.VMEM((HP_ROWS, C1), jnp.float32),               # width-pooled rows
        ],
        compiler_params=pltpu.CompilerParams(dimension_semantics=("parallel",)),
    )(x_flat, w_mat, bias, floor)


# ------------------------- kernel 2: fc1 + fc2 + fc3 (row-tiled) -------------------------

def _mlp_kernel(x_ref, w1_ref, b1_ref, w2_ref, b2_ref, w3_ref, b3_ref, o_ref):
    h = jnp.dot(x_ref[...], w1_ref[...], preferred_element_type=jnp.float32)
    h = jnp.maximum(h + b1_ref[...], 0.0)                       # fc1 + relu (padded cols stay 0)
    h = jnp.dot(h, w2_ref[...], preferred_element_type=jnp.float32)
    h = jnp.maximum(h + b2_ref[...], 0.0)                       # fc2 + relu
    h = jnp.dot(h, w3_ref[...], preferred_element_type=jnp.float32)
    o_ref[...] = h + b3_ref[...]                                # fc3


def mlp(x, w1, b1, w2, b2, w3, b3):
    N, D = x.shape
    d1, d2, d3 = w1.shape[1], w2.shape[1], w3.shape[1]
    # TM=128: x tile 2x4MB + resident fc weights fit comfortably; vmem_limit raised so
    # the v5e 16 MiB scoped-VMEM default is never the binding constraint.
    TM = N if N < 128 else 128
    const = lambda i: (0, 0)                   # weights stay resident across row tiles
    return pl.pallas_call(
        _mlp_kernel,
        out_shape=jax.ShapeDtypeStruct((N, d3), jnp.float32),
        grid=(pl.cdiv(N, TM),),
        in_specs=[pl.BlockSpec((TM, D), lambda i: (i, 0)),
                  pl.BlockSpec((D, d1), const),
                  pl.BlockSpec((1, d1), const),
                  pl.BlockSpec((d1, d2), const),
                  pl.BlockSpec((1, d2), const),
                  pl.BlockSpec((d2, d3), const),
                  pl.BlockSpec((1, d3), const)],
        out_specs=pl.BlockSpec((TM, d3), lambda i: (i, 0)),
        compiler_params=pltpu.CompilerParams(
            dimension_semantics=("parallel",),
            vmem_limit_bytes=64 * 1024 * 1024),
    )(x, w1, b1, w2, b2, w3, b3)


# ------------------------- parameter prep (one-time, host side) -------------------------

def prepare_params(p):
    # Fold the DOUBLE BatchNorm (eval) into one affine, then fold that into the conv:
    #   pool(relu(conv+b))*s2 + t2 == max(pool(conv*s2) + (b*s2+t2), t2)   (s2 = scale^2 >= 0)
    scale = p['bn_g'] / jnp.sqrt(p['bn_v'] + EPS)
    shift = p['bn_b'] - p['bn_m'] * scale
    scale2 = scale * scale
    shift2 = shift * scale + shift
    # conv1 OIHW -> rows (ky, kx, c), columns scaled by scale^2.
    w_mat = jnp.transpose(p['conv1_w'], (2, 3, 1, 0)).reshape(C_IN * K * K, C1)
    w_mat = w_mat * scale2[None, :]
    conv_b = p['conv1_b'] * scale2 + shift2
    # fc1: permute rows from PyTorch (C,H,W) flatten order to the kernel's (H,W,C) order,
    # then zero-pad 100 -> 128 output lanes (fc2 weight rows padded to match; exact).
    fc1_w = (p['fc1_w'].reshape(C1, H_P, W_P, H1)
             .transpose(1, 2, 0, 3).reshape(FEAT, H1))
    fc1_w = jnp.pad(fc1_w, ((0, 0), (0, H1P - H1)))
    fc1_b = jnp.pad(p['fc1_b'], (0, H1P - H1))
    fc2_w = jnp.pad(p['fc2_w'], ((0, H1P - H1), (0, 0)))
    return dict(
        w_mat=w_mat,
        conv_b=conv_b.reshape(1, C1),
        conv_floor=shift2.reshape(1, C1),
        fc1_w=fc1_w, fc1_b=fc1_b.reshape(1, H1P),
        fc2_w=fc2_w, fc2_b=p['fc2_b'].reshape(1, H2),
        fc3_w=p['fc3_w'], fc3_b=p['fc3_b'].reshape(1, H3),
    )


def pick_image_block(N):
    # Several images per grid step to amortize per-step overhead, while keeping at
    # least 2 grid steps so v7x's two TensorCores both get work.
    for b in (8, 4, 2):
        if N % b == 0 and N // b >= 2:
            return b
    return 1


# ------------------------- forward -------------------------

@jax.jit
def cnn24_forward(x_nchw, prep):
    N = x_nchw.shape[0]
    # NCHW -> NHWC, flatten spatially (free row-major), +2 zero rows so every im2col
    # tap offset (up to 24*2+2) stays in-bounds.
    x = jnp.transpose(x_nchw, (0, 2, 3, 1)).reshape(N, H_IN * W_IN, C_IN)
    x = jnp.pad(x, ((0, 0), (0, XROWS - H_IN * W_IN), (0, 0)))
    pooled = conv_pool_bn(x, prep['w_mat'], prep['conv_b'], prep['conv_floor'],
                          pick_image_block(N))                   # (N, 121, 64)
    feats = pooled.reshape(N, FEAT)                              # free (row-major contiguous)
    return mlp(feats, prep['fc1_w'], prep['fc1_b'],
               prep['fc2_w'], prep['fc2_b'],
               prep['fc3_w'], prep['fc3_b'])


# ------------------------- params + pure-JAX reference -------------------------

def init_params(key):
    ks = jax.random.split(key, 12)
    nrm = lambda k, shape, s: jax.random.normal(k, shape, jnp.float32) * s
    # NOTE: fc weights stored as (in, out) with PyTorch's (C,H,W) flatten order for fc1;
    # synthetic init, not a checkpoint load (checkpoint loading must feed prepare_params).
    return dict(
        conv1_w=nrm(ks[0], (C1, C_IN, K, K), 0.1),
        conv1_b=nrm(ks[1], (C1,), 0.1),
        bn_g=1.0 + nrm(ks[2], (C1,), 0.1),
        bn_b=nrm(ks[3], (C1,), 0.1),
        bn_m=nrm(ks[4], (C1,), 0.1),
        bn_v=1.0 + jnp.abs(nrm(ks[5], (C1,), 0.1)),
        fc1_w=nrm(ks[6], (FEAT, H1), 0.02),
        fc1_b=nrm(ks[7], (H1,), 0.02),
        fc2_w=nrm(ks[8], (H1, H2), 0.1),
        fc2_b=nrm(ks[9], (H2,), 0.1),
        fc3_w=nrm(ks[10], (H2, H3), 0.1),
        fc3_b=nrm(ks[11], (H3,), 0.1),
    )


def reference(x_nchw, p):
    y = jax.lax.conv_general_dilated(
        x_nchw, p['conv1_w'], (1, 1), 'VALID',
        dimension_numbers=('NCHW', 'OIHW', 'NCHW'))
    y = jnp.maximum(y + p['conv1_b'][None, :, None, None], 0.0)
    N, C, H, W = y.shape
    y = y.reshape(N, C, H // 2, 2, W // 2, 2).max(axis=(3, 5))
    scale = p['bn_g'] / jnp.sqrt(p['bn_v'] + EPS)
    shift = p['bn_b'] - p['bn_m'] * scale
    y = y * scale[None, :, None, None] + shift[None, :, None, None]
    y = y * scale[None, :, None, None] + shift[None, :, None, None]
    y = y.reshape(N, -1)
    y = jnp.maximum(y @ p['fc1_w'] + p['fc1_b'], 0.0)
    y = jnp.maximum(y @ p['fc2_w'] + p['fc2_b'], 0.0)
    return y @ p['fc3_w'] + p['fc3_b']


if __name__ == "__main__":
    key = jax.random.PRNGKey(0)
    kx, kp = jax.random.split(key)
    params = init_params(kp)
    prep = prepare_params(params)
    # fc1 expects 64*11*11 features => spatial input must be 24x24 (24-2=22, /2=11)
    x = jax.random.normal(kx, (2, 3, 24, 24), jnp.float32)

    out = jax.block_until_ready(cnn24_forward(x, prep))
    ref = jax.block_until_ready(reference(x, params))

    assert out.shape == (2, 2), out.shape
    np.testing.assert_allclose(np.asarray(out), np.asarray(ref), rtol=5e-4, atol=5e-4)
    print("KERNEL_OK")
</pallas_src>

<mosaic_0001>
module attributes {stable_mosaic.version = 11 : i64} {
  func.func @_conv_pool_bn_kernel(%arg0: i32, %arg1: memref<1x578x3xf32, #tpu.memory_space<vmem>>, %arg2: memref<27x64xf32, #tpu.memory_space<vmem>>, %arg3: memref<1x64xf32, #tpu.memory_space<vmem>>, %arg4: memref<1x64xf32, #tpu.memory_space<vmem>>, %arg5: memref<1x121x64xf32, #tpu.memory_space<vmem>>, %arg6: memref<528x27xf32, #tpu.memory_space<vmem>>, %arg7: memref<528x64xf32, #tpu.memory_space<vmem>>, %arg8: memref<264x64xf32, #tpu.memory_space<vmem>>) attributes {dimension_semantics = [#tpu.dimension_semantics<parallel>], iteration_bounds = array<i64: 2>, scalar_prefetch = 0 : i64, scratch_operands = 3 : i64, tpu.core_type = #tpu.core_type<tc>, window_params = [{transform_indices = @transform_0, window_bounds = array<i64: 1, 578, 3>}, {pipeline_mode = #tpu.pipeline_mode<synchronous>, transform_indices = @transform_1, window_bounds = array<i64: 27, 64>}, {pipeline_mode = #tpu.pipeline_mode<synchronous>, transform_indices = @transform_2, window_bounds = array<i64: 1, 64>}, {pipeline_mode = #tpu.pipeline_mode<synchronous>, transform_indices = @transform_3, window_bounds = array<i64: 1, 64>}, {transform_indices = @transform_4, window_bounds = array<i64: 1, 121, 64>}]} {
    %c0 = arith.constant 0 : index
    %c0_0 = arith.constant 0 : index
    %0 = vector.load %arg2[%c0, %c0_0] : memref<27x64xf32, #tpu.memory_space<vmem>>, vector<27x64xf32>
    %c0_1 = arith.constant 0 : index
    %c0_2 = arith.constant 0 : index
    %1 = vector.load %arg3[%c0_1, %c0_2] : memref<1x64xf32, #tpu.memory_space<vmem>>, vector<1x64xf32>
    %c0_3 = arith.constant 0 : index
    %c0_4 = arith.constant 0 : index
    %2 = vector.load %arg4[%c0_3, %c0_4] : memref<1x64xf32, #tpu.memory_space<vmem>>, vector<1x64xf32>
    %c0_5 = arith.constant 0 : index
    %c0_6 = arith.constant 0 : index
    %c0_7 = arith.constant 0 : index
    %3 = vector.load %arg1[%c0_5, %c0_6, %c0_7] : memref<1x578x3xf32, #tpu.memory_space<vmem>>, vector<1x528x3xf32>
    %4 = vector.shape_cast %3 : vector<1x528x3xf32> to vector<528x3xf32>
    %c0_8 = arith.constant 0 : index
    %c0_9 = arith.constant 0 : index
    %5 = vector.load %arg6[%c0_8, %c0_9] : memref<528x27xf32, #tpu.memory_space<vmem>>, vector<528x3xf32>
    tpu.vector_store %arg6[%c0_8, %c0_9], %4 {strides = array<i32>} : memref<528x27xf32, #tpu.memory_space<vmem>>, vector<528x3xf32>,
    %c0_10 = arith.constant 0 : index
    %c1 = arith.constant 1 : index
    %c0_11 = arith.constant 0 : index
    %6 = vector.load %arg1[%c0_10, %c1, %c0_11] : memref<1x578x3xf32, #tpu.memory_space<vmem>>, vector<1x528x3xf32>
    %7 = vector.shape_cast %6 : vector<1x528x3xf32> to vector<528x3xf32>
    %c0_12 = arith.constant 0 : index
    %c3 = arith.constant 3 : index
    %8 = vector.load %arg6[%c0_12, %c3] : memref<528x27xf32, #tpu.memory_space<vmem>>, vector<528x3xf32>
    tpu.vector_store %arg6[%c0_12, %c3], %7 {strides = array<i32>} : memref<528x27xf32, #tpu.memory_space<vmem>>, vector<528x3xf32>,
    %c0_13 = arith.constant 0 : index
    %c2 = arith.constant 2 : index
    %c0_14 = arith.constant 0 : index
    %9 = vector.load %arg1[%c0_13, %c2, %c0_14] : memref<1x578x3xf32, #tpu.memory_space<vmem>>, vector<1x528x3xf32>
    %10 = vector.shape_cast %9 : vector<1x528x3xf32> to vector<528x3xf32>
    %c0_15 = arith.constant 0 : index
    %c6 = arith.constant 6 : index
    %11 = vector.load %arg6[%c0_15, %c6] : memref<528x27xf32, #tpu.memory_space<vmem>>, vector<528x3xf32>
    tpu.vector_store %arg6[%c0_15, %c6], %10 {strides = array<i32>} : memref<528x27xf32, #tpu.memory_space<vmem>>, vector<528x3xf32>,
    %c0_16 = arith.constant 0 : index
    %c24 = arith.constant 24 : index
    %c0_17 = arith.constant 0 : index
    %12 = vector.load %arg1[%c0_16, %c24, %c0_17] : memref<1x578x3xf32, #tpu.memory_space<vmem>>, vector<1x528x3xf32>
    %13 = vector.shape_cast %12 : vector<1x528x3xf32> to vector<528x3xf32>
    %c0_18 = arith.constant 0 : index
    %c9 = arith.constant 9 : index
    %14 = vector.load %arg6[%c0_18, %c9] : memref<528x27xf32, #tpu.memory_space<vmem>>, vector<528x3xf32>
    tpu.vector_store %arg6[%c0_18, %c9], %13 {strides = array<i32>} : memref<528x27xf32, #tpu.memory_space<vmem>>, vector<528x3xf32>,
    %c0_19 = arith.constant 0 : index
    %c25 = arith.constant 25 : index
    %c0_20 = arith.constant 0 : index
    %15 = vector.load %arg1[%c0_19, %c25, %c0_20] : memref<1x578x3xf32, #tpu.memory_space<vmem>>, vector<1x528x3xf32>
    %16 = vector.shape_cast %15 : vector<1x528x3xf32> to vector<528x3xf32>
    %c0_21 = arith.constant 0 : index
    %c12 = arith.constant 12 : index
    %17 = vector.load %arg6[%c0_21, %c12] : memref<528x27xf32, #tpu.memory_space<vmem>>, vector<528x3xf32>
    tpu.vector_store %arg6[%c0_21, %c12], %16 {strides = array<i32>} : memref<528x27xf32, #tpu.memory_space<vmem>>, vector<528x3xf32>,
    %c0_22 = arith.constant 0 : index
    %c26 = arith.constant 26 : index
    %c0_23 = arith.constant 0 : index
    %18 = vector.load %arg1[%c0_22, %c26, %c0_23] : memref<1x578x3xf32, #tpu.memory_space<vmem>>, vector<1x528x3xf32>
    %19 = vector.shape_cast %18 : vector<1x528x3xf32> to vector<528x3xf32>
    %c0_24 = arith.constant 0 : index
    %c15 = arith.constant 15 : index
    %20 = vector.load %arg6[%c0_24, %c15] : memref<528x27xf32, #tpu.memory_space<vmem>>, vector<528x3xf32>
    tpu.vector_store %arg6[%c0_24, %c15], %19 {strides = array<i32>} : memref<528x27xf32, #tpu.memory_space<vmem>>, vector<528x3xf32>,
    %c0_25 = arith.constant 0 : index
    %c48 = arith.constant 48 : index
    %c0_26 = arith.constant 0 : index
    %21 = vector.load %arg1[%c0_25, %c48, %c0_26] : memref<1x578x3xf32, #tpu.memory_space<vmem>>, vector<1x528x3xf32>
    %22 = vector.shape_cast %21 : vector<1x528x3xf32> to vector<528x3xf32>
    %c0_27 = arith.constant 0 : index
    %c18 = arith.constant 18 : index
    %23 = vector.load %arg6[%c0_27, %c18] : memref<528x27xf32, #tpu.memory_space<vmem>>, vector<528x3xf32>
    tpu.vector_store %arg6[%c0_27, %c18], %22 {strides = array<i32>} : memref<528x27xf32, #tpu.memory_space<vmem>>, vector<528x3xf32>,
    %c0_28 = arith.constant 0 : index
    %c49 = arith.constant 49 : index
    %c0_29 = arith.constant 0 : index
    %24 = vector.load %arg1[%c0_28, %c49, %c0_29] : memref<1x578x3xf32, #tpu.memory_space<vmem>>, vector<1x528x3xf32>
    %25 = vector.shape_cast %24 : vector<1x528x3xf32> to vector<528x3xf32>
    %c0_30 = arith.constant 0 : index
    %c21 = arith.constant 21 : index
    %26 = vector.load %arg6[%c0_30, %c21] : memref<528x27xf32, #tpu.memory_space<vmem>>, vector<528x3xf32>
    tpu.vector_store %arg6[%c0_30, %c21], %25 {strides = array<i32>} : memref<528x27xf32, #tpu.memory_space<vmem>>, vector<528x3xf32>,
    %c0_31 = arith.constant 0 : index
    %c50 = arith.constant 50 : index
    %c0_32 = arith.constant 0 : index
    %27 = vector.load %arg1[%c0_31, %c50, %c0_32] : memref<1x578x3xf32, #tpu.memory_space<vmem>>, vector<1x528x3xf32>
    %28 = vector.shape_cast %27 : vector<1x528x3xf32> to vector<528x3xf32>
    %c0_33 = arith.constant 0 : index
    %c24_34 = arith.constant 24 : index
    %29 = vector.load %arg6[%c0_33, %c24_34] : memref<528x27xf32, #tpu.memory_space<vmem>>, vector<528x3xf32>
    tpu.vector_store %arg6[%c0_33, %c24_34], %28 {strides = array<i32>} : memref<528x27xf32, #tpu.memory_space<vmem>>, vector<528x3xf32>,
    %c0_35 = arith.constant 0 : index
    %c0_36 = arith.constant 0 : index
    %30 = vector.load %arg6[%c0_35, %c0_36] : memref<528x27xf32, #tpu.memory_space<vmem>>, vector<176x27xf32>
    %cst = arith.constant dense<0.000000e+00> : vector<176x64xf32>
    %31 = tpu.matmul %30, %0, %cst {dimension_numbers = #tpu.dot_dimension_numbers<[1], [0], [0], [1], [0, 0, 1, 1], [], []>} : vector<176x27xf32>, vector<27x64xf32>, vector<176x64xf32> -> vector<176x64xf32>
    %c0_37 = arith.constant 0 : index
    %c0_38 = arith.constant 0 : index
    %32 = vector.load %arg7[%c0_37, %c0_38] : memref<528x64xf32, #tpu.memory_space<vmem>>, vector<176x64xf32>
    tpu.vector_store %arg7[%c0_37, %c0_38], %31 {strides = array<i32>} : memref<528x64xf32, #tpu.memory_space<vmem>>, vector<176x64xf32>,
    %c176 = arith.constant 176 : index
    %c0_39 = arith.constant 0 : index
    %33 = vector.load %arg6[%c176, %c0_39] : memref<528x27xf32, #tpu.memory_space<vmem>>, vector<176x27xf32>
    %cst_40 = arith.constant dense<0.000000e+00> : vector<176x64xf32>
    %34 = tpu.matmul %33, %0, %cst_40 {dimension_numbers = #tpu.dot_dimension_numbers<[1], [0], [0], [1], [0, 0, 1, 1], [], []>} : vector<176x27xf32>, vector<27x64xf32>, vector<176x64xf32> -> vector<176x64xf32>
    %c176_41 = arith.constant 176 : index
    %c0_42 = arith.constant 0 : index
    %35 = vector.load %arg7[%c176_41, %c0_42] : memref<528x64xf32, #tpu.memory_space<vmem>>, vector<176x64xf32>
    tpu.vector_store %arg7[%c176_41, %c0_42], %34 {strides = array<i32>} : memref<528x64xf32, #tpu.memory_space<vmem>>, vector<176x64xf32>,
    %c352 = arith.constant 352 : index
    %c0_43 = arith.constant 0 : index
    %36 = vector.load %arg6[%c352, %c0_43] : memref<528x27xf32, #tpu.memory_space<vmem>>, vector<176x27xf32>
    %cst_44 = arith.constant dense<0.000000e+00> : vector<176x64xf32>
    %37 = tpu.matmul %36, %0, %cst_44 {dimension_numbers = #tpu.dot_dimension_numbers<[1], [0], [0], [1], [0, 0, 1, 1], [], []>} : vector<176x27xf32>, vector<27x64xf32>, vector<176x64xf32> -> vector<176x64xf32>
    %c352_45 = arith.constant 352 : index
    %c0_46 = arith.constant 0 : index
    %38 = vector.load %arg7[%c352_45, %c0_46] : memref<528x64xf32, #tpu.memory_space<vmem>>, vector<176x64xf32>
    tpu.vector_store %arg7[%c352_45, %c0_46], %37 {strides = array<i32>} : memref<528x64xf32, #tpu.memory_space<vmem>>, vector<176x64xf32>,
    %c0_47 = arith.constant 0 : index
    %c0_48 = arith.constant 0 : index
    %39 = tpu.strided_load %arg7[%c0_47, %c0_48] {strides = array<i32: 2, 1>} : memref<528x64xf32, #tpu.memory_space<vmem>>, vector<264x64xf32>
    %c1_49 = arith.constant 1 : index
    %c0_50 = arith.constant 0 : index
    %40 = tpu.strided_load %arg7[%c1_49, %c0_50] {strides = array<i32: 2, 1>} : memref<528x64xf32, #tpu.memory_space<vmem>>, vector<264x64xf32>
    %41 = arith.maximumf %39, %40 : vector<264x64xf32>
    %c0_51 = arith.constant 0 : index
    %c0_52 = arith.constant 0 : index
    %42 = vector.load %arg8[%c0_51, %c0_52] : memref<264x64xf32, #tpu.memory_space<vmem>>, vector<264x64xf32>
    tpu.vector_store %arg8[%c0_51, %c0_52], %41 {strides = array<i32>} : memref<264x64xf32, #tpu.memory_space<vmem>>, vector<264x64xf32>,
    %c0_53 = arith.constant 0 : index
    %c0_54 = arith.constant 0 : index
    %43 = vector.load %arg8[%c0_53, %c0_54] : memref<264x64xf32, #tpu.memory_space<vmem>>, vector<11x64xf32>
    %c12_55 = arith.constant 12 : index
    %c0_56 = arith.constant 0 : index
    %44 = vector.load %arg8[%c12_55, %c0_56] : memref<264x64xf32, #tpu.memory_space<vmem>>, vector<11x64xf32>
    %45 = arith.maximumf %43, %44 : vector<11x64xf32>
    %46 = vector.broadcast %1 : vector<1x64xf32> to vector<11x64xf32>
    %47 = arith.addf %45, %46 : vector<11x64xf32>
    %48 = vector.broadcast %2 : vector<1x64xf32> to vector<11x64xf32>
    %49 = arith.maximumf %47, %48 : vector<11x64xf32>
    %c0_57 = arith.constant 0 : index
    %c0_58 = arith.constant 0 : index
    %c0_59 = arith.constant 0 : index
    %50 = vector.load %arg5[%c0_57, %c0_58, %c0_59] : memref<1x121x64xf32, #tpu.memory_space<vmem>>, vector<1x11x64xf32>
    %51 = vector.shape_cast %50 : vector<1x11x64xf32> to vector<11x64xf32>
    %52 = vector.shape_cast %49 : vector<11x64xf32> to vector<1x11x64xf32>
    tpu.vector_store %arg5[%c0_57, %c0_58, %c0_59], %52 {strides = array<i32>} : memref<1x121x64xf32, #tpu.memory_space<vmem>>, vector<1x11x64xf32>,
    %c24_60 = arith.constant 24 : index
    %c0_61 = arith.constant 0 : index
    %53 = vector.load %arg8[%c24_60, %c0_61] : memref<264x64xf32, #tpu.memory_space<vmem>>, vector<11x64xf32>
    %c36 = arith.constant 36 : index
    %c0_62 = arith.constant 0 : index
    %54 = vector.load %arg8[%c36, %c0_62] : memref<264x64xf32, #tpu.memory_space<vmem>>, vector<11x64xf32>
    %55 = arith.maximumf %53, %54 : vector<11x64xf32>
    %56 = vector.broadcast %1 : vector<1x64xf32> to vector<11x64xf32>
    %57 = arith.addf %55, %56 : vector<11x64xf32>
    %58 = vector.broadcast %2 : vector<1x64xf32> to vector<11x64xf32>
    %59 = arith.maximumf %57, %58 : vector<11x64xf32>
    %c0_63 = arith.constant 0 : index
    %c11 = arith.constant 11 : index
    %c0_64 = arith.constant 0 : index
    %60 = vector.load %arg5[%c0_63, %c11, %c0_64] : memref<1x121x64xf32, #tpu.memory_space<vmem>>, vector<1x11x64xf32>
    %61 = vector.shape_cast %60 : vector<1x11x64xf32> to vector<11x64xf32>
    %62 = vector.shape_cast %59 : vector<11x64xf32> to vector<1x11x64xf32>
    tpu.vector_store %arg5[%c0_63, %c11, %c0_64], %62 {strides = array<i32>} : memref<1x121x64xf32, #tpu.memory_space<vmem>>, vector<1x11x64xf32>,
    %c48_65 = arith.constant 48 : index
    %c0_66 = arith.constant 0 : index
    %63 = vector.load %arg8[%c48_65, %c0_66] : memref<264x64xf32, #tpu.memory_space<vmem>>, vector<11x64xf32>
    %c60 = arith.constant 60 : index
    %c0_67 = arith.constant 0 : index
    %64 = vector.load %arg8[%c60, %c0_67] : memref<264x64xf32, #tpu.memory_space<vmem>>, vector<11x64xf32>
    %65 = arith.maximumf %63, %64 : vector<11x64xf32>
    %66 = vector.broadcast %1 : vector<1x64xf32> to vector<11x64xf32>
    %67 = arith.addf %65, %66 : vector<11x64xf32>
    %68 = vector.broadcast %2 : vector<1x64xf32> to vector<11x64xf32>
    %69 = arith.maximumf %67, %68 : vector<11x64xf32>
    %c0_68 = arith.constant 0 : index
    %c22 = arith.constant 22 : index
    %c0_69 = arith.constant 0 : index
    %70 = vector.load %arg5[%c0_68, %c22, %c0_69] : memref<1x121x64xf32, #tpu.memory_space<vmem>>, vector<1x11x64xf32>
    %71 = vector.shape_cast %70 : vector<1x11x64xf32> to vector<11x64xf32>
    %72 = vector.shape_cast %69 : vector<11x64xf32> to vector<1x11x64xf32>
    tpu.vector_store %arg5[%c0_68, %c22, %c0_69], %72 {strides = array<i32>} : memref<1x121x64xf32, #tpu.memory_space<vmem>>, vector<1x11x64xf32>,
    %c72 = arith.constant 72 : index
    %c0_70 = arith.constant 0 : index
    %73 = vector.load %arg8[%c72, %c0_70] : memref<264x64xf32, #tpu.memory_space<vmem>>, vector<11x64xf32>
    %c84 = arith.constant 84 : index
    %c0_71 = arith.constant 0 : index
    %74 = vector.load %arg8[%c84, %c0_71] : memref<264x64xf32, #tpu.memory_space<vmem>>, vector<11x64xf32>
    %75 = arith.maximumf %73, %74 : vector<11x64xf32>
    %76 = vector.broadcast %1 : vector<1x64xf32> to vector<11x64xf32>
    %77 = arith.addf %75, %76 : vector<11x64xf32>
    %78 = vector.broadcast %2 : vector<1x64xf32> to vector<11x64xf32>
    %79 = arith.maximumf %77, %78 : vector<11x64xf32>
    %c0_72 = arith.constant 0 : index
    %c33 = arith.constant 33 : index
    %c0_73 = arith.constant 0 : index
    %80 = vector.load %arg5[%c0_72, %c33, %c0_73] : memref<1x121x64xf32, #tpu.memory_space<vmem>>, vector<1x11x64xf32>
    %81 = vector.shape_cast %80 : vector<1x11x64xf32> to vector<11x64xf32>
    %82 = vector.shape_cast %79 : vector<11x64xf32> to vector<1x11x64xf32>
    tpu.vector_store %arg5[%c0_72, %c33, %c0_73], %82 {strides = array<i32>} : memref<1x121x64xf32, #tpu.memory_space<vmem>>, vector<1x11x64xf32>,
    %c96 = arith.constant 96 : index
    %c0_74 = arith.constant 0 : index
    %83 = vector.load %arg8[%c96, %c0_74] : memref<264x64xf32, #tpu.memory_space<vmem>>, vector<11x64xf32>
    %c108 = arith.constant 108 : index
    %c0_75 = arith.constant 0 : index
    %84 = vector.load %arg8[%c108, %c0_75] : memref<264x64xf32, #tpu.memory_space<vmem>>, vector<11x64xf32>
    %85 = arith.maximumf %83, %84 : vector<11x64xf32>
    %86 = vector.broadcast %1 : vector<1x64xf32> to vector<11x64xf32>
    %87 = arith.addf %85, %86 : vector<11x64xf32>
    %88 = vector.broadcast %2 : vector<1x64xf32> to vector<11x64xf32>
    %89 = arith.maximumf %87, %88 : vector<11x64xf32>
    %c0_76 = arith.constant 0 : index
    %c44 = arith.constant 44 : index
    %c0_77 = arith.constant 0 : index
    %90 = vector.load %arg5[%c0_76, %c44, %c0_77] : memref<1x121x64xf32, #tpu.memory_space<vmem>>, vector<1x11x64xf32>
    %91 = vector.shape_cast %90 : vector<1x11x64xf32> to vector<11x64xf32>
    %92 = vector.shape_cast %89 : vector<11x64xf32> to vector<1x11x64xf32>
    tpu.vector_store %arg5[%c0_76, %c44, %c0_77], %92 {strides = array<i32>} : memref<1x121x64xf32, #tpu.memory_space<vmem>>, vector<1x11x64xf32>,
    %c120 = arith.constant 120 : index
    %c0_78 = arith.constant 0 : index
    %93 = vector.load %arg8[%c120, %c0_78] : memref<264x64xf32, #tpu.memory_space<vmem>>, vector<11x64xf32>
    %c132 = arith.constant 132 : index
    %c0_79 = arith.constant 0 : index
    %94 = vector.load %arg8[%c132, %c0_79] : memref<264x64xf32, #tpu.memory_space<vmem>>, vector<11x64xf32>
    %95 = arith.maximumf %93, %94 : vector<11x64xf32>
    %96 = vector.broadcast %1 : vector<1x64xf32> to vector<11x64xf32>
    %97 = arith.addf %95, %96 : vector<11x64xf32>
    %98 = vector.broadcast %2 : vector<1x64xf32> to vector<11x64xf32>
    %99 = arith.maximumf %97, %98 : vector<11x64xf32>
    %c0_80 = arith.constant 0 : index
    %c55 = arith.constant 55 : index
    %c0_81 = arith.constant 0 : index
    %100 = vector.load %arg5[%c0_80, %c55, %c0_81] : memref<1x121x64xf32, #tpu.memory_space<vmem>>, vector<1x11x64xf32>
    %101 = vector.shape_cast %100 : vector<1x11x64xf32> to vector<11x64xf32>
    %102 = vector.shape_cast %99 : vector<11x64xf32> to vector<1x11x64xf32>
    tpu.vector_store %arg5[%c0_80, %c55, %c0_81], %102 {strides = array<i32>} : memref<1x121x64xf32, #tpu.memory_space<vmem>>, vector<1x11x64xf32>,
    %c144 = arith.constant 144 : index
    %c0_82 = arith.constant 0 : index
    %103 = vector.load %arg8[%c144, %c0_82] : memref<264x64xf32, #tpu.memory_space<vmem>>, vector<11x64xf32>
    %c156 = arith.constant 156 : index
    %c0_83 = arith.constant 0 : index
    %104 = vector.load %arg8[%c156, %c0_83] : memref<264x64xf32, #tpu.memory_space<vmem>>, vector<11x64xf32>
    %105 = arith.maximumf %103, %104 : vector<11x64xf32>
    %106 = vector.broadcast %1 : vector<1x64xf32> to vector<11x64xf32>
    %107 = arith.addf %105, %106 : vector<11x64xf32>
    %108 = vector.broadcast %2 : vector<1x64xf32> to vector<11x64xf32>
    %109 = arith.maximumf %107, %108 : vector<11x64xf32>
    %c0_84 = arith.constant 0 : index
    %c66 = arith.constant 66 : index
    %c0_85 = arith.constant 0 : index
    %110 = vector.load %arg5[%c0_84, %c66, %c0_85] : memref<1x121x64xf32, #tpu.memory_space<vmem>>, vector<1x11x64xf32>
    %111 = vector.shape_cast %110 : vector<1x11x64xf32> to vector<11x64xf32>
    %112 = vector.shape_cast %109 : vector<11x64xf32> to vector<1x11x64xf32>
    tpu.vector_store %arg5[%c0_84, %c66, %c0_85], %112 {strides = array<i32>} : memref<1x121x64xf32, #tpu.memory_space<vmem>>, vector<1x11x64xf32>,
    %c168 = arith.constant 168 : index
    %c0_86 = arith.constant 0 : index
    %113 = vector.load %arg8[%c168, %c0_86] : memref<264x64xf32, #tpu.memory_space<vmem>>, vector<11x64xf32>
    %c180 = arith.constant 180 : index
    %c0_87 = arith.constant 0 : index
    %114 = vector.load %arg8[%c180, %c0_87] : memref<264x64xf32, #tpu.memory_space<vmem>>, vector<11x64xf32>
    %115 = arith.maximumf %113, %114 : vector<11x64xf32>
    %116 = vector.broadcast %1 : vector<1x64xf32> to vector<11x64xf32>
    %117 = arith.addf %115, %116 : vector<11x64xf32>
    %118 = vector.broadcast %2 : vector<1x64xf32> to vector<11x64xf32>
    %119 = arith.maximumf %117, %118 : vector<11x64xf32>
    %c0_88 = arith.constant 0 : index
    %c77 = arith.constant 77 : index
    %c0_89 = arith.constant 0 : index
    %120 = vector.load %arg5[%c0_88, %c77, %c0_89] : memref<1x121x64xf32, #tpu.memory_space<vmem>>, vector<1x11x64xf32>
    %121 = vector.shape_cast %120 : vector<1x11x64xf32> to vector<11x64xf32>
    %122 = vector.shape_cast %119 : vector<11x64xf32> to vector<1x11x64xf32>
    tpu.vector_store %arg5[%c0_88, %c77, %c0_89], %122 {strides = array<i32>} : memref<1x121x64xf32, #tpu.memory_space<vmem>>, vector<1x11x64xf32>,
    %c192 = arith.constant 192 : index
    %c0_90 = arith.constant 0 : index
    %123 = vector.load %arg8[%c192, %c0_90] : memref<264x64xf32, #tpu.memory_space<vmem>>, vector<11x64xf32>
    %c204 = arith.constant 204 : index
    %c0_91 = arith.constant 0 : index
    %124 = vector.load %arg8[%c204, %c0_91] : memref<264x64xf32, #tpu.memory_space<vmem>>, vector<11x64xf32>
    %125 = arith.maximumf %123, %124 : vector<11x64xf32>
    %126 = vector.broadcast %1 : vector<1x64xf32> to vector<11x64xf32>
    %127 = arith.addf %125, %126 : vector<11x64xf32>
    %128 = vector.broadcast %2 : vector<1x64xf32> to vector<11x64xf32>
    %129 = arith.maximumf %127, %128 : vector<11x64xf32>
    %c0_92 = arith.constant 0 : index
    %c88 = arith.constant 88 : index
    %c0_93 = arith.constant 0 : index
    %130 = vector.load %arg5[%c0_92, %c88, %c0_93] : memref<1x121x64xf32, #tpu.memory_space<vmem>>, vector<1x11x64xf32>
    %131 = vector.shape_cast %130 : vector<1x11x64xf32> to vector<11x64xf32>
    %132 = vector.shape_cast %129 : vector<11x64xf32> to vector<1x11x64xf32>
    tpu.vector_store %arg5[%c0_92, %c88, %c0_93], %132 {strides = array<i32>} : memref<1x121x64xf32, #tpu.memory_space<vmem>>, vector<1x11x64xf32>,
    %c216 = arith.constant 216 : index
    %c0_94 = arith.constant 0 : index
    %133 = vector.load %arg8[%c216, %c0_94] : memref<264x64xf32, #tpu.memory_space<vmem>>, vector<11x64xf32>
    %c228 = arith.constant 228 : index
    %c0_95 = arith.constant 0 : index
    %134 = vector.load %arg8[%c228, %c0_95] : memref<264x64xf32, #tpu.memory_space<vmem>>, vector<11x64xf32>
    %135 = arith.maximumf %133, %134 : vector<11x64xf32>
    %136 = vector.broadcast %1 : vector<1x64xf32> to vector<11x64xf32>
    %137 = arith.addf %135, %136 : vector<11x64xf32>
    %138 = vector.broadcast %2 : vector<1x64xf32> to vector<11x64xf32>
    %139 = arith.maximumf %137, %138 : vector<11x64xf32>
    %c0_96 = arith.constant 0 : index
    %c99 = arith.constant 99 : index
    %c0_97 = arith.constant 0 : index
    %140 = vector.load %arg5[%c0_96, %c99, %c0_97] : memref<1x121x64xf32, #tpu.memory_space<vmem>>, vector<1x11x64xf32>
    %141 = vector.shape_cast %140 : vector<1x11x64xf32> to vector<11x64xf32>
    %142 = vector.shape_cast %139 : vector<11x64xf32> to vector<1x11x64xf32>
    tpu.vector_store %arg5[%c0_96, %c99, %c0_97], %142 {strides = array<i32>} : memref<1x121x64xf32, #tpu.memory_space<vmem>>, vector<1x11x64xf32>,
    %c240 = arith.constant 240 : index
    %c0_98 = arith.constant 0 : index
    %143 = vector.load %arg8[%c240, %c0_98] : memref<264x64xf32, #tpu.memory_space<vmem>>, vector<11x64xf32>
    %c252 = arith.constant 252 : index
    %c0_99 = arith.constant 0 : index
    %144 = vector.load %arg8[%c252, %c0_99] : memref<264x64xf32, #tpu.memory_space<vmem>>, vector<11x64xf32>
    %145 = arith.maximumf %143, %144 : vector<11x64xf32>
    %146 = vector.broadcast %1 : vector<1x64xf32> to vector<11x64xf32>
    %147 = arith.addf %145, %146 : vector<11x64xf32>
    %148 = vector.broadcast %2 : vector<1x64xf32> to vector<11x64xf32>
    %149 = arith.maximumf %147, %148 : vector<11x64xf32>
    %c0_100 = arith.constant 0 : index
    %c110 = arith.constant 110 : index
    %c0_101 = arith.constant 0 : index
    %150 = vector.load %arg5[%c0_100, %c110, %c0_101] : memref<1x121x64xf32, #tpu.memory_space<vmem>>, vector<1x11x64xf32>
    %151 = vector.shape_cast %150 : vector<1x11x64xf32> to vector<11x64xf32>
    %152 = vector.shape_cast %149 : vector<11x64xf32> to vector<1x11x64xf32>
    tpu.vector_store %arg5[%c0_100, %c110, %c0_101], %152 {strides = array<i32>} : memref<1x121x64xf32, #tpu.memory_space<vmem>>, vector<1x11x64xf32>,
    return
  }
  func.func @transform_0(%arg0: i32) -> (i32, i32, i32) {
    %c0_i32 = arith.constant 0 : i32
    %c0_i32_0 = arith.constant 0 : i32
    %c0_i32_1 = arith.constant 0 : i32
    return %arg0, %c0_i32, %c0_i32_0 : i32, i32, i32
  }
  func.func @transform_1(%arg0: i32) -> (i32, i32) {
    %c0_i32 = arith.constant 0 : i32
    %c0_i32_0 = arith.constant 0 : i32
    %c0_i32_1 = arith.constant 0 : i32
    return %c0_i32, %c0_i32_0 : i32, i32
  }
  func.func @transform_2(%arg0: i32) -> (i32, i32) {
    %c0_i32 = arith.constant 0 : i32
    %c0_i32_0 = arith.constant 0 : i32
    %c0_i32_1 = arith.constant 0 : i32
    return %c0_i32, %c0_i32_0 : i32, i32
  }
  func.func @transform_3(%arg0: i32) -> (i32, i32) {
    %c0_i32 = arith.constant 0 : i32
    %c0_i32_0 = arith.constant 0 : i32
    %c0_i32_1 = arith.constant 0 : i32
    return %c0_i32, %c0_i32_0 : i32, i32
  }
  func.func @transform_4(%arg0: i32) -> (i32, i32, i32) {
    %c0_i32 = arith.constant 0 : i32
    %c0_i32_0 = arith.constant 0 : i32
    %c0_i32_1 = arith.constant 0 : i32
    return %arg0, %c0_i32, %c0_i32_0 : i32, i32, i32
  }
}

module attributes {stable_mosaic.version = 11 : i64} {
  func.func @_mlp_kernel(%arg0: i32, %arg1: memref<2x7744xf32, #tpu.memory_space<vmem>>, %arg2: memref<7744x128xf32, #tpu.memory_space<vmem>>, %arg3: memref<1x128xf32, #tpu.memory_space<vmem>>, %arg4: memref<128x10xf32, #tpu.memory_space<vmem>>, %arg5: memref<1x10xf32, #tpu.memory_space<vmem>>, %arg6: memref<10x2xf32, #tpu.memory_space<vmem>>, %arg7: memref<1x2xf32, #tpu.memory_space<vmem>>, %arg8: memref<2x2xf32, #tpu.memory_space<vmem>>) attributes {dimension_semantics = [#tpu.dimension_semantics<parallel>], iteration_bounds = array<i64: 1>, scalar_prefetch = 0 : i64, scratch_operands = 0 : i64, tpu.core_type = #tpu.core_type<tc>, window_params = [{transform_indices = @transform_0, window_bounds = array<i64: 2, 7744>}, {pipeline_mode = #tpu.pipeline_mode<synchronous>, transform_indices = @transform_1, window_bounds = array<i64: 7744, 128>}, {pipeline_mode = #tpu.pipeline_mode<synchronous>, transform_indices = @transform_2, window_bounds = array<i64: 1, 128>}, {pipeline_mode = #tpu.pipeline_mode<synchronous>, transform_indices = @transform_3, window_bounds = array<i64: 128, 10>}, {pipeline_mode = #tpu.pipeline_mode<synchronous>, transform_indices = @transform_4, window_bounds = array<i64: 1, 10>}, {pipeline_mode = #tpu.pipeline_mode<synchronous>, transform_indices = @transform_5, window_bounds = array<i64: 10, 2>}, {pipeline_mode = #tpu.pipeline_mode<synchronous>, transform_indices = @transform_6, window_bounds = array<i64: 1, 2>}, {transform_indices = @transform_7, window_bounds = array<i64: 2, 2>}]} {
    %c0 = arith.constant 0 : index
    %c0_0 = arith.constant 0 : index
    %0 = vector.load %arg1[%c0, %c0_0] : memref<2x7744xf32, #tpu.memory_space<vmem>>, vector<2x7744xf32>
    %c0_1 = arith.constant 0 : index
    %c0_2 = arith.constant 0 : index
    %1 = vector.load %arg2[%c0_1, %c0_2] : memref<7744x128xf32, #tpu.memory_space<vmem>>, vector<7744x128xf32>
    %cst = arith.constant dense<0.000000e+00> : vector<2x128xf32>
    %2 = tpu.matmul %0, %1, %cst {dimension_numbers = #tpu.dot_dimension_numbers<[1], [0], [0], [1], [0, 0, 1, 1], [], []>} : vector<2x7744xf32>, vector<7744x128xf32>, vector<2x128xf32> -> vector<2x128xf32>
    %c0_3 = arith.constant 0 : index
    %c0_4 = arith.constant 0 : index
    %3 = vector.load %arg3[%c0_3, %c0_4] : memref<1x128xf32, #tpu.memory_space<vmem>>, vector<1x128xf32>
    %4 = vector.broadcast %3 : vector<1x128xf32> to vector<2x128xf32>
    %5 = arith.addf %2, %4 : vector<2x128xf32>
    %cst_5 = arith.constant 0.000000e+00 : f32
    %6 = vector.broadcast %cst_5 : f32 to vector<2x128xf32>
    %7 = arith.maximumf %5, %6 : vector<2x128xf32>
    %c0_6 = arith.constant 0 : index
    %c0_7 = arith.constant 0 : index
    %8 = vector.load %arg4[%c0_6, %c0_7] : memref<128x10xf32, #tpu.memory_space<vmem>>, vector<128x10xf32>
    %cst_8 = arith.constant dense<0.000000e+00> : vector<2x10xf32>
    %9 = tpu.matmul %7, %8, %cst_8 {dimension_numbers = #tpu.dot_dimension_numbers<[1], [0], [0], [1], [0, 0, 1, 1], [], []>} : vector<2x128xf32>, vector<128x10xf32>, vector<2x10xf32> -> vector<2x10xf32>
    %c0_9 = arith.constant 0 : index
    %c0_10 = arith.constant 0 : index
    %10 = vector.load %arg5[%c0_9, %c0_10] : memref<1x10xf32, #tpu.memory_space<vmem>>, vector<1x10xf32>
    %11 = vector.broadcast %10 : vector<1x10xf32> to vector<2x10xf32>
    %12 = arith.addf %9, %11 : vector<2x10xf32>
    %cst_11 = arith.constant 0.000000e+00 : f32
    %13 = vector.broadcast %cst_11 : f32 to vector<2x10xf32>
    %14 = arith.maximumf %12, %13 : vector<2x10xf32>
    %c0_12 = arith.constant 0 : index
    %c0_13 = arith.constant 0 : index
    %15 = vector.load %arg6[%c0_12, %c0_13] : memref<10x2xf32, #tpu.memory_space<vmem>>, vector<10x2xf32>
    %cst_14 = arith.constant dense<0.000000e+00> : vector<2x2xf32>
    %16 = tpu.matmul %14, %15, %cst_14 {dimension_numbers = #tpu.dot_dimension_numbers<[1], [0], [0], [1], [0, 0, 1, 1], [], []>} : vector<2x10xf32>, vector<10x2xf32>, vector<2x2xf32> -> vector<2x2xf32>
    %c0_15 = arith.constant 0 : index
    %c0_16 = arith.constant 0 : index
    %17 = vector.load %arg7[%c0_15, %c0_16] : memref<1x2xf32, #tpu.memory_space<vmem>>, vector<1x2xf32>
    %18 = vector.broadcast %17 : vector<1x2xf32> to vector<2x2xf32>
    %19 = arith.addf %16, %18 : vector<2x2xf32>
    %c0_17 = arith.constant 0 : index
    %c0_18 = arith.constant 0 : index
    %20 = vector.load %arg8[%c0_17, %c0_18] : memref<2x2xf32, #tpu.memory_space<vmem>>, vector<2x2xf32>
    tpu.vector_store %arg8[%c0_17, %c0_18], %19 {strides = array<i32>} : memref<2x2xf32, #tpu.memory_space<vmem>>, vector<2x2xf32>,
    return
  }
  func.func @transform_0(%arg0: i32) -> (i32, i32) {
    %c0_i32 = arith.constant 0 : i32
    %c0_i32_0 = arith.constant 0 : i32
    return %arg0, %c0_i32 : i32, i32
  }
  func.func @transform_1(%arg0: i32) -> (i32, i32) {
    %c0_i32 = arith.constant 0 : i32
    %c0_i32_0 = arith.constant 0 : i32
    %c0_i32_1 = arith.constant 0 : i32
    return %c0_i32, %c0_i32_0 : i32, i32
  }
  func.func @transform_2(%arg0: i32) -> (i32, i32) {
    %c0_i32 = arith.constant 0 : i32
    %c0_i32_0 = arith.constant 0 : i32
    %c0_i32_1 = arith.constant 0 : i32
    return %c0_i32, %c0_i32_0 : i32, i32
  }
  func.func @transform_3(%arg0: i32) -> (i32, i32) {
    %c0_i32 = arith.constant 0 : i32
    %c0_i32_0 = arith.constant 0 : i32
    %c0_i32_1 = arith.constant 0 : i32
    return %c0_i32, %c0_i32_0 : i32, i32
  }
  func.func @transform_4(%arg0: i32) -> (i32, i32) {
    %c0_i32 = arith.constant 0 : i32
    %c0_i32_0 = arith.constant 0 : i32
    %c0_i32_1 = arith.constant 0 : i32
    return %c0_i32, %c0_i32_0 : i32, i32
  }
  func.func @transform_5(%arg0: i32) -> (i32, i32) {
    %c0_i32 = arith.constant 0 : i32
    %c0_i32_0 = arith.constant 0 : i32
    %c0_i32_1 = arith.constant 0 : i32
    return %c0_i32, %c0_i32_0 : i32, i32
  }
  func.func @transform_6(%arg0: i32) -> (i32, i32) {
    %c0_i32 = arith.constant 0 : i32
    %c0_i32_0 = arith.constant 0 : i32
    %c0_i32_1 = arith.constant 0 : i32
    return %c0_i32, %c0_i32_0 : i32, i32
  }
  func.func @transform_7(%arg0: i32) -> (i32, i32) {
    %c0_i32 = arith.constant 0 : i32
    %c0_i32_0 = arith.constant 0 : i32
    return %arg0, %c0_i32 : i32, i32
  }
}

</mosaic_0001>

<llo_original>
// kernel: cnn24_forward.3
$region0: #{cnn24_forward.3}
  #allocation0 [shape = 'u32[]', space=smem, size = 0x4, offset = 0x4, fixed_abs, tag = 'smem constant byte address 0x4 - core index']
  #allocation1 [shape = 'u32[144,128]{1,0:T(1,128)}', space=vmem, size = 0x12000, scoped, tag = 'internal scratch']
  %s0 = inlined_call_operand.hbm [shape: f32[2,7744], index: 0, kind: input, shape index: {}]
  %s1 = inlined_call_operand.hbm [shape: f32[7744,128], index: 1, kind: input, shape index: {}]
  %s2 = inlined_call_operand.hbm [shape: f32[1,128], index: 2, kind: input, shape index: {}]
  %s3 = inlined_call_operand.hbm [shape: f32[128,10], index: 3, kind: input, shape index: {}]
  %s4 = inlined_call_operand.hbm [shape: f32[1,10], index: 4, kind: input, shape index: {}]
  %s5 = inlined_call_operand.hbm [shape: f32[10,2], index: 5, kind: input, shape index: {}]
  %s6 = inlined_call_operand.hbm [shape: f32[1,2], index: 6, kind: input, shape index: {}]
  %s7 = inlined_call_operand.hbm [shape: f32[2,2], index: 7, kind: output, shape index: {}]
  %s8 = sld [smem:[#allocation0]]
  $region66: #{cnn24_forward.3} parent=0
    _
  %s10 = ssub.s32 1, %s8
  %s11 = scalar_select 0, %s10, %s8
  $region1: #{cnn24_forward.3} parent=0
    #allocation2 [shape = 'u8[62464]{0}', space=vmem, size = 0xf400, scoped, tag = 'input window, operand 0, single buffered']
    #allocation3 [shape = 's32[1]{0}', space=sflag, size = 0x4, scoped, tag = 'scoped memory for cnn24_forward.3']
    #allocation4 [shape = 's32[1]{0}', space=sflag, size = 0x4, scoped, tag = 'scoped memory for cnn24_forward.3']
    #allocation5 [shape = 'u8[3964928]{0}', space=vmem, size = 0x3c8000, scoped, tag = 'input window, operand 1, single buffered']
    #allocation6 [shape = 's32[1]{0}', space=sflag, size = 0x4, scoped, tag = 'scoped memory for cnn24_forward.3']
    #allocation7 [shape = 'u8[512]{0}', space=vmem, size = 0x400, scoped, tag = 'input window, operand 2, single buffered']
    #allocation8 [shape = 'u8[65536]{0}', space=vmem, size = 0x10000, scoped, tag = 'input window, operand 3, single buffered']
    #allocation9 [shape = 's32[1]{0}', space=sflag, size = 0x4, scoped, tag = 'scoped memory for cnn24_forward.3']
    #allocation10 [shape = 'u8[512]{0}', space=vmem, size = 0x400, scoped, tag = 'input window, operand 4, single buffered']
    #allocation11 [shape = 'u8[8192]{0}', space=vmem, size = 0x2000, scoped, tag = 'input window, operand 5, single buffered']
    #allocation12 [shape = 's32[1]{0}', space=sflag, size = 0x4, scoped, tag = 'scoped memory for cnn24_forward.3']
    #allocation13 [shape = 'u8[512]{0}', space=vmem, size = 0x400, scoped, tag = 'input window, operand 6, single buffered']
    #allocation14 [shape = 'u8[1024]{0}', space=vmem, size = 0x400, scoped, tag = 'output window, operand 0, single buffered']
    %12 = vsyncpa [#allocation3], 0
    %13 = vsyncpa [#allocation6], 0
    %14 = vsyncpa [#allocation9], 0
    %15 = vsyncpa [#allocation12], 0
    %16 = vsyncpa [#allocation4], 0
    // Predicated region
    $region2: #{cnn24_forward.3} parent=1 // pred_check
      _
    $region3: #{cnn24_forward.3} parent=1 // pred_check_branch
      %18 = sbr.rel (0) target = $region5
    $region4: #{cnn24_forward.3} parent=1 // pred_region
      %s20 = ssub.s32 1952, 1952
      %21 = vsyncadd [#allocation3], %s20
      %s23 = sshll.u32 [#allocation2], 4
      %s24 = int_to_ptr.vmem [resolvable:$true] %s23
      %26 = dma.hbm_to_vmem [thread:$0]  %s0, 1952, %s24, [#allocation3]
    $region5: #{cnn24_forward.3} parent=1 // pred_fallthru
      _
    // Predicated region
    $region6: #{cnn24_forward.3} parent=1 // pred_check
      _
    $region7: #{cnn24_forward.3} parent=1 // pred_check_branch
      %28 = sbr.rel (0) target = $region9
    $region8: #{cnn24_forward.3} parent=1 // pred_region
      %s30 = ssub.s32 123904, 123904
      %31 = vsyncadd [#allocation6], %s30
      %s32 = sshll.u32 [#allocation5], 4
      %s33 = int_to_ptr.vmem [resolvable:$true] %s32
      %38 = dma.hbm_to_vmem [thread:$0]  %s1, 123904, %s33, [#allocation6], 128, 128, 8
    $region9: #{cnn24_forward.3} parent=1 // pred_fallthru
      _
    // Predicated region
    $region10: #{cnn24_forward.3} parent=1 // pred_check
      _
    $region11: #{cnn24_forward.3} parent=1 // pred_check_branch
      %40 = sbr.rel (0) target = $region13
    $region12: #{cnn24_forward.3} parent=1 // pred_region
      %s42 = ssub.s32 16, 16
      %43 = vsyncadd [#allocation6], %s42
      %s45 = sshll.u32 [#allocation7], 4
      %s46 = int_to_ptr.vmem [resolvable:$true] %s45
      %48 = dma.hbm_to_vmem [thread:$0]  %s2, 16, %s46, [#allocation6]
    $region13: #{cnn24_forward.3} parent=1 // pred_fallthru
      _
    // Predicated region
    $region14: #{cnn24_forward.3} parent=1 // pred_check
      _
    $region15: #{cnn24_forward.3} parent=1 // pred_check_branch
      %50 = sbr.rel (0) target = $region17
    $region16: #{cnn24_forward.3} parent=1 // pred_region
      %s52 = ssub.s32 2048, 2048
      %53 = vsyncadd [#allocation9], %s52
      %s54 = sshll.u32 [#allocation8], 4
      %s55 = int_to_ptr.vmem [resolvable:$true] %s54
      %60 = dma.hbm_to_vmem [thread:$0]  %s3, 2048, %s55, [#allocation9], 128, 128, 8
    $region17: #{cnn24_forward.3} parent=1 // pred_fallthru
      _
    // Predicated region
    $region18: #{cnn24_forward.3} parent=1 // pred_check
      _
    $region19: #{cnn24_forward.3} parent=1 // pred_check_branch
      %62 = sbr.rel (0) target = $region21
    $region20: #{cnn24_forward.3} parent=1 // pred_region
      %s64 = ssub.s32 16, 16
      %65 = vsyncadd [#allocation9], %s64
      %s67 = sshll.u32 [#allocation10], 4
      %s68 = int_to_ptr.vmem [resolvable:$true] %s67
      %70 = dma.hbm_to_vmem [thread:$0]  %s4, 16, %s68, [#allocation9]
    $region21: #{cnn24_forward.3} parent=1 // pred_fallthru
      _
    // Predicated region
    $region22: #{cnn24_forward.3} parent=1 // pred_check
      _
    $region23: #{cnn24_forward.3} parent=1 // pred_check_branch
      %72 = sbr.rel (0) target = $region25
    $region24: #{cnn24_forward.3} parent=1 // pred_region
      %s74 = ssub.s32 256, 256
      %75 = vsyncadd [#allocation12], %s74
      %s76 = sshll.u32 [#allocation11], 4
      %s77 = int_to_ptr.vmem [resolvable:$true] %s76
      %82 = dma.hbm_to_vmem [thread:$0]  %s5, 256, %s77, [#allocation12], 128, 128, 8
    $region25: #{cnn24_forward.3} parent=1 // pred_fallthru
      _
    // Predicated region
    $region26: #{cnn24_forward.3} parent=1 // pred_check
      _
    $region27: #{cnn24_forward.3} parent=1 // pred_check_branch
      %84 = sbr.rel (0) target = $region29
    $region28: #{cnn24_forward.3} parent=1 // pred_region
      %s86 = ssub.s32 16, 16
      %87 = vsyncadd [#allocation12], %s86
      %s89 = sshll.u32 [#allocation13], 4
      %s90 = int_to_ptr.vmem [resolvable:$true] %s89
      %92 = dma.hbm_to_vmem [thread:$0]  %s6, 16, %s90, [#allocation12]
    $region29: #{cnn24_forward.3} parent=1 // pred_fallthru
      _
    // Predicated region
    $region30: #{cnn24_forward.3} parent=1 // pred_check
      _
    $region31: #{cnn24_forward.3} parent=1 // pred_check_branch
      %94 = sbr.rel (0) target = $region33
    $region32: #{cnn24_forward.3} parent=1 // pred_region
      %95 = dma.done [#allocation3], 1952
    $region33: #{cnn24_forward.3} parent=1 // pred_fallthru
      _
    // Predicated region
    $region34: #{cnn24_forward.3} parent=1 // pred_check
      _
    $region35: #{cnn24_forward.3} parent=1 // pred_check_branch
      %97 = sbr.rel (0) target = $region37
    $region36: #{cnn24_forward.3} parent=1 // pred_region
      %98 = dma.done [#allocation6], 123904
    $region37: #{cnn24_forward.3} parent=1 // pred_fallthru
      _
    // Predicated region
    $region38: #{cnn24_forward.3} parent=1 // pred_check
      _
    $region39: #{cnn24_forward.3} parent=1 // pred_check_branch
      %100 = sbr.rel (0) target = $region41
    $region40: #{cnn24_forward.3} parent=1 // pred_region
      %101 = dma.done [#allocation6], 16
    $region41: #{cnn24_forward.3} parent=1 // pred_fallthru
      _
    // Predicated region
    $region42: #{cnn24_forward.3} parent=1 // pred_check
      _
    $region43: #{cnn24_forward.3} parent=1 // pred_check_branch
      %103 = sbr.rel (0) target = $region45
    $region44: #{cnn24_forward.3} parent=1 // pred_region
      %104 = dma.done [#allocation9], 2048
    $region45: #{cnn24_forward.3} parent=1 // pred_fallthru
      _
    // Predicated region
    $region46: #{cnn24_forward.3} parent=1 // pred_check
      _
    $region47: #{cnn24_forward.3} parent=1 // pred_check_branch
      %106 = sbr.rel (0) target = $region49
    $region48: #{cnn24_forward.3} parent=1 // pred_region
      %107 = dma.done [#allocation9], 16
    $region49: #{cnn24_forward.3} parent=1 // pred_fallthru
      _
    // Predicated region
    $region50: #{cnn24_forward.3} parent=1 // pred_check
      _
    $region51: #{cnn24_forward.3} parent=1 // pred_check_branch
      %109 = sbr.rel (0) target = $region53
    $region52: #{cnn24_forward.3} parent=1 // pred_region
      %110 = dma.done [#allocation12], 256
    $region53: #{cnn24_forward.3} parent=1 // pred_fallthru
      _
    // Predicated region
    $region54: #{cnn24_forward.3} parent=1 // pred_check
      _
    $region55: #{cnn24_forward.3} parent=1 // pred_check_branch
      %112 = sbr.rel (0) target = $region57
    $region56: #{cnn24_forward.3} parent=1 // pred_region
      %113 = dma.done [#allocation12], 16
    $region57: #{cnn24_forward.3} parent=1 // pred_fallthru
      _
    %v114 = vld [vmem:[#allocation2] sm:$0xff]
    %v115 = vld [vmem:[#allocation2 + $0x8] sm:$0xff]
    %v116 = vld [vmem:[#allocation2 + $0x10] sm:$0xff]
    %v117 = vld [vmem:[#allocation2 + $0x18] sm:$0xff]
    %v118 = vld [vmem:[#allocation2 + $0x20] sm:$0xff]
    %v119 = vld [vmem:[#allocation2 + $0x28] sm:$0xff]
    %v120 = vld [vmem:[#allocation2 + $0x30] sm:$0xff]
    %v121 = vld [vmem:[#allocation2 + $0x38] sm:$0xff]
    %v122 = vld [vmem:[#allocation2 + $0x40] sm:$0xff]
    %v123 = vld [vmem:[#allocation2 + $0x48] sm:$0xff]
    %v124 = vld [vmem:[#allocation2 + $0x50] sm:$0xff]
    %v125 = vld [vmem:[#allocation2 + $0x58] sm:$0xff]
    %v126 = vld [vmem:[#allocation2 + $0x60] sm:$0xff]
    %v127 = vld [vmem:[#allocation2 + $0x68] sm:$0xff]
    %v128 = vld [vmem:[#allocation2 + $0x70] sm:$0xff]
    %v129 = vld [vmem:[#allocation2 + $0x78] sm:$0x3]
    %v130 = vld [vmem:[#allocation5] sm:$0xff]
    %v131 = vld [vmem:[#allocation5 + $0x8] sm:$0xff]
    %v132 = vld [vmem:[#allocation5 + $0x10] sm:$0xff]
    %v133 = vld [vmem:[#allocation5 + $0x18] sm:$0xff]
    %v134 = vld [vmem:[#allocation5 + $0x20] sm:$0xff]
    %v135 = vld [vmem:[#allocation5 + $0x28] sm:$0xff]
    %v136 = vld [vmem:[#allocation5 + $0x30] sm:$0xff]
    %v137 = vld [vmem:[#allocation5 + $0x38] sm:$0xff]
    %v138 = vld [vmem:[#allocation5 + $0x40] sm:$0xff]
    %v139 = vld [vmem:[#allocation5 + $0x48] sm:$0xff]
    %v140 = vld [vmem:[#allocation5 + $0x50] sm:$0xff]
    %v141 = vld [vmem:[#allocation5 + $0x58] sm:$0xff]
    %v142 = vld [vmem:[#allocation5 + $0x60] sm:$0xff]
    %v143 = vld [vmem:[#allocation5 + $0x68] sm:$0xff]
    %v144 = vld [vmem:[#allocation5 + $0x70] sm:$0xff]
    %v145 = vld [vmem:[#allocation5 + $0x78] sm:$0xff]
    %v146 = vld [vmem:[#allocation5 + $0x80] sm:$0xff]
    %v147 = vld [vmem:[#allocation5 + $0x88] sm:$0xff]
    %v148 = vld [vmem:[#allocation5 + $0x90] sm:$0xff]
    %v149 = vld [vmem:[#allocation5 + $0x98] sm:$0xff]
    %v150 = vld [vmem:[#allocation5 + $0xa0] sm:$0xff]
    %v151 = vld [vmem:[#allocation5 + $0xa8] sm:$0xff]
    %v152 = vld [vmem:[#allocation5 + $0xb0] sm:$0xff]
    %v153 = vld [vmem:[#allocation5 + $0xb8] sm:$0xff]
    %v154 = vld [vmem:[#allocation5 + $0xc0] sm:$0xff]
    %v155 = vld [vmem:[#allocation5 + $0xc8] sm:$0xff]
    %v156 = vld [vmem:[#allocation5 + $0xd0] sm:$0xff]
    %v157 = vld [vmem:[#allocation5 + $0xd8] sm:$0xff]
    %v158 = vld [vmem:[#allocation5 + $0xe0] sm:$0xff]
    %v159 = vld [vmem:[#allocation5 + $0xe8] sm:$0xff]
    %v160 = vld [vmem:[#allocation5 + $0xf0] sm:$0xff]
    %v161 = vld [vmem:[#allocation5 + $0xf8] sm:$0xff]
    %v162 = vld [vmem:[#allocation5 + $0x100] sm:$0xff]
    %v163 = vld [vmem:[#allocation5 + $0x108] sm:$0xff]
    %v164 = vld [vmem:[#allocation5 + $0x110] sm:$0xff]
    %v165 = vld [vmem:[#allocation5 + $0x118] sm:$0xff]
    %v166 = vld [vmem:[#allocation5 + $0x120] sm:$0xff]
    %v167 = vld [vmem:[#allocation5 + $0x128] sm:$0xff]
    %v168 = vld [vmem:[#allocation5 + $0x130] sm:$0xff]
    %v169 = vld [vmem:[#allocation5 + $0x138] sm:$0xff]
    %v170 = vld [vmem:[#allocation5 + $0x140] sm:$0xff]
    %v171 = vld [vmem:[#allocation5 + $0x148] sm:$0xff]
    %v172 = vld [vmem:[#allocation5 + $0x150] sm:$0xff]
    %v173 = vld [vmem:[#allocation5 + $0x158] sm:$0xff]
    %v174 = vld [vmem:[#allocation5 + $0x160] sm:$0xff]
    %v175 = vld [vmem:[#allocation5 + $0x168] sm:$0xff]
    %v176 = vld [vmem:[#allocation5 + $0x170] sm:$0xff]
    %v177 = vld [vmem:[#allocation5 + $0x178] sm:$0xff]
    %v178 = vld [vmem:[#allocation5 + $0x180] sm:$0xff]
    %v179 = vld [vmem:[#allocation5 + $0x188] sm:$0xff]
    %v180 = vld [vmem:[#allocation5 + $0x190] sm:$0xff]
    %v181 = vld [vmem:[#allocation5 + $0x198] sm:$0xff]
    %v182 = vld [vmem:[#allocation5 + $0x1a0] sm:$0xff]
    %v183 = vld [vmem:[#allocation5 + $0x1a8] sm:$0xff]
    %v184 = vld [vmem:[#allocation5 + $0x1b0] sm:$0xff]
    %v185 = vld [vmem:[#allocation5 + $0x1b8] sm:$0xff]
    %v186 = vld [vmem:[#allocation5 + $0x1c0] sm:$0xff]
    %v187 = vld [vmem:[#allocation5 + $0x1c8] sm:$0xff]
    %v188 = vld [vmem:[#allocation5 + $0x1d0] sm:$0xff]
    %v189 = vld [vmem:[#allocation5 + $0x1d8] sm:$0xff]
    %v190 = vld [vmem:[#allocation5 + $0x1e0] sm:$0xff]
    %v191 = vld [vmem:[#allocation5 + $0x1e8] sm:$0xff]
    %v192 = vld [vmem:[#allocation5 + $0x1f0] sm:$0xff]
    %v193 = vld [vmem:[#allocation5 + $0x1f8] sm:$0xff]
    %v194 = vld [vmem:[#allocation5 + $0x200] sm:$0xff]
    %v195 = vld [vmem:[#allocation5 + $0x208] sm:$0xff]
    %v196 = vld [vmem:[#allocation5 + $0x210] sm:$0xff]
    %v197 = vld [vmem:[#allocation5 + $0x218] sm:$0xff]
    %v198 = vld [vmem:[#allocation5 + $0x220] sm:$0xff]
    %v199 = vld [vmem:[#allocation5 + $0x228] sm:$0xff]
    %v200 = vld [vmem:[#allocation5 + $0x230] sm:$0xff]
    %v201 = vld [vmem:[#allocation5 + $0x238] sm:$0xff]
    %v202 = vld [vmem:[#allocation5 + $0x240] sm:$0xff]
    %v203 = vld [vmem:[#allocation5 + $0x248] sm:$0xff]
    %v204 = vld [vmem:[#allocation5 + $0x250] sm:$0xff]
    %v205 = vld [vmem:[#allocation5 + $0x258] sm:$0xff]
    %v206 = vld [vmem:[#allocation5 + $0x260] sm:$0xff]
    %v207 = vld [vmem:[#allocation5 + $0x268] sm:$0xff]
    %v208 = vld [vmem:[#allocation5 + $0x270] sm:$0xff]
    %v209 = vld [vmem:[#allocation5 + $0x278] sm:$0xff]
    %v210 = vld [vmem:[#allocation5 + $0x280] sm:$0xff]
    %v211 = vld [vmem:[#allocation5 + $0x288] sm:$0xff]
    %v212 = vld [vmem:[#allocation5 + $0x290] sm:$0xff]
    %v213 = vld [vmem:[#allocation5 + $0x298] sm:$0xff]
    %v214 = vld [vmem:[#allocation5 + $0x2a0] sm:$0xff]
    %v215 = vld [vmem:[#allocation5 + $0x2a8] sm:$0xff]
    %v216 = vld [vmem:[#allocation5 + $0x2b0] sm:$0xff]
    %v217 = vld [vmem:[#allocation5 + $0x2b8] sm:$0xff]
    %v218 = vld [vmem:[#allocation5 + $0x2c0] sm:$0xff]
    %v219 = vld [vmem:[#allocation5 + $0x2c8] sm:$0xff]
    %v220 = vld [vmem:[#allocation5 + $0x2d0] sm:$0xff]
    %v221 = vld [vmem:[#allocation5 + $0x2d8] sm:$0xff]
    %v222 = vld [vmem:[#allocation5 + $0x2e0] sm:$0xff]
    %v223 = vld [vmem:[#allocation5 + $0x2e8] sm:$0xff]
    %v224 = vld [vmem:[#allocation5 + $0x2f0] sm:$0xff]
    %v225 = vld [vmem:[#allocation5 + $0x2f8] sm:$0xff]
    %v226 = vld [vmem:[#allocation5 + $0x300] sm:$0xff]
    %v227 = vld [vmem:[#allocation5 + $0x308] sm:$0xff]
    %v228 = vld [vmem:[#allocation5 + $0x310] sm:$0xff]
    %v229 = vld [vmem:[#allocation5 + $0x318] sm:$0xff]
    %v230 = vld [vmem:[#allocation5 + $0x320] sm:$0xff]
    %v231 = vld [vmem:[#allocation5 + $0x328] sm:$0xff]
    %v232 = vld [vmem:[#allocation5 + $0x330] sm:$0xff]
    %v233 = vld [vmem:[#allocation5 + $0x338] sm:$0xff]
    %v234 = vld [vmem:[#allocation5 + $0x340] sm:$0xff]
    %v235 = vld [vmem:[#allocation5 + $0x348] sm:$0xff]
    %v236 = vld [vmem:[#allocation5 + $0x350] sm:$0xff]
    %v237 = vld [vmem:[#allocation5 + $0x358] sm:$0xff]
    %v238 = vld [vmem:[#allocation5 + $0x360] sm:$0xff]
    %v239 = vld [vmem:[#allocation5 + $0x368] sm:$0xff]
    %v240 = vld [vmem:[#allocation5 + $0x370] sm:$0xff]
    %v241 = vld [vmem:[#allocation5 + $0x378] sm:$0xff]
    %v242 = vld [vmem:[#allocation5 + $0x380] sm:$0xff]
    %v243 = vld [vmem:[#allocation5 + $0x388] sm:$0xff]
    %v244 = vld [vmem:[#allocation5 + $0x390] sm:$0xff]
    %v245 = vld [vmem:[#allocation5 + $0x398] sm:$0xff]
    %v246 = vld [vmem:[#allocation5 + $0x3a0] sm:$0xff]
    %v247 = vld [vmem:[#allocation5 + $0x3a8] sm:$0xff]
    %v248 = vld [vmem:[#allocation5 + $0x3b0] sm:$0xff]
    %v249 = vld [vmem:[#allocation5 + $0x3b8] sm:$0xff]
    %v250 = vld [vmem:[#allocation5 + $0x3c0] sm:$0xff]
    %v251 = vld [vmem:[#allocation5 + $0x3c8] sm:$0xff]
    %v252 = vld [vmem:[#allocation5 + $0x3d0] sm:$0xff]
    %v253 = vld [vmem:[#allocation5 + $0x3d8] sm:$0xff]
    %v254 = vld [vmem:[#allocation5 + $0x3e0] sm:$0xff]
    %v255 = vld [vmem:[#allocation5 + $0x3e8] sm:$0xff]
    %v256 = vld [vmem:[#allocation5 + $0x3f0] sm:$0xff]
    %v257 = vld [vmem:[#allocation5 + $0x3f8] sm:$0xff]
    %v258 = vld [vmem:[#allocation5 + $0x400] sm:$0xff]
    %v259 = vld [vmem:[#allocation5 + $0x408] sm:$0xff]
    %v260 = vld [vmem:[#allocation5 + $0x410] sm:$0xff]
    %v261 = vld [vmem:[#allocation5 + $0x418] sm:$0xff]
    %v262 = vld [vmem:[#allocation5 + $0x420] sm:$0xff]
    %v263 = vld [vmem:[#allocation5 + $0x428] sm:$0xff]
    %v264 = vld [vmem:[#allocation5 + $0x430] sm:$0xff]
    %v265 = vld [vmem:[#allocation5 + $0x438] sm:$0xff]
    %v266 = vld [vmem:[#allocation5 + $0x440] sm:$0xff]
    %v267 = vld [vmem:[#allocation5 + $0x448] sm:$0xff]
    %v268 = vld [vmem:[#allocation5 + $0x450] sm:$0xff]
    %v269 = vld [vmem:[#allocation5 + $0x458] sm:$0xff]
    %v270 = vld [vmem:[#allocation5 + $0x460] sm:$0xff]
    %v271 = vld [vmem:[#allocation5 + $0x468] sm:$0xff]
    %v272 = vld [vmem:[#allocation5 + $0x470] sm:$0xff]
    %v273 = vld [vmem:[#allocation5 + $0x478] sm:$0xff]
    %v274 = vld [vmem:[#allocation5 + $0x480] sm:$0xff]
    %v275 = vld [vmem:[#allocation5 + $0x488] sm:$0xff]
    %v276 = vld [vmem:[#allocation5 + $0x490] sm:$0xff]
    %v277 = vld [vmem:[#allocation5 + $0x498] sm:$0xff]
    %v278 = vld [vmem:[#allocation5 + $0x4a0] sm:$0xff]
    %v279 = vld [vmem:[#allocation5 + $0x4a8] sm:$0xff]
    %v280 = vld [vmem:[#allocation5 + $0x4b0] sm:$0xff]
    %v281 = vld [vmem:[#allocation5 + $0x4b8] sm:$0xff]
    %v282 = vld [vmem:[#allocation5 + $0x4c0] sm:$0xff]
    %v283 = vld [vmem:[#allocation5 + $0x4c8] sm:$0xff]
    %v284 = vld [vmem:[#allocation5 + $0x4d0] sm:$0xff]
    %v285 = vld [vmem:[#allocation5 + $0x4d8] sm:$0xff]
    %v286 = vld [vmem:[#allocation5 + $0x4e0] sm:$0xff]
    %v287 = vld [vmem:[#allocation5 + $0x4e8] sm:$0xff]
    %v288 = vld [vmem:[#allocation5 + $0x4f0] sm:$0xff]
    %v289 = vld [vmem:[#allocation5 + $0x4f8] sm:$0xff]
    %v290 = vld [vmem:[#allocation5 + $0x500] sm:$0xff]
    %v291 = vld [vmem:[#allocation5 + $0x508] sm:$0xff]
    %v292 = vld [vmem:[#allocation5 + $0x510] sm:$0xff]
    %v293 = vld [vmem:[#allocation5 + $0x518] sm:$0xff]
    %v294 = vld [vmem:[#allocation5 + $0x520] sm:$0xff]
    %v295 = vld [vmem:[#allocation5 + $0x528] sm:$0xff]
    %v296 = vld [vmem:[#allocation5 + $0x530] sm:$0xff]
    %v297 = vld [vmem:[#allocation5 + $0x538] sm:$0xff]
    %v298 = vld [vmem:[#allocation5 + $0x540] sm:$0xff]
    %v299 = vld [vmem:[#allocation5 + $0x548] sm:$0xff]
    %v300 = vld [vmem:[#allocation5 + $0x550] sm:$0xff]
    %v301 = vld [vmem:[#allocation5 + $0x558] sm:$0xff]
    %v302 = vld [vmem:[#allocation5 + $0x560] sm:$0xff]
    %v303 = vld [vmem:[#allocation5 + $0x568] sm:$0xff]
    %v304 = vld [vmem:[#allocation5 + $0x570] sm:$0xff]
    %v305 = vld [vmem:[#allocation5 + $0x578] sm:$0xff]
    %v306 = vld [vmem:[#allocation5 + $0x580] sm:$0xff]
    %v307 = vld [vmem:[#allocation5 + $0x588] sm:$0xff]
    %v308 = vld [vmem:[#allocation5 + $0x590] sm:$0xff]
    %v309 = vld [vmem:[#allocation5 + $0x598] sm:$0xff]
    %v310 = vld [vmem:[#allocation5 + $0x5a0] sm:$0xff]
    %v311 = vld [vmem:[#allocation5 + $0x5a8] sm:$0xff]
    %v312 = vld [vmem:[#allocation5 + $0x5b0] sm:$0xff]
    %v313 = vld [vmem:[#allocation5 + $0x5b8] sm:$0xff]
    %v314 = vld [vmem:[#allocation5 + $0x5c0] sm:$0xff]
    %v315 = vld [vmem:[#allocation5 + $0x5c8] sm:$0xff]
    %v316 = vld [vmem:[#allocation5 + $0x5d0] sm:$0xff]
    %v317 = vld [vmem:[#allocation5 + $0x5d8] sm:$0xff]
    %v318 = vld [vmem:[#allocation5 + $0x5e0] sm:$0xff]
    %v319 = vld [vmem:[#allocation5 + $0x5e8] sm:$0xff]
    %v320 = vld [vmem:[#allocation5 + $0x5f0] sm:$0xff]
    %v321 = vld [vmem:[#allocation5 + $0x5f8] sm:$0xff]
    %v322 = vld [vmem:[#allocation5 + $0x600] sm:$0xff]
    %v323 = vld [vmem:[#allocation5 + $0x608] sm:$0xff]
    %v324 = vld [vmem:[#allocation5 + $0x610] sm:$0xff]
    %v325 = vld [vmem:[#allocation5 + $0x618] sm:$0xff]
    %v326 = vld [vmem:[#allocation5 + $0x620] sm:$0xff]
    %v327 = vld [vmem:[#allocation5 + $0x628] sm:$0xff]
    %v328 = vld [vmem:[#allocation5 + $0x630] sm:$0xff]
    %v329 = vld [vmem:[#allocation5 + $0x638] sm:$0xff]
    %v330 = vld [vmem:[#allocation5 + $0x640] sm:$0xff]
    %v331 = vld [vmem:[#allocation5 + $0x648] sm:$0xff]
    %v332 = vld [vmem:[#allocation5 + $0x650] sm:$0xff]
    %v333 = vld [vmem:[#allocation5 + $0x658] sm:$0xff]
    %v334 = vld [vmem:[#allocation5 + $0x660] sm:$0xff]
    %v335 = vld [vmem:[#allocation5 + $0x668] sm:$0xff]
    %v336 = vld [vmem:[#allocation5 + $0x670] sm:$0xff]
    %v337 = vld [vmem:[#allocation5 + $0x678] sm:$0xff]
    %v338 = vld [vmem:[#allocation5 + $0x680] sm:$0xff]
    %v339 = vld [vmem:[#allocation5 + $0x688] sm:$0xff]
    %v340 = vld [vmem:[#allocation5 + $0x690] sm:$0xff]
    %v341 = vld [vmem:[#allocation5 + $0x698] sm:$0xff]
    %v342 = vld [vmem:[#allocation5 + $0x6a0] sm:$0xff]
    %v343 = vld [vmem:[#allocation5 + $0x6a8] sm:$0xff]
    %v344 = vld [vmem:[#allocation5 + $0x6b0] sm:$0xff]
    %v345 = vld [vmem:[#allocation5 + $0x6b8] sm:$0xff]
    %v346 = vld [vmem:[#allocation5 + $0x6c0] sm:$0xff]
    %v347 = vld [vmem:[#allocation5 + $0x6c8] sm:$0xff]
    %v348 = vld [vmem:[#allocation5 + $0x6d0] sm:$0xff]
    %v349 = vld [vmem:[#allocation5 + $0x6d8] sm:$0xff]
    %v350 = vld [vmem:[#allocation5 + $0x6e0] sm:$0xff]
    %v351 = vld [vmem:[#allocation5 + $0x6e8] sm:$0xff]
    %v352 = vld [vmem:[#allocation5 + $0x6f0] sm:$0xff]
    %v353 = vld [vmem:[#allocation5 + $0x6f8] sm:$0xff]
    %v354 = vld [vmem:[#allocation5 + $0x700] sm:$0xff]
    %v355 = vld [vmem:[#allocation5 + $0x708] sm:$0xff]
    %v356 = vld [vmem:[#allocation5 + $0x710] sm:$0xff]
    %v357 = vld [vmem:[#allocation5 + $0x718] sm:$0xff]
    %v358 = vld [vmem:[#allocation5 + $0x720] sm:$0xff]
    %v359 = vld [vmem:[#allocation5 + $0x728] sm:$0xff]
    %v360 = vld [vmem:[#allocation5 + $0x730] sm:$0xff]
    %v361 = vld [vmem:[#allocation5 + $0x738] sm:$0xff]
    %v362 = vld [vmem:[#allocation5 + $0x740] sm:$0xff]
    %v363 = vld [vmem:[#allocation5 + $0x748] sm:$0xff]
    %v364 = vld [vmem:[#allocation5 + $0x750] sm:$0xff]
    %v365 = vld [vmem:[#allocation5 + $0x758] sm:$0xff]
    %v366 = vld [vmem:[#allocation5 + $0x760] sm:$0xff]
    %v367 = vld [vmem:[#allocation5 + $0x768] sm:$0xff]
    %v368 = vld [vmem:[#allocation5 + $0x770] sm:$0xff]
    %v369 = vld [vmem:[#allocation5 + $0x778] sm:$0xff]
    %v370 = vld [vmem:[#allocation5 + $0x780] sm:$0xff]
    %v371 = vld [vmem:[#allocation5 + $0x788] sm:$0xff]
    %v372 = vld [vmem:[#allocation5 + $0x790] sm:$0xff]
    %v373 = vld [vmem:[#allocation5 + $0x798] sm:$0xff]
    %v374 = vld [vmem:[#allocation5 + $0x7a0] sm:$0xff]
    %v375 = vld [vmem:[#allocation5 + $0x7a8] sm:$0xff]
    %v376 = vld [vmem:[#allocation5 + $0x7b0] sm:$0xff]
    %v377 = vld [vmem:[#allocation5 + $0x7b8] sm:$0xff]
    %v378 = vld [vmem:[#allocation5 + $0x7c0] sm:$0xff]
    %v379 = vld [vmem:[#allocation5 + $0x7c8] sm:$0xff]
    %v380 = vld [vmem:[#allocation5 + $0x7d0] sm:$0xff]
    %v381 = vld [vmem:[#allocation5 + $0x7d8] sm:$0xff]
    %v382 = vld [vmem:[#allocation5 + $0x7e0] sm:$0xff]
    %v383 = vld [vmem:[#allocation5 + $0x7e8] sm:$0xff]
    %v384 = vld [vmem:[#allocation5 + $0x7f0] sm:$0xff]
    %v385 = vld [vmem:[#allocation5 + $0x7f8] sm:$0xff]
    %v386 = vld [vmem:[#allocation5 + $0x800] sm:$0xff]
    %v387 = vld [vmem:[#allocation5 + $0x808] sm:$0xff]
    %v388 = vld [vmem:[#allocation5 + $0x810] sm:$0xff]
    %v389 = vld [vmem:[#allocation5 + $0x818] sm:$0xff]
    %v390 = vld [vmem:[#allocation5 + $0x820] sm:$0xff]
    %v391 = vld [vmem:[#allocation5 + $0x828] sm:$0xff]
    %v392 = vld [vmem:[#allocation5 + $0x830] sm:$0xff]
    %v393 = vld [vmem:[#allocation5 + $0x838] sm:$0xff]
    %v394 = vld [vmem:[#allocation5 + $0x840] sm:$0xff]
    %v395 = vld [vmem:[#allocation5 + $0x848] sm:$0xff]
    %v396 = vld [vmem:[#allocation5 + $0x850] sm:$0xff]
    %v397 = vld [vmem:[#allocation5 + $0x858] sm:$0xff]
    %v398 = vld [vmem:[#allocation5 + $0x860] sm:$0xff]
    %v399 = vld [vmem:[#allocation5 + $0x868] sm:$0xff]
    %v400 = vld [vmem:[#allocation5 + $0x870] sm:$0xff]
    %v401 = vld [vmem:[#allocation5 + $0x878] sm:$0xff]
    %v402 = vld [vmem:[#allocation5 + $0x880] sm:$0xff]
    %v403 = vld [vmem:[#allocation5 + $0x888] sm:$0xff]
    %v404 = vld [vmem:[#allocation5 + $0x890] sm:$0xff]
    %v405 = vld [vmem:[#allocation5 + $0x898] sm:$0xff]
    %v406 = vld [vmem:[#allocation5 + $0x8a0] sm:$0xff]
    %v407 = vld [vmem:[#allocation5 + $0x8a8] sm:$0xff]
    %v408 = vld [vmem:[#allocation5 + $0x8b0] sm:$0xff]
    %v409 = vld [vmem:[#allocation5 + $0x8b8] sm:$0xff]
    %v410 = vld [vmem:[#allocation5 + $0x8c0] sm:$0xff]
    %v411 = vld [vmem:[#allocation5 + $0x8c8] sm:$0xff]
    %v412 = vld [vmem:[#allocation5 + $0x8d0] sm:$0xff]
    %v413 = vld [vmem:[#allocation5 + $0x8d8] sm:$0xff]
    %v414 = vld [vmem:[#allocation5 + $0x8e0] sm:$0xff]
    %v415 = vld [vmem:[#allocation5 + $0x8e8] sm:$0xff]
    %v416 = vld [vmem:[#allocation5 + $0x8f0] sm:$0xff]
    %v417 = vld [vmem:[#allocation5 + $0x8f8] sm:$0xff]
    %v418 = vld [vmem:[#allocation5 + $0x900] sm:$0xff]
    %v419 = vld [vmem:[#allocation5 + $0x908] sm:$0xff]
    %v420 = vld [vmem:[#allocation5 + $0x910] sm:$0xff]
    %v421 = vld [vmem:[#allocation5 + $0x918] sm:$0xff]
    %v422 = vld [vmem:[#allocation5 + $0x920] sm:$0xff]
    %v423 = vld [vmem:[#allocation5 + $0x928] sm:$0xff]
    %v424 = vld [vmem:[#allocation5 + $0x930] sm:$0xff]
    %v425 = vld [vmem:[#allocation5 + $0x938] sm:$0xff]
    %v426 = vld [vmem:[#allocation5 + $0x940] sm:$0xff]
    %v427 = vld [vmem:[#allocation5 + $0x948] sm:$0xff]
    %v428 = vld [vmem:[#allocation5 + $0x950] sm:$0xff]
    %v429 = vld [vmem:[#allocation5 + $0x958] sm:$0xff]
    %v430 = vld [vmem:[#allocation5 + $0x960] sm:$0xff]
    %v431 = vld [vmem:[#allocation5 + $0x968] sm:$0xff]
    %v432 = vld [vmem:[#allocation5 + $0x970] sm:$0xff]
    %v433 = vld [vmem:[#allocation5 + $0x978] sm:$0xff]
    %v434 = vld [vmem:[#allocation5 + $0x980] sm:$0xff]
    %v435 = vld [vmem:[#allocation5 + $0x988] sm:$0xff]
    %v436 = vld [vmem:[#allocation5 + $0x990] sm:$0xff]
    %v437 = vld [vmem:[#allocation5 + $0x998] sm:$0xff]
    %v438 = vld [vmem:[#allocation5 + $0x9a0] sm:$0xff]
    %v439 = vld [vmem:[#allocation5 + $0x9a8] sm:$0xff]
    %v440 = vld [vmem:[#allocation5 + $0x9b0] sm:$0xff]
    %v441 = vld [vmem:[#allocation5 + $0x9b8] sm:$0xff]
    %v442 = vld [vmem:[#allocation5 + $0x9c0] sm:$0xff]
    %v443 = vld [vmem:[#allocation5 + $0x9c8] sm:$0xff]
    %v444 = vld [vmem:[#allocation5 + $0x9d0] sm:$0xff]
    %v445 = vld [vmem:[#allocation5 + $0x9d8] sm:$0xff]
    %v446 = vld [vmem:[#allocation5 + $0x9e0] sm:$0xff]
    %v447 = vld [vmem:[#allocation5 + $0x9e8] sm:$0xff]
    %v448 = vld [vmem:[#allocation5 + $0x9f0] sm:$0xff]
    %v449 = vld [vmem:[#allocation5 + $0x9f8] sm:$0xff]
    %v450 = vld [vmem:[#allocation5 + $0xa00] sm:$0xff]
    %v451 = vld [vmem:[#allocation5 + $0xa08] sm:$0xff]
    %v452 = vld [vmem:[#allocation5 + $0xa10] sm:$0xff]
    %v453 = vld [vmem:[#allocation5 + $0xa18] sm:$0xff]
    %v454 = vld [vmem:[#allocation5 + $0xa20] sm:$0xff]
    %v455 = vld [vmem:[#allocation5 + $0xa28] sm:$0xff]
    %v456 = vld [vmem:[#allocation5 + $0xa30] sm:$0xff]
    %v457 = vld [vmem:[#allocation5 + $0xa38] sm:$0xff]
    %v458 = vld [vmem:[#allocation5 + $0xa40] sm:$0xff]
    %v459 = vld [vmem:[#allocation5 + $0xa48] sm:$0xff]
    %v460 = vld [vmem:[#allocation5 + $0xa50] sm:$0xff]
    %v461 = vld [vmem:[#allocation5 + $0xa58] sm:$0xff]
    %v462 = vld [vmem:[#allocation5 + $0xa60] sm:$0xff]
    %v463 = vld [vmem:[#allocation5 + $0xa68] sm:$0xff]
    %v464 = vld [vmem:[#allocation5 + $0xa70] sm:$0xff]
    %v465 = vld [vmem:[#allocation5 + $0xa78] sm:$0xff]
    %v466 = vld [vmem:[#allocation5 + $0xa80] sm:$0xff]
    %v467 = vld [vmem:[#allocation5 + $0xa88] sm:$0xff]
    %v468 = vld [vmem:[#allocation5 + $0xa90] sm:$0xff]
    %v469 = vld [vmem:[#allocation5 + $0xa98] sm:$0xff]
    %v470 = vld [vmem:[#allocation5 + $0xaa0] sm:$0xff]
    %v471 = vld [vmem:[#allocation5 + $0xaa8] sm:$0xff]
    %v472 = vld [vmem:[#allocation5 + $0xab0] sm:$0xff]
    %v473 = vld [vmem:[#allocation5 + $0xab8] sm:$0xff]
    %v474 = vld [vmem:[#allocation5 + $0xac0] sm:$0xff]
    %v475 = vld [vmem:[#allocation5 + $0xac8] sm:$0xff]
    %v476 = vld [vmem:[#allocation5 + $0xad0] sm:$0xff]
    %v477 = vld [vmem:[#allocation5 + $0xad8] sm:$0xff]
    %v478 = vld [vmem:[#allocation5 + $0xae0] sm:$0xff]
    %v479 = vld [vmem:[#allocation5 + $0xae8] sm:$0xff]
    %v480 = vld [vmem:[#allocation5 + $0xaf0] sm:$0xff]
    %v481 = vld [vmem:[#allocation5 + $0xaf8] sm:$0xff]
    %v482 = vld [vmem:[#allocation5 + $0xb00] sm:$0xff]
    %v483 = vld [vmem:[#allocation5 + $0xb08] sm:$0xff]
    %v484 = vld [vmem:[#allocation5 + $0xb10] sm:$0xff]
    %v485 = vld [vmem:[#allocation5 + $0xb18] sm:$0xff]
    %v486 = vld [vmem:[#allocation5 + $0xb20] sm:$0xff]
    %v487 = vld [vmem:[#allocation5 + $0xb28] sm:$0xff]
    %v488 = vld [vmem:[#allocation5 + $0xb30] sm:$0xff]
    %v489 = vld [vmem:[#allocation5 + $0xb38] sm:$0xff]
    %v490 = vld [vmem:[#allocation5 + $0xb40] sm:$0xff]
    %v491 = vld [vmem:[#allocation5 + $0xb48] sm:$0xff]
    %v492 = vld [vmem:[#allocation5 + $0xb50] sm:$0xff]
    %v493 = vld [vmem:[#allocation5 + $0xb58] sm:$0xff]
    %v494 = vld [vmem:[#allocation5 + $0xb60] sm:$0xff]
    %v495 = vld [vmem:[#allocation5 + $0xb68] sm:$0xff]
    %v496 = vld [vmem:[#allocation5 + $0xb70] sm:$0xff]
    %v497 = vld [vmem:[#allocation5 + $0xb78] sm:$0xff]
    %v498 = vld [vmem:[#allocation5 + $0xb80] sm:$0xff]
    %v499 = vld [vmem:[#allocation5 + $0xb88] sm:$0xff]
    %v500 = vld [vmem:[#allocation5 + $0xb90] sm:$0xff]
    %v501 = vld [vmem:[#allocation5 + $0xb98] sm:$0xff]
    %v502 = vld [vmem:[#allocation5 + $0xba0] sm:$0xff]
    %v503 = vld [vmem:[#allocation5 + $0xba8] sm:$0xff]
    %v504 = vld [vmem:[#allocation5 + $0xbb0] sm:$0xff]
    %v505 = vld [vmem:[#allocation5 + $0xbb8] sm:$0xff]
    %v506 = vld [vmem:[#allocation5 + $0xbc0] sm:$0xff]
    %v507 = vld [vmem:[#allocation5 + $0xbc8] sm:$0xff]
    %v508 = vld [vmem:[#allocation5 + $0xbd0] sm:$0xff]
    %v509 = vld [vmem:[#allocation5 + $0xbd8] sm:$0xff]
    %v510 = vld [vmem:[#allocation5 + $0xbe0] sm:$0xff]
    %v511 = vld [vmem:[#allocation5 + $0xbe8] sm:$0xff]
    %v512 = vld [vmem:[#allocation5 + $0xbf0] sm:$0xff]
    %v513 = vld [vmem:[#allocation5 + $0xbf8] sm:$0xff]
    %v514 = vld [vmem:[#allocation5 + $0xc00] sm:$0xff]
    %v515 = vld [vmem:[#allocation5 + $0xc08] sm:$0xff]
    %v516 = vld [vmem:[#allocation5 + $0xc10] sm:$0xff]
    %v517 = vld [vmem:[#allocation5 + $0xc18] sm:$0xff]
    %v518 = vld [vmem:[#allocation5 + $0xc20] sm:$0xff]
    %v519 = vld [vmem:[#allocation5 + $0xc28] sm:$0xff]
    %v520 = vld [vmem:[#allocation5 + $0xc30] sm:$0xff]
    %v521 = vld [vmem:[#allocation5 + $0xc38] sm:$0xff]
    %v522 = vld [vmem:[#allocation5 + $0xc40] sm:$0xff]
    %v523 = vld [vmem:[#allocation5 + $0xc48] sm:$0xff]
    %v524 = vld [vmem:[#allocation5 + $0xc50] sm:$0xff]
    %v525 = vld [vmem:[#allocation5 + $0xc58] sm:$0xff]
    %v526 = vld [vmem:[#allocation5 + $0xc60] sm:$0xff]
    %v527 = vld [vmem:[#allocation5 + $0xc68] sm:$0xff]
    %v528 = vld [vmem:[#allocation5 + $0xc70] sm:$0xff]
    %v529 = vld [vmem:[#allocation5 + $0xc78] sm:$0xff]
    %v530 = vld [vmem:[#allocation5 + $0xc80] sm:$0xff]
    %v531 = vld [vmem:[#allocation5 + $0xc88] sm:$0xff]
    %v532 = vld [vmem:[#allocation5 + $0xc90] sm:$0xff]
    %v533 = vld [vmem:[#allocation5 + $0xc98] sm:$0xff]
    %v534 = vld [vmem:[#allocation5 + $0xca0] sm:$0xff]
    %v535 = vld [vmem:[#allocation5 + $0xca8] sm:$0xff]
    %v536 = vld [vmem:[#allocation5 + $0xcb0] sm:$0xff]
    %v537 = vld [vmem:[#allocation5 + $0xcb8] sm:$0xff]
    %v538 = vld [vmem:[#allocation5 + $0xcc0] sm:$0xff]
    %v539 = vld [vmem:[#allocation5 + $0xcc8] sm:$0xff]
    %v540 = vld [vmem:[#allocation5 + $0xcd0] sm:$0xff]
    %v541 = vld [vmem:[#allocation5 + $0xcd8] sm:$0xff]
    %v542 = vld [vmem:[#allocation5 + $0xce0] sm:$0xff]
    %v543 = vld [vmem:[#allocation5 + $0xce8] sm:$0xff]
    %v544 = vld [vmem:[#allocation5 + $0xcf0] sm:$0xff]
    %v545 = vld [vmem:[#allocation5 + $0xcf8] sm:$0xff]
    %v546 = vld [vmem:[#allocation5 + $0xd00] sm:$0xff]
    %v547 = vld [vmem:[#allocation5 + $0xd08] sm:$0xff]
    %v548 = vld [vmem:[#allocation5 + $0xd10] sm:$0xff]
    %v549 = vld [vmem:[#allocation5 + $0xd18] sm:$0xff]
    %v550 = vld [vmem:[#allocation5 + $0xd20] sm:$0xff]
    %v551 = vld [vmem:[#allocation5 + $0xd28] sm:$0xff]
    %v552 = vld [vmem:[#allocation5 + $0xd30] sm:$0xff]
    %v553 = vld [vmem:[#allocation5 + $0xd38] sm:$0xff]
    %v554 = vld [vmem:[#allocation5 + $0xd40] sm:$0xff]
    %v555 = vld [vmem:[#allocation5 + $0xd48] sm:$0xff]
    %v556 = vld [vmem:[#allocation5 + $0xd50] sm:$0xff]
    %v557 = vld [vmem:[#allocation5 + $0xd58] sm:$0xff]
    %v558 = vld [vmem:[#allocation5 + $0xd60] sm:$0xff]
    %v559 = vld [vmem:[#allocation5 + $0xd68] sm:$0xff]
    %v560 = vld [vmem:[#allocation5 + $0xd70] sm:$0xff]
    %v561 = vld [vmem:[#allocation5 + $0xd78] sm:$0xff]
    %v562 = vld [vmem:[#allocation5 + $0xd80] sm:$0xff]
    %v563 = vld [vmem:[#allocation5 + $0xd88] sm:$0xff]
    %v564 = vld [vmem:[#allocation5 + $0xd90] sm:$0xff]
    %v565 = vld [vmem:[#allocation5 + $0xd98] sm:$0xff]
    %v566 = vld [vmem:[#allocation5 + $0xda0] sm:$0xff]
    %v567 = vld [vmem:[#allocation5 + $0xda8] sm:$0xff]
    %v568 = vld [vmem:[#allocation5 + $0xdb0] sm:$0xff]
    %v569 = vld [vmem:[#allocation5 + $0xdb8] sm:$0xff]
    %v570 = vld [vmem:[#allocation5 + $0xdc0] sm:$0xff]
    %v571 = vld [vmem:[#allocation5 + $0xdc8] sm:$0xff]
    %v572 = vld [vmem:[#allocation5 + $0xdd0] sm:$0xff]
    %v573 = vld [vmem:[#allocation5 + $0xdd8] sm:$0xff]
    %v574 = vld [vmem:[#allocation5 + $0xde0] sm:$0xff]
    %v575 = vld [vmem:[#allocation5 + $0xde8] sm:$0xff]
    %v576 = vld [vmem:[#allocation5 + $0xdf0] sm:$0xff]
    %v577 = vld [vmem:[#allocation5 + $0xdf8] sm:$0xff]
    %v578 = vld [vmem:[#allocation5 + $0xe00] sm:$0xff]
    %v579 = vld [vmem:[#allocation5 + $0xe08] sm:$0xff]
    %v580 = vld [vmem:[#allocation5 + $0xe10] sm:$0xff]
    %v581 = vld [vmem:[#allocation5 + $0xe18] sm:$0xff]
    %v582 = vld [vmem:[#allocation5 + $0xe20] sm:$0xff]
    %v583 = vld [vmem:[#allocation5 + $0xe28] sm:$0xff]
    %v584 = vld [vmem:[#allocation5 + $0xe30] sm:$0xff]
    %v585 = vld [vmem:[#allocation5 + $0xe38] sm:$0xff]
    %v586 = vld [vmem:[#allocation5 + $0xe40] sm:$0xff]
    %v587 = vld [vmem:[#allocation5 + $0xe48] sm:$0xff]
    %v588 = vld [vmem:[#allocation5 + $0xe50] sm:$0xff]
    %v589 = vld [vmem:[#allocation5 + $0xe58] sm:$0xff]
    %v590 = vld [vmem:[#allocation5 + $0xe60] sm:$0xff]
    %v591 = vld [vmem:[#allocation5 + $0xe68] sm:$0xff]
    %v592 = vld [vmem:[#allocation5 + $0xe70] sm:$0xff]
    %v593 = vld [vmem:[#allocation5 + $0xe78] sm:$0xff]
    %v594 = vld [vmem:[#allocation5 + $0xe80] sm:$0xff]
    %v595 = vld [vmem:[#allocation5 + $0xe88] sm:$0xff]
    %v596 = vld [vmem:[#allocation5 + $0xe90] sm:$0xff]
    %v597 = vld [vmem:[#allocation5 + $0xe98] sm:$0xff]
    %v598 = vld [vmem:[#allocation5 + $0xea0] sm:$0xff]
    %v599 = vld [vmem:[#allocation5 + $0xea8] sm:$0xff]
    %v600 = vld [vmem:[#allocation5 + $0xeb0] sm:$0xff]
    %v601 = vld [vmem:[#allocation5 + $0xeb8] sm:$0xff]
    %v602 = vld [vmem:[#allocation5 + $0xec0] sm:$0xff]
    %v603 = vld [vmem:[#allocation5 + $0xec8] sm:$0xff]
    %v604 = vld [vmem:[#allocation5 + $0xed0] sm:$0xff]
    %v605 = vld [vmem:[#allocation5 + $0xed8] sm:$0xff]
    %v606 = vld [vmem:[#allocation5 + $0xee0] sm:$0xff]
    %v607 = vld [vmem:[#allocation5 + $0xee8] sm:$0xff]
    %v608 = vld [vmem:[#allocation5 + $0xef0] sm:$0xff]
    %v609 = vld [vmem:[#allocation5 + $0xef8] sm:$0xff]
    %v610 = vld [vmem:[#allocation5 + $0xf00] sm:$0xff]
    %v611 = vld [vmem:[#allocation5 + $0xf08] sm:$0xff]
    %v612 = vld [vmem:[#allocation5 + $0xf10] sm:$0xff]
    %v613 = vld [vmem:[#allocation5 + $0xf18] sm:$0xff]
    %v614 = vld [vmem:[#allocation5 + $0xf20] sm:$0xff]
    %v615 = vld [vmem:[#allocation5 + $0xf28] sm:$0xff]
    %v616 = vld [vmem:[#allocation5 + $0xf30] sm:$0xff]
    %v617 = vld [vmem:[#allocation5 + $0xf38] sm:$0xff]
    %v618 = vld [vmem:[#allocation5 + $0xf40] sm:$0xff]
    %v619 = vld [vmem:[#allocation5 + $0xf48] sm:$0xff]
    %v620 = vld [vmem:[#allocation5 + $0xf50] sm:$0xff]
    %v621 = vld [vmem:[#allocation5 + $0xf58] sm:$0xff]
    %v622 = vld [vmem:[#allocation5 + $0xf60] sm:$0xff]
    %v623 = vld [vmem:[#allocation5 + $0xf68] sm:$0xff]
    %v624 = vld [vmem:[#allocation5 + $0xf70] sm:$0xff]
    %v625 = vld [vmem:[#allocation5 + $0xf78] sm:$0xff]
    %v626 = vld [vmem:[#allocation5 + $0xf80] sm:$0xff]
    %v627 = vld [vmem:[#allocation5 + $0xf88] sm:$0xff]
    %v628 = vld [vmem:[#allocation5 + $0xf90] sm:$0xff]
    %v629 = vld [vmem:[#allocation5 + $0xf98] sm:$0xff]
    %v630 = vld [vmem:[#allocation5 + $0xfa0] sm:$0xff]
    %v631 = vld [vmem:[#allocation5 + $0xfa8] sm:$0xff]
    %v632 = vld [vmem:[#allocation5 + $0xfb0] sm:$0xff]
    %v633 = vld [vmem:[#allocation5 + $0xfb8] sm:$0xff]
    %v634 = vld [vmem:[#allocation5 + $0xfc0] sm:$0xff]
    %v635 = vld [vmem:[#allocation5 + $0xfc8] sm:$0xff]
    %v636 = vld [vmem:[#allocation5 + $0xfd0] sm:$0xff]
    %v637 = vld [vmem:[#allocation5 + $0xfd8] sm:$0xff]
    %v638 = vld [vmem:[#allocation5 + $0xfe0] sm:$0xff]
    %v639 = vld [vmem:[#allocation5 + $0xfe8] sm:$0xff]
    %v640 = vld [vmem:[#allocation5 + $0xff0] sm:$0xff]
    %v641 = vld [vmem:[#allocation5 + $0xff8] sm:$0xff]
    %v642 = vld [vmem:[#allocation5 + $0x1000] sm:$0xff]
    %v643 = vld [vmem:[#allocation5 + $0x1008] sm:$0xff]
    %v644 = vld [vmem:[#allocation5 + $0x1010] sm:$0xff]
    %v645 = vld [vmem:[#allocation5 + $0x1018] sm:$0xff]
    %v646 = vld [vmem:[#allocation5 + $0x1020] sm:$0xff]
    %v647 = vld [vmem:[#allocation5 + $0x1028] sm:$0xff]
    %v648 = vld [vmem:[#allocation5 + $0x1030] sm:$0xff]
    %v649 = vld [vmem:[#allocation5 + $0x1038] sm:$0xff]
    %v650 = vld [vmem:[#allocation5 + $0x1040] sm:$0xff]
    %v651 = vld [vmem:[#allocation5 + $0x1048] sm:$0xff]
    %v652 = vld [vmem:[#allocation5 + $0x1050] sm:$0xff]
    %v653 = vld [vmem:[#allocation5 + $0x1058] sm:$0xff]
    %v654 = vld [vmem:[#allocation5 + $0x1060] sm:$0xff]
    %v655 = vld [vmem:[#allocation5 + $0x1068] sm:$0xff]
    %v656 = vld [vmem:[#allocation5 + $0x1070] sm:$0xff]
    %v657 = vld [vmem:[#allocation5 + $0x1078] sm:$0xff]
    %v658 = vld [vmem:[#allocation5 + $0x1080] sm:$0xff]
    %v659 = vld [vmem:[#allocation5 + $0x1088] sm:$0xff]
    %v660 = vld [vmem:[#allocation5 + $0x1090] sm:$0xff]
    %v661 = vld [vmem:[#allocation5 + $0x1098] sm:$0xff]
    %v662 = vld [vmem:[#allocation5 + $0x10a0] sm:$0xff]
    %v663 = vld [vmem:[#allocation5 + $0x10a8] sm:$0xff]
    %v664 = vld [vmem:[#allocation5 + $0x10b0] sm:$0xff]
    %v665 = vld [vmem:[#allocation5 + $0x10b8] sm:$0xff]
    %v666 = vld [vmem:[#allocation5 + $0x10c0] sm:$0xff]
    %v667 = vld [vmem:[#allocation5 + $0x10c8] sm:$0xff]
    %v668 = vld [vmem:[#allocation5 + $0x10d0] sm:$0xff]
    %v669 = vld [vmem:[#allocation5 + $0x10d8] sm:$0xff]
    %v670 = vld [vmem:[#allocation5 + $0x10e0] sm:$0xff]
    %v671 = vld [vmem:[#allocation5 + $0x10e8] sm:$0xff]
    %v672 = vld [vmem:[#allocation5 + $0x10f0] sm:$0xff]
    %v673 = vld [vmem:[#allocation5 + $0x10f8] sm:$0xff]
    %v674 = vld [vmem:[#allocation5 + $0x1100] sm:$0xff]
    %v675 = vld [vmem:[#allocation5 + $0x1108] sm:$0xff]
    %v676 = vld [vmem:[#allocation5 + $0x1110] sm:$0xff]
    %v677 = vld [vmem:[#allocation5 + $0x1118] sm:$0xff]
    %v678 = vld [vmem:[#allocation5 + $0x1120] sm:$0xff]
    %v679 = vld [vmem:[#allocation5 + $0x1128] sm:$0xff]
    %v680 = vld [vmem:[#allocation5 + $0x1130] sm:$0xff]
    %v681 = vld [vmem:[#allocation5 + $0x1138] sm:$0xff]
    %v682 = vld [vmem:[#allocation5 + $0x1140] sm:$0xff]
    %v683 = vld [vmem:[#allocation5 + $0x1148] sm:$0xff]
    %v684 = vld [vmem:[#allocation5 + $0x1150] sm:$0xff]
    %v685 = vld [vmem:[#allocation5 + $0x1158] sm:$0xff]
    %v686 = vld [vmem:[#allocation5 + $0x1160] sm:$0xff]
    %v687 = vld [vmem:[#allocation5 + $0x1168] sm:$0xff]
    %v688 = vld [vmem:[#allocation5 + $0x1170] sm:$0xff]
    %v689 = vld [vmem:[#allocation5 + $0x1178] sm:$0xff]
    %v690 = vld [vmem:[#allocation5 + $0x1180] sm:$0xff]
    %v691 = vld [vmem:[#allocation5 + $0x1188] sm:$0xff]
    %v692 = vld [vmem:[#allocation5 + $0x1190] sm:$0xff]
    %v693 = vld [vmem:[#allocation5 + $0x1198] sm:$0xff]
    %v694 = vld [vmem:[#allocation5 + $0x11a0] sm:$0xff]
    %v695 = vld [vmem:[#allocation5 + $0x11a8] sm:$0xff]
    %v696 = vld [vmem:[#allocation5 + $0x11b0] sm:$0xff]
    %v697 = vld [vmem:[#allocation5 + $0x11b8] sm:$0xff]
    %v698 = vld [vmem:[#allocation5 + $0x11c0] sm:$0xff]
    %v699 = vld [vmem:[#allocation5 + $0x11c8] sm:$0xff]
    %v700 = vld [vmem:[#allocation5 + $0x11d0] sm:$0xff]
    %v701 = vld [vmem:[#allocation5 + $0x11d8] sm:$0xff]
    %v702 = vld [vmem:[#allocation5 + $0x11e0] sm:$0xff]
    %v703 = vld [vmem:[#allocation5 + $0x11e8] sm:$0xff]
    %v704 = vld [vmem:[#allocation5 + $0x11f0] sm:$0xff]
    %v705 = vld [vmem:[#allocation5 + $0x11f8] sm:$0xff]
    %v706 = vld [vmem:[#allocation5 + $0x1200] sm:$0xff]
    %v707 = vld [vmem:[#allocation5 + $0x1208] sm:$0xff]
    %v708 = vld [vmem:[#allocation5 + $0x1210] sm:$0xff]
    %v709 = vld [vmem:[#allocation5 + $0x1218] sm:$0xff]
    %v710 = vld [vmem:[#allocation5 + $0x1220] sm:$0xff]
    %v711 = vld [vmem:[#allocation5 + $0x1228] sm:$0xff]
    %v712 = vld [vmem:[#allocation5 + $0x1230] sm:$0xff]
    %v713 = vld [vmem:[#allocation5 + $0x1238] sm:$0xff]
    %v714 = vld [vmem:[#allocation5 + $0x1240] sm:$0xff]
    %v715 = vld [vmem:[#allocation5 + $0x1248] sm:$0xff]
    %v716 = vld [vmem:[#allocation5 + $0x1250] sm:$0xff]
    %v717 = vld [vmem:[#allocation5 + $0x1258] sm:$0xff]
    %v718 = vld [vmem:[#allocation5 + $0x1260] sm:$0xff]
    %v719 = vld [vmem:[#allocation5 + $0x1268] sm:$0xff]
    %v720 = vld [vmem:[#allocation5 + $0x1270] sm:$0xff]
    %v721 = vld [vmem:[#allocation5 + $0x1278] sm:$0xff]
    %v722 = vld [vmem:[#allocation5 + $0x1280] sm:$0xff]
    %v723 = vld [vmem:[#allocation5 + $0x1288] sm:$0xff]
    %v724 = vld [vmem:[#allocation5 + $0x1290] sm:$0xff]
    %v725 = vld [vmem:[#allocation5 + $0x1298] sm:$0xff]
    %v726 = vld [vmem:[#allocation5 + $0x12a0] sm:$0xff]
    %v727 = vld [vmem:[#allocation5 + $0x12a8] sm:$0xff]
    %v728 = vld [vmem:[#allocation5 + $0x12b0] sm:$0xff]
    %v729 = vld [vmem:[#allocation5 + $0x12b8] sm:$0xff]
    %v730 = vld [vmem:[#allocation5 + $0x12c0] sm:$0xff]
    %v731 = vld [vmem:[#allocation5 + $0x12c8] sm:$0xff]
    %v732 = vld [vmem:[#allocation5 + $0x12d0] sm:$0xff]
    %v733 = vld [vmem:[#allocation5 + $0x12d8] sm:$0xff]
    %v734 = vld [vmem:[#allocation5 + $0x12e0] sm:$0xff]
    %v735 = vld [vmem:[#allocation5 + $0x12e8] sm:$0xff]
    %v736 = vld [vmem:[#allocation5 + $0x12f0] sm:$0xff]
    %v737 = vld [vmem:[#allocation5 + $0x12f8] sm:$0xff]
    %v738 = vld [vmem:[#allocation5 + $0x1300] sm:$0xff]
    %v739 = vld [vmem:[#allocation5 + $0x1308] sm:$0xff]
    %v740 = vld [vmem:[#allocation5 + $0x1310] sm:$0xff]
    %v741 = vld [vmem:[#allocation5 + $0x1318] sm:$0xff]
    %v742 = vld [vmem:[#allocation5 + $0x1320] sm:$0xff]
    %v743 = vld [vmem:[#allocation5 + $0x1328] sm:$0xff]
    %v744 = vld [vmem:[#allocation5 + $0x1330] sm:$0xff]
    %v745 = vld [vmem:[#allocation5 + $0x1338] sm:$0xff]
    %v746 = vld [vmem:[#allocation5 + $0x1340] sm:$0xff]
    %v747 = vld [vmem:[#allocation5 + $0x1348] sm:$0xff]
    %v748 = vld [vmem:[#allocation5 + $0x1350] sm:$0xff]
    %v749 = vld [vmem:[#allocation5 + $0x1358] sm:$0xff]
    %v750 = vld [vmem:[#allocation5 + $0x1360] sm:$0xff]
    %v751 = vld [vmem:[#allocation5 + $0x1368] sm:$0xff]
    %v752 = vld [vmem:[#allocation5 + $0x1370] sm:$0xff]
    %v753 = vld [vmem:[#allocation5 + $0x1378] sm:$0xff]
    %v754 = vld [vmem:[#allocation5 + $0x1380] sm:$0xff]
    %v755 = vld [vmem:[#allocation5 + $0x1388] sm:$0xff]
    %v756 = vld [vmem:[#allocation5 + $0x1390] sm:$0xff]
    %v757 = vld [vmem:[#allocation5 + $0x1398] sm:$0xff]
    %v758 = vld [vmem:[#allocation5 + $0x13a0] sm:$0xff]
    %v759 = vld [vmem:[#allocation5 + $0x13a8] sm:$0xff]
    %v760 = vld [vmem:[#allocation5 + $0x13b0] sm:$0xff]
    %v761 = vld [vmem:[#allocation5 + $0x13b8] sm:$0xff]
    %v762 = vld [vmem:[#allocation5 + $0x13c0] sm:$0xff]
    %v763 = vld [vmem:[#allocation5 + $0x13c8] sm:$0xff]
    %v764 = vld [vmem:[#allocation5 + $0x13d0] sm:$0xff]
    %v765 = vld [vmem:[#allocation5 + $0x13d8] sm:$0xff]
    %v766 = vld [vmem:[#allocation5 + $0x13e0] sm:$0xff]
    %v767 = vld [vmem:[#allocation5 + $0x13e8] sm:$0xff]
    %v768 = vld [vmem:[#allocation5 + $0x13f0] sm:$0xff]
    %v769 = vld [vmem:[#allocation5 + $0x13f8] sm:$0xff]
    %v770 = vld [vmem:[#allocation5 + $0x1400] sm:$0xff]
    %v771 = vld [vmem:[#allocation5 + $0x1408] sm:$0xff]
    %v772 = vld [vmem:[#allocation5 + $0x1410] sm:$0xff]
    %v773 = vld [vmem:[#allocation5 + $0x1418] sm:$0xff]
    %v774 = vld [vmem:[#allocation5 + $0x1420] sm:$0xff]
    %v775 = vld [vmem:[#allocation5 + $0x1428] sm:$0xff]
    %v776 = vld [vmem:[#allocation5 + $0x1430] sm:$0xff]
    %v777 = vld [vmem:[#allocation5 + $0x1438] sm:$0xff]
    %v778 = vld [vmem:[#allocation5 + $0x1440] sm:$0xff]
    %v779 = vld [vmem:[#allocation5 + $0x1448] sm:$0xff]
    %v780 = vld [vmem:[#allocation5 + $0x1450] sm:$0xff]
    %v781 = vld [vmem:[#allocation5 + $0x1458] sm:$0xff]
    %v782 = vld [vmem:[#allocation5 + $0x1460] sm:$0xff]
    %v783 = vld [vmem:[#allocation5 + $0x1468] sm:$0xff]
    %v784 = vld [vmem:[#allocation5 + $0x1470] sm:$0xff]
    %v785 = vld [vmem:[#allocation5 + $0x1478] sm:$0xff]
    %v786 = vld [vmem:[#allocation5 + $0x1480] sm:$0xff]
    %v787 = vld [vmem:[#allocation5 + $0x1488] sm:$0xff]
    %v788 = vld [vmem:[#allocation5 + $0x1490] sm:$0xff]
    %v789 = vld [vmem:[#allocation5 + $0x1498] sm:$0xff]
    %v790 = vld [vmem:[#allocation5 + $0x14a0] sm:$0xff]
    %v791 = vld [vmem:[#allocation5 + $0x14a8] sm:$0xff]
    %v792 = vld [vmem:[#allocation5 + $0x14b0] sm:$0xff]
    %v793 = vld [vmem:[#allocation5 + $0x14b8] sm:$0xff]
    %v794 = vld [vmem:[#allocation5 + $0x14c0] sm:$0xff]
    %v795 = vld [vmem:[#allocation5 + $0x14c8] sm:$0xff]
    %v796 = vld [vmem:[#allocation5 + $0x14d0] sm:$0xff]
    %v797 = vld [vmem:[#allocation5 + $0x14d8] sm:$0xff]
    %v798 = vld [vmem:[#allocation5 + $0x14e0] sm:$0xff]
    %v799 = vld [vmem:[#allocation5 + $0x14e8] sm:$0xff]
    %v800 = vld [vmem:[#allocation5 + $0x14f0] sm:$0xff]
    %v801 = vld [vmem:[#allocation5 + $0x14f8] sm:$0xff]
    %v802 = vld [vmem:[#allocation5 + $0x1500] sm:$0xff]
    %v803 = vld [vmem:[#allocation5 + $0x1508] sm:$0xff]
    %v804 = vld [vmem:[#allocation5 + $0x1510] sm:$0xff]
    %v805 = vld [vmem:[#allocation5 + $0x1518] sm:$0xff]
    %v806 = vld [vmem:[#allocation5 + $0x1520] sm:$0xff]
    %v807 = vld [vmem:[#allocation5 + $0x1528] sm:$0xff]
    %v808 = vld [vmem:[#allocation5 + $0x1530] sm:$0xff]
    %v809 = vld [vmem:[#allocation5 + $0x1538] sm:$0xff]
    %v810 = vld [vmem:[#allocation5 + $0x1540] sm:$0xff]
    %v811 = vld [vmem:[#allocation5 + $0x1548] sm:$0xff]
    %v812 = vld [vmem:[#allocation5 + $0x1550] sm:$0xff]
    %v813 = vld [vmem:[#allocation5 + $0x1558] sm:$0xff]
    %v814 = vld [vmem:[#allocation5 + $0x1560] sm:$0xff]
    %v815 = vld [vmem:[#allocation5 + $0x1568] sm:$0xff]
    %v816 = vld [vmem:[#allocation5 + $0x1570] sm:$0xff]
    %v817 = vld [vmem:[#allocation5 + $0x1578] sm:$0xff]
    %v818 = vld [vmem:[#allocation5 + $0x1580] sm:$0xff]
    %v819 = vld [vmem:[#allocation5 + $0x1588] sm:$0xff]
    %v820 = vld [vmem:[#allocation5 + $0x1590] sm:$0xff]
    %v821 = vld [vmem:[#allocation5 + $0x1598] sm:$0xff]
    %v822 = vld [vmem:[#allocation5 + $0x15a0] sm:$0xff]
    %v823 = vld [vmem:[#allocation5 + $0x15a8] sm:$0xff]
    %v824 = vld [vmem:[#allocation5 + $0x15b0] sm:$0xff]
    %v825 = vld [vmem:[#allocation5 + $0x15b8] sm:$0xff]
    %v826 = vld [vmem:[#allocation5 + $0x15c0] sm:$0xff]
    %v827 = vld [vmem:[#allocation5 + $0x15c8] sm:$0xff]
    %v828 = vld [vmem:[#allocation5 + $0x15d0] sm:$0xff]
    %v829 = vld [vmem:[#allocation5 + $0x15d8] sm:$0xff]
    %v830 = vld [vmem:[#allocation5 + $0x15e0] sm:$0xff]
    %v831 = vld [vmem:[#allocation5 + $0x15e8] sm:$0xff]
    %v832 = vld [vmem:[#allocation5 + $0x15f0] sm:$0xff]
    %v833 = vld [vmem:[#allocation5 + $0x15f8] sm:$0xff]
    %v834 = vld [vmem:[#allocation5 + $0x1600] sm:$0xff]
    %v835 = vld [vmem:[#allocation5 + $0x1608] sm:$0xff]
    %v836 = vld [vmem:[#allocation5 + $0x1610] sm:$0xff]
    %v837 = vld [vmem:[#allocation5 + $0x1618] sm:$0xff]
    %v838 = vld [vmem:[#allocation5 + $0x1620] sm:$0xff]
    %v839 = vld [vmem:[#allocation5 + $0x1628] sm:$0xff]
    %v840 = vld [vmem:[#allocation5 + $0x1630] sm:$0xff]
    %v841 = vld [vmem:[#allocation5 + $0x1638] sm:$0xff]
    %v842 = vld [vmem:[#allocation5 + $0x1640] sm:$0xff]
    %v843 = vld [vmem:[#allocation5 + $0x1648] sm:$0xff]
    %v844 = vld [vmem:[#allocation5 + $0x1650] sm:$0xff]
    %v845 = vld [vmem:[#allocation5 + $0x1658] sm:$0xff]
    %v846 = vld [vmem:[#allocation5 + $0x1660] sm:$0xff]
    %v847 = vld [vmem:[#allocation5 + $0x1668] sm:$0xff]
    %v848 = vld [vmem:[#allocation5 + $0x1670] sm:$0xff]
    %v849 = vld [vmem:[#allocation5 + $0x1678] sm:$0xff]
    %v850 = vld [vmem:[#allocation5 + $0x1680] sm:$0xff]
    %v851 = vld [vmem:[#allocation5 + $0x1688] sm:$0xff]
    %v852 = vld [vmem:[#allocation5 + $0x1690] sm:$0xff]
    %v853 = vld [vmem:[#allocation5 + $0x1698] sm:$0xff]
    %v854 = vld [vmem:[#allocation5 + $0x16a0] sm:$0xff]
    %v855 = vld [vmem:[#allocation5 + $0x16a8] sm:$0xff]
    %v856 = vld [vmem:[#allocation5 + $0x16b0] sm:$0xff]
    %v857 = vld [vmem:[#allocation5 + $0x16b8] sm:$0xff]
    %v858 = vld [vmem:[#allocation5 + $0x16c0] sm:$0xff]
    %v859 = vld [vmem:[#allocation5 + $0x16c8] sm:$0xff]
    %v860 = vld [vmem:[#allocation5 + $0x16d0] sm:$0xff]
    %v861 = vld [vmem:[#allocation5 + $0x16d8] sm:$0xff]
    %v862 = vld [vmem:[#allocation5 + $0x16e0] sm:$0xff]
    %v863 = vld [vmem:[#allocation5 + $0x16e8] sm:$0xff]
    %v864 = vld [vmem:[#allocation5 + $0x16f0] sm:$0xff]
    %v865 = vld [vmem:[#allocation5 + $0x16f8] sm:$0xff]
    %v866 = vld [vmem:[#allocation5 + $0x1700] sm:$0xff]
    %v867 = vld [vmem:[#allocation5 + $0x1708] sm:$0xff]
    %v868 = vld [vmem:[#allocation5 + $0x1710] sm:$0xff]
    %v869 = vld [vmem:[#allocation5 + $0x1718] sm:$0xff]
    %v870 = vld [vmem:[#allocation5 + $0x1720] sm:$0xff]
    %v871 = vld [vmem:[#allocation5 + $0x1728] sm:$0xff]
    %v872 = vld [vmem:[#allocation5 + $0x1730] sm:$0xff]
    %v873 = vld [vmem:[#allocation5 + $0x1738] sm:$0xff]
    %v874 = vld [vmem:[#allocation5 + $0x1740] sm:$0xff]
    %v875 = vld [vmem:[#allocation5 + $0x1748] sm:$0xff]
    %v876 = vld [vmem:[#allocation5 + $0x1750] sm:$0xff]
    %v877 = vld [vmem:[#allocation5 + $0x1758] sm:$0xff]
    %v878 = vld [vmem:[#allocation5 + $0x1760] sm:$0xff]
    %v879 = vld [vmem:[#allocation5 + $0x1768] sm:$0xff]
    %v880 = vld [vmem:[#allocation5 + $0x1770] sm:$0xff]
    %v881 = vld [vmem:[#allocation5 + $0x1778] sm:$0xff]
    %v882 = vld [vmem:[#allocation5 + $0x1780] sm:$0xff]
    %v883 = vld [vmem:[#allocation5 + $0x1788] sm:$0xff]
    %v884 = vld [vmem:[#allocation5 + $0x1790] sm:$0xff]
    %v885 = vld [vmem:[#allocation5 + $0x1798] sm:$0xff]
    %v886 = vld [vmem:[#allocation5 + $0x17a0] sm:$0xff]
    %v887 = vld [vmem:[#allocation5 + $0x17a8] sm:$0xff]
    %v888 = vld [vmem:[#allocation5 + $0x17b0] sm:$0xff]
    %v889 = vld [vmem:[#allocation5 + $0x17b8] sm:$0xff]
    %v890 = vld [vmem:[#allocation5 + $0x17c0] sm:$0xff]
    %v891 = vld [vmem:[#allocation5 + $0x17c8] sm:$0xff]
    %v892 = vld [vmem:[#allocation5 + $0x17d0] sm:$0xff]
    %v893 = vld [vmem:[#allocation5 + $0x17d8] sm:$0xff]
    %v894 = vld [vmem:[#allocation5 + $0x17e0] sm:$0xff]
    %v895 = vld [vmem:[#allocation5 + $0x17e8] sm:$0xff]
    %v896 = vld [vmem:[#allocation5 + $0x17f0] sm:$0xff]
    %v897 = vld [vmem:[#allocation5 + $0x17f8] sm:$0xff]
    %v898 = vld [vmem:[#allocation5 + $0x1800] sm:$0xff]
    %v899 = vld [vmem:[#allocation5 + $0x1808] sm:$0xff]
    %v900 = vld [vmem:[#allocation5 + $0x1810] sm:$0xff]
    %v901 = vld [vmem:[#allocation5 + $0x1818] sm:$0xff]
    %v902 = vld [vmem:[#allocation5 + $0x1820] sm:$0xff]
    %v903 = vld [vmem:[#allocation5 + $0x1828] sm:$0xff]
    %v904 = vld [vmem:[#allocation5 + $0x1830] sm:$0xff]
    %v905 = vld [vmem:[#allocation5 + $0x1838] sm:$0xff]
    %v906 = vld [vmem:[#allocation5 + $0x1840] sm:$0xff]
    %v907 = vld [vmem:[#allocation5 + $0x1848] sm:$0xff]
    %v908 = vld [vmem:[#allocation5 + $0x1850] sm:$0xff]
    %v909 = vld [vmem:[#allocation5 + $0x1858] sm:$0xff]
    %v910 = vld [vmem:[#allocation5 + $0x1860] sm:$0xff]
    %v911 = vld [vmem:[#allocation5 + $0x1868] sm:$0xff]
    %v912 = vld [vmem:[#allocation5 + $0x1870] sm:$0xff]
    %v913 = vld [vmem:[#allocation5 + $0x1878] sm:$0xff]
    %v914 = vld [vmem:[#allocation5 + $0x1880] sm:$0xff]
    %v915 = vld [vmem:[#allocation5 + $0x1888] sm:$0xff]
    %v916 = vld [vmem:[#allocation5 + $0x1890] sm:$0xff]
    %v917 = vld [vmem:[#allocation5 + $0x1898] sm:$0xff]
    %v918 = vld [vmem:[#allocation5 + $0x18a0] sm:$0xff]
    %v919 = vld [vmem:[#allocation5 + $0x18a8] sm:$0xff]
    %v920 = vld [vmem:[#allocation5 + $0x18b0] sm:$0xff]
    %v921 = vld [vmem:[#allocation5 + $0x18b8] sm:$0xff]
    %v922 = vld [vmem:[#allocation5 + $0x18c0] sm:$0xff]
    %v923 = vld [vmem:[#allocation5 + $0x18c8] sm:$0xff]
    %v924 = vld [vmem:[#allocation5 + $0x18d0] sm:$0xff]
    %v925 = vld [vmem:[#allocation5 + $0x18d8] sm:$0xff]
    %v926 = vld [vmem:[#allocation5 + $0x18e0] sm:$0xff]
    %v927 = vld [vmem:[#allocation5 + $0x18e8] sm:$0xff]
    %v928 = vld [vmem:[#allocation5 + $0x18f0] sm:$0xff]
    %v929 = vld [vmem:[#allocation5 + $0x18f8] sm:$0xff]
    %v930 = vld [vmem:[#allocation5 + $0x1900] sm:$0xff]
    %v931 = vld [vmem:[#allocation5 + $0x1908] sm:$0xff]
    %v932 = vld [vmem:[#allocation5 + $0x1910] sm:$0xff]
    %v933 = vld [vmem:[#allocation5 + $0x1918] sm:$0xff]
    %v934 = vld [vmem:[#allocation5 + $0x1920] sm:$0xff]
    %v935 = vld [vmem:[#allocation5 + $0x1928] sm:$0xff]
    %v936 = vld [vmem:[#allocation5 + $0x1930] sm:$0xff]
    %v937 = vld [vmem:[#allocation5 + $0x1938] sm:$0xff]
    %v938 = vld [vmem:[#allocation5 + $0x1940] sm:$0xff]
    %v939 = vld [vmem:[#allocation5 + $0x1948] sm:$0xff]
    %v940 = vld [vmem:[#allocation5 + $0x1950] sm:$0xff]
    %v941 = vld [vmem:[#allocation5 + $0x1958] sm:$0xff]
    %v942 = vld [vmem:[#allocation5 + $0x1960] sm:$0xff]
    %v943 = vld [vmem:[#allocation5 + $0x1968] sm:$0xff]
    %v944 = vld [vmem:[#allocation5 + $0x1970] sm:$0xff]
    %v945 = vld [vmem:[#allocation5 + $0x1978] sm:$0xff]
    %v946 = vld [vmem:[#allocation5 + $0x1980] sm:$0xff]
    %v947 = vld [vmem:[#allocation5 + $0x1988] sm:$0xff]
    %v948 = vld [vmem:[#allocation5 + $0x1990] sm:$0xff]
    %v949 = vld [vmem:[#allocation5 + $0x1998] sm:$0xff]
    %v950 = vld [vmem:[#allocation5 + $0x19a0] sm:$0xff]
    %v951 = vld [vmem:[#allocation5 + $0x19a8] sm:$0xff]
    %v952 = vld [vmem:[#allocation5 + $0x19b0] sm:$0xff]
    %v953 = vld [vmem:[#allocation5 + $0x19b8] sm:$0xff]
    %v954 = vld [vmem:[#allocation5 + $0x19c0] sm:$0xff]
    %v955 = vld [vmem:[#allocation5 + $0x19c8] sm:$0xff]
    %v956 = vld [vmem:[#allocation5 + $0x19d0] sm:$0xff]
    %v957 = vld [vmem:[#allocation5 + $0x19d8] sm:$0xff]
    %v958 = vld [vmem:[#allocation5 + $0x19e0] sm:$0xff]
    %v959 = vld [vmem:[#allocation5 + $0x19e8] sm:$0xff]
    %v960 = vld [vmem:[#allocation5 + $0x19f0] sm:$0xff]
    %v961 = vld [vmem:[#allocation5 + $0x19f8] sm:$0xff]
    %v962 = vld [vmem:[#allocation5 + $0x1a00] sm:$0xff]
    %v963 = vld [vmem:[#allocation5 + $0x1a08] sm:$0xff]
    %v964 = vld [vmem:[#allocation5 + $0x1a10] sm:$0xff]
    %v965 = vld [vmem:[#allocation5 + $0x1a18] sm:$0xff]
    %v966 = vld [vmem:[#allocation5 + $0x1a20] sm:$0xff]
    %v967 = vld [vmem:[#allocation5 + $0x1a28] sm:$0xff]
    %v968 = vld [vmem:[#allocation5 + $0x1a30] sm:$0xff]
    %v969 = vld [vmem:[#allocation5 + $0x1a38] sm:$0xff]
    %v970 = vld [vmem:[#allocation5 + $0x1a40] sm:$0xff]
    %v971 = vld [vmem:[#allocation5 + $0x1a48] sm:$0xff]
    %v972 = vld [vmem:[#allocation5 + $0x1a50] sm:$0xff]
    %v973 = vld [vmem:[#allocation5 + $0x1a58] sm:$0xff]
    %v974 = vld [vmem:[#allocation5 + $0x1a60] sm:$0xff]
    %v975 = vld [vmem:[#allocation5 + $0x1a68] sm:$0xff]
    %v976 = vld [vmem:[#allocation5 + $0x1a70] sm:$0xff]
    %v977 = vld [vmem:[#allocation5 + $0x1a78] sm:$0xff]
    %v978 = vld [vmem:[#allocation5 + $0x1a80] sm:$0xff]
    %v979 = vld [vmem:[#allocation5 + $0x1a88] sm:$0xff]
    %v980 = vld [vmem:[#allocation5 + $0x1a90] sm:$0xff]
    %v981 = vld [vmem:[#allocation5 + $0x1a98] sm:$0xff]
    %v982 = vld [vmem:[#allocation5 + $0x1aa0] sm:$0xff]
    %v983 = vld [vmem:[#allocation5 + $0x1aa8] sm:$0xff]
    %v984 = vld [vmem:[#allocation5 + $0x1ab0] sm:$0xff]
    %v985 = vld [vmem:[#allocation5 + $0x1ab8] sm:$0xff]
    %v986 = vld [vmem:[#allocation5 + $0x1ac0] sm:$0xff]
    %v987 = vld [vmem:[#allocation5 + $0x1ac8] sm:$0xff]
    %v988 = vld [vmem:[#allocation5 + $0x1ad0] sm:$0xff]
    %v989 = vld [vmem:[#allocation5 + $0x1ad8] sm:$0xff]
    %v990 = vld [vmem:[#allocation5 + $0x1ae0] sm:$0xff]
    %v991 = vld [vmem:[#allocation5 + $0x1ae8] sm:$0xff]
    %v992 = vld [vmem:[#allocation5 + $0x1af0] sm:$0xff]
    %v993 = vld [vmem:[#allocation5 + $0x1af8] sm:$0xff]
    %v994 = vld [vmem:[#allocation5 + $0x1b00] sm:$0xff]
    %v995 = vld [vmem:[#allocation5 + $0x1b08] sm:$0xff]
    %v996 = vld [vmem:[#allocation5 + $0x1b10] sm:$0xff]
    %v997 = vld [vmem:[#allocation5 + $0x1b18] sm:$0xff]
    %v998 = vld [vmem:[#allocation5 + $0x1b20] sm:$0xff]
    %v999 = vld [vmem:[#allocation5 + $0x1b28] sm:$0xff]
    %v1000 = vld [vmem:[#allocation5 + $0x1b30] sm:$0xff]
    %v1001 = vld [vmem:[#allocation5 + $0x1b38] sm:$0xff]
    %v1002 = vld [vmem:[#allocation5 + $0x1b40] sm:$0xff]
    %v1003 = vld [vmem:[#allocation5 + $0x1b48] sm:$0xff]
    %v1004 = vld [vmem:[#allocation5 + $0x1b50] sm:$0xff]
    %v1005 = vld [vmem:[#allocation5 + $0x1b58] sm:$0xff]
    %v1006 = vld [vmem:[#allocation5 + $0x1b60] sm:$0xff]
    %v1007 = vld [vmem:[#allocation5 + $0x1b68] sm:$0xff]
    %v1008 = vld [vmem:[#allocation5 + $0x1b70] sm:$0xff]
    %v1009 = vld [vmem:[#allocation5 + $0x1b78] sm:$0xff]
    %v1010 = vld [vmem:[#allocation5 + $0x1b80] sm:$0xff]
    %v1011 = vld [vmem:[#allocation5 + $0x1b88] sm:$0xff]
    %v1012 = vld [vmem:[#allocation5 + $0x1b90] sm:$0xff]
    %v1013 = vld [vmem:[#allocation5 + $0x1b98] sm:$0xff]
    %v1014 = vld [vmem:[#allocation5 + $0x1ba0] sm:$0xff]
    %v1015 = vld [vmem:[#allocation5 + $0x1ba8] sm:$0xff]
    %v1016 = vld [vmem:[#allocation5 + $0x1bb0] sm:$0xff]
    %v1017 = vld [vmem:[#allocation5 + $0x1bb8] sm:$0xff]
    %v1018 = vld [vmem:[#allocation5 + $0x1bc0] sm:$0xff]
    %v1019 = vld [vmem:[#allocation5 + $0x1bc8] sm:$0xff]
    %v1020 = vld [vmem:[#allocation5 + $0x1bd0] sm:$0xff]
    %v1021 = vld [vmem:[#allocation5 + $0x1bd8] sm:$0xff]
    %v1022 = vld [vmem:[#allocation5 + $0x1be0] sm:$0xff]
    %v1023 = vld [vmem:[#allocation5 + $0x1be8] sm:$0xff]
    %v1024 = vld [vmem:[#allocation5 + $0x1bf0] sm:$0xff]
    %v1025 = vld [vmem:[#allocation5 + $0x1bf8] sm:$0xff]
    %v1026 = vld [vmem:[#allocation5 + $0x1c00] sm:$0xff]
    %v1027 = vld [vmem:[#allocation5 + $0x1c08] sm:$0xff]
    %v1028 = vld [vmem:[#allocation5 + $0x1c10] sm:$0xff]
    %v1029 = vld [vmem:[#allocation5 + $0x1c18] sm:$0xff]
    %v1030 = vld [vmem:[#allocation5 + $0x1c20] sm:$0xff]
    %v1031 = vld [vmem:[#allocation5 + $0x1c28] sm:$0xff]
    %v1032 = vld [vmem:[#allocation5 + $0x1c30] sm:$0xff]
    %v1033 = vld [vmem:[#allocation5 + $0x1c38] sm:$0xff]
    %v1034 = vld [vmem:[#allocation5 + $0x1c40] sm:$0xff]
    %v1035 = vld [vmem:[#allocation5 + $0x1c48] sm:$0xff]
    %v1036 = vld [vmem:[#allocation5 + $0x1c50] sm:$0xff]
    %v1037 = vld [vmem:[#allocation5 + $0x1c58] sm:$0xff]
    %v1038 = vld [vmem:[#allocation5 + $0x1c60] sm:$0xff]
    %v1039 = vld [vmem:[#allocation5 + $0x1c68] sm:$0xff]
    %v1040 = vld [vmem:[#allocation5 + $0x1c70] sm:$0xff]
    %v1041 = vld [vmem:[#allocation5 + $0x1c78] sm:$0xff]
    %v1042 = vld [vmem:[#allocation5 + $0x1c80] sm:$0xff]
    %v1043 = vld [vmem:[#allocation5 + $0x1c88] sm:$0xff]
    %v1044 = vld [vmem:[#allocation5 + $0x1c90] sm:$0xff]
    %v1045 = vld [vmem:[#allocation5 + $0x1c98] sm:$0xff]
    %v1046 = vld [vmem:[#allocation5 + $0x1ca0] sm:$0xff]
    %v1047 = vld [vmem:[#allocation5 + $0x1ca8] sm:$0xff]
    %v1048 = vld [vmem:[#allocation5 + $0x1cb0] sm:$0xff]
    %v1049 = vld [vmem:[#allocation5 + $0x1cb8] sm:$0xff]
    %v1050 = vld [vmem:[#allocation5 + $0x1cc0] sm:$0xff]
    %v1051 = vld [vmem:[#allocation5 + $0x1cc8] sm:$0xff]
    %v1052 = vld [vmem:[#allocation5 + $0x1cd0] sm:$0xff]
    %v1053 = vld [vmem:[#allocation5 + $0x1cd8] sm:$0xff]
    %v1054 = vld [vmem:[#allocation5 + $0x1ce0] sm:$0xff]
    %v1055 = vld [vmem:[#allocation5 + $0x1ce8] sm:$0xff]
    %v1056 = vld [vmem:[#allocation5 + $0x1cf0] sm:$0xff]
    %v1057 = vld [vmem:[#allocation5 + $0x1cf8] sm:$0xff]
    %v1058 = vld [vmem:[#allocation5 + $0x1d00] sm:$0xff]
    %v1059 = vld [vmem:[#allocation5 + $0x1d08] sm:$0xff]
    %v1060 = vld [vmem:[#allocation5 + $0x1d10] sm:$0xff]
    %v1061 = vld [vmem:[#allocation5 + $0x1d18] sm:$0xff]
    %v1062 = vld [vmem:[#allocation5 + $0x1d20] sm:$0xff]
    %v1063 = vld [vmem:[#allocation5 + $0x1d28] sm:$0xff]
    %v1064 = vld [vmem:[#allocation5 + $0x1d30] sm:$0xff]
    %v1065 = vld [vmem:[#allocation5 + $0x1d38] sm:$0xff]
    %v1066 = vld [vmem:[#allocation5 + $0x1d40] sm:$0xff]
    %v1067 = vld [vmem:[#allocation5 + $0x1d48] sm:$0xff]
    %v1068 = vld [vmem:[#allocation5 + $0x1d50] sm:$0xff]
    %v1069 = vld [vmem:[#allocation5 + $0x1d58] sm:$0xff]
    %v1070 = vld [vmem:[#allocation5 + $0x1d60] sm:$0xff]
    %v1071 = vld [vmem:[#allocation5 + $0x1d68] sm:$0xff]
    %v1072 = vld [vmem:[#allocation5 + $0x1d70] sm:$0xff]
    %v1073 = vld [vmem:[#allocation5 + $0x1d78] sm:$0xff]
    %v1074 = vld [vmem:[#allocation5 + $0x1d80] sm:$0xff]
    %v1075 = vld [vmem:[#allocation5 + $0x1d88] sm:$0xff]
    %v1076 = vld [vmem:[#allocation5 + $0x1d90] sm:$0xff]
    %v1077 = vld [vmem:[#allocation5 + $0x1d98] sm:$0xff]
    %v1078 = vld [vmem:[#allocation5 + $0x1da0] sm:$0xff]
    %v1079 = vld [vmem:[#allocation5 + $0x1da8] sm:$0xff]
    %v1080 = vld [vmem:[#allocation5 + $0x1db0] sm:$0xff]
    %v1081 = vld [vmem:[#allocation5 + $0x1db8] sm:$0xff]
    %v1082 = vld [vmem:[#allocation5 + $0x1dc0] sm:$0xff]
    %v1083 = vld [vmem:[#allocation5 + $0x1dc8] sm:$0xff]
    %v1084 = vld [vmem:[#allocation5 + $0x1dd0] sm:$0xff]
    %v1085 = vld [vmem:[#allocation5 + $0x1dd8] sm:$0xff]
    %v1086 = vld [vmem:[#allocation5 + $0x1de0] sm:$0xff]
    %v1087 = vld [vmem:[#allocation5 + $0x1de8] sm:$0xff]
    %v1088 = vld [vmem:[#allocation5 + $0x1df0] sm:$0xff]
    %v1089 = vld [vmem:[#allocation5 + $0x1df8] sm:$0xff]
    %v1090 = vld [vmem:[#allocation5 + $0x1e00] sm:$0xff]
    %v1091 = vld [vmem:[#allocation5 + $0x1e08] sm:$0xff]
    %v1092 = vld [vmem:[#allocation5 + $0x1e10] sm:$0xff]
    %v1093 = vld [vmem:[#allocation5 + $0x1e18] sm:$0xff]
    %v1094 = vld [vmem:[#allocation5 + $0x1e20] sm:$0xff]
    %v1095 = vld [vmem:[#allocation5 + $0x1e28] sm:$0xff]
    %v1096 = vld [vmem:[#allocation5 + $0x1e30] sm:$0xff]
    %v1097 = vld [vmem:[#allocation5 + $0x1e38] sm:$0xff]
    %v1098 = vld [vmem:[#allocation7] sm:$0x1]
    %v1100 = vlaneseq
    %v1101 = vshrl.u32 %v1100, 7
    %v1102 = vsub.s32 0, %v1101
    %v1103 = vrot.slane %v1098, %v1102
    %v1121 = vcombine.high %v114, %v114
    %v1123 = vunpack.c.l.s4 1983009808
    %v1124 = vunpack.c.0.s8 %v1123
    %v1125 = vlaneseq
    %v1126 = vshrl.u32 %v1125, 7
    %v1127 = vsub.s32 %v1124, %v1126
    %v1128 = vrot.slane %v114, %v1127
    %v1130 = vunpack.c.l.s4 1983009808
    %v1131 = vunpack.c.0.s8 %v1130
    %v1132 = vlaneseq
    %v1133 = vshrl.u32 %v1132, 7
    %v1134 = vsub.s32 %v1131, %v1133
    %v1135 = vrot.slane %v1121, %v1134
    %v1136 = vcombine.high %v1128, %v1128
    %v1137 = vcombine.high %v1135, %v1135
    %v1138 = vcombine.high %v115, %v115
    %v1140 = vunpack.c.l.s4 1983009808
    %v1141 = vunpack.c.0.s8 %v1140
    %v1142 = vlaneseq
    %v1143 = vshrl.u32 %v1142, 7
    %v1144 = vsub.s32 %v1141, %v1143
    %v1145 = vrot.slane %v115, %v1144
    %v1147 = vunpack.c.l.s4 1983009808
    %v1148 = vunpack.c.0.s8 %v1147
    %v1149 = vlaneseq
    %v1150 = vshrl.u32 %v1149, 7
    %v1151 = vsub.s32 %v1148, %v1150
    %v1152 = vrot.slane %v1138, %v1151
    %v1153 = vcombine.high %v1145, %v1145
    %v1154 = vcombine.high %v1152, %v1152
    %v1155 = vcombine.high %v116, %v116
    %v1157 = vunpack.c.l.s4 1983009808
    %v1158 = vunpack.c.0.s8 %v1157
    %v1159 = vlaneseq
    %v1160 = vshrl.u32 %v1159, 7
    %v1161 = vsub.s32 %v1158, %v1160
    %v1162 = vrot.slane %v116, %v1161
    %v1164 = vunpack.c.l.s4 1983009808
    %v1165 = vunpack.c.0.s8 %v1164
    %v1166 = vlaneseq
    %v1167 = vshrl.u32 %v1166, 7
    %v1168 = vsub.s32 %v1165, %v1167
    %v1169 = vrot.slane %v1155, %v1168
    %v1170 = vcombine.high %v1162, %v1162
    %v1171 = vcombine.high %v1169, %v1169
    %v1172 = vcombine.high %v117, %v117
    %v1174 = vunpack.c.l.s4 1983009808
    %v1175 = vunpack.c.0.s8 %v1174
    %v1176 = vlaneseq
    %v1177 = vshrl.u32 %v1176, 7
    %v1178 = vsub.s32 %v1175, %v1177
    %v1179 = vrot.slane %v117, %v1178
    %v1181 = vunpack.c.l.s4 1983009808
    %v1182 = vunpack.c.0.s8 %v1181
    %v1183 = vlaneseq
    %v1184 = vshrl.u32 %v1183, 7
    %v1185 = vsub.s32 %v1182, %v1184
    %v1186 = vrot.slane %v1172, %v1185
    %v1187 = vcombine.high %v1179, %v1179
    %v1188 = vcombine.high %v1186, %v1186
    %v1189 = vcombine.high %v118, %v118
    %v1191 = vunpack.c.l.s4 1983009808
    %v1192 = vunpack.c.0.s8 %v1191
    %v1193 = vlaneseq
    %v1194 = vshrl.u32 %v1193, 7
    %v1195 = vsub.s32 %v1192, %v1194
    %v1196 = vrot.slane %v118, %v1195
    %v1198 = vunpack.c.l.s4 1983009808
    %v1199 = vunpack.c.0.s8 %v1198
    %v1200 = vlaneseq
    %v1201 = vshrl.u32 %v1200, 7
    %v1202 = vsub.s32 %v1199, %v1201
    %v1203 = vrot.slane %v1189, %v1202
    %v1204 = vcombine.high %v1196, %v1196
    %v1205 = vcombine.high %v1203, %v1203
    %v1206 = vcombine.high %v119, %v119
    %v1208 = vunpack.c.l.s4 1983009808
    %v1209 = vunpack.c.0.s8 %v1208
    %v1210 = vlaneseq
    %v1211 = vshrl.u32 %v1210, 7
    %v1212 = vsub.s32 %v1209, %v1211
    %v1213 = vrot.slane %v119, %v1212
    %v1215 = vunpack.c.l.s4 1983009808
    %v1216 = vunpack.c.0.s8 %v1215
    %v1217 = vlaneseq
    %v1218 = vshrl.u32 %v1217, 7
    %v1219 = vsub.s32 %v1216, %v1218
    %v1220 = vrot.slane %v1206, %v1219
    %v1221 = vcombine.high %v1213, %v1213
    %v1222 = vcombine.high %v1220, %v1220
    %v1223 = vcombine.high %v120, %v120
    %v1225 = vunpack.c.l.s4 1983009808
    %v1226 = vunpack.c.0.s8 %v1225
    %v1227 = vlaneseq
    %v1228 = vshrl.u32 %v1227, 7
    %v1229 = vsub.s32 %v1226, %v1228
    %v1230 = vrot.slane %v120, %v1229
    %v1232 = vunpack.c.l.s4 1983009808
    %v1233 = vunpack.c.0.s8 %v1232
    %v1234 = vlaneseq
    %v1235 = vshrl.u32 %v1234, 7
    %v1236 = vsub.s32 %v1233, %v1235
    %v1237 = vrot.slane %v1223, %v1236
    %v1238 = vcombine.high %v1230, %v1230
    %v1239 = vcombine.high %v1237, %v1237
    %v1240 = vcombine.high %v121, %v121
    %v1242 = vunpack.c.l.s4 1983009808
    %v1243 = vunpack.c.0.s8 %v1242
    %v1244 = vlaneseq
    %v1245 = vshrl.u32 %v1244, 7
    %v1246 = vsub.s32 %v1243, %v1245
    %v1247 = vrot.slane %v121, %v1246
    %v1249 = vunpack.c.l.s4 1983009808
    %v1250 = vunpack.c.0.s8 %v1249
    %v1251 = vlaneseq
    %v1252 = vshrl.u32 %v1251, 7
    %v1253 = vsub.s32 %v1250, %v1252
    %v1254 = vrot.slane %v1240, %v1253
    %v1255 = vcombine.high %v1247, %v1247
    %v1256 = vcombine.high %v1254, %v1254
    %v1257 = vcombine.high %v122, %v122
    %v1259 = vunpack.c.l.s4 1983009808
    %v1260 = vunpack.c.0.s8 %v1259
    %v1261 = vlaneseq
    %v1262 = vshrl.u32 %v1261, 7
    %v1263 = vsub.s32 %v1260, %v1262
    %v1264 = vrot.slane %v122, %v1263
    %v1266 = vunpack.c.l.s4 1983009808
    %v1267 = vunpack.c.0.s8 %v1266
    %v1268 = vlaneseq
    %v1269 = vshrl.u32 %v1268, 7
    %v1270 = vsub.s32 %v1267, %v1269
    %v1271 = vrot.slane %v1257, %v1270
    %v1272 = vcombine.high %v1264, %v1264
    %v1273 = vcombine.high %v1271, %v1271
    %v1274 = vcombine.high %v123, %v123
    %v1276 = vunpack.c.l.s4 1983009808
    %v1277 = vunpack.c.0.s8 %v1276
    %v1278 = vlaneseq
    %v1279 = vshrl.u32 %v1278, 7
    %v1280 = vsub.s32 %v1277, %v1279
    %v1281 = vrot.slane %v123, %v1280
    %v1283 = vunpack.c.l.s4 1983009808
    %v1284 = vunpack.c.0.s8 %v1283
    %v1285 = vlaneseq
    %v1286 = vshrl.u32 %v1285, 7
    %v1287 = vsub.s32 %v1284, %v1286
    %v1288 = vrot.slane %v1274, %v1287
    %v1289 = vcombine.high %v1281, %v1281
    %v1290 = vcombine.high %v1288, %v1288
    %v1291 = vcombine.high %v124, %v124
    %v1293 = vunpack.c.l.s4 1983009808
    %v1294 = vunpack.c.0.s8 %v1293
    %v1295 = vlaneseq
    %v1296 = vshrl.u32 %v1295, 7
    %v1297 = vsub.s32 %v1294, %v1296
    %v1298 = vrot.slane %v124, %v1297
    %v1300 = vunpack.c.l.s4 1983009808
    %v1301 = vunpack.c.0.s8 %v1300
    %v1302 = vlaneseq
    %v1303 = vshrl.u32 %v1302, 7
    %v1304 = vsub.s32 %v1301, %v1303
    %v1305 = vrot.slane %v1291, %v1304
    %v1306 = vcombine.high %v1298, %v1298
    %v1307 = vcombine.high %v1305, %v1305
    %v1308 = vcombine.high %v125, %v125
    %v1310 = vunpack.c.l.s4 1983009808
    %v1311 = vunpack.c.0.s8 %v1310
    %v1312 = vlaneseq
    %v1313 = vshrl.u32 %v1312, 7
    %v1314 = vsub.s32 %v1311, %v1313
    %v1315 = vrot.slane %v125, %v1314
    %v1317 = vunpack.c.l.s4 1983009808
    %v1318 = vunpack.c.0.s8 %v1317
    %v1319 = vlaneseq
    %v1320 = vshrl.u32 %v1319, 7
    %v1321 = vsub.s32 %v1318, %v1320
    %v1322 = vrot.slane %v1308, %v1321
    %v1323 = vcombine.high %v1315, %v1315
    %v1324 = vcombine.high %v1322, %v1322
    %v1325 = vcombine.high %v126, %v126
    %v1327 = vunpack.c.l.s4 1983009808
    %v1328 = vunpack.c.0.s8 %v1327
    %v1329 = vlaneseq
    %v1330 = vshrl.u32 %v1329, 7
    %v1331 = vsub.s32 %v1328, %v1330
    %v1332 = vrot.slane %v126, %v1331
    %v1334 = vunpack.c.l.s4 1983009808
    %v1335 = vunpack.c.0.s8 %v1334
    %v1336 = vlaneseq
    %v1337 = vshrl.u32 %v1336, 7
    %v1338 = vsub.s32 %v1335, %v1337
    %v1339 = vrot.slane %v1325, %v1338
    %v1340 = vcombine.high %v1332, %v1332
    %v1341 = vcombine.high %v1339, %v1339
    %v1342 = vcombine.high %v127, %v127
    %v1344 = vunpack.c.l.s4 1983009808
    %v1345 = vunpack.c.0.s8 %v1344
    %v1346 = vlaneseq
    %v1347 = vshrl.u32 %v1346, 7
    %v1348 = vsub.s32 %v1345, %v1347
    %v1349 = vrot.slane %v127, %v1348
    %v1351 = vunpack.c.l.s4 1983009808
    %v1352 = vunpack.c.0.s8 %v1351
    %v1353 = vlaneseq
    %v1354 = vshrl.u32 %v1353, 7
    %v1355 = vsub.s32 %v1352, %v1354
    %v1356 = vrot.slane %v1342, %v1355
    %v1357 = vcombine.high %v1349, %v1349
    %v1358 = vcombine.high %v1356, %v1356
    %v1359 = vcombine.high %v128, %v128
    %v1361 = vunpack.c.l.s4 1983009808
    %v1362 = vunpack.c.0.s8 %v1361
    %v1363 = vlaneseq
    %v1364 = vshrl.u32 %v1363, 7
    %v1365 = vsub.s32 %v1362, %v1364
    %v1366 = vrot.slane %v128, %v1365
    %v1368 = vunpack.c.l.s4 1983009808
    %v1369 = vunpack.c.0.s8 %v1368
    %v1370 = vlaneseq
    %v1371 = vshrl.u32 %v1370, 7
    %v1372 = vsub.s32 %v1369, %v1371
    %v1373 = vrot.slane %v1359, %v1372
    %v1374 = vcombine.high %v1366, %v1366
    %v1375 = vcombine.high %v1373, %v1373
    %v1377 = vunpack.c.l.s4 1983009808
    %v1378 = vunpack.c.0.s8 %v1377
    %v1379 = vlaneseq
    %v1380 = vshrl.u32 %v1379, 7
    %v1381 = vsub.s32 %v1378, %v1380
    %v1382 = vrot.slane %v129, %v1381
    %vm1443 = vcmask 523264
    %v1444 = vsel %vm1443, %v1382, 0
    %1446 = vmatprep.subr.mxu0 0.0
    %1447 = vmatpush1.msra.mxu0 %v130
    %1448 = vmatprep.subr.mxu0 0.0
    %1449 = vmatpush1.msra.mxu0 %v131
    %1450 = vmatprep.subr.mxu0 0.0
    %1451 = vmatpush1.msra.mxu0 %v132
    %1452 = vmatprep.subr.mxu0 0.0
    %1453 = vmatpush1.msra.mxu0 %v133
    %1454 = vmatprep.subr.mxu0 0.0
    %1455 = vmatpush1.msra.mxu0 %v134
    %1456 = vmatprep.subr.mxu0 0.0
    %1457 = vmatpush1.msra.mxu0 %v135
    %1458 = vmatprep.subr.mxu0 0.0
    %1459 = vmatpush1.msra.mxu0 %v136
    %1460 = vmatprep.subr.mxu0 0.0
    %1461 = vmatpush1.msra.mxu0 %v137
    %1462 = vmatprep.subr.mxu0 0.0
    %1463 = vmatpush1.msra.mxu0 %v138
    %1464 = vmatprep.subr.mxu0 0.0
    %1465 = vmatpush1.msra.mxu0 %v139
    %1466 = vmatprep.subr.mxu0 0.0
    %1467 = vmatpush1.msra.mxu0 %v140
    %1468 = vmatprep.subr.mxu0 0.0
    %1469 = vmatpush1.msra.mxu0 %v141
    %1470 = vmatprep.subr.mxu0 0.0
    %1471 = vmatpush1.msra.mxu0 %v142
    %1472 = vmatprep.subr.mxu0 0.0
    %1473 = vmatpush1.msra.mxu0 %v143
    %1474 = vmatprep.subr.mxu0 0.0
    %1475 = vmatpush1.msra.mxu0 %v144
    %1476 = vmatprep.subr.mxu0 0.0
    %1477 = vmatpush1.msra.mxu0 %v145
    %1478 = vmatprep.subr.mxu0 0.0
    %1479 = vmatpush1.msra.mxu0 %v146
    %1480 = vmatprep.subr.mxu0 0.0
    %1481 = vmatpush1.msra.mxu0 %v147
    %1482 = vmatprep.subr.mxu0 0.0
    %1483 = vmatpush1.msra.mxu0 %v148
    %1484 = vmatprep.subr.mxu0 0.0
    %1485 = vmatpush1.msra.mxu0 %v149
    %1486 = vmatprep.subr.mxu0 0.0
    %1487 = vmatpush1.msra.mxu0 %v150
    %1488 = vmatprep.subr.mxu0 0.0
    %1489 = vmatpush1.msra.mxu0 %v151
    %1490 = vmatprep.subr.mxu0 0.0
    %1491 = vmatpush1.msra.mxu0 %v152
    %1492 = vmatprep.subr.mxu0 0.0
    %1493 = vmatpush1.msra.mxu0 %v153
    %1494 = vmatprep.subr.mxu0 0.0
    %1495 = vmatpush1.msra.mxu0 %v154
    %1496 = vmatprep.subr.mxu0 0.0
    %1497 = vmatpush1.msra.mxu0 %v155
    %1498 = vmatprep.subr.mxu0 0.0
    %1499 = vmatpush1.msra.mxu0 %v156
    %1500 = vmatprep.subr.mxu0 0.0
    %1501 = vmatpush1.msra.mxu0 %v157
    %1502 = vmatprep.subr.mxu0 0.0
    %1503 = vmatpush1.msra.mxu0 %v158
    %1504 = vmatprep.subr.mxu0 0.0
    %1505 = vmatpush1.msra.mxu0 %v159
    %1506 = vmatprep.subr.mxu0 0.0
    %1507 = vmatpush1.msra.mxu0 %v160
    %1508 = vmatprep.subr.mxu0 0.0
    %1509 = vmatpush1.msra.mxu0 %v161
    %1510 = vmatprep.mubr.f32.mxu0 %v1136
    %1511 = vmatmul.mubr.f32.gmra.mrb[0].mxu0 %v1128
    %v1512 = vpop.f32.mrb[0].mxu0
    %v1513 = vadd.f32 %v1103, %v1512
    %v1514 = vpop.f32.mrb[0].mxu0
    %1515 = vdwg.mxu0
    %1516 = vmatprep.subr.mxu0 0.0
    %1517 = vmatpush1.msra.mxu0 %v162
    %1518 = vmatprep.subr.mxu0 0.0
    %1519 = vmatpush1.msra.mxu0 %v163
    %1520 = vmatprep.subr.mxu0 0.0
    %1521 = vmatpush1.msra.mxu0 %v164
    %1522 = vmatprep.subr.mxu0 0.0
    %1523 = vmatpush1.msra.mxu0 %v165
    %1524 = vmatprep.subr.mxu0 0.0
    %1525 = vmatpush1.msra.mxu0 %v166
    %1526 = vmatprep.subr.mxu0 0.0
    %1527 = vmatpush1.msra.mxu0 %v167
    %1528 = vmatprep.subr.mxu0 0.0
    %1529 = vmatpush1.msra.mxu0 %v168
    %1530 = vmatprep.subr.mxu0 0.0
    %1531 = vmatpush1.msra.mxu0 %v169
    %1532 = vmatprep.subr.mxu0 0.0
    %1533 = vmatpush1.msra.mxu0 %v170
    %1534 = vmatprep.subr.mxu0 0.0
    %1535 = vmatpush1.msra.mxu0 %v171
    %1536 = vmatprep.subr.mxu0 0.0
    %1537 = vmatpush1.msra.mxu0 %v172
    %1538 = vmatprep.subr.mxu0 0.0
    %1539 = vmatpush1.msra.mxu0 %v173
    %1540 = vmatprep.subr.mxu0 0.0
    %1541 = vmatpush1.msra.mxu0 %v174
    %1542 = vmatprep.subr.mxu0 0.0
    %1543 = vmatpush1.msra.mxu0 %v175
    %1544 = vmatprep.subr.mxu0 0.0
    %1545 = vmatpush1.msra.mxu0 %v176
    %1546 = vmatprep.subr.mxu0 0.0
    %1547 = vmatpush1.msra.mxu0 %v177
    %1548 = vmatprep.subr.mxu0 0.0
    %1549 = vmatpush1.msra.mxu0 %v178
    %1550 = vmatprep.subr.mxu0 0.0
    %1551 = vmatpush1.msra.mxu0 %v179
    %1552 = vmatprep.subr.mxu0 0.0
    %1553 = vmatpush1.msra.mxu0 %v180
    %1554 = vmatprep.subr.mxu0 0.0
    %1555 = vmatpush1.msra.mxu0 %v181
    %1556 = vmatprep.subr.mxu0 0.0
    %1557 = vmatpush1.msra.mxu0 %v182
    %1558 = vmatprep.subr.mxu0 0.0
    %1559 = vmatpush1.msra.mxu0 %v183
    %1560 = vmatprep.subr.mxu0 0.0
    %1561 = vmatpush1.msra.mxu0 %v184
    %1562 = vmatprep.subr.mxu0 0.0
    %1563 = vmatpush1.msra.mxu0 %v185
    %1564 = vmatprep.subr.mxu0 0.0
    %1565 = vmatpush1.msra.mxu0 %v186
    %1566 = vmatprep.subr.mxu0 0.0
    %1567 = vmatpush1.msra.mxu0 %v187
    %1568 = vmatprep.subr.mxu0 0.0
    %1569 = vmatpush1.msra.mxu0 %v188
    %1570 = vmatprep.subr.mxu0 0.0
    %1571 = vmatpush1.msra.mxu0 %v189
    %1572 = vmatprep.subr.mxu0 0.0
    %1573 = vmatpush1.msra.mxu0 %v190
    %1574 = vmatprep.subr.mxu0 0.0
    %1575 = vmatpush1.msra.mxu0 %v191
    %1576 = vmatprep.subr.mxu0 0.0
    %1577 = vmatpush1.msra.mxu0 %v192
    %1578 = vmatprep.subr.mxu0 0.0
    %1579 = vmatpush1.msra.mxu0 %v193
    %1580 = vmatprep.mubr.f32.mxu0 %v1137
    %1581 = vmatmul.mubr.f32.gmra.mrb[0].mxu0 %v1135
    %v1582 = vpop.f32.mrb[0].mxu0
    %v1583 = vadd.f32 %v1513, %v1582
    %v1584 = vpop.f32.mrb[0].mxu0
    %1585 = vdwg.mxu0
    %1586 = vmatprep.subr.mxu0 0.0
    %1587 = vmatpush1.msra.mxu0 %v194
    %1588 = vmatprep.subr.mxu0 0.0
    %1589 = vmatpush1.msra.mxu0 %v195
    %1590 = vmatprep.subr.mxu0 0.0
    %1591 = vmatpush1.msra.mxu0 %v196
    %1592 = vmatprep.subr.mxu0 0.0
    %1593 = vmatpush1.msra.mxu0 %v197
    %1594 = vmatprep.subr.mxu0 0.0
    %1595 = vmatpush1.msra.mxu0 %v198
    %1596 = vmatprep.subr.mxu0 0.0
    %1597 = vmatpush1.msra.mxu0 %v199
    %1598 = vmatprep.subr.mxu0 0.0
    %1599 = vmatpush1.msra.mxu0 %v200
    %1600 = vmatprep.subr.mxu0 0.0
    %1601 = vmatpush1.msra.mxu0 %v201
    %1602 = vmatprep.subr.mxu0 0.0
    %1603 = vmatpush1.msra.mxu0 %v202
    %1604 = vmatprep.subr.mxu0 0.0
    %1605 = vmatpush1.msra.mxu0 %v203
    %1606 = vmatprep.subr.mxu0 0.0
    %1607 = vmatpush1.msra.mxu0 %v204
    %1608 = vmatprep.subr.mxu0 0.0
    %1609 = vmatpush1.msra.mxu0 %v205
    %1610 = vmatprep.subr.mxu0 0.0
    %1611 = vmatpush1.msra.mxu0 %v206
    %1612 = vmatprep.subr.mxu0 0.0
    %1613 = vmatpush1.msra.mxu0 %v207
    %1614 = vmatprep.subr.mxu0 0.0
    %1615 = vmatpush1.msra.mxu0 %v208
    %1616 = vmatprep.subr.mxu0 0.0
    %1617 = vmatpush1.msra.mxu0 %v209
    %1618 = vmatprep.subr.mxu0 0.0
    %1619 = vmatpush1.msra.mxu0 %v210
    %1620 = vmatprep.subr.mxu0 0.0
    %1621 = vmatpush1.msra.mxu0 %v211
    %1622 = vmatprep.subr.mxu0 0.0
    %1623 = vmatpush1.msra.mxu0 %v212
    %1624 = vmatprep.subr.mxu0 0.0
    %1625 = vmatpush1.msra.mxu0 %v213
    %1626 = vmatprep.subr.mxu0 0.0
    %1627 = vmatpush1.msra.mxu0 %v214
    %1628 = vmatprep.subr.mxu0 0.0
    %1629 = vmatpush1.msra.mxu0 %v215
    %1630 = vmatprep.subr.mxu0 0.0
    %1631 = vmatpush1.msra.mxu0 %v216
    %1632 = vmatprep.subr.mxu0 0.0
    %1633 = vmatpush1.msra.mxu0 %v217
    %1634 = vmatprep.subr.mxu0 0.0
    %1635 = vmatpush1.msra.mxu0 %v218
    %1636 = vmatprep.subr.mxu0 0.0
    %1637 = vmatpush1.msra.mxu0 %v219
    %1638 = vmatprep.subr.mxu0 0.0
    %1639 = vmatpush1.msra.mxu0 %v220
    %1640 = vmatprep.subr.mxu0 0.0
    %1641 = vmatpush1.msra.mxu0 %v221
    %1642 = vmatprep.subr.mxu0 0.0
    %1643 = vmatpush1.msra.mxu0 %v222
    %1644 = vmatprep.subr.mxu0 0.0
    %1645 = vmatpush1.msra.mxu0 %v223
    %1646 = vmatprep.subr.mxu0 0.0
    %1647 = vmatpush1.msra.mxu0 %v224
    %1648 = vmatprep.subr.mxu0 0.0
    %1649 = vmatpush1.msra.mxu0 %v225
    %1650 = vmatprep.mubr.f32.mxu0 %v1153
    %1651 = vmatmul.mubr.f32.gmra.mrb[0].mxu0 %v1145
    %v1652 = vpop.f32.mrb[0].mxu0
    %v1653 = vadd.f32 %v1583, %v1652
    %v1654 = vpop.f32.mrb[0].mxu0
    %1655 = vdwg.mxu0
    %1656 = vmatprep.subr.mxu0 0.0
    %1657 = vmatpush1.msra.mxu0 %v226
    %1658 = vmatprep.subr.mxu0 0.0
    %1659 = vmatpush1.msra.mxu0 %v227
    %1660 = vmatprep.subr.mxu0 0.0
    %1661 = vmatpush1.msra.mxu0 %v228
    %1662 = vmatprep.subr.mxu0 0.0
    %1663 = vmatpush1.msra.mxu0 %v229
    %1664 = vmatprep.subr.mxu0 0.0
    %1665 = vmatpush1.msra.mxu0 %v230
    %1666 = vmatprep.subr.mxu0 0.0
    %1667 = vmatpush1.msra.mxu0 %v231
    %1668 = vmatprep.subr.mxu0 0.0
    %1669 = vmatpush1.msra.mxu0 %v232
    %1670 = vmatprep.subr.mxu0 0.0
    %1671 = vmatpush1.msra.mxu0 %v233
    %1672 = vmatprep.subr.mxu0 0.0
    %1673 = vmatpush1.msra.mxu0 %v234
    %1674 = vmatprep.subr.mxu0 0.0
    %1675 = vmatpush1.msra.mxu0 %v235
    %1676 = vmatprep.subr.mxu0 0.0
    %1677 = vmatpush1.msra.mxu0 %v236
    %1678 = vmatprep.subr.mxu0 0.0
    %1679 = vmatpush1.msra.mxu0 %v237
    %1680 = vmatprep.subr.mxu0 0.0
    %1681 = vmatpush1.msra.mxu0 %v238
    %1682 = vmatprep.subr.mxu0 0.0
    %1683 = vmatpush1.msra.mxu0 %v239
    %1684 = vmatprep.subr.mxu0 0.0
    %1685 = vmatpush1.msra.mxu0 %v240
    %1686 = vmatprep.subr.mxu0 0.0
    %1687 = vmatpush1.msra.mxu0 %v241
    %1688 = vmatprep.subr.mxu0 0.0
    %1689 = vmatpush1.msra.mxu0 %v242
    %1690 = vmatprep.subr.mxu0 0.0
    %1691 = vmatpush1.msra.mxu0 %v243
    %1692 = vmatprep.subr.mxu0 0.0
    %1693 = vmatpush1.msra.mxu0 %v244
    %1694 = vmatprep.subr.mxu0 0.0
    %1695 = vmatpush1.msra.mxu0 %v245
    %1696 = vmatprep.subr.mxu0 0.0
    %1697 = vmatpush1.msra.mxu0 %v246
    %1698 = vmatprep.subr.mxu0 0.0
    %1699 = vmatpush1.msra.mxu0 %v247
    %1700 = vmatprep.subr.mxu0 0.0
    %1701 = vmatpush1.msra.mxu0 %v248
    %1702 = vmatprep.subr.mxu0 0.0
    %1703 = vmatpush1.msra.mxu0 %v249
    %1704 = vmatprep.subr.mxu0 0.0
    %1705 = vmatpush1.msra.mxu0 %v250
    %1706 = vmatprep.subr.mxu0 0.0
    %1707 = vmatpush1.msra.mxu0 %v251
    %1708 = vmatprep.subr.mxu0 0.0
    %1709 = vmatpush1.msra.mxu0 %v252
    %1710 = vmatprep.subr.mxu0 0.0
    %1711 = vmatpush1.msra.mxu0 %v253
    %1712 = vmatprep.subr.mxu0 0.0
    %1713 = vmatpush1.msra.mxu0 %v254
    %1714 = vmatprep.subr.mxu0 0.0
    %1715 = vmatpush1.msra.mxu0 %v255
    %1716 = vmatprep.subr.mxu0 0.0
    %1717 = vmatpush1.msra.mxu0 %v256
    %1718 = vmatprep.subr.mxu0 0.0
    %1719 = vmatpush1.msra.mxu0 %v257
    %1720 = vmatprep.mubr.f32.mxu0 %v1154
    %1721 = vmatmul.mubr.f32.gmra.mrb[0].mxu0 %v1152
    %v1722 = vpop.f32.mrb[0].mxu0
    %v1723 = vadd.f32 %v1653, %v1722
    %v1724 = vpop.f32.mrb[0].mxu0
    %1725 = vdwg.mxu0
    %1726 = vmatprep.subr.mxu0 0.0
    %1727 = vmatpush1.msra.mxu0 %v258
    %1728 = vmatprep.subr.mxu0 0.0
    %1729 = vmatpush1.msra.mxu0 %v259
    %1730 = vmatprep.subr.mxu0 0.0
    %1731 = vmatpush1.msra.mxu0 %v260
    %1732 = vmatprep.subr.mxu0 0.0
    %1733 = vmatpush1.msra.mxu0 %v261
    %1734 = vmatprep.subr.mxu0 0.0
    %1735 = vmatpush1.msra.mxu0 %v262
    %1736 = vmatprep.subr.mxu0 0.0
    %1737 = vmatpush1.msra.mxu0 %v263
    %1738 = vmatprep.subr.mxu0 0.0
    %1739 = vmatpush1.msra.mxu0 %v264
    %1740 = vmatprep.subr.mxu0 0.0
    %1741 = vmatpush1.msra.mxu0 %v265
    %1742 = vmatprep.subr.mxu0 0.0
    %1743 = vmatpush1.msra.mxu0 %v266
    %1744 = vmatprep.subr.mxu0 0.0
    %1745 = vmatpush1.msra.mxu0 %v267
    %1746 = vmatprep.subr.mxu0 0.0
    %1747 = vmatpush1.msra.mxu0 %v268
    %1748 = vmatprep.subr.mxu0 0.0
    %1749 = vmatpush1.msra.mxu0 %v269
    %1750 = vmatprep.subr.mxu0 0.0
    %1751 = vmatpush1.msra.mxu0 %v270
    %1752 = vmatprep.subr.mxu0 0.0
    %1753 = vmatpush1.msra.mxu0 %v271
    %1754 = vmatprep.subr.mxu0 0.0
    %1755 = vmatpush1.msra.mxu0 %v272
    %1756 = vmatprep.subr.mxu0 0.0
    %1757 = vmatpush1.msra.mxu0 %v273
    %1758 = vmatprep.subr.mxu0 0.0
    %1759 = vmatpush1.msra.mxu0 %v274
    %1760 = vmatprep.subr.mxu0 0.0
    %1761 = vmatpush1.msra.mxu0 %v275
    %1762 = vmatprep.subr.mxu0 0.0
    %1763 = vmatpush1.msra.mxu0 %v276
    %1764 = vmatprep.subr.mxu0 0.0
    %1765 = vmatpush1.msra.mxu0 %v277
    %1766 = vmatprep.subr.mxu0 0.0
    %1767 = vmatpush1.msra.mxu0 %v278
    %1768 = vmatprep.subr.mxu0 0.0
    %1769 = vmatpush1.msra.mxu0 %v279
    %1770 = vmatprep.subr.mxu0 0.0
    %1771 = vmatpush1.msra.mxu0 %v280
    %1772 = vmatprep.subr.mxu0 0.0
    %1773 = vmatpush1.msra.mxu0 %v281
    %1774 = vmatprep.subr.mxu0 0.0
    %1775 = vmatpush1.msra.mxu0 %v282
    %1776 = vmatprep.subr.mxu0 0.0
    %1777 = vmatpush1.msra.mxu0 %v283
    %1778 = vmatprep.subr.mxu0 0.0
    %1779 = vmatpush1.msra.mxu0 %v284
    %1780 = vmatprep.subr.mxu0 0.0
    %1781 = vmatpush1.msra.mxu0 %v285
    %1782 = vmatprep.subr.mxu0 0.0
    %1783 = vmatpush1.msra.mxu0 %v286
    %1784 = vmatprep.subr.mxu0 0.0
    %1785 = vmatpush1.msra.mxu0 %v287
    %1786 = vmatprep.subr.mxu0 0.0
    %1787 = vmatpush1.msra.mxu0 %v288
    %1788 = vmatprep.subr.mxu0 0.0
    %1789 = vmatpush1.msra.mxu0 %v289
    %1790 = vmatprep.mubr.f32.mxu0 %v1170
    %1791 = vmatmul.mubr.f32.gmra.mrb[0].mxu0 %v1162
    %v1792 = vpop.f32.mrb[0].mxu0
    %v1793 = vadd.f32 %v1723, %v1792
    %v1794 = vpop.f32.mrb[0].mxu0
    %1795 = vdwg.mxu0
    %1796 = vmatprep.subr.mxu0 0.0
    %1797 = vmatpush1.msra.mxu0 %v290
    %1798 = vmatprep.subr.mxu0 0.0
    %1799 = vmatpush1.msra.mxu0 %v291
    %1800 = vmatprep.subr.mxu0 0.0
    %1801 = vmatpush1.msra.mxu0 %v292
    %1802 = vmatprep.subr.mxu0 0.0
    %1803 = vmatpush1.msra.mxu0 %v293
    %1804 = vmatprep.subr.mxu0 0.0
    %1805 = vmatpush1.msra.mxu0 %v294
    %1806 = vmatprep.subr.mxu0 0.0
    %1807 = vmatpush1.msra.mxu0 %v295
    %1808 = vmatprep.subr.mxu0 0.0
    %1809 = vmatpush1.msra.mxu0 %v296
    %1810 = vmatprep.subr.mxu0 0.0
    %1811 = vmatpush1.msra.mxu0 %v297
    %1812 = vmatprep.subr.mxu0 0.0
    %1813 = vmatpush1.msra.mxu0 %v298
    %1814 = vmatprep.subr.mxu0 0.0
    %1815 = vmatpush1.msra.mxu0 %v299
    %1816 = vmatprep.subr.mxu0 0.0
    %1817 = vmatpush1.msra.mxu0 %v300
    %1818 = vmatprep.subr.mxu0 0.0
    %1819 = vmatpush1.msra.mxu0 %v301
    %1820 = vmatprep.subr.mxu0 0.0
    %1821 = vmatpush1.msra.mxu0 %v302
    %1822 = vmatprep.subr.mxu0 0.0
    %1823 = vmatpush1.msra.mxu0 %v303
    %1824 = vmatprep.subr.mxu0 0.0
    %1825 = vmatpush1.msra.mxu0 %v304
    %1826 = vmatprep.subr.mxu0 0.0
    %1827 = vmatpush1.msra.mxu0 %v305
    %1828 = vmatprep.subr.mxu0 0.0
    %1829 = vmatpush1.msra.mxu0 %v306
    %1830 = vmatprep.subr.mxu0 0.0
    %1831 = vmatpush1.msra.mxu0 %v307
    %1832 = vmatprep.subr.mxu0 0.0
    %1833 = vmatpush1.msra.mxu0 %v308
    %1834 = vmatprep.subr.mxu0 0.0
    %1835 = vmatpush1.msra.mxu0 %v309
    %1836 = vmatprep.subr.mxu0 0.0
    %1837 = vmatpush1.msra.mxu0 %v310
    %1838 = vmatprep.subr.mxu0 0.0
    %1839 = vmatpush1.msra.mxu0 %v311
    %1840 = vmatprep.subr.mxu0 0.0
    %1841 = vmatpush1.msra.mxu0 %v312
    %1842 = vmatprep.subr.mxu0 0.0
    %1843 = vmatpush1.msra.mxu0 %v313
    %1844 = vmatprep.subr.mxu0 0.0
    %1845 = vmatpush1.msra.mxu0 %v314
    %1846 = vmatprep.subr.mxu0 0.0
    %1847 = vmatpush1.msra.mxu0 %v315
    %1848 = vmatprep.subr.mxu0 0.0
    %1849 = vmatpush1.msra.mxu0 %v316
    %1850 = vmatprep.subr.mxu0 0.0
    %1851 = vmatpush1.msra.mxu0 %v317
    %1852 = vmatprep.subr.mxu0 0.0
    %1853 = vmatpush1.msra.mxu0 %v318
    %1854 = vmatprep.subr.mxu0 0.0
    %1855 = vmatpush1.msra.mxu0 %v319
    %1856 = vmatprep.subr.mxu0 0.0
    %1857 = vmatpush1.msra.mxu0 %v320
    %1858 = vmatprep.subr.mxu0 0.0
    %1859 = vmatpush1.msra.mxu0 %v321
    %1860 = vmatprep.mubr.f32.mxu0 %v1171
    %1861 = vmatmul.mubr.f32.gmra.mrb[0].mxu0 %v1169
    %v1862 = vpop.f32.mrb[0].mxu0
    %v1863 = vadd.f32 %v1793, %v1862
    %v1864 = vpop.f32.mrb[0].mxu0
    %1865 = vdwg.mxu0
    %1866 = vmatprep.subr.mxu0 0.0
    %1867 = vmatpush1.msra.mxu0 %v322
    %1868 = vmatprep.subr.mxu0 0.0
    %1869 = vmatpush1.msra.mxu0 %v323
    %1870 = vmatprep.subr.mxu0 0.0
    %1871 = vmatpush1.msra.mxu0 %v324
    %1872 = vmatprep.subr.mxu0 0.0
    %1873 = vmatpush1.msra.mxu0 %v325
    %1874 = vmatprep.subr.mxu0 0.0
    %1875 = vmatpush1.msra.mxu0 %v326
    %1876 = vmatprep.subr.mxu0 0.0
    %1877 = vmatpush1.msra.mxu0 %v327
    %1878 = vmatprep.subr.mxu0 0.0
    %1879 = vmatpush1.msra.mxu0 %v328
    %1880 = vmatprep.subr.mxu0 0.0
    %1881 = vmatpush1.msra.mxu0 %v329
    %1882 = vmatprep.subr.mxu0 0.0
    %1883 = vmatpush1.msra.mxu0 %v330
    %1884 = vmatprep.subr.mxu0 0.0
    %1885 = vmatpush1.msra.mxu0 %v331
    %1886 = vmatprep.subr.mxu0 0.0
    %1887 = vmatpush1.msra.mxu0 %v332
    %1888 = vmatprep.subr.mxu0 0.0
    %1889 = vmatpush1.msra.mxu0 %v333
    %1890 = vmatprep.subr.mxu0 0.0
    %1891 = vmatpush1.msra.mxu0 %v334
    %1892 = vmatprep.subr.mxu0 0.0
    %1893 = vmatpush1.msra.mxu0 %v335
    %1894 = vmatprep.subr.mxu0 0.0
    %1895 = vmatpush1.msra.mxu0 %v336
    %1896 = vmatprep.subr.mxu0 0.0
    %1897 = vmatpush1.msra.mxu0 %v337
    %1898 = vmatprep.subr.mxu0 0.0
    %1899 = vmatpush1.msra.mxu0 %v338
    %1900 = vmatprep.subr.mxu0 0.0
    %1901 = vmatpush1.msra.mxu0 %v339
    %1902 = vmatprep.subr.mxu0 0.0
    %1903 = vmatpush1.msra.mxu0 %v340
    %1904 = vmatprep.subr.mxu0 0.0
    %1905 = vmatpush1.msra.mxu0 %v341
    %1906 = vmatprep.subr.mxu0 0.0
    %1907 = vmatpush1.msra.mxu0 %v342
    %1908 = vmatprep.subr.mxu0 0.0
    %1909 = vmatpush1.msra.mxu0 %v343
    %1910 = vmatprep.subr.mxu0 0.0
    %1911 = vmatpush1.msra.mxu0 %v344
    %1912 = vmatprep.subr.mxu0 0.0
    %1913 = vmatpush1.msra.mxu0 %v345
    %1914 = vmatprep.subr.mxu0 0.0
    %1915 = vmatpush1.msra.mxu0 %v346
    %1916 = vmatprep.subr.mxu0 0.0
    %1917 = vmatpush1.msra.mxu0 %v347
    %1918 = vmatprep.subr.mxu0 0.0
    %1919 = vmatpush1.msra.mxu0 %v348
    %1920 = vmatprep.subr.mxu0 0.0
    %1921 = vmatpush1.msra.mxu0 %v349
    %1922 = vmatprep.subr.mxu0 0.0
    %1923 = vmatpush1.msra.mxu0 %v350
    %1924 = vmatprep.subr.mxu0 0.0
    %1925 = vmatpush1.msra.mxu0 %v351
    %1926 = vmatprep.subr.mxu0 0.0
    %1927 = vmatpush1.msra.mxu0 %v352
    %1928 = vmatprep.subr.mxu0 0.0
    %1929 = vmatpush1.msra.mxu0 %v353
    %1930 = vmatprep.mubr.f32.mxu0 %v1187
    %1931 = vmatmul.mubr.f32.gmra.mrb[0].mxu0 %v1179
    %v1932 = vpop.f32.mrb[0].mxu0
    %v1933 = vadd.f32 %v1863, %v1932
    %v1934 = vpop.f32.mrb[0].mxu0
    %1935 = vdwg.mxu0
    %1936 = vmatprep.subr.mxu0 0.0
    %1937 = vmatpush1.msra.mxu0 %v354
    %1938 = vmatprep.subr.mxu0 0.0
    %1939 = vmatpush1.msra.mxu0 %v355
    %1940 = vmatprep.subr.mxu0 0.0
    %1941 = vmatpush1.msra.mxu0 %v356
    %1942 = vmatprep.subr.mxu0 0.0
    %1943 = vmatpush1.msra.mxu0 %v357
    %1944 = vmatprep.subr.mxu0 0.0
    %1945 = vmatpush1.msra.mxu0 %v358
    %1946 = vmatprep.subr.mxu0 0.0
    %1947 = vmatpush1.msra.mxu0 %v359
    %1948 = vmatprep.subr.mxu0 0.0
    %1949 = vmatpush1.msra.mxu0 %v360
    %1950 = vmatprep.subr.mxu0 0.0
    %1951 = vmatpush1.msra.mxu0 %v361
    %1952 = vmatprep.subr.mxu0 0.0
    %1953 = vmatpush1.msra.mxu0 %v362
    %1954 = vmatprep.subr.mxu0 0.0
    %1955 = vmatpush1.msra.mxu0 %v363
    %1956 = vmatprep.subr.mxu0 0.0
    %1957 = vmatpush1.msra.mxu0 %v364
    %1958 = vmatprep.subr.mxu0 0.0
    %1959 = vmatpush1.msra.mxu0 %v365
    %1960 = vmatprep.subr.mxu0 0.0
    %1961 = vmatpush1.msra.mxu0 %v366
    %1962 = vmatprep.subr.mxu0 0.0
    %1963 = vmatpush1.msra.mxu0 %v367
    %1964 = vmatprep.subr.mxu0 0.0
    %1965 = vmatpush1.msra.mxu0 %v368
    %1966 = vmatprep.subr.mxu0 0.0
    %1967 = vmatpush1.msra.mxu0 %v369
    %1968 = vmatprep.subr.mxu0 0.0
    %1969 = vmatpush1.msra.mxu0 %v370
    %1970 = vmatprep.subr.mxu0 0.0
    %1971 = vmatpush1.msra.mxu0 %v371
    %1972 = vmatprep.subr.mxu0 0.0
    %1973 = vmatpush1.msra.mxu0 %v372
    %1974 = vmatprep.subr.mxu0 0.0
    %1975 = vmatpush1.msra.mxu0 %v373
    %1976 = vmatprep.subr.mxu0 0.0
    %1977 = vmatpush1.msra.mxu0 %v374
    %1978 = vmatprep.subr.mxu0 0.0
    %1979 = vmatpush1.msra.mxu0 %v375
    %1980 = vmatprep.subr.mxu0 0.0
    %1981 = vmatpush1.msra.mxu0 %v376
    %1982 = vmatprep.subr.mxu0 0.0
    %1983 = vmatpush1.msra.mxu0 %v377
    %1984 = vmatprep.subr.mxu0 0.0
    %1985 = vmatpush1.msra.mxu0 %v378
    %1986 = vmatprep.subr.mxu0 0.0
    %1987 = vmatpush1.msra.mxu0 %v379
    %1988 = vmatprep.subr.mxu0 0.0
    %1989 = vmatpush1.msra.mxu0 %v380
    %1990 = vmatprep.subr.mxu0 0.0
    %1991 = vmatpush1.msra.mxu0 %v381
    %1992 = vmatprep.subr.mxu0 0.0
    %1993 = vmatpush1.msra.mxu0 %v382
    %1994 = vmatprep.subr.mxu0 0.0
    %1995 = vmatpush1.msra.mxu0 %v383
    %1996 = vmatprep.subr.mxu0 0.0
    %1997 = vmatpush1.msra.mxu0 %v384
    %1998 = vmatprep.subr.mxu0 0.0
    %1999 = vmatpush1.msra.mxu0 %v385
    %2000 = vmatprep.mubr.f32.mxu0 %v1188
    %2001 = vmatmul.mubr.f32.gmra.mrb[0].mxu0 %v1186
    %v2002 = vpop.f32.mrb[0].mxu0
    %v2003 = vadd.f32 %v1933, %v2002
    %v2004 = vpop.f32.mrb[0].mxu0
    %2005 = vdwg.mxu0
    %2006 = vmatprep.subr.mxu0 0.0
    %2007 = vmatpush1.msra.mxu0 %v386
    %2008 = vmatprep.subr.mxu0 0.0
    %2009 = vmatpush1.msra.mxu0 %v387
    %2010 = vmatprep.subr.mxu0 0.0
    %2011 = vmatpush1.msra.mxu0 %v388
    %2012 = vmatprep.subr.mxu0 0.0
    %2013 = vmatpush1.msra.mxu0 %v389
    %2014 = vmatprep.subr.mxu0 0.0
    %2015 = vmatpush1.msra.mxu0 %v390
    %2016 = vmatprep.subr.mxu0 0.0
    %2017 = vmatpush1.msra.mxu0 %v391
    %2018 = vmatprep.subr.mxu0 0.0
    %2019 = vmatpush1.msra.mxu0 %v392
    %2020 = vmatprep.subr.mxu0 0.0
    %2021 = vmatpush1.msra.mxu0 %v393
    %2022 = vmatprep.subr.mxu0 0.0
    %2023 = vmatpush1.msra.mxu0 %v394
    %2024 = vmatprep.subr.mxu0 0.0
    %2025 = vmatpush1.msra.mxu0 %v395
    %2026 = vmatprep.subr.mxu0 0.0
    %2027 = vmatpush1.msra.mxu0 %v396
    %2028 = vmatprep.subr.mxu0 0.0
    %2029 = vmatpush1.msra.mxu0 %v397
    %2030 = vmatprep.subr.mxu0 0.0
    %2031 = vmatpush1.msra.mxu0 %v398
    %2032 = vmatprep.subr.mxu0 0.0
    %2033 = vmatpush1.msra.mxu0 %v399
    %2034 = vmatprep.subr.mxu0 0.0
    %2035 = vmatpush1.msra.mxu0 %v400
    %2036 = vmatprep.subr.mxu0 0.0
    %2037 = vmatpush1.msra.mxu0 %v401
    %2038 = vmatprep.subr.mxu0 0.0
    %2039 = vmatpush1.msra.mxu0 %v402
    %2040 = vmatprep.subr.mxu0 0.0
    %2041 = vmatpush1.msra.mxu0 %v403
    %2042 = vmatprep.subr.mxu0 0.0
    %2043 = vmatpush1.msra.mxu0 %v404
    %2044 = vmatprep.subr.mxu0 0.0
    %2045 = vmatpush1.msra.mxu0 %v405
    %2046 = vmatprep.subr.mxu0 0.0
    %2047 = vmatpush1.msra.mxu0 %v406
    %2048 = vmatprep.subr.mxu0 0.0
    %2049 = vmatpush1.msra.mxu0 %v407
    %2050 = vmatprep.subr.mxu0 0.0
    %2051 = vmatpush1.msra.mxu0 %v408
    %2052 = vmatprep.subr.mxu0 0.0
    %2053 = vmatpush1.msra.mxu0 %v409
    %2054 = vmatprep.subr.mxu0 0.0
    %2055 = vmatpush1.msra.mxu0 %v410
    %2056 = vmatprep.subr.mxu0 0.0
    %2057 = vmatpush1.msra.mxu0 %v411
    %2058 = vmatprep.subr.mxu0 0.0
    %2059 = vmatpush1.msra.mxu0 %v412
    %2060 = vmatprep.subr.mxu0 0.0
    %2061 = vmatpush1.msra.mxu0 %v413
    %2062 = vmatprep.subr.mxu0 0.0
    %2063 = vmatpush1.msra.mxu0 %v414
    %2064 = vmatprep.subr.mxu0 0.0
    %2065 = vmatpush1.msra.mxu0 %v415
    %2066 = vmatprep.subr.mxu0 0.0
    %2067 = vmatpush1.msra.mxu0 %v416
    %2068 = vmatprep.subr.mxu0 0.0
    %2069 = vmatpush1.msra.mxu0 %v417
    %2070 = vmatprep.mubr.f32.mxu0 %v1204
    %2071 = vmatmul.mubr.f32.gmra.mrb[0].mxu0 %v1196
    %v2072 = vpop.f32.mrb[0].mxu0
    %v2073 = vadd.f32 %v2003, %v2072
    %v2074 = vpop.f32.mrb[0].mxu0
    %2075 = vdwg.mxu0
    %2076 = vmatprep.subr.mxu0 0.0
    %2077 = vmatpush1.msra.mxu0 %v418
    %2078 = vmatprep.subr.mxu0 0.0
    %2079 = vmatpush1.msra.mxu0 %v419
    %2080 = vmatprep.subr.mxu0 0.0
    %2081 = vmatpush1.msra.mxu0 %v420
    %2082 = vmatprep.subr.mxu0 0.0
    %2083 = vmatpush1.msra.mxu0 %v421
    %2084 = vmatprep.subr.mxu0 0.0
    %2085 = vmatpush1.msra.mxu0 %v422
    %2086 = vmatprep.subr.mxu0 0.0
    %2087 = vmatpush1.msra.mxu0 %v423
    %2088 = vmatprep.subr.mxu0 0.0
    %2089 = vmatpush1.msra.mxu0 %v424
    %2090 = vmatprep.subr.mxu0 0.0
    %2091 = vmatpush1.msra.mxu0 %v425
    %2092 = vmatprep.subr.mxu0 0.0
    %2093 = vmatpush1.msra.mxu0 %v426
    %2094 = vmatprep.subr.mxu0 0.0
    %2095 = vmatpush1.msra.mxu0 %v427
    %2096 = vmatprep.subr.mxu0 0.0
    %2097 = vmatpush1.msra.mxu0 %v428
    %2098 = vmatprep.subr.mxu0 0.0
    %2099 = vmatpush1.msra.mxu0 %v429
    %2100 = vmatprep.subr.mxu0 0.0
    %2101 = vmatpush1.msra.mxu0 %v430
    %2102 = vmatprep.subr.mxu0 0.0
    %2103 = vmatpush1.msra.mxu0 %v431
    %2104 = vmatprep.subr.mxu0 0.0
    %2105 = vmatpush1.msra.mxu0 %v432
    %2106 = vmatprep.subr.mxu0 0.0
    %2107 = vmatpush1.msra.mxu0 %v433
    %2108 = vmatprep.subr.mxu0 0.0
    %2109 = vmatpush1.msra.mxu0 %v434
    %2110 = vmatprep.subr.mxu0 0.0
    %2111 = vmatpush1.msra.mxu0 %v435
    %2112 = vmatprep.subr.mxu0 0.0
    %2113 = vmatpush1.msra.mxu0 %v436
    %2114 = vmatprep.subr.mxu0 0.0
    %2115 = vmatpush1.msra.mxu0 %v437
    %2116 = vmatprep.subr.mxu0 0.0
    %2117 = vmatpush1.msra.mxu0 %v438
    %2118 = vmatprep.subr.mxu0 0.0
    %2119 = vmatpush1.msra.mxu0 %v439
    %2120 = vmatprep.subr.mxu0 0.0
    %2121 = vmatpush1.msra.mxu0 %v440
    %2122 = vmatprep.subr.mxu0 0.0
    %2123 = vmatpush1.msra.mxu0 %v441
    %2124 = vmatprep.subr.mxu0 0.0
    %2125 = vmatpush1.msra.mxu0 %v442
    %2126 = vmatprep.subr.mxu0 0.0
    %2127 = vmatpush1.msra.mxu0 %v443
    %2128 = vmatprep.subr.mxu0 0.0
    %2129 = vmatpush1.msra.mxu0 %v444
    %2130 = vmatprep.subr.mxu0 0.0
    %2131 = vmatpush1.msra.mxu0 %v445
    %2132 = vmatprep.subr.mxu0 0.0
    %2133 = vmatpush1.msra.mxu0 %v446
    %2134 = vmatprep.subr.mxu0 0.0
    %2135 = vmatpush1.msra.mxu0 %v447
    %2136 = vmatprep.subr.mxu0 0.0
    %2137 = vmatpush1.msra.mxu0 %v448
    %2138 = vmatprep.subr.mxu0 0.0
    %2139 = vmatpush1.msra.mxu0 %v449
    %2140 = vmatprep.mubr.f32.mxu0 %v1205
    %2141 = vmatmul.mubr.f32.gmra.mrb[0].mxu0 %v1203
    %v2142 = vpop.f32.mrb[0].mxu0
    %v2143 = vadd.f32 %v2073, %v2142
    %v2144 = vpop.f32.mrb[0].mxu0
    %2145 = vdwg.mxu0
    %2146 = vmatprep.subr.mxu0 0.0
    %2147 = vmatpush1.msra.mxu0 %v450
    %2148 = vmatprep.subr.mxu0 0.0
    %2149 = vmatpush1.msra.mxu0 %v451
    %2150 = vmatprep.subr.mxu0 0.0
    %2151 = vmatpush1.msra.mxu0 %v452
    %2152 = vmatprep.subr.mxu0 0.0
    %2153 = vmatpush1.msra.mxu0 %v453
    %2154 = vmatprep.subr.mxu0 0.0
    %2155 = vmatpush1.msra.mxu0 %v454
    %2156 = vmatprep.subr.mxu0 0.0
    %2157 = vmatpush1.msra.mxu0 %v455
    %2158 = vmatprep.subr.mxu0 0.0
    %2159 = vmatpush1.msra.mxu0 %v456
    %2160 = vmatprep.subr.mxu0 0.0
    %2161 = vmatpush1.msra.mxu0 %v457
    %2162 = vmatprep.subr.mxu0 0.0
    %2163 = vmatpush1.msra.mxu0 %v458
    %2164 = vmatprep.subr.mxu0 0.0
    %2165 = vmatpush1.msra.mxu0 %v459
    %2166 = vmatprep.subr.mxu0 0.0
    %2167 = vmatpush1.msra.mxu0 %v460
    %2168 = vmatprep.subr.mxu0 0.0
    %2169 = vmatpush1.msra.mxu0 %v461
    %2170 = vmatprep.subr.mxu0 0.0
    %2171 = vmatpush1.msra.mxu0 %v462
    %2172 = vmatprep.subr.mxu0 0.0
    %2173 = vmatpush1.msra.mxu0 %v463
    %2174 = vmatprep.subr.mxu0 0.0
    %2175 = vmatpush1.msra.mxu0 %v464
    %2176 = vmatprep.subr.mxu0 0.0
    %2177 = vmatpush1.msra.mxu0 %v465
    %2178 = vmatprep.subr.mxu0 0.0
    %2179 = vmatpush1.msra.mxu0 %v466
    %2180 = vmatprep.subr.mxu0 0.0
    %2181 = vmatpush1.msra.mxu0 %v467
    %2182 = vmatprep.subr.mxu0 0.0
    %2183 = vmatpush1.msra.mxu0 %v468
    %2184 = vmatprep.subr.mxu0 0.0
    %2185 = vmatpush1.msra.mxu0 %v469
    %2186 = vmatprep.subr.mxu0 0.0
    %2187 = vmatpush1.msra.mxu0 %v470
    %2188 = vmatprep.subr.mxu0 0.0
    %2189 = vmatpush1.msra.mxu0 %v471
    %2190 = vmatprep.subr.mxu0 0.0
    %2191 = vmatpush1.msra.mxu0 %v472
    %2192 = vmatprep.subr.mxu0 0.0
    %2193 = vmatpush1.msra.mxu0 %v473
    %2194 = vmatprep.subr.mxu0 0.0
    %2195 = vmatpush1.msra.mxu0 %v474
    %2196 = vmatprep.subr.mxu0 0.0
    %2197 = vmatpush1.msra.mxu0 %v475
    %2198 = vmatprep.subr.mxu0 0.0
    %2199 = vmatpush1.msra.mxu0 %v476
    %2200 = vmatprep.subr.mxu0 0.0
    %2201 = vmatpush1.msra.mxu0 %v477
    %2202 = vmatprep.subr.mxu0 0.0
    %2203 = vmatpush1.msra.mxu0 %v478
    %2204 = vmatprep.subr.mxu0 0.0
    %2205 = vmatpush1.msra.mxu0 %v479
    %2206 = vmatprep.subr.mxu0 0.0
    %2207 = vmatpush1.msra.mxu0 %v480
    %2208 = vmatprep.subr.mxu0 0.0
    %2209 = vmatpush1.msra.mxu0 %v481
    %2210 = vmatprep.mubr.f32.mxu0 %v1221
    %2211 = vmatmul.mubr.f32.gmra.mrb[0].mxu0 %v1213
    %v2212 = vpop.f32.mrb[0].mxu0
    %v2213 = vadd.f32 %v2143, %v2212
    %v2214 = vpop.f32.mrb[0].mxu0
    %2215 = vdwg.mxu0
    %2216 = vmatprep.subr.mxu0 0.0
    %2217 = vmatpush1.msra.mxu0 %v482
    %2218 = vmatprep.subr.mxu0 0.0
    %2219 = vmatpush1.msra.mxu0 %v483
    %2220 = vmatprep.subr.mxu0 0.0
    %2221 = vmatpush1.msra.mxu0 %v484
    %2222 = vmatprep.subr.mxu0 0.0
    %2223 = vmatpush1.msra.mxu0 %v485
    %2224 = vmatprep.subr.mxu0 0.0
    %2225 = vmatpush1.msra.mxu0 %v486
    %2226 = vmatprep.subr.mxu0 0.0
    %2227 = vmatpush1.msra.mxu0 %v487
    %2228 = vmatprep.subr.mxu0 0.0
    %2229 = vmatpush1.msra.mxu0 %v488
    %2230 = vmatprep.subr.mxu0 0.0
    %2231 = vmatpush1.msra.mxu0 %v489
    %2232 = vmatprep.subr.mxu0 0.0
    %2233 = vmatpush1.msra.mxu0 %v490
    %2234 = vmatprep.subr.mxu0 0.0
    %2235 = vmatpush1.msra.mxu0 %v491
    %2236 = vmatprep.subr.mxu0 0.0
    %2237 = vmatpush1.msra.mxu0 %v492
    %2238 = vmatprep.subr.mxu0 0.0
    %2239 = vmatpush1.msra.mxu0 %v493
    %2240 = vmatprep.subr.mxu0 0.0
    %2241 = vmatpush1.msra.mxu0 %v494
    %2242 = vmatprep.subr.mxu0 0.0
    %2243 = vmatpush1.msra.mxu0 %v495
    %2244 = vmatprep.subr.mxu0 0.0
    %2245 = vmatpush1.msra.mxu0 %v496
    %2246 = vmatprep.subr.mxu0 0.0
    %2247 = vmatpush1.msra.mxu0 %v497
    %2248 = vmatprep.subr.mxu0 0.0
    %2249 = vmatpush1.msra.mxu0 %v498
    %2250 = vmatprep.subr.mxu0 0.0
    %2251 = vmatpush1.msra.mxu0 %v499
    %2252 = vmatprep.subr.mxu0 0.0
    %2253 = vmatpush1.msra.mxu0 %v500
    %2254 = vmatprep.subr.mxu0 0.0
    %2255 = vmatpush1.msra.mxu0 %v501
    %2256 = vmatprep.subr.mxu0 0.0
    %2257 = vmatpush1.msra.mxu0 %v502
    %2258 = vmatprep.subr.mxu0 0.0
    %2259 = vmatpush1.msra.mxu0 %v503
    %2260 = vmatprep.subr.mxu0 0.0
    %2261 = vmatpush1.msra.mxu0 %v504
    %2262 = vmatprep.subr.mxu0 0.0
    %2263 = vmatpush1.msra.mxu0 %v505
    %2264 = vmatprep.subr.mxu0 0.0
    %2265 = vmatpush1.msra.mxu0 %v506
    %2266 = vmatprep.subr.mxu0 0.0
    %2267 = vmatpush1.msra.mxu0 %v507
    %2268 = vmatprep.subr.mxu0 0.0
    %2269 = vmatpush1.msra.mxu0 %v508
    %2270 = vmatprep.subr.mxu0 0.0
    %2271 = vmatpush1.msra.mxu0 %v509
    %2272 = vmatprep.subr.mxu0 0.0
    %2273 = vmatpush1.msra.mxu0 %v510
    %2274 = vmatprep.subr.mxu0 0.0
    %2275 = vmatpush1.msra.mxu0 %v511
    %2276 = vmatprep.subr.mxu0 0.0
    %2277 = vmatpush1.msra.mxu0 %v512
    %2278 = vmatprep.subr.mxu0 0.0
    %2279 = vmatpush1.msra.mxu0 %v513
    %2280 = vmatprep.mubr.f32.mxu0 %v1222
    %2281 = vmatmul.mubr.f32.gmra.mrb[0].mxu0 %v1220
    %v2282 = vpop.f32.mrb[0].mxu0
    %v2283 = vadd.f32 %v2213, %v2282
    %v2284 = vpop.f32.mrb[0].mxu0
    %2285 = vdwg.mxu0
    %2286 = vmatprep.subr.mxu0 0.0
    %2287 = vmatpush1.msra.mxu0 %v514
    %2288 = vmatprep.subr.mxu0 0.0
    %2289 = vmatpush1.msra.mxu0 %v515
    %2290 = vmatprep.subr.mxu0 0.0
    %2291 = vmatpush1.msra.mxu0 %v516
    %2292 = vmatprep.subr.mxu0 0.0
    %2293 = vmatpush1.msra.mxu0 %v517
    %2294 = vmatprep.subr.mxu0 0.0
    %2295 = vmatpush1.msra.mxu0 %v518
    %2296 = vmatprep.subr.mxu0 0.0
    %2297 = vmatpush1.msra.mxu0 %v519
    %2298 = vmatprep.subr.mxu0 0.0
    %2299 = vmatpush1.msra.mxu0 %v520
    %2300 = vmatprep.subr.mxu0 0.0
    %2301 = vmatpush1.msra.mxu0 %v521
    %2302 = vmatprep.subr.mxu0 0.0
    %2303 = vmatpush1.msra.mxu0 %v522
    %2304 = vmatprep.subr.mxu0 0.0
    %2305 = vmatpush1.msra.mxu0 %v523
    %2306 = vmatprep.subr.mxu0 0.0
    %2307 = vmatpush1.msra.mxu0 %v524
    %2308 = vmatprep.subr.mxu0 0.0
    %2309 = vmatpush1.msra.mxu0 %v525
    %2310 = vmatprep.subr.mxu0 0.0
    %2311 = vmatpush1.msra.mxu0 %v526
    %2312 = vmatprep.subr.mxu0 0.0
    %2313 = vmatpush1.msra.mxu0 %v527
    %2314 = vmatprep.subr.mxu0 0.0
    %2315 = vmatpush1.msra.mxu0 %v528
    %2316 = vmatprep.subr.mxu0 0.0
    %2317 = vmatpush1.msra.mxu0 %v529
    %2318 = vmatprep.subr.mxu0 0.0
    %2319 = vmatpush1.msra.mxu0 %v530
    %2320 = vmatprep.subr.mxu0 0.0
    %2321 = vmatpush1.msra.mxu0 %v531
    %2322 = vmatprep.subr.mxu0 0.0
    %2323 = vmatpush1.msra.mxu0 %v532
    %2324 = vmatprep.subr.mxu0 0.0
    %2325 = vmatpush1.msra.mxu0 %v533
    %2326 = vmatprep.subr.mxu0 0.0
    %2327 = vmatpush1.msra.mxu0 %v534
    %2328 = vmatprep.subr.mxu0 0.0
    %2329 = vmatpush1.msra.mxu0 %v535
    %2330 = vmatprep.subr.mxu0 0.0
    %2331 = vmatpush1.msra.mxu0 %v536
    %2332 = vmatprep.subr.mxu0 0.0
    %2333 = vmatpush1.msra.mxu0 %v537
    %2334 = vmatprep.subr.mxu0 0.0
    %2335 = vmatpush1.msra.mxu0 %v538
    %2336 = vmatprep.subr.mxu0 0.0
    %2337 = vmatpush1.msra.mxu0 %v539
    %2338 = vmatprep.subr.mxu0 0.0
    %2339 = vmatpush1.msra.mxu0 %v540
    %2340 = vmatprep.subr.mxu0 0.0
    %2341 = vmatpush1.msra.mxu0 %v541
    %2342 = vmatprep.subr.mxu0 0.0
    %2343 = vmatpush1.msra.mxu0 %v542
    %2344 = vmatprep.subr.mxu0 0.0
    %2345 = vmatpush1.msra.mxu0 %v543
    %2346 = vmatprep.subr.mxu0 0.0
    %2347 = vmatpush1.msra.mxu0 %v544
    %2348 = vmatprep.subr.mxu0 0.0
    %2349 = vmatpush1.msra.mxu0 %v545
    %2350 = vmatprep.mubr.f32.mxu0 %v1238
    %2351 = vmatmul.mubr.f32.gmra.mrb[0].mxu0 %v1230
    %v2352 = vpop.f32.mrb[0].mxu0
    %v2353 = vadd.f32 %v2283, %v2352
    %v2354 = vpop.f32.mrb[0].mxu0
    %2355 = vdwg.mxu0
    %2356 = vmatprep.subr.mxu0 0.0
    %2357 = vmatpush1.msra.mxu0 %v546
    %2358 = vmatprep.subr.mxu0 0.0
    %2359 = vmatpush1.msra.mxu0 %v547
    %2360 = vmatprep.subr.mxu0 0.0
    %2361 = vmatpush1.msra.mxu0 %v548
    %2362 = vmatprep.subr.mxu0 0.0
    %2363 = vmatpush1.msra.mxu0 %v549
    %2364 = vmatprep.subr.mxu0 0.0
    %2365 = vmatpush1.msra.mxu0 %v550
    %2366 = vmatprep.subr.mxu0 0.0
    %2367 = vmatpush1.msra.mxu0 %v551
    %2368 = vmatprep.subr.mxu0 0.0
    %2369 = vmatpush1.msra.mxu0 %v552
    %2370 = vmatprep.subr.mxu0 0.0
    %2371 = vmatpush1.msra.mxu0 %v553
    %2372 = vmatprep.subr.mxu0 0.0
    %2373 = vmatpush1.msra.mxu0 %v554
    %2374 = vmatprep.subr.mxu0 0.0
    %2375 = vmatpush1.msra.mxu0 %v555
    %2376 = vmatprep.subr.mxu0 0.0
    %2377 = vmatpush1.msra.mxu0 %v556
    %2378 = vmatprep.subr.mxu0 0.0
    %2379 = vmatpush1.msra.mxu0 %v557
    %2380 = vmatprep.subr.mxu0 0.0
    %2381 = vmatpush1.msra.mxu0 %v558
    %2382 = vmatprep.subr.mxu0 0.0
    %2383 = vmatpush1.msra.mxu0 %v559
    %2384 = vmatprep.subr.mxu0 0.0
    %2385 = vmatpush1.msra.mxu0 %v560
    %2386 = vmatprep.subr.mxu0 0.0
    %2387 = vmatpush1.msra.mxu0 %v561
    %2388 = vmatprep.subr.mxu0 0.0
    %2389 = vmatpush1.msra.mxu0 %v562
    %2390 = vmatprep.subr.mxu0 0.0
    %2391 = vmatpush1.msra.mxu0 %v563
    %2392 = vmatprep.subr.mxu0 0.0
    %2393 = vmatpush1.msra.mxu0 %v564
    %2394 = vmatprep.subr.mxu0 0.0
    %2395 = vmatpush1.msra.mxu0 %v565
    %2396 = vmatprep.subr.mxu0 0.0
    %2397 = vmatpush1.msra.mxu0 %v566
    %2398 = vmatprep.subr.mxu0 0.0
    %2399 = vmatpush1.msra.mxu0 %v567
    %2400 = vmatprep.subr.mxu0 0.0
    %2401 = vmatpush1.msra.mxu0 %v568
    %2402 = vmatprep.subr.mxu0 0.0
    %2403 = vmatpush1.msra.mxu0 %v569
    %2404 = vmatprep.subr.mxu0 0.0
    %2405 = vmatpush1.msra.mxu0 %v570
    %2406 = vmatprep.subr.mxu0 0.0
    %2407 = vmatpush1.msra.mxu0 %v571
    %2408 = vmatprep.subr.mxu0 0.0
    %2409 = vmatpush1.msra.mxu0 %v572
    %2410 = vmatprep.subr.mxu0 0.0
    %2411 = vmatpush1.msra.mxu0 %v573
    %2412 = vmatprep.subr.mxu0 0.0
    %2413 = vmatpush1.msra.mxu0 %v574
    %2414 = vmatprep.subr.mxu0 0.0
    %2415 = vmatpush1.msra.mxu0 %v575
    %2416 = vmatprep.subr.mxu0 0.0
    %2417 = vmatpush1.msra.mxu0 %v576
    %2418 = vmatprep.subr.mxu0 0.0
    %2419 = vmatpush1.msra.mxu0 %v577
    %2420 = vmatprep.mubr.f32.mxu0 %v1239
    %2421 = vmatmul.mubr.f32.gmra.mrb[0].mxu0 %v1237
    %v2422 = vpop.f32.mrb[0].mxu0
    %v2423 = vadd.f32 %v2353, %v2422
    %v2424 = vpop.f32.mrb[0].mxu0
    %2425 = vdwg.mxu0
    %2426 = vmatprep.subr.mxu0 0.0
    %2427 = vmatpush1.msra.mxu0 %v578
    %2428 = vmatprep.subr.mxu0 0.0
    %2429 = vmatpush1.msra.mxu0 %v579
    %2430 = vmatprep.subr.mxu0 0.0
    %2431 = vmatpush1.msra.mxu0 %v580
    %2432 = vmatprep.subr.mxu0 0.0
    %2433 = vmatpush1.msra.mxu0 %v581
    %2434 = vmatprep.subr.mxu0 0.0
    %2435 = vmatpush1.msra.mxu0 %v582
    %2436 = vmatprep.subr.mxu0 0.0
    %2437 = vmatpush1.msra.mxu0 %v583
    %2438 = vmatprep.subr.mxu0 0.0
    %2439 = vmatpush1.msra.mxu0 %v584
    %2440 = vmatprep.subr.mxu0 0.0
    %2441 = vmatpush1.msra.mxu0 %v585
    %2442 = vmatprep.subr.mxu0 0.0
    %2443 = vmatpush1.msra.mxu0 %v586
    %2444 = vmatprep.subr.mxu0 0.0
    %2445 = vmatpush1.msra.mxu0 %v587
    %2446 = vmatprep.subr.mxu0 0.0
    %2447 = vmatpush1.msra.mxu0 %v588
    %2448 = vmatprep.subr.mxu0 0.0
    %2449 = vmatpush1.msra.mxu0 %v589
    %2450 = vmatprep.subr.mxu0 0.0
    %2451 = vmatpush1.msra.mxu0 %v590
    %2452 = vmatprep.subr.mxu0 0.0
    %2453 = vmatpush1.msra.mxu0 %v591
    %2454 = vmatprep.subr.mxu0 0.0
    %2455 = vmatpush1.msra.mxu0 %v592
    %2456 = vmatprep.subr.mxu0 0.0
    %2457 = vmatpush1.msra.mxu0 %v593
    %2458 = vmatprep.subr.mxu0 0.0
    %2459 = vmatpush1.msra.mxu0 %v594
    %2460 = vmatprep.subr.mxu0 0.0
    %2461 = vmatpush1.msra.mxu0 %v595
    %2462 = vmatprep.subr.mxu0 0.0
    %2463 = vmatpush1.msra.mxu0 %v596
    %2464 = vmatprep.subr.mxu0 0.0
    %2465 = vmatpush1.msra.mxu0 %v597
    %2466 = vmatprep.subr.mxu0 0.0
    %2467 = vmatpush1.msra.mxu0 %v598
    %2468 = vmatprep.subr.mxu0 0.0
    %2469 = vmatpush1.msra.mxu0 %v599
    %2470 = vmatprep.subr.mxu0 0.0
    %2471 = vmatpush1.msra.mxu0 %v600
    %2472 = vmatprep.subr.mxu0 0.0
    %2473 = vmatpush1.msra.mxu0 %v601
    %2474 = vmatprep.subr.mxu0 0.0
    %2475 = vmatpush1.msra.mxu0 %v602
    %2476 = vmatprep.subr.mxu0 0.0
    %2477 = vmatpush1.msra.mxu0 %v603
    %2478 = vmatprep.subr.mxu0 0.0
    %2479 = vmatpush1.msra.mxu0 %v604
    %2480 = vmatprep.subr.mxu0 0.0
    %2481 = vmatpush1.msra.mxu0 %v605
    %2482 = vmatprep.subr.mxu0 0.0
    %2483 = vmatpush1.msra.mxu0 %v606
    %2484 = vmatprep.subr.mxu0 0.0
    %2485 = vmatpush1.msra.mxu0 %v607
    %2486 = vmatprep.subr.mxu0 0.0
    %2487 = vmatpush1.msra.mxu0 %v608
    %2488 = vmatprep.subr.mxu0 0.0
    %2489 = vmatpush1.msra.mxu0 %v609
    %2490 = vmatprep.mubr.f32.mxu0 %v1255
    %2491 = vmatmul.mubr.f32.gmra.mrb[0].mxu0 %v1247
    %v2492 = vpop.f32.mrb[0].mxu0
    %v2493 = vadd.f32 %v2423, %v2492
    %v2494 = vpop.f32.mrb[0].mxu0
    %2495 = vdwg.mxu0
    %2496 = vmatprep.subr.mxu0 0.0
    %2497 = vmatpush1.msra.mxu0 %v610
    %2498 = vmatprep.subr.mxu0 0.0
    %2499 = vmatpush1.msra.mxu0 %v611
    %2500 = vmatprep.subr.mxu0 0.0
    %2501 = vmatpush1.msra.mxu0 %v612
    %2502 = vmatprep.subr.mxu0 0.0
    %2503 = vmatpush1.msra.mxu0 %v613
    %2504 = vmatprep.subr.mxu0 0.0
    %2505 = vmatpush1.msra.mxu0 %v614
    %2506 = vmatprep.subr.mxu0 0.0
    %2507 = vmatpush1.msra.mxu0 %v615
    %2508 = vmatprep.subr.mxu0 0.0
    %2509 = vmatpush1.msra.mxu0 %v616
    %2510 = vmatprep.subr.mxu0 0.0
    %2511 = vmatpush1.msra.mxu0 %v617
    %2512 = vmatprep.subr.mxu0 0.0
    %2513 = vmatpush1.msra.mxu0 %v618
    %2514 = vmatprep.subr.mxu0 0.0
    %2515 = vmatpush1.msra.mxu0 %v619
    %2516 = vmatprep.subr.mxu0 0.0
    %2517 = vmatpush1.msra.mxu0 %v620
    %2518 = vmatprep.subr.mxu0 0.0
    %2519 = vmatpush1.msra.mxu0 %v621
    %2520 = vmatprep.subr.mxu0 0.0
    %2521 = vmatpush1.msra.mxu0 %v622
    %2522 = vmatprep.subr.mxu0 0.0
    %2523 = vmatpush1.msra.mxu0 %v623
    %2524 = vmatprep.subr.mxu0 0.0
    %2525 = vmatpush1.msra.mxu0 %v624
    %2526 = vmatprep.subr.mxu0 0.0
    %2527 = vmatpush1.msra.mxu0 %v625
    %2528 = vmatprep.subr.mxu0 0.0
    %2529 = vmatpush1.msra.mxu0 %v626
    %2530 = vmatprep.subr.mxu0 0.0
    %2531 = vmatpush1.msra.mxu0 %v627
    %2532 = vmatprep.subr.mxu0 0.0
    %2533 = vmatpush1.msra.mxu0 %v628
    %2534 = vmatprep.subr.mxu0 0.0
    %2535 = vmatpush1.msra.mxu0 %v629
    %2536 = vmatprep.subr.mxu0 0.0
    %2537 = vmatpush1.msra.mxu0 %v630
    %2538 = vmatprep.subr.mxu0 0.0
    %2539 = vmatpush1.msra.mxu0 %v631
    %2540 = vmatprep.subr.mxu0 0.0
    %2541 = vmatpush1.msra.mxu0 %v632
    %2542 = vmatprep.subr.mxu0 0.0
    %2543 = vmatpush1.msra.mxu0 %v633
    %2544 = vmatprep.subr.mxu0 0.0
    %2545 = vmatpush1.msra.mxu0 %v634
    %2546 = vmatprep.subr.mxu0 0.0
    %2547 = vmatpush1.msra.mxu0 %v635
    %2548 = vmatprep.subr.mxu0 0.0
    %2549 = vmatpush1.msra.mxu0 %v636
    %2550 = vmatprep.subr.mxu0 0.0
    %2551 = vmatpush1.msra.mxu0 %v637
    %2552 = vmatprep.subr.mxu0 0.0
    %2553 = vmatpush1.msra.mxu0 %v638
    %2554 = vmatprep.subr.mxu0 0.0
    %2555 = vmatpush1.msra.mxu0 %v639
    %2556 = vmatprep.subr.mxu0 0.0
    %2557 = vmatpush1.msra.mxu0 %v640
    %2558 = vmatprep.subr.mxu0 0.0
    %2559 = vmatpush1.msra.mxu0 %v641
    %2560 = vmatprep.mubr.f32.mxu0 %v1256
    %2561 = vmatmul.mubr.f32.gmra.mrb[0].mxu0 %v1254
    %v2562 = vpop.f32.mrb[0].mxu0
    %v2563 = vadd.f32 %v2493, %v2562
    %v2564 = vpop.f32.mrb[0].mxu0
    %2565 = vdwg.mxu0
    %2566 = vmatprep.subr.mxu0 0.0
    %2567 = vmatpush1.msra.mxu0 %v642
    %2568 = vmatprep.subr.mxu0 0.0
    %2569 = vmatpush1.msra.mxu0 %v643
    %2570 = vmatprep.subr.mxu0 0.0
    %2571 = vmatpush1.msra.mxu0 %v644
    %2572 = vmatprep.subr.mxu0 0.0
    %2573 = vmatpush1.msra.mxu0 %v645
    %2574 = vmatprep.subr.mxu0 0.0
    %2575 = vmatpush1.msra.mxu0 %v646
    %2576 = vmatprep.subr.mxu0 0.0
    %2577 = vmatpush1.msra.mxu0 %v647
    %2578 = vmatprep.subr.mxu0 0.0
    %2579 = vmatpush1.msra.mxu0 %v648
    %2580 = vmatprep.subr.mxu0 0.0
    %2581 = vmatpush1.msra.mxu0 %v649
    %2582 = vmatprep.subr.mxu0 0.0
    %2583 = vmatpush1.msra.mxu0 %v650
    %2584 = vmatprep.subr.mxu0 0.0
    %2585 = vmatpush1.msra.mxu0 %v651
    %2586 = vmatprep.subr.mxu0 0.0
    %2587 = vmatpush1.msra.mxu0 %v652
    %2588 = vmatprep.subr.mxu0 0.0
    %2589 = vmatpush1.msra.mxu0 %v653
    %2590 = vmatprep.subr.mxu0 0.0
    %2591 = vmatpush1.msra.mxu0 %v654
    %2592 = vmatprep.subr.mxu0 0.0
    %2593 = vmatpush1.msra.mxu0 %v655
    %2594 = vmatprep.subr.mxu0 0.0
    %2595 = vmatpush1.msra.mxu0 %v656
    %2596 = vmatprep.subr.mxu0 0.0
    %2597 = vmatpush1.msra.mxu0 %v657
    %2598 = vmatprep.subr.mxu0 0.0
    %2599 = vmatpush1.msra.mxu0 %v658
    %2600 = vmatprep.subr.mxu0 0.0
    %2601 = vmatpush1.msra.mxu0 %v659
    %2602 = vmatprep.subr.mxu0 0.0
    %2603 = vmatpush1.msra.mxu0 %v660
    %2604 = vmatprep.subr.mxu0 0.0
    %2605 = vmatpush1.msra.mxu0 %v661
    %2606 = vmatprep.subr.mxu0 0.0
    %2607 = vmatpush1.msra.mxu0 %v662
    %2608 = vmatprep.subr.mxu0 0.0
    %2609 = vmatpush1.msra.mxu0 %v663
    %2610 = vmatprep.subr.mxu0 0.0
    %2611 = vmatpush1.msra.mxu0 %v664
    %2612 = vmatprep.subr.mxu0 0.0
    %2613 = vmatpush1.msra.mxu0 %v665
    %2614 = vmatprep.subr.mxu0 0.0
    %2615 = vmatpush1.msra.mxu0 %v666
    %2616 = vmatprep.subr.mxu0 0.0
    %2617 = vmatpush1.msra.mxu0 %v667
    %2618 = vmatprep.subr.mxu0 0.0
    %2619 = vmatpush1.msra.mxu0 %v668
    %2620 = vmatprep.subr.mxu0 0.0
    %2621 = vmatpush1.msra.mxu0 %v669
    %2622 = vmatprep.subr.mxu0 0.0
    %2623 = vmatpush1.msra.mxu0 %v670
    %2624 = vmatprep.subr.mxu0 0.0
    %2625 = vmatpush1.msra.mxu0 %v671
    %2626 = vmatprep.subr.mxu0 0.0
    %2627 = vmatpush1.msra.mxu0 %v672
    %2628 = vmatprep.subr.mxu0 0.0
    %2629 = vmatpush1.msra.mxu0 %v673
    %2630 = vmatprep.mubr.f32.mxu0 %v1272
    %2631 = vmatmul.mubr.f32.gmra.mrb[0].mxu0 %v1264
    %v2632 = vpop.f32.mrb[0].mxu0
    %v2633 = vadd.f32 %v2563, %v2632
    %v2634 = vpop.f32.mrb[0].mxu0
    %2635 = vdwg.mxu0
    %2636 = vmatprep.subr.mxu0 0.0
    %2637 = vmatpush1.msra.mxu0 %v674
    %2638 = vmatprep.subr.mxu0 0.0
    %2639 = vmatpush1.msra.mxu0 %v675
    %2640 = vmatprep.subr.mxu0 0.0
    %2641 = vmatpush1.msra.mxu0 %v676
    %2642 = vmatprep.subr.mxu0 0.0
    %2643 = vmatpush1.msra.mxu0 %v677
    %2644 = vmatprep.subr.mxu0 0.0
    %2645 = vmatpush1.msra.mxu0 %v678
    %2646 = vmatprep.subr.mxu0 0.0
    %2647 = vmatpush1.msra.mxu0 %v679
    %2648 = vmatprep.subr.mxu0 0.0
    %2649 = vmatpush1.msra.mxu0 %v680
    %2650 = vmatprep.subr.mxu0 0.0
    %2651 = vmatpush1.msra.mxu0 %v681
    %2652 = vmatprep.subr.mxu0 0.0
    %2653 = vmatpush1.msra.mxu0 %v682
    %2654 = vmatprep.subr.mxu0 0.0
    %2655 = vmatpush1.msra.mxu0 %v683
    %2656 = vmatprep.subr.mxu0 0.0
    %2657 = vmatpush1.msra.mxu0 %v684
    %2658 = vmatprep.subr.mxu0 0.0
    %2659 = vmatpush1.msra.mxu0 %v685
    %2660 = vmatprep.subr.mxu0 0.0
    %2661 = vmatpush1.msra.mxu0 %v686
    %2662 = vmatprep.subr.mxu0 0.0
    %2663 = vmatpush1.msra.mxu0 %v687
    %2664 = vmatprep.subr.mxu0 0.0
    %2665 = vmatpush1.msra.mxu0 %v688
    %2666 = vmatprep.subr.mxu0 0.0
    %2667 = vmatpush1.msra.mxu0 %v689
    %2668 = vmatprep.subr.mxu0 0.0
    %2669 = vmatpush1.msra.mxu0 %v690
    %2670 = vmatprep.subr.mxu0 0.0
    %2671 = vmatpush1.msra.mxu0 %v691
    %2672 = vmatprep.subr.mxu0 0.0
    %2673 = vmatpush1.msra.mxu0 %v692
    %2674 = vmatprep.subr.mxu0 0.0
    %2675 = vmatpush1.msra.mxu0 %v693
    %2676 = vmatprep.subr.mxu0 0.0
    %2677 = vmatpush1.msra.mxu0 %v694
    %2678 = vmatprep.subr.mxu0 0.0
    %2679 = vmatpush1.msra.mxu0 %v695
    %2680 = vmatprep.subr.mxu0 0.0
    %2681 = vmatpush1.msra.mxu0 %v696
    %2682 = vmatprep.subr.mxu0 0.0
    %2683 = vmatpush1.msra.mxu0 %v697
    %2684 = vmatprep.subr.mxu0 0.0
    %2685 = vmatpush1.msra.mxu0 %v698
    %2686 = vmatprep.subr.mxu0 0.0
    %2687 = vmatpush1.msra.mxu0 %v699
    %2688 = vmatprep.subr.mxu0 0.0
    %2689 = vmatpush1.msra.mxu0 %v700
    %2690 = vmatprep.subr.mxu0 0.0
    %2691 = vmatpush1.msra.mxu0 %v701
    %2692 = vmatprep.subr.mxu0 0.0
    %2693 = vmatpush1.msra.mxu0 %v702
    %2694 = vmatprep.subr.mxu0 0.0
    %2695 = vmatpush1.msra.mxu0 %v703
    %2696 = vmatprep.subr.mxu0 0.0
    %2697 = vmatpush1.msra.mxu0 %v704
    %2698 = vmatprep.subr.mxu0 0.0
    %2699 = vmatpush1.msra.mxu0 %v705
    %2700 = vmatprep.mubr.f32.mxu0 %v1273
    %2701 = vmatmul.mubr.f32.gmra.mrb[0].mxu0 %v1271
    %v2702 = vpop.f32.mrb[0].mxu0
    %v2703 = vadd.f32 %v2633, %v2702
    %v2704 = vpop.f32.mrb[0].mxu0
    %2705 = vdwg.mxu0
    %2706 = vmatprep.subr.mxu0 0.0
    %2707 = vmatpush1.msra.mxu0 %v706
    %2708 = vmatprep.subr.mxu0 0.0
    %2709 = vmatpush1.msra.mxu0 %v707
    %2710 = vmatprep.subr.mxu0 0.0
    %2711 = vmatpush1.msra.mxu0 %v708
    %2712 = vmatprep.subr.mxu0 0.0
    %2713 = vmatpush1.msra.mxu0 %v709
    %2714 = vmatprep.subr.mxu0 0.0
    %2715 = vmatpush1.msra.mxu0 %v710
    %2716 = vmatprep.subr.mxu0 0.0
    %2717 = vmatpush1.msra.mxu0 %v711
    %2718 = vmatprep.subr.mxu0 0.0
    %2719 = vmatpush1.msra.mxu0 %v712
    %2720 = vmatprep.subr.mxu0 0.0
    %2721 = vmatpush1.msra.mxu0 %v713
    %2722 = vmatprep.subr.mxu0 0.0
    %2723 = vmatpush1.msra.mxu0 %v714
    %2724 = vmatprep.subr.mxu0 0.0
    %2725 = vmatpush1.msra.mxu0 %v715
    %2726 = vmatprep.subr.mxu0 0.0
    %2727 = vmatpush1.msra.mxu0 %v716
    %2728 = vmatprep.subr.mxu0 0.0
    %2729 = vmatpush1.msra.mxu0 %v717
    %2730 = vmatprep.subr.mxu0 0.0
    %2731 = vmatpush1.msra.mxu0 %v718
    %2732 = vmatprep.subr.mxu0 0.0
    %2733 = vmatpush1.msra.mxu0 %v719
    %2734 = vmatprep.subr.mxu0 0.0
    %2735 = vmatpush1.msra.mxu0 %v720
    %2736 = vmatprep.subr.mxu0 0.0
    %2737 = vmatpush1.msra.mxu0 %v721
    %2738 = vmatprep.subr.mxu0 0.0
    %2739 = vmatpush1.msra.mxu0 %v722
    %2740 = vmatprep.subr.mxu0 0.0
    %2741 = vmatpush1.msra.mxu0 %v723
    %2742 = vmatprep.subr.mxu0 0.0
    %2743 = vmatpush1.msra.mxu0 %v724
    %2744 = vmatprep.subr.mxu0 0.0
    %2745 = vmatpush1.msra.mxu0 %v725
    %2746 = vmatprep.subr.mxu0 0.0
    %2747 = vmatpush1.msra.mxu0 %v726
    %2748 = vmatprep.subr.mxu0 0.0
    %2749 = vmatpush1.msra.mxu0 %v727
    %2750 = vmatprep.subr.mxu0 0.0
    %2751 = vmatpush1.msra.mxu0 %v728
    %2752 = vmatprep.subr.mxu0 0.0
    %2753 = vmatpush1.msra.mxu0 %v729
    %2754 = vmatprep.subr.mxu0 0.0
    %2755 = vmatpush1.msra.mxu0 %v730
    %2756 = vmatprep.subr.mxu0 0.0
    %2757 = vmatpush1.msra.mxu0 %v731
    %2758 = vmatprep.subr.mxu0 0.0
    %2759 = vmatpush1.msra.mxu0 %v732
    %2760 = vmatprep.subr.mxu0 0.0
    %2761 = vmatpush1.msra.mxu0 %v733
    %2762 = vmatprep.subr.mxu0 0.0
    %2763 = vmatpush1.msra.mxu0 %v734
    %2764 = vmatprep.subr.mxu0 0.0
    %2765 = vmatpush1.msra.mxu0 %v735
    %2766 = vmatprep.subr.mxu0 0.0
    %2767 = vmatpush1.msra.mxu0 %v736
    %2768 = vmatprep.subr.mxu0 0.0
    %2769 = vmatpush1.msra.mxu0 %v737
    %2770 = vmatprep.mubr.f32.mxu0 %v1289
    %2771 = vmatmul.mubr.f32.gmra.mrb[0].mxu0 %v1281
    %v2772 = vpop.f32.mrb[0].mxu0
    %v2773 = vadd.f32 %v2703, %v2772
    %v2774 = vpop.f32.mrb[0].mxu0
    %2775 = vdwg.mxu0
    %2776 = vmatprep.subr.mxu0 0.0
    %2777 = vmatpush1.msra.mxu0 %v738
    %2778 = vmatprep.subr.mxu0 0.0
    %2779 = vmatpush1.msra.mxu0 %v739
    %2780 = vmatprep.subr.mxu0 0.0
    %2781 = vmatpush1.msra.mxu0 %v740
    %2782 = vmatprep.subr.mxu0 0.0
    %2783 = vmatpush1.msra.mxu0 %v741
    %2784 = vmatprep.subr.mxu0 0.0
    %2785 = vmatpush1.msra.mxu0 %v742
    %2786 = vmatprep.subr.mxu0 0.0
    %2787 = vmatpush1.msra.mxu0 %v743
    %2788 = vmatprep.subr.mxu0 0.0
    %2789 = vmatpush1.msra.mxu0 %v744
    %2790 = vmatprep.subr.mxu0 0.0
    %2791 = vmatpush1.msra.mxu0 %v745
    %2792 = vmatprep.subr.mxu0 0.0
    %2793 = vmatpush1.msra.mxu0 %v746
    %2794 = vmatprep.subr.mxu0 0.0
    %2795 = vmatpush1.msra.mxu0 %v747
    %2796 = vmatprep.subr.mxu0 0.0
    %2797 = vmatpush1.msra.mxu0 %v748
    %2798 = vmatprep.subr.mxu0 0.0
    %2799 = vmatpush1.msra.mxu0 %v749
    %2800 = vmatprep.subr.mxu0 0.0
    %2801 = vmatpush1.msra.mxu0 %v750
    %2802 = vmatprep.subr.mxu0 0.0
    %2803 = vmatpush1.msra.mxu0 %v751
    %2804 = vmatprep.subr.mxu0 0.0
    %2805 = vmatpush1.msra.mxu0 %v752
    %2806 = vmatprep.subr.mxu0 0.0
    %2807 = vmatpush1.msra.mxu0 %v753
    %2808 = vmatprep.subr.mxu0 0.0
    %2809 = vmatpush1.msra.mxu0 %v754
    %2810 = vmatprep.subr.mxu0 0.0
    %2811 = vmatpush1.msra.mxu0 %v755
    %2812 = vmatprep.subr.mxu0 0.0
    %2813 = vmatpush1.msra.mxu0 %v756
    %2814 = vmatprep.subr.mxu0 0.0
    %2815 = vmatpush1.msra.mxu0 %v757
    %2816 = vmatprep.subr.mxu0 0.0
    %2817 = vmatpush1.msra.mxu0 %v758
    %2818 = vmatprep.subr.mxu0 0.0
    %2819 = vmatpush1.msra.mxu0 %v759
    %2820 = vmatprep.subr.mxu0 0.0
    %2821 = vmatpush1.msra.mxu0 %v760
    %2822 = vmatprep.subr.mxu0 0.0
    %2823 = vmatpush1.msra.mxu0 %v761
    %2824 = vmatprep.subr.mxu0 0.0
    %2825 = vmatpush1.msra.mxu0 %v762
    %2826 = vmatprep.subr.mxu0 0.0
    %2827 = vmatpush1.msra.mxu0 %v763
    %2828 = vmatprep.subr.mxu0 0.0
    %2829 = vmatpush1.msra.mxu0 %v764
    %2830 = vmatprep.subr.mxu0 0.0
    %2831 = vmatpush1.msra.mxu0 %v765
    %2832 = vmatprep.subr.mxu0 0.0
    %2833 = vmatpush1.msra.mxu0 %v766
    %2834 = vmatprep.subr.mxu0 0.0
    %2835 = vmatpush1.msra.mxu0 %v767
    %2836 = vmatprep.subr.mxu0 0.0
    %2837 = vmatpush1.msra.mxu0 %v768
    %2838 = vmatprep.subr.mxu0 0.0
    %2839 = vmatpush1.msra.mxu0 %v769
    %2840 = vmatprep.mubr.f32.mxu0 %v1290
    %2841 = vmatmul.mubr.f32.gmra.mrb[0].mxu0 %v1288
    %v2842 = vpop.f32.mrb[0].mxu0
    %v2843 = vadd.f32 %v2773, %v2842
    %v2844 = vpop.f32.mrb[0].mxu0
    %2845 = vdwg.mxu0
    %2846 = vmatprep.subr.mxu0 0.0
    %2847 = vmatpush1.msra.mxu0 %v770
    %2848 = vmatprep.subr.mxu0 0.0
    %2849 = vmatpush1.msra.mxu0 %v771
    %2850 = vmatprep.subr.mxu0 0.0
    %2851 = vmatpush1.msra.mxu0 %v772
    %2852 = vmatprep.subr.mxu0 0.0
    %2853 = vmatpush1.msra.mxu0 %v773
    %2854 = vmatprep.subr.mxu0 0.0
    %2855 = vmatpush1.msra.mxu0 %v774
    %2856 = vmatprep.subr.mxu0 0.0
    %2857 = vmatpush1.msra.mxu0 %v775
    %2858 = vmatprep.subr.mxu0 0.0
    %2859 = vmatpush1.msra.mxu0 %v776
    %2860 = vmatprep.subr.mxu0 0.0
    %2861 = vmatpush1.msra.mxu0 %v777
    %2862 = vmatprep.subr.mxu0 0.0
    %2863 = vmatpush1.msra.mxu0 %v778
    %2864 = vmatprep.subr.mxu0 0.0
    %2865 = vmatpush1.msra.mxu0 %v779
    %2866 = vmatprep.subr.mxu0 0.0
    %2867 = vmatpush1.msra.mxu0 %v780
    %2868 = vmatprep.subr.mxu0 0.0
    %2869 = vmatpush1.msra.mxu0 %v781
    %2870 = vmatprep.subr.mxu0 0.0
    %2871 = vmatpush1.msra.mxu0 %v782
    %2872 = vmatprep.subr.mxu0 0.0
    %2873 = vmatpush1.msra.mxu0 %v783
    %2874 = vmatprep.subr.mxu0 0.0
    %2875 = vmatpush1.msra.mxu0 %v784
    %2876 = vmatprep.subr.mxu0 0.0
    %2877 = vmatpush1.msra.mxu0 %v785
    %2878 = vmatprep.subr.mxu0 0.0
    %2879 = vmatpush1.msra.mxu0 %v786
    %2880 = vmatprep.subr.mxu0 0.0
    %2881 = vmatpush1.msra.mxu0 %v787
    %2882 = vmatprep.subr.mxu0 0.0
    %2883 = vmatpush1.msra.mxu0 %v788
    %2884 = vmatprep.subr.mxu0 0.0
    %2885 = vmatpush1.msra.mxu0 %v789
    %2886 = vmatprep.subr.mxu0 0.0
    %2887 = vmatpush1.msra.mxu0 %v790
    %2888 = vmatprep.subr.mxu0 0.0
    %2889 = vmatpush1.msra.mxu0 %v791
    %2890 = vmatprep.subr.mxu0 0.0
    %2891 = vmatpush1.msra.mxu0 %v792
    %2892 = vmatprep.subr.mxu0 0.0
    %2893 = vmatpush1.msra.mxu0 %v793
    %2894 = vmatprep.subr.mxu0 0.0
    %2895 = vmatpush1.msra.mxu0 %v794
    %2896 = vmatprep.subr.mxu0 0.0
    %2897 = vmatpush1.msra.mxu0 %v795
    %2898 = vmatprep.subr.mxu0 0.0
    %2899 = vmatpush1.msra.mxu0 %v796
    %2900 = vmatprep.subr.mxu0 0.0
    %2901 = vmatpush1.msra.mxu0 %v797
    %2902 = vmatprep.subr.mxu0 0.0
    %2903 = vmatpush1.msra.mxu0 %v798
    %2904 = vmatprep.subr.mxu0 0.0
    %2905 = vmatpush1.msra.mxu0 %v799
    %2906 = vmatprep.subr.mxu0 0.0
    %2907 = vmatpush1.msra.mxu0 %v800
    %2908 = vmatprep.subr.mxu0 0.0
    %2909 = vmatpush1.msra.mxu0 %v801
    %2910 = vmatprep.mubr.f32.mxu0 %v1306
    %2911 = vmatmul.mubr.f32.gmra.mrb[0].mxu0 %v1298
    %v2912 = vpop.f32.mrb[0].mxu0
    %v2913 = vadd.f32 %v2843, %v2912
    %v2914 = vpop.f32.mrb[0].mxu0
    %2915 = vdwg.mxu0
    %2916 = vmatprep.subr.mxu0 0.0
    %2917 = vmatpush1.msra.mxu0 %v802
    %2918 = vmatprep.subr.mxu0 0.0
    %2919 = vmatpush1.msra.mxu0 %v803
    %2920 = vmatprep.subr.mxu0 0.0
    %2921 = vmatpush1.msra.mxu0 %v804
    %2922 = vmatprep.subr.mxu0 0.0
    %2923 = vmatpush1.msra.mxu0 %v805
    %2924 = vmatprep.subr.mxu0 0.0
    %2925 = vmatpush1.msra.mxu0 %v806
    %2926 = vmatprep.subr.mxu0 0.0
    %2927 = vmatpush1.msra.mxu0 %v807
    %2928 = vmatprep.subr.mxu0 0.0
    %2929 = vmatpush1.msra.mxu0 %v808
    %2930 = vmatprep.subr.mxu0 0.0
    %2931 = vmatpush1.msra.mxu0 %v809
    %2932 = vmatprep.subr.mxu0 0.0
    %2933 = vmatpush1.msra.mxu0 %v810
    %2934 = vmatprep.subr.mxu0 0.0
    %2935 = vmatpush1.msra.mxu0 %v811
    %2936 = vmatprep.subr.mxu0 0.0
    %2937 = vmatpush1.msra.mxu0 %v812
    %2938 = vmatprep.subr.mxu0 0.0
    %2939 = vmatpush1.msra.mxu0 %v813
    %2940 = vmatprep.subr.mxu0 0.0
    %2941 = vmatpush1.msra.mxu0 %v814
    %2942 = vmatprep.subr.mxu0 0.0
    %2943 = vmatpush1.msra.mxu0 %v815
    %2944 = vmatprep.subr.mxu0 0.0
    %2945 = vmatpush1.msra.mxu0 %v816
    %2946 = vmatprep.subr.mxu0 0.0
    %2947 = vmatpush1.msra.mxu0 %v817
    %2948 = vmatprep.subr.mxu0 0.0
    %2949 = vmatpush1.msra.mxu0 %v818
    %2950 = vmatprep.subr.mxu0 0.0
    %2951 = vmatpush1.msra.mxu0 %v819
    %2952 = vmatprep.subr.mxu0 0.0
    %2953 = vmatpush1.msra.mxu0 %v820
    %2954 = vmatprep.subr.mxu0 0.0
    %2955 = vmatpush1.msra.mxu0 %v821
    %2956 = vmatprep.subr.mxu0 0.0
    %2957 = vmatpush1.msra.mxu0 %v822
    %2958 = vmatprep.subr.mxu0 0.0
    %2959 = vmatpush1.msra.mxu0 %v823
    %2960 = vmatprep.subr.mxu0 0.0
    %2961 = vmatpush1.msra.mxu0 %v824
    %2962 = vmatprep.subr.mxu0 0.0
    %2963 = vmatpush1.msra.mxu0 %v825
    %2964 = vmatprep.subr.mxu0 0.0
    %2965 = vmatpush1.msra.mxu0 %v826
    %2966 = vmatprep.subr.mxu0 0.0
    %2967 = vmatpush1.msra.mxu0 %v827
    %2968 = vmatprep.subr.mxu0 0.0
    %2969 = vmatpush1.msra.mxu0 %v828
    %2970 = vmatprep.subr.mxu0 0.0
    %2971 = vmatpush1.msra.mxu0 %v829
    %2972 = vmatprep.subr.mxu0 0.0
    %2973 = vmatpush1.msra.mxu0 %v830
    %2974 = vmatprep.subr.mxu0 0.0
    %2975 = vmatpush1.msra.mxu0 %v831
    %2976 = vmatprep.subr.mxu0 0.0
    %2977 = vmatpush1.msra.mxu0 %v832
    %2978 = vmatprep.subr.mxu0 0.0
    %2979 = vmatpush1.msra.mxu0 %v833
    %2980 = vmatprep.mubr.f32.mxu0 %v1307
    %2981 = vmatmul.mubr.f32.gmra.mrb[0].mxu0 %v1305
    %v2982 = vpop.f32.mrb[0].mxu0
    %v2983 = vadd.f32 %v2913, %v2982
    %v2984 = vpop.f32.mrb[0].mxu0
    %2985 = vdwg.mxu0
    %2986 = vmatprep.subr.mxu0 0.0
    %2987 = vmatpush1.msra.mxu0 %v834
    %2988 = vmatprep.subr.mxu0 0.0
    %2989 = vmatpush1.msra.mxu0 %v835
    %2990 = vmatprep.subr.mxu0 0.0
    %2991 = vmatpush1.msra.mxu0 %v836
    %2992 = vmatprep.subr.mxu0 0.0
    %2993 = vmatpush1.msra.mxu0 %v837
    %2994 = vmatprep.subr.mxu0 0.0
    %2995 = vmatpush1.msra.mxu0 %v838
    %2996 = vmatprep.subr.mxu0 0.0
    %2997 = vmatpush1.msra.mxu0 %v839
    %2998 = vmatprep.subr.mxu0 0.0
    %2999 = vmatpush1.msra.mxu0 %v840
    %3000 = vmatprep.subr.mxu0 0.0
    %3001 = vmatpush1.msra.mxu0 %v841
    %3002 = vmatprep.subr.mxu0 0.0
    %3003 = vmatpush1.msra.mxu0 %v842
    %3004 = vmatprep.subr.mxu0 0.0
    %3005 = vmatpush1.msra.mxu0 %v843
    %3006 = vmatprep.subr.mxu0 0.0
    %3007 = vmatpush1.msra.mxu0 %v844
    %3008 = vmatprep.subr.mxu0 0.0
    %3009 = vmatpush1.msra.mxu0 %v845
    %3010 = vmatprep.subr.mxu0 0.0
    %3011 = vmatpush1.msra.mxu0 %v846
    %3012 = vmatprep.subr.mxu0 0.0
    %3013 = vmatpush1.msra.mxu0 %v847
    %3014 = vmatprep.subr.mxu0 0.0
    %3015 = vmatpush1.msra.mxu0 %v848
    %3016 = vmatprep.subr.mxu0 0.0
    %3017 = vmatpush1.msra.mxu0 %v849
    %3018 = vmatprep.subr.mxu0 0.0
    %3019 = vmatpush1.msra.mxu0 %v850
    %3020 = vmatprep.subr.mxu0 0.0
    %3021 = vmatpush1.msra.mxu0 %v851
    %3022 = vmatprep.subr.mxu0 0.0
    %3023 = vmatpush1.msra.mxu0 %v852
    %3024 = vmatprep.subr.mxu0 0.0
    %3025 = vmatpush1.msra.mxu0 %v853
    %3026 = vmatprep.subr.mxu0 0.0
    %3027 = vmatpush1.msra.mxu0 %v854
    %3028 = vmatprep.subr.mxu0 0.0
    %3029 = vmatpush1.msra.mxu0 %v855
    %3030 = vmatprep.subr.mxu0 0.0
    %3031 = vmatpush1.msra.mxu0 %v856
    %3032 = vmatprep.subr.mxu0 0.0
    %3033 = vmatpush1.msra.mxu0 %v857
    %3034 = vmatprep.subr.mxu0 0.0
    %3035 = vmatpush1.msra.mxu0 %v858
    %3036 = vmatprep.subr.mxu0 0.0
    %3037 = vmatpush1.msra.mxu0 %v859
    %3038 = vmatprep.subr.mxu0 0.0
    %3039 = vmatpush1.msra.mxu0 %v860
    %3040 = vmatprep.subr.mxu0 0.0
    %3041 = vmatpush1.msra.mxu0 %v861
    %3042 = vmatprep.subr.mxu0 0.0
    %3043 = vmatpush1.msra.mxu0 %v862
    %3044 = vmatprep.subr.mxu0 0.0
    %3045 = vmatpush1.msra.mxu0 %v863
    %3046 = vmatprep.subr.mxu0 0.0
    %3047 = vmatpush1.msra.mxu0 %v864
    %3048 = vmatprep.subr.mxu0 0.0
    %3049 = vmatpush1.msra.mxu0 %v865
    %3050 = vmatprep.mubr.f32.mxu0 %v1323
    %3051 = vmatmul.mubr.f32.gmra.mrb[0].mxu0 %v1315
    %v3052 = vpop.f32.mrb[0].mxu0
    %v3053 = vadd.f32 %v2983, %v3052
    %v3054 = vpop.f32.mrb[0].mxu0
    %3055 = vdwg.mxu0
    %3056 = vmatprep.subr.mxu0 0.0
    %3057 = vmatpush1.msra.mxu0 %v866
    %3058 = vmatprep.subr.mxu0 0.0
    %3059 = vmatpush1.msra.mxu0 %v867
    %3060 = vmatprep.subr.mxu0 0.0
    %3061 = vmatpush1.msra.mxu0 %v868
    %3062 = vmatprep.subr.mxu0 0.0
    %3063 = vmatpush1.msra.mxu0 %v869
    %3064 = vmatprep.subr.mxu0 0.0
    %3065 = vmatpush1.msra.mxu0 %v870
    %3066 = vmatprep.subr.mxu0 0.0
    %3067 = vmatpush1.msra.mxu0 %v871
    %3068 = vmatprep.subr.mxu0 0.0
    %3069 = vmatpush1.msra.mxu0 %v872
    %3070 = vmatprep.subr.mxu0 0.0
    %3071 = vmatpush1.msra.mxu0 %v873
    %3072 = vmatprep.subr.mxu0 0.0
    %3073 = vmatpush1.msra.mxu0 %v874
    %3074 = vmatprep.subr.mxu0 0.0
    %3075 = vmatpush1.msra.mxu0 %v875
    %3076 = vmatprep.subr.mxu0 0.0
    %3077 = vmatpush1.msra.mxu0 %v876
    %3078 = vmatprep.subr.mxu0 0.0
    %3079 = vmatpush1.msra.mxu0 %v877
    %3080 = vmatprep.subr.mxu0 0.0
    %3081 = vmatpush1.msra.mxu0 %v878
    %3082 = vmatprep.subr.mxu0 0.0
    %3083 = vmatpush1.msra.mxu0 %v879
    %3084 = vmatprep.subr.mxu0 0.0
    %3085 = vmatpush1.msra.mxu0 %v880
    %3086 = vmatprep.subr.mxu0 0.0
    %3087 = vmatpush1.msra.mxu0 %v881
    %3088 = vmatprep.subr.mxu0 0.0
    %3089 = vmatpush1.msra.mxu0 %v882
    %3090 = vmatprep.subr.mxu0 0.0
    %3091 = vmatpush1.msra.mxu0 %v883
    %3092 = vmatprep.subr.mxu0 0.0
    %3093 = vmatpush1.msra.mxu0 %v884
    %3094 = vmatprep.subr.mxu0 0.0
    %3095 = vmatpush1.msra.mxu0 %v885
    %3096 = vmatprep.subr.mxu0 0.0
    %3097 = vmatpush1.msra.mxu0 %v886
    %3098 = vmatprep.subr.mxu0 0.0
    %3099 = vmatpush1.msra.mxu0 %v887
    %3100 = vmatprep.subr.mxu0 0.0
    %3101 = vmatpush1.msra.mxu0 %v888
    %3102 = vmatprep.subr.mxu0 0.0
    %3103 = vmatpush1.msra.mxu0 %v889
    %3104 = vmatprep.subr.mxu0 0.0
    %3105 = vmatpush1.msra.mxu0 %v890
    %3106 = vmatprep.subr.mxu0 0.0
    %3107 = vmatpush1.msra.mxu0 %v891
    %3108 = vmatprep.subr.mxu0 0.0
    %3109 = vmatpush1.msra.mxu0 %v892
    %3110 = vmatprep.subr.mxu0 0.0
    %3111 = vmatpush1.msra.mxu0 %v893
    %3112 = vmatprep.subr.mxu0 0.0
    %3113 = vmatpush1.msra.mxu0 %v894
    %3114 = vmatprep.subr.mxu0 0.0
    %3115 = vmatpush1.msra.mxu0 %v895
    %3116 = vmatprep.subr.mxu0 0.0
    %3117 = vmatpush1.msra.mxu0 %v896
    %3118 = vmatprep.subr.mxu0 0.0
    %3119 = vmatpush1.msra.mxu0 %v897
    %3120 = vmatprep.mubr.f32.mxu0 %v1324
    %3121 = vmatmul.mubr.f32.gmra.mrb[0].mxu0 %v1322
    %v3122 = vpop.f32.mrb[0].mxu0
    %v3123 = vadd.f32 %v3053, %v3122
    %v3124 = vpop.f32.mrb[0].mxu0
    %3125 = vdwg.mxu0
    %3126 = vmatprep.subr.mxu0 0.0
    %3127 = vmatpush1.msra.mxu0 %v898
    %3128 = vmatprep.subr.mxu0 0.0
    %3129 = vmatpush1.msra.mxu0 %v899
    %3130 = vmatprep.subr.mxu0 0.0
    %3131 = vmatpush1.msra.mxu0 %v900
    %3132 = vmatprep.subr.mxu0 0.0
    %3133 = vmatpush1.msra.mxu0 %v901
    %3134 = vmatprep.subr.mxu0 0.0
    %3135 = vmatpush1.msra.mxu0 %v902
    %3136 = vmatprep.subr.mxu0 0.0
    %3137 = vmatpush1.msra.mxu0 %v903
    %3138 = vmatprep.subr.mxu0 0.0
    %3139 = vmatpush1.msra.mxu0 %v904
    %3140 = vmatprep.subr.mxu0 0.0
    %3141 = vmatpush1.msra.mxu0 %v905
    %3142 = vmatprep.subr.mxu0 0.0
    %3143 = vmatpush1.msra.mxu0 %v906
    %3144 = vmatprep.subr.mxu0 0.0
    %3145 = vmatpush1.msra.mxu0 %v907
    %3146 = vmatprep.subr.mxu0 0.0
    %3147 = vmatpush1.msra.mxu0 %v908
    %3148 = vmatprep.subr.mxu0 0.0
    %3149 = vmatpush1.msra.mxu0 %v909
    %3150 = vmatprep.subr.mxu0 0.0
    %3151 = vmatpush1.msra.mxu0 %v910
    %3152 = vmatprep.subr.mxu0 0.0
    %3153 = vmatpush1.msra.mxu0 %v911
    %3154 = vmatprep.subr.mxu0 0.0
    %3155 = vmatpush1.msra.mxu0 %v912
    %3156 = vmatprep.subr.mxu0 0.0
    %3157 = vmatpush1.msra.mxu0 %v913
    %3158 = vmatprep.subr.mxu0 0.0
    %3159 = vmatpush1.msra.mxu0 %v914
    %3160 = vmatprep.subr.mxu0 0.0
    %3161 = vmatpush1.msra.mxu0 %v915
    %3162 = vmatprep.subr.mxu0 0.0
    %3163 = vmatpush1.msra.mxu0 %v916
    %3164 = vmatprep.subr.mxu0 0.0
    %3165 = vmatpush1.msra.mxu0 %v917
    %3166 = vmatprep.subr.mxu0 0.0
    %3167 = vmatpush1.msra.mxu0 %v918
    %3168 = vmatprep.subr.mxu0 0.0
    %3169 = vmatpush1.msra.mxu0 %v919
    %3170 = vmatprep.subr.mxu0 0.0
    %3171 = vmatpush1.msra.mxu0 %v920
    %3172 = vmatprep.subr.mxu0 0.0
    %3173 = vmatpush1.msra.mxu0 %v921
    %3174 = vmatprep.subr.mxu0 0.0
    %3175 = vmatpush1.msra.mxu0 %v922
    %3176 = vmatprep.subr.mxu0 0.0
    %3177 = vmatpush1.msra.mxu0 %v923
    %3178 = vmatprep.subr.mxu0 0.0
    %3179 = vmatpush1.msra.mxu0 %v924
    %3180 = vmatprep.subr.mxu0 0.0
    %3181 = vmatpush1.msra.mxu0 %v925
    %3182 = vmatprep.subr.mxu0 0.0
    %3183 = vmatpush1.msra.mxu0 %v926
    %3184 = vmatprep.subr.mxu0 0.0
    %3185 = vmatpush1.msra.mxu0 %v927
    %3186 = vmatprep.subr.mxu0 0.0
    %3187 = vmatpush1.msra.mxu0 %v928
    %3188 = vmatprep.subr.mxu0 0.0
    %3189 = vmatpush1.msra.mxu0 %v929
    %3190 = vmatprep.mubr.f32.mxu0 %v1340
    %3191 = vmatmul.mubr.f32.gmra.mrb[0].mxu0 %v1332
    %v3192 = vpop.f32.mrb[0].mxu0
    %v3193 = vadd.f32 %v3123, %v3192
    %v3194 = vpop.f32.mrb[0].mxu0
    %3195 = vdwg.mxu0
    %3196 = vmatprep.subr.mxu0 0.0
    %3197 = vmatpush1.msra.mxu0 %v930
    %3198 = vmatprep.subr.mxu0 0.0
    %3199 = vmatpush1.msra.mxu0 %v931
    %3200 = vmatprep.subr.mxu0 0.0
    %3201 = vmatpush1.msra.mxu0 %v932
    %3202 = vmatprep.subr.mxu0 0.0
    %3203 = vmatpush1.msra.mxu0 %v933
    %3204 = vmatprep.subr.mxu0 0.0
    %3205 = vmatpush1.msra.mxu0 %v934
    %3206 = vmatprep.subr.mxu0 0.0
    %3207 = vmatpush1.msra.mxu0 %v935
    %3208 = vmatprep.subr.mxu0 0.0
    %3209 = vmatpush1.msra.mxu0 %v936
    %3210 = vmatprep.subr.mxu0 0.0
    %3211 = vmatpush1.msra.mxu0 %v937
    %3212 = vmatprep.subr.mxu0 0.0
    %3213 = vmatpush1.msra.mxu0 %v938
    %3214 = vmatprep.subr.mxu0 0.0
    %3215 = vmatpush1.msra.mxu0 %v939
    %3216 = vmatprep.subr.mxu0 0.0
    %3217 = vmatpush1.msra.mxu0 %v940
    %3218 = vmatprep.subr.mxu0 0.0
    %3219 = vmatpush1.msra.mxu0 %v941
    %3220 = vmatprep.subr.mxu0 0.0
    %3221 = vmatpush1.msra.mxu0 %v942
    %3222 = vmatprep.subr.mxu0 0.0
    %3223 = vmatpush1.msra.mxu0 %v943
    %3224 = vmatprep.subr.mxu0 0.0
    %3225 = vmatpush1.msra.mxu0 %v944
    %3226 = vmatprep.subr.mxu0 0.0
    %3227 = vmatpush1.msra.mxu0 %v945
    %3228 = vmatprep.subr.mxu0 0.0
    %3229 = vmatpush1.msra.mxu0 %v946
    %3230 = vmatprep.subr.mxu0 0.0
    %3231 = vmatpush1.msra.mxu0 %v947
    %3232 = vmatprep.subr.mxu0 0.0
    %3233 = vmatpush1.msra.mxu0 %v948
    %3234 = vmatprep.subr.mxu0 0.0
    %3235 = vmatpush1.msra.mxu0 %v949
    %3236 = vmatprep.subr.mxu0 0.0
    %3237 = vmatpush1.msra.mxu0 %v950
    %3238 = vmatprep.subr.mxu0 0.0
    %3239 = vmatpush1.msra.mxu0 %v951
    %3240 = vmatprep.subr.mxu0 0.0
    %3241 = vmatpush1.msra.mxu0 %v952
    %3242 = vmatprep.subr.mxu0 0.0
    %3243 = vmatpush1.msra.mxu0 %v953
    %3244 = vmatprep.subr.mxu0 0.0
    %3245 = vmatpush1.msra.mxu0 %v954
    %3246 = vmatprep.subr.mxu0 0.0
    %3247 = vmatpush1.msra.mxu0 %v955
    %3248 = vmatprep.subr.mxu0 0.0
    %3249 = vmatpush1.msra.mxu0 %v956
    %3250 = vmatprep.subr.mxu0 0.0
    %3251 = vmatpush1.msra.mxu0 %v957
    %3252 = vmatprep.subr.mxu0 0.0
    %3253 = vmatpush1.msra.mxu0 %v958
    %3254 = vmatprep.subr.mxu0 0.0
    %3255 = vmatpush1.msra.mxu0 %v959
    %3256 = vmatprep.subr.mxu0 0.0
    %3257 = vmatpush1.msra.mxu0 %v960
    %3258 = vmatprep.subr.mxu0 0.0
    %3259 = vmatpush1.msra.mxu0 %v961
    %3260 = vmatprep.mubr.f32.mxu0 %v1341
    %3261 = vmatmul.mubr.f32.gmra.mrb[0].mxu0 %v1339
    %v3262 = vpop.f32.mrb[0].mxu0
    %v3263 = vadd.f32 %v3193, %v3262
    %v3264 = vpop.f32.mrb[0].mxu0
    %3265 = vdwg.mxu0
    %3266 = vmatprep.subr.mxu0 0.0
    %3267 = vmatpush1.msra.mxu0 %v962
    %3268 = vmatprep.subr.mxu0 0.0
    %3269 = vmatpush1.msra.mxu0 %v963
    %3270 = vmatprep.subr.mxu0 0.0
    %3271 = vmatpush1.msra.mxu0 %v964
    %3272 = vmatprep.subr.mxu0 0.0
    %3273 = vmatpush1.msra.mxu0 %v965
    %3274 = vmatprep.subr.mxu0 0.0
    %3275 = vmatpush1.msra.mxu0 %v966
    %3276 = vmatprep.subr.mxu0 0.0
    %3277 = vmatpush1.msra.mxu0 %v967
    %3278 = vmatprep.subr.mxu0 0.0
    %3279 = vmatpush1.msra.mxu0 %v968
    %3280 = vmatprep.subr.mxu0 0.0
    %3281 = vmatpush1.msra.mxu0 %v969
    %3282 = vmatprep.subr.mxu0 0.0
    %3283 = vmatpush1.msra.mxu0 %v970
    %3284 = vmatprep.subr.mxu0 0.0
    %3285 = vmatpush1.msra.mxu0 %v971
    %3286 = vmatprep.subr.mxu0 0.0
    %3287 = vmatpush1.msra.mxu0 %v972
    %3288 = vmatprep.subr.mxu0 0.0
    %3289 = vmatpush1.msra.mxu0 %v973
    %3290 = vmatprep.subr.mxu0 0.0
    %3291 = vmatpush1.msra.mxu0 %v974
    %3292 = vmatprep.subr.mxu0 0.0
    %3293 = vmatpush1.msra.mxu0 %v975
    %3294 = vmatprep.subr.mxu0 0.0
    %3295 = vmatpush1.msra.mxu0 %v976
    %3296 = vmatprep.subr.mxu0 0.0
    %3297 = vmatpush1.msra.mxu0 %v977
    %3298 = vmatprep.subr.mxu0 0.0
    %3299 = vmatpush1.msra.mxu0 %v978
    %3300 = vmatprep.subr.mxu0 0.0
    %3301 = vmatpush1.msra.mxu0 %v979
    %3302 = vmatprep.subr.mxu0 0.0
    %3303 = vmatpush1.msra.mxu0 %v980
    %3304 = vmatprep.subr.mxu0 0.0
    %3305 = vmatpush1.msra.mxu0 %v981
    %3306 = vmatprep.subr.mxu0 0.0
    %3307 = vmatpush1.msra.mxu0 %v982
    %3308 = vmatprep.subr.mxu0 0.0
    %3309 = vmatpush1.msra.mxu0 %v983
    %3310 = vmatprep.subr.mxu0 0.0
    %3311 = vmatpush1.msra.mxu0 %v984
    %3312 = vmatprep.subr.mxu0 0.0
    %3313 = vmatpush1.msra.mxu0 %v985
    %3314 = vmatprep.subr.mxu0 0.0
    %3315 = vmatpush1.msra.mxu0 %v986
    %3316 = vmatprep.subr.mxu0 0.0
    %3317 = vmatpush1.msra.mxu0 %v987
    %3318 = vmatprep.subr.mxu0 0.0
    %3319 = vmatpush1.msra.mxu0 %v988
    %3320 = vmatprep.subr.mxu0 0.0
    %3321 = vmatpush1.msra.mxu0 %v989
    %3322 = vmatprep.subr.mxu0 0.0
    %3323 = vmatpush1.msra.mxu0 %v990
    %3324 = vmatprep.subr.mxu0 0.0
    %3325 = vmatpush1.msra.mxu0 %v991
    %3326 = vmatprep.subr.mxu0 0.0
    %3327 = vmatpush1.msra.mxu0 %v992
    %3328 = vmatprep.subr.mxu0 0.0
    %3329 = vmatpush1.msra.mxu0 %v993
    %3330 = vmatprep.mubr.f32.mxu0 %v1357
    %3331 = vmatmul.mubr.f32.gmra.mrb[0].mxu0 %v1349
    %v3332 = vpop.f32.mrb[0].mxu0
    %v3333 = vadd.f32 %v3263, %v3332
    %v3334 = vpop.f32.mrb[0].mxu0
    %3335 = vdwg.mxu0
    %3336 = vmatprep.subr.mxu0 0.0
    %3337 = vmatpush1.msra.mxu0 %v994
    %3338 = vmatprep.subr.mxu0 0.0
    %3339 = vmatpush1.msra.mxu0 %v995
    %3340 = vmatprep.subr.mxu0 0.0
    %3341 = vmatpush1.msra.mxu0 %v996
    %3342 = vmatprep.subr.mxu0 0.0
    %3343 = vmatpush1.msra.mxu0 %v997
    %3344 = vmatprep.subr.mxu0 0.0
    %3345 = vmatpush1.msra.mxu0 %v998
    %3346 = vmatprep.subr.mxu0 0.0
    %3347 = vmatpush1.msra.mxu0 %v999
    %3348 = vmatprep.subr.mxu0 0.0
    %3349 = vmatpush1.msra.mxu0 %v1000
    %3350 = vmatprep.subr.mxu0 0.0
    %3351 = vmatpush1.msra.mxu0 %v1001
    %3352 = vmatprep.subr.mxu0 0.0
    %3353 = vmatpush1.msra.mxu0 %v1002
    %3354 = vmatprep.subr.mxu0 0.0
    %3355 = vmatpush1.msra.mxu0 %v1003
    %3356 = vmatprep.subr.mxu0 0.0
    %3357 = vmatpush1.msra.mxu0 %v1004
    %3358 = vmatprep.subr.mxu0 0.0
    %3359 = vmatpush1.msra.mxu0 %v1005
    %3360 = vmatprep.subr.mxu0 0.0
    %3361 = vmatpush1.msra.mxu0 %v1006
    %3362 = vmatprep.subr.mxu0 0.0
    %3363 = vmatpush1.msra.mxu0 %v1007
    %3364 = vmatprep.subr.mxu0 0.0
    %3365 = vmatpush1.msra.mxu0 %v1008
    %3366 = vmatprep.subr.mxu0 0.0
    %3367 = vmatpush1.msra.mxu0 %v1009
    %3368 = vmatprep.subr.mxu0 0.0
    %3369 = vmatpush1.msra.mxu0 %v1010
    %3370 = vmatprep.subr.mxu0 0.0
    %3371 = vmatpush1.msra.mxu0 %v1011
    %3372 = vmatprep.subr.mxu0 0.0
    %3373 = vmatpush1.msra.mxu0 %v1012
    %3374 = vmatprep.subr.mxu0 0.0
    %3375 = vmatpush1.msra.mxu0 %v1013
    %3376 = vmatprep.subr.mxu0 0.0
    %3377 = vmatpush1.msra.mxu0 %v1014
    %3378 = vmatprep.subr.mxu0 0.0
    %3379 = vmatpush1.msra.mxu0 %v1015
    %3380 = vmatprep.subr.mxu0 0.0
    %3381 = vmatpush1.msra.mxu0 %v1016
    %3382 = vmatprep.subr.mxu0 0.0
    %3383 = vmatpush1.msra.mxu0 %v1017
    %3384 = vmatprep.subr.mxu0 0.0
    %3385 = vmatpush1.msra.mxu0 %v1018
    %3386 = vmatprep.subr.mxu0 0.0
    %3387 = vmatpush1.msra.mxu0 %v1019
    %3388 = vmatprep.subr.mxu0 0.0
    %3389 = vmatpush1.msra.mxu0 %v1020
    %3390 = vmatprep.subr.mxu0 0.0
    %3391 = vmatpush1.msra.mxu0 %v1021
    %3392 = vmatprep.subr.mxu0 0.0
    %3393 = vmatpush1.msra.mxu0 %v1022
    %3394 = vmatprep.subr.mxu0 0.0
    %3395 = vmatpush1.msra.mxu0 %v1023
    %3396 = vmatprep.subr.mxu0 0.0
    %3397 = vmatpush1.msra.mxu0 %v1024
    %3398 = vmatprep.subr.mxu0 0.0
    %3399 = vmatpush1.msra.mxu0 %v1025
    %3400 = vmatprep.mubr.f32.mxu0 %v1358
    %3401 = vmatmul.mubr.f32.gmra.mrb[0].mxu0 %v1356
    %v3402 = vpop.f32.mrb[0].mxu0
    %v3403 = vadd.f32 %v3333, %v3402
    %v3404 = vpop.f32.mrb[0].mxu0
    %3405 = vdwg.mxu0
    %3406 = vmatprep.subr.mxu0 0.0
    %3407 = vmatpush1.msra.mxu0 %v1026
    %3408 = vmatprep.subr.mxu0 0.0
    %3409 = vmatpush1.msra.mxu0 %v1027
    %3410 = vmatprep.subr.mxu0 0.0
    %3411 = vmatpush1.msra.mxu0 %v1028
    %3412 = vmatprep.subr.mxu0 0.0
    %3413 = vmatpush1.msra.mxu0 %v1029
    %3414 = vmatprep.subr.mxu0 0.0
    %3415 = vmatpush1.msra.mxu0 %v1030
    %3416 = vmatprep.subr.mxu0 0.0
    %3417 = vmatpush1.msra.mxu0 %v1031
    %3418 = vmatprep.subr.mxu0 0.0
    %3419 = vmatpush1.msra.mxu0 %v1032
    %3420 = vmatprep.subr.mxu0 0.0
    %3421 = vmatpush1.msra.mxu0 %v1033
    %3422 = vmatprep.subr.mxu0 0.0
    %3423 = vmatpush1.msra.mxu0 %v1034
    %3424 = vmatprep.subr.mxu0 0.0
    %3425 = vmatpush1.msra.mxu0 %v1035
    %3426 = vmatprep.subr.mxu0 0.0
    %3427 = vmatpush1.msra.mxu0 %v1036
    %3428 = vmatprep.subr.mxu0 0.0
    %3429 = vmatpush1.msra.mxu0 %v1037
    %3430 = vmatprep.subr.mxu0 0.0
    %3431 = vmatpush1.msra.mxu0 %v1038
    %3432 = vmatprep.subr.mxu0 0.0
    %3433 = vmatpush1.msra.mxu0 %v1039
    %3434 = vmatprep.subr.mxu0 0.0
    %3435 = vmatpush1.msra.mxu0 %v1040
    %3436 = vmatprep.subr.mxu0 0.0
    %3437 = vmatpush1.msra.mxu0 %v1041
    %3438 = vmatprep.subr.mxu0 0.0
    %3439 = vmatpush1.msra.mxu0 %v1042
    %3440 = vmatprep.subr.mxu0 0.0
    %3441 = vmatpush1.msra.mxu0 %v1043
    %3442 = vmatprep.subr.mxu0 0.0
    %3443 = vmatpush1.msra.mxu0 %v1044
    %3444 = vmatprep.subr.mxu0 0.0
    %3445 = vmatpush1.msra.mxu0 %v1045
    %3446 = vmatprep.subr.mxu0 0.0
    %3447 = vmatpush1.msra.mxu0 %v1046
    %3448 = vmatprep.subr.mxu0 0.0
    %3449 = vmatpush1.msra.mxu0 %v1047
    %3450 = vmatprep.subr.mxu0 0.0
    %3451 = vmatpush1.msra.mxu0 %v1048
    %3452 = vmatprep.subr.mxu0 0.0
    %3453 = vmatpush1.msra.mxu0 %v1049
    %3454 = vmatprep.subr.mxu0 0.0
    %3455 = vmatpush1.msra.mxu0 %v1050
    %3456 = vmatprep.subr.mxu0 0.0
    %3457 = vmatpush1.msra.mxu0 %v1051
    %3458 = vmatprep.subr.mxu0 0.0
    %3459 = vmatpush1.msra.mxu0 %v1052
    %3460 = vmatprep.subr.mxu0 0.0
    %3461 = vmatpush1.msra.mxu0 %v1053
    %3462 = vmatprep.subr.mxu0 0.0
    %3463 = vmatpush1.msra.mxu0 %v1054
    %3464 = vmatprep.subr.mxu0 0.0
    %3465 = vmatpush1.msra.mxu0 %v1055
    %3466 = vmatprep.subr.mxu0 0.0
    %3467 = vmatpush1.msra.mxu0 %v1056
    %3468 = vmatprep.subr.mxu0 0.0
    %3469 = vmatpush1.msra.mxu0 %v1057
    %3470 = vmatprep.mubr.f32.mxu0 %v1374
    %3471 = vmatmul.mubr.f32.gmra.mrb[0].mxu0 %v1366
    %v3472 = vpop.f32.mrb[0].mxu0
    %v3473 = vadd.f32 %v3403, %v3472
    %v3474 = vpop.f32.mrb[0].mxu0
    %3475 = vdwg.mxu0
    %3476 = vmatprep.subr.mxu0 0.0
    %3477 = vmatpush1.msra.mxu0 %v1058
    %3478 = vmatprep.subr.mxu0 0.0
    %3479 = vmatpush1.msra.mxu0 %v1059
    %3480 = vmatprep.subr.mxu0 0.0
    %3481 = vmatpush1.msra.mxu0 %v1060
    %3482 = vmatprep.subr.mxu0 0.0
    %3483 = vmatpush1.msra.mxu0 %v1061
    %3484 = vmatprep.subr.mxu0 0.0
    %3485 = vmatpush1.msra.mxu0 %v1062
    %3486 = vmatprep.subr.mxu0 0.0
    %3487 = vmatpush1.msra.mxu0 %v1063
    %3488 = vmatprep.subr.mxu0 0.0
    %3489 = vmatpush1.msra.mxu0 %v1064
    %3490 = vmatprep.subr.mxu0 0.0
    %3491 = vmatpush1.msra.mxu0 %v1065
    %3492 = vmatprep.subr.mxu0 0.0
    %3493 = vmatpush1.msra.mxu0 %v1066
    %3494 = vmatprep.subr.mxu0 0.0
    %3495 = vmatpush1.msra.mxu0 %v1067
    %3496 = vmatprep.subr.mxu0 0.0
    %3497 = vmatpush1.msra.mxu0 %v1068
    %3498 = vmatprep.subr.mxu0 0.0
    %3499 = vmatpush1.msra.mxu0 %v1069
    %3500 = vmatprep.subr.mxu0 0.0
    %3501 = vmatpush1.msra.mxu0 %v1070
    %3502 = vmatprep.subr.mxu0 0.0
    %3503 = vmatpush1.msra.mxu0 %v1071
    %3504 = vmatprep.subr.mxu0 0.0
    %3505 = vmatpush1.msra.mxu0 %v1072
    %3506 = vmatprep.subr.mxu0 0.0
    %3507 = vmatpush1.msra.mxu0 %v1073
    %3508 = vmatprep.subr.mxu0 0.0
    %3509 = vmatpush1.msra.mxu0 %v1074
    %3510 = vmatprep.subr.mxu0 0.0
    %3511 = vmatpush1.msra.mxu0 %v1075
    %3512 = vmatprep.subr.mxu0 0.0
    %3513 = vmatpush1.msra.mxu0 %v1076
    %3514 = vmatprep.subr.mxu0 0.0
    %3515 = vmatpush1.msra.mxu0 %v1077
    %3516 = vmatprep.subr.mxu0 0.0
    %3517 = vmatpush1.msra.mxu0 %v1078
    %3518 = vmatprep.subr.mxu0 0.0
    %3519 = vmatpush1.msra.mxu0 %v1079
    %3520 = vmatprep.subr.mxu0 0.0
    %3521 = vmatpush1.msra.mxu0 %v1080
    %3522 = vmatprep.subr.mxu0 0.0
    %3523 = vmatpush1.msra.mxu0 %v1081
    %3524 = vmatprep.subr.mxu0 0.0
    %3525 = vmatpush1.msra.mxu0 %v1082
    %3526 = vmatprep.subr.mxu0 0.0
    %3527 = vmatpush1.msra.mxu0 %v1083
    %3528 = vmatprep.subr.mxu0 0.0
    %3529 = vmatpush1.msra.mxu0 %v1084
    %3530 = vmatprep.subr.mxu0 0.0
    %3531 = vmatpush1.msra.mxu0 %v1085
    %3532 = vmatprep.subr.mxu0 0.0
    %3533 = vmatpush1.msra.mxu0 %v1086
    %3534 = vmatprep.subr.mxu0 0.0
    %3535 = vmatpush1.msra.mxu0 %v1087
    %3536 = vmatprep.subr.mxu0 0.0
    %3537 = vmatpush1.msra.mxu0 %v1088
    %3538 = vmatprep.subr.mxu0 0.0
    %3539 = vmatpush1.msra.mxu0 %v1089
    %3540 = vmatprep.mubr.f32.mxu0 %v1375
    %3541 = vmatmul.mubr.f32.gmra.mrb[0].mxu0 %v1373
    %v3542 = vpop.f32.mrb[0].mxu0
    %v3543 = vadd.f32 %v3473, %v3542
    %v3544 = vpop.f32.mrb[0].mxu0
    %3545 = vdwg.mxu0
    %3546 = vmatprep.subr.mxu0 0.0
    %3547 = vmatpush1.msra.mxu0 %v1090
    %3548 = vmatprep.subr.mxu0 0.0
    %3549 = vmatpush1.msra.mxu0 %v1091
    %3550 = vmatprep.subr.mxu0 0.0
    %3551 = vmatpush1.msra.mxu0 %v1092
    %3552 = vmatprep.subr.mxu0 0.0
    %3553 = vmatpush1.msra.mxu0 %v1093
    %3554 = vmatprep.subr.mxu0 0.0
    %3555 = vmatpush1.msra.mxu0 %v1094
    %3556 = vmatprep.subr.mxu0 0.0
    %3557 = vmatpush1.msra.mxu0 %v1095
    %3558 = vmatprep.subr.mxu0 0.0
    %3559 = vmatpush1.msra.mxu0 %v1096
    %3560 = vmatprep.subr.mxu0 0.0
    %3561 = vmatpush1.msra.mxu0 %v1097
    %3562 = vmatprep.subr.mxu0 0.0
    %3563 = vmatpush1.msra.mxu0 0.0
    %3564 = vmatprep.subr.mxu0 0.0
    %3565 = vmatpush1.msra.mxu0 0.0
    %3566 = vmatprep.subr.mxu0 0.0
    %3567 = vmatpush1.msra.mxu0 0.0
    %3568 = vmatprep.subr.mxu0 0.0
    %3569 = vmatpush1.msra.mxu0 0.0
    %3570 = vmatprep.subr.mxu0 0.0
    %3571 = vmatpush1.msra.mxu0 0.0
    %3572 = vmatprep.subr.mxu0 0.0
    %3573 = vmatpush1.msra.mxu0 0.0
    %3574 = vmatprep.subr.mxu0 0.0
    %3575 = vmatpush1.msra.mxu0 0.0
    %3576 = vmatprep.subr.mxu0 0.0
    %3577 = vmatpush1.msra.mxu0 0.0
    %3578 = vmatprep.subr.mxu0 0.0
    %3579 = vmatpush1.msra.mxu0 0.0
    %3580 = vmatprep.subr.mxu0 0.0
    %3581 = vmatpush1.msra.mxu0 0.0
    %3582 = vmatprep.subr.mxu0 0.0
    %3583 = vmatpush1.msra.mxu0 0.0
    %3584 = vmatprep.subr.mxu0 0.0
    %3585 = vmatpush1.msra.mxu0 0.0
    %3586 = vmatprep.subr.mxu0 0.0
    %3587 = vmatpush1.msra.mxu0 0.0
    %3588 = vmatprep.subr.mxu0 0.0
    %3589 = vmatpush1.msra.mxu0 0.0
    %3590 = vmatprep.subr.mxu0 0.0
    %3591 = vmatpush1.msra.mxu0 0.0
    %3592 = vmatprep.subr.mxu0 0.0
    %3593 = vmatpush1.msra.mxu0 0.0
    %3594 = vmatprep.subr.mxu0 0.0
    %3595 = vmatpush1.msra.mxu0 0.0
    %3596 = vmatprep.subr.mxu0 0.0
    %3597 = vmatpush1.msra.mxu0 0.0
    %3598 = vmatprep.subr.mxu0 0.0
    %3599 = vmatpush1.msra.mxu0 0.0
    %3600 = vmatprep.subr.mxu0 0.0
    %3601 = vmatpush1.msra.mxu0 0.0
    %3602 = vmatprep.subr.mxu0 0.0
    %3603 = vmatpush1.msra.mxu0 0.0
    %3604 = vmatprep.subr.mxu0 0.0
    %3605 = vmatpush1.msra.mxu0 0.0
    %3606 = vmatprep.subr.mxu0 0.0
    %3607 = vmatpush1.msra.mxu0 0.0
    %3608 = vmatprep.subr.mxu0 0.0
    %3609 = vmatpush1.msra.mxu0 0.0
    %3610 = vmatprep.mubr.f32.mxu0 0.0
    %3611 = vmatmul.mubr.f32.gmra.mrb[0].mxu0 %v1444
    %v3612 = vpop.f32.mrb[0].mxu0
    %v3613 = vadd.f32 %v3543, %v3612
    %v3614 = vpop.f32.mrb[0].mxu0
    %3615 = vdwg.mxu0
    %v3616 = vmax.f32 %v3613, 0.0
    %v3617 = vld [vmem:[#allocation8] sm:$0xff]
    %v3618 = vld [vmem:[#allocation8 + $0x8] sm:$0xff]
    %v3619 = vld [vmem:[#allocation8 + $0x10] sm:$0xff]
    %v3620 = vld [vmem:[#allocation8 + $0x18] sm:$0xff]
    %v3621 = vld [vmem:[#allocation8 + $0x20] sm:$0xff]
    %v3622 = vld [vmem:[#allocation8 + $0x28] sm:$0xff]
    %v3623 = vld [vmem:[#allocation8 + $0x30] sm:$0xff]
    %v3624 = vld [vmem:[#allocation8 + $0x38] sm:$0xff]
    %v3625 = vld [vmem:[#allocation8 + $0x40] sm:$0xff]
    %v3626 = vld [vmem:[#allocation8 + $0x48] sm:$0xff]
    %v3627 = vld [vmem:[#allocation8 + $0x50] sm:$0xff]
    %v3628 = vld [vmem:[#allocation8 + $0x58] sm:$0xff]
    %v3629 = vld [vmem:[#allocation8 + $0x60] sm:$0xff]
    %v3630 = vld [vmem:[#allocation8 + $0x68] sm:$0xff]
    %v3631 = vld [vmem:[#allocation8 + $0x70] sm:$0xff]
    %v3632 = vld [vmem:[#allocation8 + $0x78] sm:$0xff]
    %v3633 = vld [vmem:[#allocation10] sm:$0x1]
    %v3635 = vlaneseq
    %v3636 = vshrl.u32 %v3635, 7
    %v3637 = vsub.s32 0, %v3636
    %v3638 = vrot.slane %v3633, %v3637
    %3640 = vmatprep.subr.mxu0 0.0
    %3641 = vmatpush1.msra.mxu0 %v3617
    %3642 = vmatprep.subr.mxu0 0.0
    %3643 = vmatpush1.msra.mxu0 %v3618
    %3644 = vmatprep.subr.mxu0 0.0
    %3645 = vmatpush1.msra.mxu0 %v3619
    %3646 = vmatprep.subr.mxu0 0.0
    %3647 = vmatpush1.msra.mxu0 %v3620
    %3648 = vmatprep.subr.mxu0 0.0
    %3649 = vmatpush1.msra.mxu0 %v3621
    %3650 = vmatprep.subr.mxu0 0.0
    %3651 = vmatpush1.msra.mxu0 %v3622
    %3652 = vmatprep.subr.mxu0 0.0
    %3653 = vmatpush1.msra.mxu0 %v3623
    %3654 = vmatprep.subr.mxu0 0.0
    %3655 = vmatpush1.msra.mxu0 %v3624
    %3656 = vmatprep.subr.mxu0 0.0
    %3657 = vmatpush1.msra.mxu0 %v3625
    %3658 = vmatprep.subr.mxu0 0.0
    %3659 = vmatpush1.msra.mxu0 %v3626
    %3660 = vmatprep.subr.mxu0 0.0
    %3661 = vmatpush1.msra.mxu0 %v3627
    %3662 = vmatprep.subr.mxu0 0.0
    %3663 = vmatpush1.msra.mxu0 %v3628
    %3664 = vmatprep.subr.mxu0 0.0
    %3665 = vmatpush1.msra.mxu0 %v3629
    %3666 = vmatprep.subr.mxu0 0.0
    %3667 = vmatpush1.msra.mxu0 %v3630
    %3668 = vmatprep.subr.mxu0 0.0
    %3669 = vmatpush1.msra.mxu0 %v3631
    %3670 = vmatprep.subr.mxu0 0.0
    %3671 = vmatpush1.msra.mxu0 %v3632
    %3672 = vmatprep.subr.mxu0 0.0
    %3673 = vmatpush1.msra.mxu0 0.0
    %3674 = vmatprep.subr.mxu0 0.0
    %3675 = vmatpush1.msra.mxu0 0.0
    %3676 = vmatprep.subr.mxu0 0.0
    %3677 = vmatpush1.msra.mxu0 0.0
    %3678 = vmatprep.subr.mxu0 0.0
    %3679 = vmatpush1.msra.mxu0 0.0
    %3680 = vmatprep.subr.mxu0 0.0
    %3681 = vmatpush1.msra.mxu0 0.0
    %3682 = vmatprep.subr.mxu0 0.0
    %3683 = vmatpush1.msra.mxu0 0.0
    %3684 = vmatprep.subr.mxu0 0.0
    %3685 = vmatpush1.msra.mxu0 0.0
    %3686 = vmatprep.subr.mxu0 0.0
    %3687 = vmatpush1.msra.mxu0 0.0
    %3688 = vmatprep.subr.mxu0 0.0
    %3689 = vmatpush1.msra.mxu0 0.0
    %3690 = vmatprep.subr.mxu0 0.0
    %3691 = vmatpush1.msra.mxu0 0.0
    %3692 = vmatprep.subr.mxu0 0.0
    %3693 = vmatpush1.msra.mxu0 0.0
    %3694 = vmatprep.subr.mxu0 0.0
    %3695 = vmatpush1.msra.mxu0 0.0
    %3696 = vmatprep.subr.mxu0 0.0
    %3697 = vmatpush1.msra.mxu0 0.0
    %3698 = vmatprep.subr.mxu0 0.0
    %3699 = vmatpush1.msra.mxu0 0.0
    %3700 = vmatprep.subr.mxu0 0.0
    %3701 = vmatpush1.msra.mxu0 0.0
    %3702 = vmatprep.subr.mxu0 0.0
    %3703 = vmatpush1.msra.mxu0 0.0
    %3704 = vmatprep.mubr.f32.mxu0 0.0
    %3705 = vmatmul.mubr.f32.gmra.mrb[0].mxu0 %v3616
    %v3706 = vpop.f32.mrb[0].mxu0
    %v3707 = vadd.f32 %v3638, %v3706
    %v3708 = vpop.f32.mrb[0].mxu0
    %3709 = vdwg.mxu0
    %v3710 = vmax.f32 %v3707, 0.0
    %v3711 = vld [vmem:[#allocation11] sm:$0xff]
    %v3712 = vld [vmem:[#allocation11 + $0x8] sm:$0x3]
    %v3713 = vld [vmem:[#allocation13] sm:$0x1]
    %v3715 = vlaneseq
    %v3716 = vshrl.u32 %v3715, 7
    %v3717 = vsub.s32 0, %v3716
    %v3718 = vrot.slane %v3713, %v3717
    %vm3720 = vcmask 80896
    %v3722 = vsel %vm3720, %v3710, 0
    %vm3724 = vcmask 1041408
    %v3726 = vsel %vm3724, %v3712, 0
    %3728 = vmatprep.subr.mxu0 0.0
    %3729 = vmatpush1.msra.mxu0 %v3711
    %3730 = vmatprep.subr.mxu0 0.0
    %3731 = vmatpush1.msra.mxu0 %v3726
    %3732 = vmatprep.subr.mxu0 0.0
    %3733 = vmatpush1.msra.mxu0 0.0
    %3734 = vmatprep.subr.mxu0 0.0
    %3735 = vmatpush1.msra.mxu0 0.0
    %3736 = vmatprep.subr.mxu0 0.0
    %3737 = vmatpush1.msra.mxu0 0.0
    %3738 = vmatprep.subr.mxu0 0.0
    %3739 = vmatpush1.msra.mxu0 0.0
    %3740 = vmatprep.subr.mxu0 0.0
    %3741 = vmatpush1.msra.mxu0 0.0
    %3742 = vmatprep.subr.mxu0 0.0
    %3743 = vmatpush1.msra.mxu0 0.0
    %3744 = vmatprep.subr.mxu0 0.0
    %3745 = vmatpush1.msra.mxu0 0.0
    %3746 = vmatprep.subr.mxu0 0.0
    %3747 = vmatpush1.msra.mxu0 0.0
    %3748 = vmatprep.subr.mxu0 0.0
    %3749 = vmatpush1.msra.mxu0 0.0
    %3750 = vmatprep.subr.mxu0 0.0
    %3751 = vmatpush1.msra.mxu0 0.0
    %3752 = vmatprep.subr.mxu0 0.0
    %3753 = vmatpush1.msra.mxu0 0.0
    %3754 = vmatprep.subr.mxu0 0.0
    %3755 = vmatpush1.msra.mxu0 0.0
    %3756 = vmatprep.subr.mxu0 0.0
    %3757 = vmatpush1.msra.mxu0 0.0
    %3758 = vmatprep.subr.mxu0 0.0
    %3759 = vmatpush1.msra.mxu0 0.0
    %3760 = vmatprep.subr.mxu0 0.0
    %3761 = vmatpush1.msra.mxu0 0.0
    %3762 = vmatprep.subr.mxu0 0.0
    %3763 = vmatpush1.msra.mxu0 0.0
    %3764 = vmatprep.subr.mxu0 0.0
    %3765 = vmatpush1.msra.mxu0 0.0
    %3766 = vmatprep.subr.mxu0 0.0
    %3767 = vmatpush1.msra.mxu0 0.0
    %3768 = vmatprep.subr.mxu0 0.0
    %3769 = vmatpush1.msra.mxu0 0.0
    %3770 = vmatprep.subr.mxu0 0.0
    %3771 = vmatpush1.msra.mxu0 0.0
    %3772 = vmatprep.subr.mxu0 0.0
    %3773 = vmatpush1.msra.mxu0 0.0
    %3774 = vmatprep.subr.mxu0 0.0
    %3775 = vmatpush1.msra.mxu0 0.0
    %3776 = vmatprep.subr.mxu0 0.0
    %3777 = vmatpush1.msra.mxu0 0.0
    %3778 = vmatprep.subr.mxu0 0.0
    %3779 = vmatpush1.msra.mxu0 0.0
    %3780 = vmatprep.subr.mxu0 0.0
    %3781 = vmatpush1.msra.mxu0 0.0
    %3782 = vmatprep.subr.mxu0 0.0
    %3783 = vmatpush1.msra.mxu0 0.0
    %3784 = vmatprep.subr.mxu0 0.0
    %3785 = vmatpush1.msra.mxu0 0.0
    %3786 = vmatprep.subr.mxu0 0.0
    %3787 = vmatpush1.msra.mxu0 0.0
    %3788 = vmatprep.subr.mxu0 0.0
    %3789 = vmatpush1.msra.mxu0 0.0
    %3790 = vmatprep.subr.mxu0 0.0
    %3791 = vmatpush1.msra.mxu0 0.0
    %3792 = vmatprep.mubr.f32.mxu0 0.0
    %3793 = vmatmul.mubr.f32.gmra.mrb[0].mxu0 %v3722
    %v3794 = vpop.f32.mrb[0].mxu0
    %v3795 = vadd.f32 %v3718, %v3794
    %v3796 = vpop.f32.mrb[0].mxu0
    %3797 = vdwg.mxu0
    %vm3798 = vcmask 9216
    %3799 = vst.msk [vmem:[#allocation14] sm:$0x3] %vm3798, %v3795
    // Predicated region
    $region58: #{cnn24_forward.3} parent=1 // pred_check
      _
    $region59: #{cnn24_forward.3} parent=1 // pred_check_branch
      %3801 = sbr.rel (0) target = $region61
    $region60: #{cnn24_forward.3} parent=1 // pred_region
      %s3803 = ssub.s32 32, 32
      %3804 = vsyncadd [#allocation4], %s3803
      %s3806 = sshll.u32 [#allocation14], 4
      %s3807 = int_to_ptr.vmem [resolvable:$true] %s3806
      %3809 = dma.vmem_to_hbm [thread:$0]  %s3807, 32, %s7, [#allocation4]
    $region61: #{cnn24_forward.3} parent=1 // pred_fallthru
      _
    // Predicated region
    $region62: #{cnn24_forward.3} parent=1 // pred_check
      _
    $region63: #{cnn24_forward.3} parent=1 // pred_check_branch
      %3811 = sbr.rel (0) target = $region65
    $region64: #{cnn24_forward.3} parent=1 // pred_region
      %3812 = dma.done [#allocation4], 32
    $region65: #{cnn24_forward.3} parent=1 // pred_fallthru
      _
    %3813 = vsyncpa [#allocation3], 1
    %3814 = vsyncpa [#allocation6], 1
    %3815 = vsyncpa [#allocation9], 1
    %3816 = vsyncpa [#allocation12], 1
    %3817 = vsyncpa [#allocation4], 1

// kernel: cnn24_forward.2
$region0: #{cnn24_forward.2}
  #allocation0 [shape = 'u32[]', space=smem, size = 0x4, offset = 0x4, fixed_abs, tag = 'smem constant byte address 0x4 - core index']
  #allocation1 [shape = 'u32[144,128]{1,0:T(1,128)}', space=vmem, size = 0x12000, scoped, tag = 'internal scratch']
  #allocation2 [shape = 'f32[528,27]{1,0:T(8,128)}', space=vmem, size = 0x42000, scoped, tag = 'scratch operand']
  #allocation3 [shape = 'f32[528,64]{1,0:T(8,128)}', space=vmem, size = 0x42000, scoped, tag = 'scratch operand']
  #allocation4 [shape = 'f32[264,64]{1,0:T(8,128)}', space=vmem, size = 0x21000, scoped, tag = 'scratch operand']
  %s0 = inlined_call_operand.vmem [shape: f32[2,578,3], index: 0, kind: input, shape index: {}]
  %s1 = inlined_call_operand.hbm [shape: f32[27,64], index: 1, kind: input, shape index: {}]
  %s2 = inlined_call_operand.hbm [shape: f32[1,64], index: 2, kind: input, shape index: {}]
  %s3 = inlined_call_operand.hbm [shape: f32[1,64], index: 3, kind: input, shape index: {}]
  %s4 = inlined_call_operand.vmem [shape: f32[2,121,64], index: 4, kind: output, shape index: {}]
  %s5 = sld [smem:[#allocation0]]
  $region61: #{cnn24_forward.2} parent=0
    _
  %s7 = ssub.s32 1, %s5
  %s8 = scalar_select 0, %s7, %s5
  $region1: #{cnn24_forward.2} parent=0
    #allocation5 [shape = 'u8[16384]{0}', space=vmem, size = 0x4000, scoped, tag = 'input window, operand 1, single buffered']
    #allocation6 [shape = 's32[2]{0}', space=sflag, size = 0x8, scoped, tag = 'scoped memory for cnn24_forward.2']
    #allocation7 [shape = 'u8[512]{0}', space=vmem, size = 0x400, scoped, tag = 'input window, operand 2, single buffered']
    #allocation8 [shape = 's32[1]{0}', space=sflag, size = 0x4, scoped, tag = 'scoped memory for cnn24_forward.2']
    #allocation9 [shape = 'u8[512]{0}', space=vmem, size = 0x400, scoped, tag = 'input window, operand 3, single buffered']
    %9 = vsyncpa [#allocation6], 0
    %10 = vsyncpa [#allocation8], 0
    loop: start=0, step=1, limit=4
    $region2: #{cnn24_forward.2} parent=1 // loop_pre_header
      _
    $region3: #{cnn24_forward.2} parent=1 // loop_header
      %s12 = sphi 0, %s16
      %p13 = scmp.ge.s32.totalorder %s12, 4
      %s22 = sphi 0, %s24
      %s25 = sphi 0, %s22
      %s26 = sphi 0, %s25
      %s42 = sphi 0, %s26
      %s46 = sphi 0, %s46
      %s48 = sphi 0, %s46
      %s49 = sphi 0, %s48
      %s63 = sphi 0, %s49
      %s67 = sphi 0, %s67
      %s69 = sphi 0, %s67
      %s70 = sphi 0, %s69
      %s84 = sphi 0, %s70
      %s88 = sphi 0, %s88
      %s90 = sphi 0, %s88
      %s91 = sphi 0, %s90
      %s105 = sphi 0, %s91
      %s111 = sphi 0, %s113
      %s114 = sphi 0, %s111
      %s115 = sphi 0, %s114
      %s131 = sphi 0, %s115
    $region4: #{cnn24_forward.2} parent=1 // loop_header_branch
      %15 = sbr.rel (%p13) target = $region8
    $region5: #{cnn24_forward.2} parent=1 // loop_body
      %s17 = ssub.s32 %s12, 1
      %s18 = ssub.s32 %s12, 2
      %s19 = sadd.s32 %s12, 1
      %s20 = ssub.s32 %s12, %s19
      %p21 = scmp.eq.s32.totalorder %s20, 0
      %s23 = sadd.s32 %s22, 1
      %s24 = scalar_select %p21, %s22, %s23
      %p27 = pneg %p21
      %p28 = scmp.eq.s32.totalorder %s12, 1
      %p29 = por %p27, %p28
      %p30 = scmp.ne.s32.totalorder %s22, %s25
      %p31 = scmp.eq.s32.totalorder %s12, 0
      %p32 = por %p30, %p31
      %p33 = scmp.ne.s32.totalorder %s22, %s25
      %p34 = scmp.eq.s32.totalorder %s17, 1
      %p35 = por %p33, %p34
      %p36 = scmp.ne.s32.totalorder %s25, %s26
      %p37 = scmp.eq.s32.totalorder %s17, 0
      %p38 = por %p36, %p37
      %p39 = scmp.ne.s32.totalorder %s25, %s26
      %p40 = scmp.eq.s32.totalorder %s18, 1
      %p41 = por %p39, %p40
      %p43 = scmp.ne.s32.totalorder %s26, %s42
      %p44 = scmp.eq.s32.totalorder %s18, 0
      %p45 = por %p43, %p44
      %s47 = sadd.s32 %s46, 1
      %p50 = scmp.eq.s32.totalorder %s12, 1
      %p51 = scmp.ne.s32.totalorder %s46, %s48
      %p52 = scmp.eq.s32.totalorder %s12, 0
      %p53 = por %p51, %p52
      %p54 = scmp.ne.s32.totalorder %s46, %s48
      %p55 = scmp.eq.s32.totalorder %s17, 1
      %p56 = por %p54, %p55
      %p57 = scmp.ne.s32.totalorder %s48, %s49
      %p58 = scmp.eq.s32.totalorder %s17, 0
      %p59 = por %p57, %p58
      %p60 = scmp.ne.s32.totalorder %s48, %s49
      %p61 = scmp.eq.s32.totalorder %s18, 1
      %p62 = por %p60, %p61
      %p64 = scmp.ne.s32.totalorder %s49, %s63
      %p65 = scmp.eq.s32.totalorder %s18, 0
      %p66 = por %p64, %p65
      %s68 = sadd.s32 %s67, 1
      %p71 = scmp.eq.s32.totalorder %s12, 1
      %p72 = scmp.ne.s32.totalorder %s67, %s69
      %p73 = scmp.eq.s32.totalorder %s12, 0
      %p74 = por %p72, %p73
      %p75 = scmp.ne.s32.totalorder %s67, %s69
      %p76 = scmp.eq.s32.totalorder %s17, 1
      %p77 = por %p75, %p76
      %p78 = scmp.ne.s32.totalorder %s69, %s70
      %p79 = scmp.eq.s32.totalorder %s17, 0
      %p80 = por %p78, %p79
      %p81 = scmp.ne.s32.totalorder %s69, %s70
      %p82 = scmp.eq.s32.totalorder %s18, 1
      %p83 = por %p81, %p82
      %p85 = scmp.ne.s32.totalorder %s70, %s84
      %p86 = scmp.eq.s32.totalorder %s18, 0
      %p87 = por %p85, %p86
      %s89 = sadd.s32 %s88, 1
      %p92 = scmp.eq.s32.totalorder %s12, 1
      %p93 = scmp.ne.s32.totalorder %s88, %s90
      %p94 = scmp.eq.s32.totalorder %s12, 0
      %p95 = por %p93, %p94
      %p96 = scmp.ne.s32.totalorder %s88, %s90
      %p97 = scmp.eq.s32.totalorder %s17, 1
      %p98 = por %p96, %p97
      %p99 = scmp.ne.s32.totalorder %s90, %s91
      %p100 = scmp.eq.s32.totalorder %s17, 0
      %p101 = por %p99, %p100
      %p102 = scmp.ne.s32.totalorder %s90, %s91
      %p103 = scmp.eq.s32.totalorder %s18, 1
      %p104 = por %p102, %p103
      %p106 = scmp.ne.s32.totalorder %s91, %s105
      %p107 = scmp.eq.s32.totalorder %s18, 0
      %p108 = por %p106, %p107
      %s109 = ssub.s32 %s12, %s19
      %p110 = scmp.eq.s32.totalorder %s109, 0
      %s112 = sadd.s32 %s111, 1
      %s113 = scalar_select %p110, %s111, %s112
      %p116 = pneg %p110
      %p117 = scmp.eq.s32.totalorder %s12, 1
      %p118 = por %p116, %p117
      %p119 = scmp.ne.s32.totalorder %s111, %s114
      %p120 = scmp.eq.s32.totalorder %s12, 0
      %p121 = por %p119, %p120
      %p122 = scmp.ne.s32.totalorder %s111, %s114
      %p123 = scmp.eq.s32.totalorder %s17, 1
      %p124 = por %p122, %p123
      %p125 = scmp.ne.s32.totalorder %s114, %s115
      %p126 = scmp.eq.s32.totalorder %s17, 0
      %p127 = por %p125, %p126
      %p128 = scmp.ne.s32.totalorder %s114, %s115
      %p129 = scmp.eq.s32.totalorder %s18, 1
      %p130 = por %p128, %p129
      %p132 = scmp.ne.s32.totalorder %s115, %s131
      %p133 = scmp.eq.s32.totalorder %s18, 0
      %p134 = por %p132, %p133
      %p135 = scmp.le.s32.totalorder 1, %s12
      %p136 = scmp.lt.s32.totalorder %s12, 3
      %p137 = pnand %p135, %p136
      %p138 = pneg %p137
      // Predicated region
      $region9: #{cnn24_forward.2} parent=5 // pred_check
        _
      $region10: #{cnn24_forward.2} parent=5 // pred_check_branch
        %140 = sbr.rel (%p137) target = $region12
      $region11: #{cnn24_forward.2} parent=5 // pred_region
        %s141 = ssub.s32 %s12, 1
        // Predicated region
        $region13: #{cnn24_forward.2} parent=11 // pred_check
          %p142 = pneg %p59
        $region14: #{cnn24_forward.2} parent=11 // pred_check_branch
          %144 = sbr.rel (%p142) target = $region16
        $region15: #{cnn24_forward.2} parent=11 // pred_region
          %s146 = ssub.s32 512, 512
          %147 = vsyncadd [#allocation6], %s146
          %s148 = sshll.u32 [#allocation5], 4
          %s149 = int_to_ptr.vmem [resolvable:$true] %s148
          %154 = dma.hbm_to_vmem [thread:$0]  %s1, 512, %s149, [#allocation6], 128, 128, 8
        $region16: #{cnn24_forward.2} parent=11 // pred_fallthru
          _
        // Predicated region
        $region17: #{cnn24_forward.2} parent=11 // pred_check
          %p155 = pneg %p80
        $region18: #{cnn24_forward.2} parent=11 // pred_check_branch
          %157 = sbr.rel (%p155) target = $region20
        $region19: #{cnn24_forward.2} parent=11 // pred_region
          %s159 = ssub.s32 16, 16
          %160 = vsyncadd [#allocation8], %s159
          %s162 = sshll.u32 [#allocation7], 4
          %s163 = int_to_ptr.vmem [resolvable:$true] %s162
          %165 = dma.hbm_to_vmem [thread:$0]  %s2, 16, %s163, [#allocation8]
        $region20: #{cnn24_forward.2} parent=11 // pred_fallthru
          _
        // Predicated region
        $region21: #{cnn24_forward.2} parent=11 // pred_check
          %p166 = pneg %p101
        $region22: #{cnn24_forward.2} parent=11 // pred_check_branch
          %168 = sbr.rel (%p166) target = $region24
        $region23: #{cnn24_forward.2} parent=11 // pred_region
          %s170 = ssub.s32 16, 16
          %171 = vsyncadd [#allocation8], %s170
          %s173 = sshll.u32 [#allocation9], 4
          %s174 = int_to_ptr.vmem [resolvable:$true] %s173
          %176 = dma.hbm_to_vmem [thread:$0]  %s3, 16, %s174, [#allocation8]
        $region24: #{cnn24_forward.2} parent=11 // pred_fallthru
          _
      $region12: #{cnn24_forward.2} parent=5 // pred_fallthru
        _
      %p177 = scmp.lt.s32.totalorder %s12, 2
      // Predicated region
      $region25: #{cnn24_forward.2} parent=5 // pred_check
        %p178 = pneg %p177
      $region26: #{cnn24_forward.2} parent=5 // pred_check_branch
        %180 = sbr.rel (%p178) target = $region28
      $region27: #{cnn24_forward.2} parent=5 // pred_region
        // Predicated region
        $region29: #{cnn24_forward.2} parent=27 // pred_check
          %p181 = pneg %p32
        $region30: #{cnn24_forward.2} parent=27 // pred_check_branch
          %183 = sbr.rel (%p181) target = $region32
        $region31: #{cnn24_forward.2} parent=27 // pred_region
          %p184 = scmp.lt.s32.totalorder %s12, 1
          %s185 = scalar_select %p184, %s12, 1
          %s186 = smul.addr %s185, 73
          %s187 = smul.addr %s186, 8
          %s188 = scalar_lea.vmem %s0, %s187
        $region32: #{cnn24_forward.2} parent=27 // pred_fallthru
          _
      $region28: #{cnn24_forward.2} parent=5 // pred_fallthru
        _
      %p189 = scmp.le.s32.totalorder 1, %s12
      %p190 = scmp.lt.s32.totalorder %s12, 3
      %p191 = pnand %p189, %p190
      %p192 = pneg %p191
      // Predicated region
      $region33: #{cnn24_forward.2} parent=5 // pred_check
        _
      $region34: #{cnn24_forward.2} parent=5 // pred_check_branch
        %194 = sbr.rel (%p191) target = $region36
      $region35: #{cnn24_forward.2} parent=5 // pred_region
        %s195 = ssub.s32 %s12, 1
        // Predicated region
        $region37: #{cnn24_forward.2} parent=35 // pred_check
          %p196 = pneg %p59
        $region38: #{cnn24_forward.2} parent=35 // pred_check_branch
          %198 = sbr.rel (%p196) target = $region40
        $region39: #{cnn24_forward.2} parent=35 // pred_region
          %199 = dma.done [#allocation6], 512
        $region40: #{cnn24_forward.2} parent=35 // pred_fallthru
          _
        // Predicated region
        $region41: #{cnn24_forward.2} parent=35 // pred_check
          %p200 = pneg %p80
        $region42: #{cnn24_forward.2} parent=35 // pred_check_branch
          %202 = sbr.rel (%p200) target = $region44
        $region43: #{cnn24_forward.2} parent=35 // pred_region
          %203 = dma.done [#allocation8], 16
        $region44: #{cnn24_forward.2} parent=35 // pred_fallthru
          _
        // Predicated region
        $region45: #{cnn24_forward.2} parent=35 // pred_check
          %p204 = pneg %p101
        $region46: #{cnn24_forward.2} parent=35 // pred_check_branch
          %206 = sbr.rel (%p204) target = $region48
        $region47: #{cnn24_forward.2} parent=35 // pred_region
          %207 = dma.done [#allocation8], 16
        $region48: #{cnn24_forward.2} parent=35 // pred_fallthru
          _
        %p208 = scmp.lt.s32.totalorder %s17, 1
        %s209 = scalar_select %p208, %s17, 1
        %s210 = smul.addr %s209, 73
        %s211 = smul.addr %s210, 8
        %s212 = scalar_lea.vmem %s0, %s211
        %p213 = pneg %p38
        %p214 = pneg %p35
        %p215 = pneg %p59
        %p216 = pneg %p56
        %p217 = pneg %p80
        %p218 = pneg %p77
        %p219 = pneg %p101
        %p220 = pneg %p98
        %p221 = pneg %p127
        %p222 = pneg %p124
        %p223 = scmp.lt.s32.totalorder %s17, 1
        %s224 = scalar_select %p223, %s17, 1
        %s225 = smul.addr %s224, 16
        %s226 = smul.addr %s225, 8
        %s227 = scalar_lea.vmem %s4, %s226
        %p228 = scmp.lt.s32.totalorder %s17, 1
        %s229 = scalar_select %p228, %s17, 1
        %s230 = smul.addr %s229, 73
        %s231 = smul.addr %s230, 8
        %s232 = scalar_lea.vmem %s0, %s231
        %p233 = scmp.lt.s32.totalorder %s17, 1
        %s234 = scalar_select %p233, %s17, 1
        %s235 = smul.addr %s234, 16
        %s236 = smul.addr %s235, 8
        %s237 = scalar_lea.vmem %s4, %s236
        %v238 = vld [vmem:[#allocation5] sm:$0xff]
        %v239 = vld [vmem:[#allocation5 + $0x8] sm:$0xff]
        %v240 = vld [vmem:[#allocation5 + $0x10] sm:$0xff]
        %v241 = vld [vmem:[#allocation5 + $0x18] sm:$0x7]
        %v242 = vld [vmem:[#allocation7] sm:$0x1]
        %v243 = vld [vmem:[#allocation9] sm:$0x1]
        %v244 = vld [vmem:[%s232] sm:$0xff]
        %v245 = vld [vmem:[%s232 + $0x8] sm:$0xff]
        %v246 = vld [vmem:[%s232 + $0x10] sm:$0xff]
        %v247 = vld [vmem:[%s232 + $0x18] sm:$0xff]
        %v248 = vld [vmem:[%s232 + $0x20] sm:$0xff]
        %v249 = vld [vmem:[%s232 + $0x28] sm:$0xff]
        %v250 = vld [vmem:[%s232 + $0x30] sm:$0xff]
        %v251 = vld [vmem:[%s232 + $0x38] sm:$0xff]
        %v252 = vld [vmem:[%s232 + $0x40] sm:$0xff]
        %v253 = vld [vmem:[%s232 + $0x48] sm:$0xff]
        %v254 = vld [vmem:[%s232 + $0x50] sm:$0xff]
        %v255 = vld [vmem:[%s232 + $0x58] sm:$0xff]
        %v256 = vld [vmem:[%s232 + $0x60] sm:$0xff]
        %v257 = vld [vmem:[%s232 + $0x68] sm:$0xff]
        %v258 = vld [vmem:[%s232 + $0x70] sm:$0xff]
        %v259 = vld [vmem:[%s232 + $0x78] sm:$0xff]
        %v260 = vld [vmem:[%s232 + $0x80] sm:$0xff]
        %v261 = vld [vmem:[%s232 + $0x88] sm:$0xff]
        %v262 = vld [vmem:[%s232 + $0x90] sm:$0xff]
        %v263 = vld [vmem:[%s232 + $0x98] sm:$0xff]
        %v264 = vld [vmem:[%s232 + $0xa0] sm:$0xff]
        %v265 = vld [vmem:[%s232 + $0xa8] sm:$0xff]
        %v266 = vld [vmem:[%s232 + $0xb0] sm:$0xff]
        %v267 = vld [vmem:[%s232 + $0xb8] sm:$0xff]
        %v268 = vld [vmem:[%s232 + $0xc0] sm:$0xff]
        %v269 = vld [vmem:[%s232 + $0xc8] sm:$0xff]
        %v270 = vld [vmem:[%s232 + $0xd0] sm:$0xff]
        %v271 = vld [vmem:[%s232 + $0xd8] sm:$0xff]
        %v272 = vld [vmem:[%s232 + $0xe0] sm:$0xff]
        %v273 = vld [vmem:[%s232 + $0xe8] sm:$0xff]
        %v274 = vld [vmem:[%s232 + $0xf0] sm:$0xff]
        %v275 = vld [vmem:[%s232 + $0xf8] sm:$0xff]
        %v276 = vld [vmem:[%s232 + $0x100] sm:$0xff]
        %v277 = vld [vmem:[%s232 + $0x108] sm:$0xff]
        %v278 = vld [vmem:[%s232 + $0x110] sm:$0xff]
        %v279 = vld [vmem:[%s232 + $0x118] sm:$0xff]
        %v280 = vld [vmem:[%s232 + $0x120] sm:$0xff]
        %v281 = vld [vmem:[%s232 + $0x128] sm:$0xff]
        %v282 = vld [vmem:[%s232 + $0x130] sm:$0xff]
        %v283 = vld [vmem:[%s232 + $0x138] sm:$0xff]
        %v284 = vld [vmem:[%s232 + $0x140] sm:$0xff]
        %v285 = vld [vmem:[%s232 + $0x148] sm:$0xff]
        %v286 = vld [vmem:[%s232 + $0x150] sm:$0xff]
        %v287 = vld [vmem:[%s232 + $0x158] sm:$0xff]
        %v288 = vld [vmem:[%s232 + $0x160] sm:$0xff]
        %v289 = vld [vmem:[%s232 + $0x168] sm:$0xff]
        %v290 = vld [vmem:[%s232 + $0x170] sm:$0xff]
        %v291 = vld [vmem:[%s232 + $0x178] sm:$0xff]
        %v292 = vld [vmem:[%s232 + $0x180] sm:$0xff]
        %v293 = vld [vmem:[%s232 + $0x188] sm:$0xff]
        %v294 = vld [vmem:[%s232 + $0x190] sm:$0xff]
        %v295 = vld [vmem:[%s232 + $0x198] sm:$0xff]
        %v296 = vld [vmem:[%s232 + $0x1a0] sm:$0xff]
        %v297 = vld [vmem:[%s232 + $0x1a8] sm:$0xff]
        %v298 = vld [vmem:[%s232 + $0x1b0] sm:$0xff]
        %v299 = vld [vmem:[%s232 + $0x1b8] sm:$0xff]
        %v300 = vld [vmem:[%s232 + $0x1c0] sm:$0xff]
        %v301 = vld [vmem:[%s232 + $0x1c8] sm:$0xff]
        %v302 = vld [vmem:[%s232 + $0x1d0] sm:$0xff]
        %v303 = vld [vmem:[%s232 + $0x1d8] sm:$0xff]
        %v304 = vld [vmem:[%s232 + $0x1e0] sm:$0xff]
        %v305 = vld [vmem:[%s232 + $0x1e8] sm:$0xff]
        %v306 = vld [vmem:[%s232 + $0x1f0] sm:$0xff]
        %v307 = vld [vmem:[%s232 + $0x1f8] sm:$0xff]
        %v308 = vld [vmem:[%s232 + $0x200] sm:$0xff]
        %v309 = vld [vmem:[%s232 + $0x208] sm:$0xff]
        %vm310 = vcmask 23552
        %311 = vst.msk [vmem:[#allocation2] sm:$0xff] %vm310, %v244
        %312 = vst.msk [vmem:[#allocation2 + $0x8] sm:$0xff] %vm310, %v245
        %313 = vst.msk [vmem:[#allocation2 + $0x10] sm:$0xff] %vm310, %v246
        %314 = vst.msk [vmem:[#allocation2 + $0x18] sm:$0xff] %vm310, %v247
        %315 = vst.msk [vmem:[#allocation2 + $0x20] sm:$0xff] %vm310, %v248
        %316 = vst.msk [vmem:[#allocation2 + $0x28] sm:$0xff] %vm310, %v249
        %317 = vst.msk [vmem:[#allocation2 + $0x30] sm:$0xff] %vm310, %v250
        %318 = vst.msk [vmem:[#allocation2 + $0x38] sm:$0xff] %vm310, %v251
        %319 = vst.msk [vmem:[#allocation2 + $0x40] sm:$0xff] %vm310, %v252
        %320 = vst.msk [vmem:[#allocation2 + $0x48] sm:$0xff] %vm310, %v253
        %321 = vst.msk [vmem:[#allocation2 + $0x50] sm:$0xff] %vm310, %v254
        %322 = vst.msk [vmem:[#allocation2 + $0x58] sm:$0xff] %vm310, %v255
        %323 = vst.msk [vmem:[#allocation2 + $0x60] sm:$0xff] %vm310, %v256
        %324 = vst.msk [vmem:[#allocation2 + $0x68] sm:$0xff] %vm310, %v257
        %325 = vst.msk [vmem:[#allocation2 + $0x70] sm:$0xff] %vm310, %v258
        %326 = vst.msk [vmem:[#allocation2 + $0x78] sm:$0xff] %vm310, %v259
        %327 = vst.msk [vmem:[#allocation2 + $0x80] sm:$0xff] %vm310, %v260
        %328 = vst.msk [vmem:[#allocation2 + $0x88] sm:$0xff] %vm310, %v261
        %329 = vst.msk [vmem:[#allocation2 + $0x90] sm:$0xff] %vm310, %v262
        %330 = vst.msk [vmem:[#allocation2 + $0x98] sm:$0xff] %vm310, %v263
        %331 = vst.msk [vmem:[#allocation2 + $0xa0] sm:$0xff] %vm310, %v264
        %332 = vst.msk [vmem:[#allocation2 + $0xa8] sm:$0xff] %vm310, %v265
        %333 = vst.msk [vmem:[#allocation2 + $0xb0] sm:$0xff] %vm310, %v266
        %334 = vst.msk [vmem:[#allocation2 + $0xb8] sm:$0xff] %vm310, %v267
        %335 = vst.msk [vmem:[#allocation2 + $0xc0] sm:$0xff] %vm310, %v268
        %336 = vst.msk [vmem:[#allocation2 + $0xc8] sm:$0xff] %vm310, %v269
        %337 = vst.msk [vmem:[#allocation2 + $0xd0] sm:$0xff] %vm310, %v270
        %338 = vst.msk [vmem:[#allocation2 + $0xd8] sm:$0xff] %vm310, %v271
        %339 = vst.msk [vmem:[#allocation2 + $0xe0] sm:$0xff] %vm310, %v272
        %340 = vst.msk [vmem:[#allocation2 + $0xe8] sm:$0xff] %vm310, %v273
        %341 = vst.msk [vmem:[#allocation2 + $0xf0] sm:$0xff] %vm310, %v274
        %342 = vst.msk [vmem:[#allocation2 + $0xf8] sm:$0xff] %vm310, %v275
        %343 = vst.msk [vmem:[#allocation2 + $0x100] sm:$0xff] %vm310, %v276
        %344 = vst.msk [vmem:[#allocation2 + $0x108] sm:$0xff] %vm310, %v277
        %345 = vst.msk [vmem:[#allocation2 + $0x110] sm:$0xff] %vm310, %v278
        %346 = vst.msk [vmem:[#allocation2 + $0x118] sm:$0xff] %vm310, %v279
        %347 = vst.msk [vmem:[#allocation2 + $0x120] sm:$0xff] %vm310, %v280
        %348 = vst.msk [vmem:[#allocation2 + $0x128] sm:$0xff] %vm310, %v281
        %349 = vst.msk [vmem:[#allocation2 + $0x130] sm:$0xff] %vm310, %v282
        %350 = vst.msk [vmem:[#allocation2 + $0x138] sm:$0xff] %vm310, %v283
        %351 = vst.msk [vmem:[#allocation2 + $0x140] sm:$0xff] %vm310, %v284
        %352 = vst.msk [vmem:[#allocation2 + $0x148] sm:$0xff] %vm310, %v285
        %353 = vst.msk [vmem:[#allocation2 + $0x150] sm:$0xff] %vm310, %v286
        %354 = vst.msk [vmem:[#allocation2 + $0x158] sm:$0xff] %vm310, %v287
        %355 = vst.msk [vmem:[#allocation2 + $0x160] sm:$0xff] %vm310, %v288
        %356 = vst.msk [vmem:[#allocation2 + $0x168] sm:$0xff] %vm310, %v289
        %357 = vst.msk [vmem:[#allocation2 + $0x170] sm:$0xff] %vm310, %v290
        %358 = vst.msk [vmem:[#allocation2 + $0x178] sm:$0xff] %vm310, %v291
        %359 = vst.msk [vmem:[#allocation2 + $0x180] sm:$0xff] %vm310, %v292
        %360 = vst.msk [vmem:[#allocation2 + $0x188] sm:$0xff] %vm310, %v293
        %361 = vst.msk [vmem:[#allocation2 + $0x190] sm:$0xff] %vm310, %v294
        %362 = vst.msk [vmem:[#allocation2 + $0x198] sm:$0xff] %vm310, %v295
        %363 = vst.msk [vmem:[#allocation2 + $0x1a0] sm:$0xff] %vm310, %v296
        %364 = vst.msk [vmem:[#allocation2 + $0x1a8] sm:$0xff] %vm310, %v297
        %365 = vst.msk [vmem:[#allocation2 + $0x1b0] sm:$0xff] %vm310, %v298
        %366 = vst.msk [vmem:[#allocation2 + $0x1b8] sm:$0xff] %vm310, %v299
        %367 = vst.msk [vmem:[#allocation2 + $0x1c0] sm:$0xff] %vm310, %v300
        %368 = vst.msk [vmem:[#allocation2 + $0x1c8] sm:$0xff] %vm310, %v301
        %369 = vst.msk [vmem:[#allocation2 + $0x1d0] sm:$0xff] %vm310, %v302
        %370 = vst.msk [vmem:[#allocation2 + $0x1d8] sm:$0xff] %vm310, %v303
        %371 = vst.msk [vmem:[#allocation2 + $0x1e0] sm:$0xff] %vm310, %v304
        %372 = vst.msk [vmem:[#allocation2 + $0x1e8] sm:$0xff] %vm310, %v305
        %373 = vst.msk [vmem:[#allocation2 + $0x1f0] sm:$0xff] %vm310, %v306
        %374 = vst.msk [vmem:[#allocation2 + $0x1f8] sm:$0xff] %vm310, %v307
        %375 = vst.msk [vmem:[#allocation2 + $0x200] sm:$0xff] %vm310, %v308
        %376 = vst.msk [vmem:[#allocation2 + $0x208] sm:$0xff] %vm310, %v309
        %v377 = vld [vmem:[%s232 + $0x1] sm:$0xff]
        %v378 = vld [vmem:[%s232 + $0x9] sm:$0xff]
        %v379 = vld [vmem:[%s232 + $0x11] sm:$0xff]
        %v380 = vld [vmem:[%s232 + $0x19] sm:$0xff]
        %v381 = vld [vmem:[%s232 + $0x21] sm:$0xff]
        %v382 = vld [vmem:[%s232 + $0x29] sm:$0xff]
        %v383 = vld [vmem:[%s232 + $0x31] sm:$0xff]
        %v384 = vld [vmem:[%s232 + $0x39] sm:$0xff]
        %v385 = vld [vmem:[%s232 + $0x41] sm:$0xff]
        %v386 = vld [vmem:[%s232 + $0x49] sm:$0xff]
        %v387 = vld [vmem:[%s232 + $0x51] sm:$0xff]
        %v388 = vld [vmem:[%s232 + $0x59] sm:$0xff]
        %v389 = vld [vmem:[%s232 + $0x61] sm:$0xff]
        %v390 = vld [vmem:[%s232 + $0x69] sm:$0xff]
        %v391 = vld [vmem:[%s232 + $0x71] sm:$0xff]
        %v392 = vld [vmem:[%s232 + $0x79] sm:$0xff]
        %v393 = vld [vmem:[%s232 + $0x81] sm:$0xff]
        %v394 = vld [vmem:[%s232 + $0x89] sm:$0xff]
        %v395 = vld [vmem:[%s232 + $0x91] sm:$0xff]
        %v396 = vld [vmem:[%s232 + $0x99] sm:$0xff]
        %v397 = vld [vmem:[%s232 + $0xa1] sm:$0xff]
        %v398 = vld [vmem:[%s232 + $0xa9] sm:$0xff]
        %v399 = vld [vmem:[%s232 + $0xb1] sm:$0xff]
        %v400 = vld [vmem:[%s232 + $0xb9] sm:$0xff]
        %v401 = vld [vmem:[%s232 + $0xc1] sm:$0xff]
        %v402 = vld [vmem:[%s232 + $0xc9] sm:$0xff]
        %v403 = vld [vmem:[%s232 + $0xd1] sm:$0xff]
        %v404 = vld [vmem:[%s232 + $0xd9] sm:$0xff]
        %v405 = vld [vmem:[%s232 + $0xe1] sm:$0xff]
        %v406 = vld [vmem:[%s232 + $0xe9] sm:$0xff]
        %v407 = vld [vmem:[%s232 + $0xf1] sm:$0xff]
        %v408 = vld [vmem:[%s232 + $0xf9] sm:$0xff]
        %v409 = vld [vmem:[%s232 + $0x101] sm:$0xff]
        %v410 = vld [vmem:[%s232 + $0x109] sm:$0xff]
        %v411 = vld [vmem:[%s232 + $0x111] sm:$0xff]
        %v412 = vld [vmem:[%s232 + $0x119] sm:$0xff]
        %v413 = vld [vmem:[%s232 + $0x121] sm:$0xff]
        %v414 = vld [vmem:[%s232 + $0x129] sm:$0xff]
        %v415 = vld [vmem:[%s232 + $0x131] sm:$0xff]
        %v416 = vld [vmem:[%s232 + $0x139] sm:$0xff]
        %v417 = vld [vmem:[%s232 + $0x141] sm:$0xff]
        %v418 = vld [vmem:[%s232 + $0x149] sm:$0xff]
        %v419 = vld [vmem:[%s232 + $0x151] sm:$0xff]
        %v420 = vld [vmem:[%s232 + $0x159] sm:$0xff]
        %v421 = vld [vmem:[%s232 + $0x161] sm:$0xff]
        %v422 = vld [vmem:[%s232 + $0x169] sm:$0xff]
        %v423 = vld [vmem:[%s232 + $0x171] sm:$0xff]
        %v424 = vld [vmem:[%s232 + $0x179] sm:$0xff]
        %v425 = vld [vmem:[%s232 + $0x181] sm:$0xff]
        %v426 = vld [vmem:[%s232 + $0x189] sm:$0xff]
        %v427 = vld [vmem:[%s232 + $0x191] sm:$0xff]
        %v428 = vld [vmem:[%s232 + $0x199] sm:$0xff]
        %v429 = vld [vmem:[%s232 + $0x1a1] sm:$0xff]
        %v430 = vld [vmem:[%s232 + $0x1a9] sm:$0xff]
        %v431 = vld [vmem:[%s232 + $0x1b1] sm:$0xff]
        %v432 = vld [vmem:[%s232 + $0x1b9] sm:$0xff]
        %v433 = vld [vmem:[%s232 + $0x1c1] sm:$0xff]
        %v434 = vld [vmem:[%s232 + $0x1c9] sm:$0xff]
        %v435 = vld [vmem:[%s232 + $0x1d1] sm:$0xff]
        %v436 = vld [vmem:[%s232 + $0x1d9] sm:$0xff]
        %v437 = vld [vmem:[%s232 + $0x1e1] sm:$0xff]
        %v438 = vld [vmem:[%s232 + $0x1e9] sm:$0xff]
        %v439 = vld [vmem:[%s232 + $0x1f1] sm:$0xff]
        %v440 = vld [vmem:[%s232 + $0x1f9] sm:$0xff]
        %v441 = vld [vmem:[%s232 + $0x201] sm:$0xff]
        %v442 = vld [vmem:[%s232 + $0x209] sm:$0xff]
        %509 = vrot.lane.b32.xlu0 %v377, 3
        %v510 = vpop.permute.xlu0 %509
        %511 = vrot.lane.b32.xlu0 %v378, 3
        %v512 = vpop.permute.xlu0 %511
        %513 = vrot.lane.b32.xlu0 %v379, 3
        %v514 = vpop.permute.xlu0 %513
        %515 = vrot.lane.b32.xlu0 %v380, 3
        %v516 = vpop.permute.xlu0 %515
        %517 = vrot.lane.b32.xlu0 %v381, 3
        %v518 = vpop.permute.xlu0 %517
        %519 = vrot.lane.b32.xlu0 %v382, 3
        %v520 = vpop.permute.xlu0 %519
        %521 = vrot.lane.b32.xlu0 %v383, 3
        %v522 = vpop.permute.xlu0 %521
        %523 = vrot.lane.b32.xlu0 %v384, 3
        %v524 = vpop.permute.xlu0 %523
        %525 = vrot.lane.b32.xlu0 %v385, 3
        %v526 = vpop.permute.xlu0 %525
        %527 = vrot.lane.b32.xlu0 %v386, 3
        %v528 = vpop.permute.xlu0 %527
        %529 = vrot.lane.b32.xlu0 %v387, 3
        %v530 = vpop.permute.xlu0 %529
        %531 = vrot.lane.b32.xlu0 %v388, 3
        %v532 = vpop.permute.xlu0 %531
        %533 = vrot.lane.b32.xlu0 %v389, 3
        %v534 = vpop.permute.xlu0 %533
        %535 = vrot.lane.b32.xlu0 %v390, 3
        %v536 = vpop.permute.xlu0 %535
        %537 = vrot.lane.b32.xlu0 %v391, 3
        %v538 = vpop.permute.xlu0 %537
        %539 = vrot.lane.b32.xlu0 %v392, 3
        %v540 = vpop.permute.xlu0 %539
        %541 = vrot.lane.b32.xlu0 %v393, 3
        %v542 = vpop.permute.xlu0 %541
        %543 = vrot.lane.b32.xlu0 %v394, 3
        %v544 = vpop.permute.xlu0 %543
        %545 = vrot.lane.b32.xlu0 %v395, 3
        %v546 = vpop.permute.xlu0 %545
        %547 = vrot.lane.b32.xlu0 %v396, 3
        %v548 = vpop.permute.xlu0 %547
        %549 = vrot.lane.b32.xlu0 %v397, 3
        %v550 = vpop.permute.xlu0 %549
        %551 = vrot.lane.b32.xlu0 %v398, 3
        %v552 = vpop.permute.xlu0 %551
        %553 = vrot.lane.b32.xlu0 %v399, 3
        %v554 = vpop.permute.xlu0 %553
        %555 = vrot.lane.b32.xlu0 %v400, 3
        %v556 = vpop.permute.xlu0 %555
        %557 = vrot.lane.b32.xlu0 %v401, 3
        %v558 = vpop.permute.xlu0 %557
        %559 = vrot.lane.b32.xlu0 %v402, 3
        %v560 = vpop.permute.xlu0 %559
        %561 = vrot.lane.b32.xlu0 %v403, 3
        %v562 = vpop.permute.xlu0 %561
        %563 = vrot.lane.b32.xlu0 %v404, 3
        %v564 = vpop.permute.xlu0 %563
        %565 = vrot.lane.b32.xlu0 %v405, 3
        %v566 = vpop.permute.xlu0 %565
        %567 = vrot.lane.b32.xlu0 %v406, 3
        %v568 = vpop.permute.xlu0 %567
        %569 = vrot.lane.b32.xlu0 %v407, 3
        %v570 = vpop.permute.xlu0 %569
        %571 = vrot.lane.b32.xlu0 %v408, 3
        %v572 = vpop.permute.xlu0 %571
        %573 = vrot.lane.b32.xlu0 %v409, 3
        %v574 = vpop.permute.xlu0 %573
        %575 = vrot.lane.b32.xlu0 %v410, 3
        %v576 = vpop.permute.xlu0 %575
        %577 = vrot.lane.b32.xlu0 %v411, 3
        %v578 = vpop.permute.xlu0 %577
        %579 = vrot.lane.b32.xlu0 %v412, 3
        %v580 = vpop.permute.xlu0 %579
        %581 = vrot.lane.b32.xlu0 %v413, 3
        %v582 = vpop.permute.xlu0 %581
        %583 = vrot.lane.b32.xlu0 %v414, 3
        %v584 = vpop.permute.xlu0 %583
        %585 = vrot.lane.b32.xlu0 %v415, 3
        %v586 = vpop.permute.xlu0 %585
        %587 = vrot.lane.b32.xlu0 %v416, 3
        %v588 = vpop.permute.xlu0 %587
        %589 = vrot.lane.b32.xlu0 %v417, 3
        %v590 = vpop.permute.xlu0 %589
        %591 = vrot.lane.b32.xlu0 %v418, 3
        %v592 = vpop.permute.xlu0 %591
        %593 = vrot.lane.b32.xlu0 %v419, 3
        %v594 = vpop.permute.xlu0 %593
        %595 = vrot.lane.b32.xlu0 %v420, 3
        %v596 = vpop.permute.xlu0 %595
        %597 = vrot.lane.b32.xlu0 %v421, 3
        %v598 = vpop.permute.xlu0 %597
        %599 = vrot.lane.b32.xlu0 %v422, 3
        %v600 = vpop.permute.xlu0 %599
        %601 = vrot.lane.b32.xlu0 %v423, 3
        %v602 = vpop.permute.xlu0 %601
        %603 = vrot.lane.b32.xlu0 %v424, 3
        %v604 = vpop.permute.xlu0 %603
        %605 = vrot.lane.b32.xlu0 %v425, 3
        %v606 = vpop.permute.xlu0 %605
        %607 = vrot.lane.b32.xlu0 %v426, 3
        %v608 = vpop.permute.xlu0 %607
        %609 = vrot.lane.b32.xlu0 %v427, 3
        %v610 = vpop.permute.xlu0 %609
        %611 = vrot.lane.b32.xlu0 %v428, 3
        %v612 = vpop.permute.xlu0 %611
        %613 = vrot.lane.b32.xlu0 %v429, 3
        %v614 = vpop.permute.xlu0 %613
        %615 = vrot.lane.b32.xlu0 %v430, 3
        %v616 = vpop.permute.xlu0 %615
        %617 = vrot.lane.b32.xlu0 %v431, 3
        %v618 = vpop.permute.xlu0 %617
        %619 = vrot.lane.b32.xlu0 %v432, 3
        %v620 = vpop.permute.xlu0 %619
        %621 = vrot.lane.b32.xlu0 %v433, 3
        %v622 = vpop.permute.xlu0 %621
        %623 = vrot.lane.b32.xlu0 %v434, 3
        %v624 = vpop.permute.xlu0 %623
        %625 = vrot.lane.b32.xlu0 %v435, 3
        %v626 = vpop.permute.xlu0 %625
        %627 = vrot.lane.b32.xlu0 %v436, 3
        %v628 = vpop.permute.xlu0 %627
        %629 = vrot.lane.b32.xlu0 %v437, 3
        %v630 = vpop.permute.xlu0 %629
        %631 = vrot.lane.b32.xlu0 %v438, 3
        %v632 = vpop.permute.xlu0 %631
        %633 = vrot.lane.b32.xlu0 %v439, 3
        %v634 = vpop.permute.xlu0 %633
        %635 = vrot.lane.b32.xlu0 %v440, 3
        %v636 = vpop.permute.xlu0 %635
        %637 = vrot.lane.b32.xlu0 %v441, 3
        %v638 = vpop.permute.xlu0 %637
        %639 = vrot.lane.b32.xlu0 %v442, 3
        %v640 = vpop.permute.xlu0 %639
        %vm707 = vcmask 48152
        %708 = vst.msk [vmem:[#allocation2] sm:$0xff] %vm707, %v510
        %709 = vst.msk [vmem:[#allocation2 + $0x8] sm:$0xff] %vm707, %v512
        %710 = vst.msk [vmem:[#allocation2 + $0x10] sm:$0xff] %vm707, %v514
        %711 = vst.msk [vmem:[#allocation2 + $0x18] sm:$0xff] %vm707, %v516
        %712 = vst.msk [vmem:[#allocation2 + $0x20] sm:$0xff] %vm707, %v518
        %713 = vst.msk [vmem:[#allocation2 + $0x28] sm:$0xff] %vm707, %v520
        %714 = vst.msk [vmem:[#allocation2 + $0x30] sm:$0xff] %vm707, %v522
        %715 = vst.msk [vmem:[#allocation2 + $0x38] sm:$0xff] %vm707, %v524
        %716 = vst.msk [vmem:[#allocation2 + $0x40] sm:$0xff] %vm707, %v526
        %717 = vst.msk [vmem:[#allocation2 + $0x48] sm:$0xff] %vm707, %v528
        %718 = vst.msk [vmem:[#allocation2 + $0x50] sm:$0xff] %vm707, %v530
        %719 = vst.msk [vmem:[#allocation2 + $0x58] sm:$0xff] %vm707, %v532
        %720 = vst.msk [vmem:[#allocation2 + $0x60] sm:$0xff] %vm707, %v534
        %721 = vst.msk [vmem:[#allocation2 + $0x68] sm:$0xff] %vm707, %v536
        %722 = vst.msk [vmem:[#allocation2 + $0x70] sm:$0xff] %vm707, %v538
        %723 = vst.msk [vmem:[#allocation2 + $0x78] sm:$0xff] %vm707, %v540
        %724 = vst.msk [vmem:[#allocation2 + $0x80] sm:$0xff] %vm707, %v542
        %725 = vst.msk [vmem:[#allocation2 + $0x88] sm:$0xff] %vm707, %v544
        %726 = vst.msk [vmem:[#allocation2 + $0x90] sm:$0xff] %vm707, %v546
        %727 = vst.msk [vmem:[#allocation2 + $0x98] sm:$0xff] %vm707, %v548
        %728 = vst.msk [vmem:[#allocation2 + $0xa0] sm:$0xff] %vm707, %v550
        %729 = vst.msk [vmem:[#allocation2 + $0xa8] sm:$0xff] %vm707, %v552
        %730 = vst.msk [vmem:[#allocation2 + $0xb0] sm:$0xff] %vm707, %v554
        %731 = vst.msk [vmem:[#allocation2 + $0xb8] sm:$0xff] %vm707, %v556
        %732 = vst.msk [vmem:[#allocation2 + $0xc0] sm:$0xff] %vm707, %v558
        %733 = vst.msk [vmem:[#allocation2 + $0xc8] sm:$0xff] %vm707, %v560
        %734 = vst.msk [vmem:[#allocation2 + $0xd0] sm:$0xff] %vm707, %v562
        %735 = vst.msk [vmem:[#allocation2 + $0xd8] sm:$0xff] %vm707, %v564
        %736 = vst.msk [vmem:[#allocation2 + $0xe0] sm:$0xff] %vm707, %v566
        %737 = vst.msk [vmem:[#allocation2 + $0xe8] sm:$0xff] %vm707, %v568
        %738 = vst.msk [vmem:[#allocation2 + $0xf0] sm:$0xff] %vm707, %v570
        %739 = vst.msk [vmem:[#allocation2 + $0xf8] sm:$0xff] %vm707, %v572
        %740 = vst.msk [vmem:[#allocation2 + $0x100] sm:$0xff] %vm707, %v574
        %741 = vst.msk [vmem:[#allocation2 + $0x108] sm:$0xff] %vm707, %v576
        %742 = vst.msk [vmem:[#allocation2 + $0x110] sm:$0xff] %vm707, %v578
        %743 = vst.msk [vmem:[#allocation2 + $0x118] sm:$0xff] %vm707, %v580
        %744 = vst.msk [vmem:[#allocation2 + $0x120] sm:$0xff] %vm707, %v582
        %745 = vst.msk [vmem:[#allocation2 + $0x128] sm:$0xff] %vm707, %v584
        %746 = vst.msk [vmem:[#allocation2 + $0x130] sm:$0xff] %vm707, %v586
        %747 = vst.msk [vmem:[#allocation2 + $0x138] sm:$0xff] %vm707, %v588
        %748 = vst.msk [vmem:[#allocation2 + $0x140] sm:$0xff] %vm707, %v590
        %749 = vst.msk [vmem:[#allocation2 + $0x148] sm:$0xff] %vm707, %v592
        %750 = vst.msk [vmem:[#allocation2 + $0x150] sm:$0xff] %vm707, %v594
        %751 = vst.msk [vmem:[#allocation2 + $0x158] sm:$0xff] %vm707, %v596
        %752 = vst.msk [vmem:[#allocation2 + $0x160] sm:$0xff] %vm707, %v598
        %753 = vst.msk [vmem:[#allocation2 + $0x168] sm:$0xff] %vm707, %v600
        %754 = vst.msk [vmem:[#allocation2 + $0x170] sm:$0xff] %vm707, %v602
        %755 = vst.msk [vmem:[#allocation2 + $0x178] sm:$0xff] %vm707, %v604
        %756 = vst.msk [vmem:[#allocation2 + $0x180] sm:$0xff] %vm707, %v606
        %757 = vst.msk [vmem:[#allocation2 + $0x188] sm:$0xff] %vm707, %v608
        %758 = vst.msk [vmem:[#allocation2 + $0x190] sm:$0xff] %vm707, %v610
        %759 = vst.msk [vmem:[#allocation2 + $0x198] sm:$0xff] %vm707, %v612
        %760 = vst.msk [vmem:[#allocation2 + $0x1a0] sm:$0xff] %vm707, %v614
        %761 = vst.msk [vmem:[#allocation2 + $0x1a8] sm:$0xff] %vm707, %v616
        %762 = vst.msk [vmem:[#allocation2 + $0x1b0] sm:$0xff] %vm707, %v618
        %763 = vst.msk [vmem:[#allocation2 + $0x1b8] sm:$0xff] %vm707, %v620
        %764 = vst.msk [vmem:[#allocation2 + $0x1c0] sm:$0xff] %vm707, %v622
        %765 = vst.msk [vmem:[#allocation2 + $0x1c8] sm:$0xff] %vm707, %v624
        %766 = vst.msk [vmem:[#allocation2 + $0x1d0] sm:$0xff] %vm707, %v626
        %767 = vst.msk [vmem:[#allocation2 + $0x1d8] sm:$0xff] %vm707, %v628
        %768 = vst.msk [vmem:[#allocation2 + $0x1e0] sm:$0xff] %vm707, %v630
        %769 = vst.msk [vmem:[#allocation2 + $0x1e8] sm:$0xff] %vm707, %v632
        %770 = vst.msk [vmem:[#allocation2 + $0x1f0] sm:$0xff] %vm707, %v634
        %771 = vst.msk [vmem:[#allocation2 + $0x1f8] sm:$0xff] %vm707, %v636
        %772 = vst.msk [vmem:[#allocation2 + $0x200] sm:$0xff] %vm707, %v638
        %773 = vst.msk [vmem:[#allocation2 + $0x208] sm:$0xff] %vm707, %v640
        %v774 = vld [vmem:[%s232 + $0x2] sm:$0xff]
        %v775 = vld [vmem:[%s232 + $0xa] sm:$0xff]
        %v776 = vld [vmem:[%s232 + $0x12] sm:$0xff]
        %v777 = vld [vmem:[%s232 + $0x1a] sm:$0xff]
        %v778 = vld [vmem:[%s232 + $0x22] sm:$0xff]
        %v779 = vld [vmem:[%s232 + $0x2a] sm:$0xff]
        %v780 = vld [vmem:[%s232 + $0x32] sm:$0xff]
        %v781 = vld [vmem:[%s232 + $0x3a] sm:$0xff]
        %v782 = vld [vmem:[%s232 + $0x42] sm:$0xff]
        %v783 = vld [vmem:[%s232 + $0x4a] sm:$0xff]
        %v784 = vld [vmem:[%s232 + $0x52] sm:$0xff]
        %v785 = vld [vmem:[%s232 + $0x5a] sm:$0xff]
        %v786 = vld [vmem:[%s232 + $0x62] sm:$0xff]
        %v787 = vld [vmem:[%s232 + $0x6a] sm:$0xff]
        %v788 = vld [vmem:[%s232 + $0x72] sm:$0xff]
        %v789 = vld [vmem:[%s232 + $0x7a] sm:$0xff]
        %v790 = vld [vmem:[%s232 + $0x82] sm:$0xff]
        %v791 = vld [vmem:[%s232 + $0x8a] sm:$0xff]
        %v792 = vld [vmem:[%s232 + $0x92] sm:$0xff]
        %v793 = vld [vmem:[%s232 + $0x9a] sm:$0xff]
        %v794 = vld [vmem:[%s232 + $0xa2] sm:$0xff]
        %v795 = vld [vmem:[%s232 + $0xaa] sm:$0xff]
        %v796 = vld [vmem:[%s232 + $0xb2] sm:$0xff]
        %v797 = vld [vmem:[%s232 + $0xba] sm:$0xff]
        %v798 = vld [vmem:[%s232 + $0xc2] sm:$0xff]
        %v799 = vld [vmem:[%s232 + $0xca] sm:$0xff]
        %v800 = vld [vmem:[%s232 + $0xd2] sm:$0xff]
        %v801 = vld [vmem:[%s232 + $0xda] sm:$0xff]
        %v802 = vld [vmem:[%s232 + $0xe2] sm:$0xff]
        %v803 = vld [vmem:[%s232 + $0xea] sm:$0xff]
        %v804 = vld [vmem:[%s232 + $0xf2] sm:$0xff]
        %v805 = vld [vmem:[%s232 + $0xfa] sm:$0xff]
        %v806 = vld [vmem:[%s232 + $0x102] sm:$0xff]
        %v807 = vld [vmem:[%s232 + $0x10a] sm:$0xff]
        %v808 = vld [vmem:[%s232 + $0x112] sm:$0xff]
        %v809 = vld [vmem:[%s232 + $0x11a] sm:$0xff]
        %v810 = vld [vmem:[%s232 + $0x122] sm:$0xff]
        %v811 = vld [vmem:[%s232 + $0x12a] sm:$0xff]
        %v812 = vld [vmem:[%s232 + $0x132] sm:$0xff]
        %v813 = vld [vmem:[%s232 + $0x13a] sm:$0xff]
        %v814 = vld [vmem:[%s232 + $0x142] sm:$0xff]
        %v815 = vld [vmem:[%s232 + $0x14a] sm:$0xff]
        %v816 = vld [vmem:[%s232 + $0x152] sm:$0xff]
        %v817 = vld [vmem:[%s232 + $0x15a] sm:$0xff]
        %v818 = vld [vmem:[%s232 + $0x162] sm:$0xff]
        %v819 = vld [vmem:[%s232 + $0x16a] sm:$0xff]
        %v820 = vld [vmem:[%s232 + $0x172] sm:$0xff]
        %v821 = vld [vmem:[%s232 + $0x17a] sm:$0xff]
        %v822 = vld [vmem:[%s232 + $0x182] sm:$0xff]
        %v823 = vld [vmem:[%s232 + $0x18a] sm:$0xff]
        %v824 = vld [vmem:[%s232 + $0x192] sm:$0xff]
        %v825 = vld [vmem:[%s232 + $0x19a] sm:$0xff]
        %v826 = vld [vmem:[%s232 + $0x1a2] sm:$0xff]
        %v827 = vld [vmem:[%s232 + $0x1aa] sm:$0xff]
        %v828 = vld [vmem:[%s232 + $0x1b2] sm:$0xff]
        %v829 = vld [vmem:[%s232 + $0x1ba] sm:$0xff]
        %v830 = vld [vmem:[%s232 + $0x1c2] sm:$0xff]
        %v831 = vld [vmem:[%s232 + $0x1ca] sm:$0xff]
        %v832 = vld [vmem:[%s232 + $0x1d2] sm:$0xff]
        %v833 = vld [vmem:[%s232 + $0x1da] sm:$0xff]
        %v834 = vld [vmem:[%s232 + $0x1e2] sm:$0xff]
        %v835 = vld [vmem:[%s232 + $0x1ea] sm:$0xff]
        %v836 = vld [vmem:[%s232 + $0x1f2] sm:$0xff]
        %v837 = vld [vmem:[%s232 + $0x1fa] sm:$0xff]
        %v838 = vld [vmem:[%s232 + $0x202] sm:$0xff]
        %v839 = vld [vmem:[%s232 + $0x20a] sm:$0xff]
        %906 = vrot.lane.b32.xlu0 %v774, 6
        %v907 = vpop.permute.xlu0 %906
        %908 = vrot.lane.b32.xlu0 %v775, 6
        %v909 = vpop.permute.xlu0 %908
        %910 = vrot.lane.b32.xlu0 %v776, 6
        %v911 = vpop.permute.xlu0 %910
        %912 = vrot.lane.b32.xlu0 %v777, 6
        %v913 = vpop.permute.xlu0 %912
        %914 = vrot.lane.b32.xlu0 %v778, 6
        %v915 = vpop.permute.xlu0 %914
        %916 = vrot.lane.b32.xlu0 %v779, 6
        %v917 = vpop.permute.xlu0 %916
        %918 = vrot.lane.b32.xlu0 %v780, 6
        %v919 = vpop.permute.xlu0 %918
        %920 = vrot.lane.b32.xlu0 %v781, 6
        %v921 = vpop.permute.xlu0 %920
        %922 = vrot.lane.b32.xlu0 %v782, 6
        %v923 = vpop.permute.xlu0 %922
        %924 = vrot.lane.b32.xlu0 %v783, 6
        %v925 = vpop.permute.xlu0 %924
        %926 = vrot.lane.b32.xlu0 %v784, 6
        %v927 = vpop.permute.xlu0 %926
        %928 = vrot.lane.b32.xlu0 %v785, 6
        %v929 = vpop.permute.xlu0 %928
        %930 = vrot.lane.b32.xlu0 %v786, 6
        %v931 = vpop.permute.xlu0 %930
        %932 = vrot.lane.b32.xlu0 %v787, 6
        %v933 = vpop.permute.xlu0 %932
        %934 = vrot.lane.b32.xlu0 %v788, 6
        %v935 = vpop.permute.xlu0 %934
        %936 = vrot.lane.b32.xlu0 %v789, 6
        %v937 = vpop.permute.xlu0 %936
        %938 = vrot.lane.b32.xlu0 %v790, 6
        %v939 = vpop.permute.xlu0 %938
        %940 = vrot.lane.b32.xlu0 %v791, 6
        %v941 = vpop.permute.xlu0 %940
        %942 = vrot.lane.b32.xlu0 %v792, 6
        %v943 = vpop.permute.xlu0 %942
        %944 = vrot.lane.b32.xlu0 %v793, 6
        %v945 = vpop.permute.xlu0 %944
        %946 = vrot.lane.b32.xlu0 %v794, 6
        %v947 = vpop.permute.xlu0 %946
        %948 = vrot.lane.b32.xlu0 %v795, 6
        %v949 = vpop.permute.xlu0 %948
        %950 = vrot.lane.b32.xlu0 %v796, 6
        %v951 = vpop.permute.xlu0 %950
        %952 = vrot.lane.b32.xlu0 %v797, 6
        %v953 = vpop.permute.xlu0 %952
        %954 = vrot.lane.b32.xlu0 %v798, 6
        %v955 = vpop.permute.xlu0 %954
        %956 = vrot.lane.b32.xlu0 %v799, 6
        %v957 = vpop.permute.xlu0 %956
        %958 = vrot.lane.b32.xlu0 %v800, 6
        %v959 = vpop.permute.xlu0 %958
        %960 = vrot.lane.b32.xlu0 %v801, 6
        %v961 = vpop.permute.xlu0 %960
        %962 = vrot.lane.b32.xlu0 %v802, 6
        %v963 = vpop.permute.xlu0 %962
        %964 = vrot.lane.b32.xlu0 %v803, 6
        %v965 = vpop.permute.xlu0 %964
        %966 = vrot.lane.b32.xlu0 %v804, 6
        %v967 = vpop.permute.xlu0 %966
        %968 = vrot.lane.b32.xlu0 %v805, 6
        %v969 = vpop.permute.xlu0 %968
        %970 = vrot.lane.b32.xlu0 %v806, 6
        %v971 = vpop.permute.xlu0 %970
        %972 = vrot.lane.b32.xlu0 %v807, 6
        %v973 = vpop.permute.xlu0 %972
        %974 = vrot.lane.b32.xlu0 %v808, 6
        %v975 = vpop.permute.xlu0 %974
        %976 = vrot.lane.b32.xlu0 %v809, 6
        %v977 = vpop.permute.xlu0 %976
        %978 = vrot.lane.b32.xlu0 %v810, 6
        %v979 = vpop.permute.xlu0 %978
        %980 = vrot.lane.b32.xlu0 %v811, 6
        %v981 = vpop.permute.xlu0 %980
        %982 = vrot.lane.b32.xlu0 %v812, 6
        %v983 = vpop.permute.xlu0 %982
        %984 = vrot.lane.b32.xlu0 %v813, 6
        %v985 = vpop.permute.xlu0 %984
        %986 = vrot.lane.b32.xlu0 %v814, 6
        %v987 = vpop.permute.xlu0 %986
        %988 = vrot.lane.b32.xlu0 %v815, 6
        %v989 = vpop.permute.xlu0 %988
        %990 = vrot.lane.b32.xlu0 %v816, 6
        %v991 = vpop.permute.xlu0 %990
        %992 = vrot.lane.b32.xlu0 %v817, 6
        %v993 = vpop.permute.xlu0 %992
        %994 = vrot.lane.b32.xlu0 %v818, 6
        %v995 = vpop.permute.xlu0 %994
        %996 = vrot.lane.b32.xlu0 %v819, 6
        %v997 = vpop.permute.xlu0 %996
        %998 = vrot.lane.b32.xlu0 %v820, 6
        %v999 = vpop.permute.xlu0 %998
        %1000 = vrot.lane.b32.xlu0 %v821, 6
        %v1001 = vpop.permute.xlu0 %1000
        %1002 = vrot.lane.b32.xlu0 %v822, 6
        %v1003 = vpop.permute.xlu0 %1002
        %1004 = vrot.lane.b32.xlu0 %v823, 6
        %v1005 = vpop.permute.xlu0 %1004
        %1006 = vrot.lane.b32.xlu0 %v824, 6
        %v1007 = vpop.permute.xlu0 %1006
        %1008 = vrot.lane.b32.xlu0 %v825, 6
        %v1009 = vpop.permute.xlu0 %1008
        %1010 = vrot.lane.b32.xlu0 %v826, 6
        %v1011 = vpop.permute.xlu0 %1010
        %1012 = vrot.lane.b32.xlu0 %v827, 6
        %v1013 = vpop.permute.xlu0 %1012
        %1014 = vrot.lane.b32.xlu0 %v828, 6
        %v1015 = vpop.permute.xlu0 %1014
        %1016 = vrot.lane.b32.xlu0 %v829, 6
        %v1017 = vpop.permute.xlu0 %1016
        %1018 = vrot.lane.b32.xlu0 %v830, 6
        %v1019 = vpop.permute.xlu0 %1018
        %1020 = vrot.lane.b32.xlu0 %v831, 6
        %v1021 = vpop.permute.xlu0 %1020
        %1022 = vrot.lane.b32.xlu0 %v832, 6
        %v1023 = vpop.permute.xlu0 %1022
        %1024 = vrot.lane.b32.xlu0 %v833, 6
        %v1025 = vpop.permute.xlu0 %1024
        %1026 = vrot.lane.b32.xlu0 %v834, 6
        %v1027 = vpop.permute.xlu0 %1026
        %1028 = vrot.lane.b32.xlu0 %v835, 6
        %v1029 = vpop.permute.xlu0 %1028
        %1030 = vrot.lane.b32.xlu0 %v836, 6
        %v1031 = vpop.permute.xlu0 %1030
        %1032 = vrot.lane.b32.xlu0 %v837, 6
        %v1033 = vpop.permute.xlu0 %1032
        %1034 = vrot.lane.b32.xlu0 %v838, 6
        %v1035 = vpop.permute.xlu0 %1034
        %1036 = vrot.lane.b32.xlu0 %v839, 6
        %v1037 = vpop.permute.xlu0 %1036
        %vm1104 = vcmask 72752
        %1105 = vst.msk [vmem:[#allocation2] sm:$0xff] %vm1104, %v907
        %1106 = vst.msk [vmem:[#allocation2 + $0x8] sm:$0xff] %vm1104, %v909
        %1107 = vst.msk [vmem:[#allocation2 + $0x10] sm:$0xff] %vm1104, %v911
        %1108 = vst.msk [vmem:[#allocation2 + $0x18] sm:$0xff] %vm1104, %v913
        %1109 = vst.msk [vmem:[#allocation2 + $0x20] sm:$0xff] %vm1104, %v915
        %1110 = vst.msk [vmem:[#allocation2 + $0x28] sm:$0xff] %vm1104, %v917
        %1111 = vst.msk [vmem:[#allocation2 + $0x30] sm:$0xff] %vm1104, %v919
        %1112 = vst.msk [vmem:[#allocation2 + $0x38] sm:$0xff] %vm1104, %v921
        %1113 = vst.msk [vmem:[#allocation2 + $0x40] sm:$0xff] %vm1104, %v923
        %1114 = vst.msk [vmem:[#allocation2 + $0x48] sm:$0xff] %vm1104, %v925
        %1115 = vst.msk [vmem:[#allocation2 + $0x50] sm:$0xff] %vm1104, %v927
        %1116 = vst.msk [vmem:[#allocation2 + $0x58] sm:$0xff] %vm1104, %v929
        %1117 = vst.msk [vmem:[#allocation2 + $0x60] sm:$0xff] %vm1104, %v931
        %1118 = vst.msk [vmem:[#allocation2 + $0x68] sm:$0xff] %vm1104, %v933
        %1119 = vst.msk [vmem:[#allocation2 + $0x70] sm:$0xff] %vm1104, %v935
        %1120 = vst.msk [vmem:[#allocation2 + $0x78] sm:$0xff] %vm1104, %v937
        %1121 = vst.msk [vmem:[#allocation2 + $0x80] sm:$0xff] %vm1104, %v939
        %1122 = vst.msk [vmem:[#allocation2 + $0x88] sm:$0xff] %vm1104, %v941
        %1123 = vst.msk [vmem:[#allocation2 + $0x90] sm:$0xff] %vm1104, %v943
        %1124 = vst.msk [vmem:[#allocation2 + $0x98] sm:$0xff] %vm1104, %v945
        %1125 = vst.msk [vmem:[#allocation2 + $0xa0] sm:$0xff] %vm1104, %v947
        %1126 = vst.msk [vmem:[#allocation2 + $0xa8] sm:$0xff] %vm1104, %v949
        %1127 = vst.msk [vmem:[#allocation2 + $0xb0] sm:$0xff] %vm1104, %v951
        %1128 = vst.msk [vmem:[#allocation2 + $0xb8] sm:$0xff] %vm1104, %v953
        %1129 = vst.msk [vmem:[#allocation2 + $0xc0] sm:$0xff] %vm1104, %v955
        %1130 = vst.msk [vmem:[#allocation2 + $0xc8] sm:$0xff] %vm1104, %v957
        %1131 = vst.msk [vmem:[#allocation2 + $0xd0] sm:$0xff] %vm1104, %v959
        %1132 = vst.msk [vmem:[#allocation2 + $0xd8] sm:$0xff] %vm1104, %v961
        %1133 = vst.msk [vmem:[#allocation2 + $0xe0] sm:$0xff] %vm1104, %v963
        %1134 = vst.msk [vmem:[#allocation2 + $0xe8] sm:$0xff] %vm1104, %v965
        %1135 = vst.msk [vmem:[#allocation2 + $0xf0] sm:$0xff] %vm1104, %v967
        %1136 = vst.msk [vmem:[#allocation2 + $0xf8] sm:$0xff] %vm1104, %v969
        %1137 = vst.msk [vmem:[#allocation2 + $0x100] sm:$0xff] %vm1104, %v971
        %1138 = vst.msk [vmem:[#allocation2 + $0x108] sm:$0xff] %vm1104, %v973
        %1139 = vst.msk [vmem:[#allocation2 + $0x110] sm:$0xff] %vm1104, %v975
        %1140 = vst.msk [vmem:[#allocation2 + $0x118] sm:$0xff] %vm1104, %v977
        %1141 = vst.msk [vmem:[#allocation2 + $0x120] sm:$0xff] %vm1104, %v979
        %1142 = vst.msk [vmem:[#allocation2 + $0x128] sm:$0xff] %vm1104, %v981
        %1143 = vst.msk [vmem:[#allocation2 + $0x130] sm:$0xff] %vm1104, %v983
        %1144 = vst.msk [vmem:[#allocation2 + $0x138] sm:$0xff] %vm1104, %v985
        %1145 = vst.msk [vmem:[#allocation2 + $0x140] sm:$0xff] %vm1104, %v987
        %1146 = vst.msk [vmem:[#allocation2 + $0x148] sm:$0xff] %vm1104, %v989
        %1147 = vst.msk [vmem:[#allocation2 + $0x150] sm:$0xff] %vm1104, %v991
        %1148 = vst.msk [vmem:[#allocation2 + $0x158] sm:$0xff] %vm1104, %v993
        %1149 = vst.msk [vmem:[#allocation2 + $0x160] sm:$0xff] %vm1104, %v995
        %1150 = vst.msk [vmem:[#allocation2 + $0x168] sm:$0xff] %vm1104, %v997
        %1151 = vst.msk [vmem:[#allocation2 + $0x170] sm:$0xff] %vm1104, %v999
        %1152 = vst.msk [vmem:[#allocation2 + $0x178] sm:$0xff] %vm1104, %v1001
        %1153 = vst.msk [vmem:[#allocation2 + $0x180] sm:$0xff] %vm1104, %v1003
        %1154 = vst.msk [vmem:[#allocation2 + $0x188] sm:$0xff] %vm1104, %v1005
        %1155 = vst.msk [vmem:[#allocation2 + $0x190] sm:$0xff] %vm1104, %v1007
        %1156 = vst.msk [vmem:[#allocation2 + $0x198] sm:$0xff] %vm1104, %v1009
        %1157 = vst.msk [vmem:[#allocation2 + $0x1a0] sm:$0xff] %vm1104, %v1011
        %1158 = vst.msk [vmem:[#allocation2 + $0x1a8] sm:$0xff] %vm1104, %v1013
        %1159 = vst.msk [vmem:[#allocation2 + $0x1b0] sm:$0xff] %vm1104, %v1015
        %1160 = vst.msk [vmem:[#allocation2 + $0x1b8] sm:$0xff] %vm1104, %v1017
        %1161 = vst.msk [vmem:[#allocation2 + $0x1c0] sm:$0xff] %vm1104, %v1019
        %1162 = vst.msk [vmem:[#allocation2 + $0x1c8] sm:$0xff] %vm1104, %v1021
        %1163 = vst.msk [vmem:[#allocation2 + $0x1d0] sm:$0xff] %vm1104, %v1023
        %1164 = vst.msk [vmem:[#allocation2 + $0x1d8] sm:$0xff] %vm1104, %v1025
        %1165 = vst.msk [vmem:[#allocation2 + $0x1e0] sm:$0xff] %vm1104, %v1027
        %1166 = vst.msk [vmem:[#allocation2 + $0x1e8] sm:$0xff] %vm1104, %v1029
        %1167 = vst.msk [vmem:[#allocation2 + $0x1f0] sm:$0xff] %vm1104, %v1031
        %1168 = vst.msk [vmem:[#allocation2 + $0x1f8] sm:$0xff] %vm1104, %v1033
        %1169 = vst.msk [vmem:[#allocation2 + $0x200] sm:$0xff] %vm1104, %v1035
        %1170 = vst.msk [vmem:[#allocation2 + $0x208] sm:$0xff] %vm1104, %v1037
        %v1171 = vld [vmem:[%s232 + $0x18] sm:$0xff]
        %v1172 = vld [vmem:[%s232 + $0x20] sm:$0xff]
        %v1173 = vld [vmem:[%s232 + $0x28] sm:$0xff]
        %v1174 = vld [vmem:[%s232 + $0x30] sm:$0xff]
        %v1175 = vld [vmem:[%s232 + $0x38] sm:$0xff]
        %v1176 = vld [vmem:[%s232 + $0x40] sm:$0xff]
        %v1177 = vld [vmem:[%s232 + $0x48] sm:$0xff]
        %v1178 = vld [vmem:[%s232 + $0x50] sm:$0xff]
        %v1179 = vld [vmem:[%s232 + $0x58] sm:$0xff]
        %v1180 = vld [vmem:[%s232 + $0x60] sm:$0xff]
        %v1181 = vld [vmem:[%s232 + $0x68] sm:$0xff]
        %v1182 = vld [vmem:[%s232 + $0x70] sm:$0xff]
        %v1183 = vld [vmem:[%s232 + $0x78] sm:$0xff]
        %v1184 = vld [vmem:[%s232 + $0x80] sm:$0xff]
        %v1185 = vld [vmem:[%s232 + $0x88] sm:$0xff]
        %v1186 = vld [vmem:[%s232 + $0x90] sm:$0xff]
        %v1187 = vld [vmem:[%s232 + $0x98] sm:$0xff]
        %v1188 = vld [vmem:[%s232 + $0xa0] sm:$0xff]
        %v1189 = vld [vmem:[%s232 + $0xa8] sm:$0xff]
        %v1190 = vld [vmem:[%s232 + $0xb0] sm:$0xff]
        %v1191 = vld [vmem:[%s232 + $0xb8] sm:$0xff]
        %v1192 = vld [vmem:[%s232 + $0xc0] sm:$0xff]
        %v1193 = vld [vmem:[%s232 + $0xc8] sm:$0xff]
        %v1194 = vld [vmem:[%s232 + $0xd0] sm:$0xff]
        %v1195 = vld [vmem:[%s232 + $0xd8] sm:$0xff]
        %v1196 = vld [vmem:[%s232 + $0xe0] sm:$0xff]
        %v1197 = vld [vmem:[%s232 + $0xe8] sm:$0xff]
        %v1198 = vld [vmem:[%s232 + $0xf0] sm:$0xff]
        %v1199 = vld [vmem:[%s232 + $0xf8] sm:$0xff]
        %v1200 = vld [vmem:[%s232 + $0x100] sm:$0xff]
        %v1201 = vld [vmem:[%s232 + $0x108] sm:$0xff]
        %v1202 = vld [vmem:[%s232 + $0x110] sm:$0xff]
        %v1203 = vld [vmem:[%s232 + $0x118] sm:$0xff]
        %v1204 = vld [vmem:[%s232 + $0x120] sm:$0xff]
        %v1205 = vld [vmem:[%s232 + $0x128] sm:$0xff]
        %v1206 = vld [vmem:[%s232 + $0x130] sm:$0xff]
        %v1207 = vld [vmem:[%s232 + $0x138] sm:$0xff]
        %v1208 = vld [vmem:[%s232 + $0x140] sm:$0xff]
        %v1209 = vld [vmem:[%s232 + $0x148] sm:$0xff]
        %v1210 = vld [vmem:[%s232 + $0x150] sm:$0xff]
        %v1211 = vld [vmem:[%s232 + $0x158] sm:$0xff]
        %v1212 = vld [vmem:[%s232 + $0x160] sm:$0xff]
        %v1213 = vld [vmem:[%s232 + $0x168] sm:$0xff]
        %v1214 = vld [vmem:[%s232 + $0x170] sm:$0xff]
        %v1215 = vld [vmem:[%s232 + $0x178] sm:$0xff]
        %v1216 = vld [vmem:[%s232 + $0x180] sm:$0xff]
        %v1217 = vld [vmem:[%s232 + $0x188] sm:$0xff]
        %v1218 = vld [vmem:[%s232 + $0x190] sm:$0xff]
        %v1219 = vld [vmem:[%s232 + $0x198] sm:$0xff]
        %v1220 = vld [vmem:[%s232 + $0x1a0] sm:$0xff]
        %v1221 = vld [vmem:[%s232 + $0x1a8] sm:$0xff]
        %v1222 = vld [vmem:[%s232 + $0x1b0] sm:$0xff]
        %v1223 = vld [vmem:[%s232 + $0x1b8] sm:$0xff]
        %v1224 = vld [vmem:[%s232 + $0x1c0] sm:$0xff]
        %v1225 = vld [vmem:[%s232 + $0x1c8] sm:$0xff]
        %v1226 = vld [vmem:[%s232 + $0x1d0] sm:$0xff]
        %v1227 = vld [vmem:[%s232 + $0x1d8] sm:$0xff]
        %v1228 = vld [vmem:[%s232 + $0x1e0] sm:$0xff]
        %v1229 = vld [vmem:[%s232 + $0x1e8] sm:$0xff]
        %v1230 = vld [vmem:[%s232 + $0x1f0] sm:$0xff]
        %v1231 = vld [vmem:[%s232 + $0x1f8] sm:$0xff]
        %v1232 = vld [vmem:[%s232 + $0x200] sm:$0xff]
        %v1233 = vld [vmem:[%s232 + $0x208] sm:$0xff]
        %v1234 = vld [vmem:[%s232 + $0x210] sm:$0xff]
        %v1235 = vld [vmem:[%s232 + $0x218] sm:$0xff]
        %v1236 = vld [vmem:[%s232 + $0x220] sm:$0xff]
        %1303 = vrot.lane.b32.xlu0 %v1171, 9
        %v1304 = vpop.permute.xlu0 %1303
        %1305 = vrot.lane.b32.xlu0 %v1172, 9
        %v1306 = vpop.permute.xlu0 %1305
        %1307 = vrot.lane.b32.xlu0 %v1173, 9
        %v1308 = vpop.permute.xlu0 %1307
        %1309 = vrot.lane.b32.xlu0 %v1174, 9
        %v1310 = vpop.permute.xlu0 %1309
        %1311 = vrot.lane.b32.xlu0 %v1175, 9
        %v1312 = vpop.permute.xlu0 %1311
        %1313 = vrot.lane.b32.xlu0 %v1176, 9
        %v1314 = vpop.permute.xlu0 %1313
        %1315 = vrot.lane.b32.xlu0 %v1177, 9
        %v1316 = vpop.permute.xlu0 %1315
        %1317 = vrot.lane.b32.xlu0 %v1178, 9
        %v1318 = vpop.permute.xlu0 %1317
        %1319 = vrot.lane.b32.xlu0 %v1179, 9
        %v1320 = vpop.permute.xlu0 %1319
        %1321 = vrot.lane.b32.xlu0 %v1180, 9
        %v1322 = vpop.permute.xlu0 %1321
        %1323 = vrot.lane.b32.xlu0 %v1181, 9
        %v1324 = vpop.permute.xlu0 %1323
        %1325 = vrot.lane.b32.xlu0 %v1182, 9
        %v1326 = vpop.permute.xlu0 %1325
        %1327 = vrot.lane.b32.xlu0 %v1183, 9
        %v1328 = vpop.permute.xlu0 %1327
        %1329 = vrot.lane.b32.xlu0 %v1184, 9
        %v1330 = vpop.permute.xlu0 %1329
        %1331 = vrot.lane.b32.xlu0 %v1185, 9
        %v1332 = vpop.permute.xlu0 %1331
        %1333 = vrot.lane.b32.xlu0 %v1186, 9
        %v1334 = vpop.permute.xlu0 %1333
        %1335 = vrot.lane.b32.xlu0 %v1187, 9
        %v1336 = vpop.permute.xlu0 %1335
        %1337 = vrot.lane.b32.xlu0 %v1188, 9
        %v1338 = vpop.permute.xlu0 %1337
        %1339 = vrot.lane.b32.xlu0 %v1189, 9
        %v1340 = vpop.permute.xlu0 %1339
        %1341 = vrot.lane.b32.xlu0 %v1190, 9
        %v1342 = vpop.permute.xlu0 %1341
        %1343 = vrot.lane.b32.xlu0 %v1191, 9
        %v1344 = vpop.permute.xlu0 %1343
        %1345 = vrot.lane.b32.xlu0 %v1192, 9
        %v1346 = vpop.permute.xlu0 %1345
        %1347 = vrot.lane.b32.xlu0 %v1193, 9
        %v1348 = vpop.permute.xlu0 %1347
        %1349 = vrot.lane.b32.xlu0 %v1194, 9
        %v1350 = vpop.permute.xlu0 %1349
        %1351 = vrot.lane.b32.xlu0 %v1195, 9
        %v1352 = vpop.permute.xlu0 %1351
        %1353 = vrot.lane.b32.xlu0 %v1196, 9
        %v1354 = vpop.permute.xlu0 %1353
        %1355 = vrot.lane.b32.xlu0 %v1197, 9
        %v1356 = vpop.permute.xlu0 %1355
        %1357 = vrot.lane.b32.xlu0 %v1198, 9
        %v1358 = vpop.permute.xlu0 %1357
        %1359 = vrot.lane.b32.xlu0 %v1199, 9
        %v1360 = vpop.permute.xlu0 %1359
        %1361 = vrot.lane.b32.xlu0 %v1200, 9
        %v1362 = vpop.permute.xlu0 %1361
        %1363 = vrot.lane.b32.xlu0 %v1201, 9
        %v1364 = vpop.permute.xlu0 %1363
        %1365 = vrot.lane.b32.xlu0 %v1202, 9
        %v1366 = vpop.permute.xlu0 %1365
        %1367 = vrot.lane.b32.xlu0 %v1203, 9
        %v1368 = vpop.permute.xlu0 %1367
        %1369 = vrot.lane.b32.xlu0 %v1204, 9
        %v1370 = vpop.permute.xlu0 %1369
        %1371 = vrot.lane.b32.xlu0 %v1205, 9
        %v1372 = vpop.permute.xlu0 %1371
        %1373 = vrot.lane.b32.xlu0 %v1206, 9
        %v1374 = vpop.permute.xlu0 %1373
        %1375 = vrot.lane.b32.xlu0 %v1207, 9
        %v1376 = vpop.permute.xlu0 %1375
        %1377 = vrot.lane.b32.xlu0 %v1208, 9
        %v1378 = vpop.permute.xlu0 %1377
        %1379 = vrot.lane.b32.xlu0 %v1209, 9
        %v1380 = vpop.permute.xlu0 %1379
        %1381 = vrot.lane.b32.xlu0 %v1210, 9
        %v1382 = vpop.permute.xlu0 %1381
        %1383 = vrot.lane.b32.xlu0 %v1211, 9
        %v1384 = vpop.permute.xlu0 %1383
        %1385 = vrot.lane.b32.xlu0 %v1212, 9
        %v1386 = vpop.permute.xlu0 %1385
        %1387 = vrot.lane.b32.xlu0 %v1213, 9
        %v1388 = vpop.permute.xlu0 %1387
        %1389 = vrot.lane.b32.xlu0 %v1214, 9
        %v1390 = vpop.permute.xlu0 %1389
        %1391 = vrot.lane.b32.xlu0 %v1215, 9
        %v1392 = vpop.permute.xlu0 %1391
        %1393 = vrot.lane.b32.xlu0 %v1216, 9
        %v1394 = vpop.permute.xlu0 %1393
        %1395 = vrot.lane.b32.xlu0 %v1217, 9
        %v1396 = vpop.permute.xlu0 %1395
        %1397 = vrot.lane.b32.xlu0 %v1218, 9
        %v1398 = vpop.permute.xlu0 %1397
        %1399 = vrot.lane.b32.xlu0 %v1219, 9
        %v1400 = vpop.permute.xlu0 %1399
        %1401 = vrot.lane.b32.xlu0 %v1220, 9
        %v1402 = vpop.permute.xlu0 %1401
        %1403 = vrot.lane.b32.xlu0 %v1221, 9
        %v1404 = vpop.permute.xlu0 %1403
        %1405 = vrot.lane.b32.xlu0 %v1222, 9
        %v1406 = vpop.permute.xlu0 %1405
        %1407 = vrot.lane.b32.xlu0 %v1223, 9
        %v1408 = vpop.permute.xlu0 %1407
        %1409 = vrot.lane.b32.xlu0 %v1224, 9
        %v1410 = vpop.permute.xlu0 %1409
        %1411 = vrot.lane.b32.xlu0 %v1225, 9
        %v1412 = vpop.permute.xlu0 %1411
        %1413 = vrot.lane.b32.xlu0 %v1226, 9
        %v1414 = vpop.permute.xlu0 %1413
        %1415 = vrot.lane.b32.xlu0 %v1227, 9
        %v1416 = vpop.permute.xlu0 %1415
        %1417 = vrot.lane.b32.xlu0 %v1228, 9
        %v1418 = vpop.permute.xlu0 %1417
        %1419 = vrot.lane.b32.xlu0 %v1229, 9
        %v1420 = vpop.permute.xlu0 %1419
        %1421 = vrot.lane.b32.xlu0 %v1230, 9
        %v1422 = vpop.permute.xlu0 %1421
        %1423 = vrot.lane.b32.xlu0 %v1231, 9
        %v1424 = vpop.permute.xlu0 %1423
        %1425 = vrot.lane.b32.xlu0 %v1232, 9
        %v1426 = vpop.permute.xlu0 %1425
        %1427 = vrot.lane.b32.xlu0 %v1233, 9
        %v1428 = vpop.permute.xlu0 %1427
        %1429 = vrot.lane.b32.xlu0 %v1234, 9
        %v1430 = vpop.permute.xlu0 %1429
        %1431 = vrot.lane.b32.xlu0 %v1235, 9
        %v1432 = vpop.permute.xlu0 %1431
        %1433 = vrot.lane.b32.xlu0 %v1236, 9
        %v1434 = vpop.permute.xlu0 %1433
        %vm1501 = vcmask 97352
        %1502 = vst.msk [vmem:[#allocation2] sm:$0xff] %vm1501, %v1304
        %1503 = vst.msk [vmem:[#allocation2 + $0x8] sm:$0xff] %vm1501, %v1306
        %1504 = vst.msk [vmem:[#allocation2 + $0x10] sm:$0xff] %vm1501, %v1308
        %1505 = vst.msk [vmem:[#allocation2 + $0x18] sm:$0xff] %vm1501, %v1310
        %1506 = vst.msk [vmem:[#allocation2 + $0x20] sm:$0xff] %vm1501, %v1312
        %1507 = vst.msk [vmem:[#allocation2 + $0x28] sm:$0xff] %vm1501, %v1314
        %1508 = vst.msk [vmem:[#allocation2 + $0x30] sm:$0xff] %vm1501, %v1316
        %1509 = vst.msk [vmem:[#allocation2 + $0x38] sm:$0xff] %vm1501, %v1318
        %1510 = vst.msk [vmem:[#allocation2 + $0x40] sm:$0xff] %vm1501, %v1320
        %1511 = vst.msk [vmem:[#allocation2 + $0x48] sm:$0xff] %vm1501, %v1322
        %1512 = vst.msk [vmem:[#allocation2 + $0x50] sm:$0xff] %vm1501, %v1324
        %1513 = vst.msk [vmem:[#allocation2 + $0x58] sm:$0xff] %vm1501, %v1326
        %1514 = vst.msk [vmem:[#allocation2 + $0x60] sm:$0xff] %vm1501, %v1328
        %1515 = vst.msk [vmem:[#allocation2 + $0x68] sm:$0xff] %vm1501, %v1330
        %1516 = vst.msk [vmem:[#allocation2 + $0x70] sm:$0xff] %vm1501, %v1332
        %1517 = vst.msk [vmem:[#allocation2 + $0x78] sm:$0xff] %vm1501, %v1334
        %1518 = vst.msk [vmem:[#allocation2 + $0x80] sm:$0xff] %vm1501, %v1336
        %1519 = vst.msk [vmem:[#allocation2 + $0x88] sm:$0xff] %vm1501, %v1338
        %1520 = vst.msk [vmem:[#allocation2 + $0x90] sm:$0xff] %vm1501, %v1340
        %1521 = vst.msk [vmem:[#allocation2 + $0x98] sm:$0xff] %vm1501, %v1342
        %1522 = vst.msk [vmem:[#allocation2 + $0xa0] sm:$0xff] %vm1501, %v1344
        %1523 = vst.msk [vmem:[#allocation2 + $0xa8] sm:$0xff] %vm1501, %v1346
        %1524 = vst.msk [vmem:[#allocation2 + $0xb0] sm:$0xff] %vm1501, %v1348
        %1525 = vst.msk [vmem:[#allocation2 + $0xb8] sm:$0xff] %vm1501, %v1350
        %1526 = vst.msk [vmem:[#allocation2 + $0xc0] sm:$0xff] %vm1501, %v1352
        %1527 = vst.msk [vmem:[#allocation2 + $0xc8] sm:$0xff] %vm1501, %v1354
        %1528 = vst.msk [vmem:[#allocation2 + $0xd0] sm:$0xff] %vm1501, %v1356
        %1529 = vst.msk [vmem:[#allocation2 + $0xd8] sm:$0xff] %vm1501, %v1358
        %1530 = vst.msk [vmem:[#allocation2 + $0xe0] sm:$0xff] %vm1501, %v1360
        %1531 = vst.msk [vmem:[#allocation2 + $0xe8] sm:$0xff] %vm1501, %v1362
        %1532 = vst.msk [vmem:[#allocation2 + $0xf0] sm:$0xff] %vm1501, %v1364
        %1533 = vst.msk [vmem:[#allocation2 + $0xf8] sm:$0xff] %vm1501, %v1366
        %1534 = vst.msk [vmem:[#allocation2 + $0x100] sm:$0xff] %vm1501, %v1368
        %1535 = vst.msk [vmem:[#allocation2 + $0x108] sm:$0xff] %vm1501, %v1370
        %1536 = vst.msk [vmem:[#allocation2 + $0x110] sm:$0xff] %vm1501, %v1372
        %1537 = vst.msk [vmem:[#allocation2 + $0x118] sm:$0xff] %vm1501, %v1374
        %1538 = vst.msk [vmem:[#allocation2 + $0x120] sm:$0xff] %vm1501, %v1376
        %1539 = vst.msk [vmem:[#allocation2 + $0x128] sm:$0xff] %vm1501, %v1378
        %1540 = vst.msk [vmem:[#allocation2 + $0x130] sm:$0xff] %vm1501, %v1380
        %1541 = vst.msk [vmem:[#allocation2 + $0x138] sm:$0xff] %vm1501, %v1382
        %1542 = vst.msk [vmem:[#allocation2 + $0x140] sm:$0xff] %vm1501, %v1384
        %1543 = vst.msk [vmem:[#allocation2 + $0x148] sm:$0xff] %vm1501, %v1386
        %1544 = vst.msk [vmem:[#allocation2 + $0x150] sm:$0xff] %vm1501, %v1388
        %1545 = vst.msk [vmem:[#allocation2 + $0x158] sm:$0xff] %vm1501, %v1390
        %1546 = vst.msk [vmem:[#allocation2 + $0x160] sm:$0xff] %vm1501, %v1392
        %1547 = vst.msk [vmem:[#allocation2 + $0x168] sm:$0xff] %vm1501, %v1394
        %1548 = vst.msk [vmem:[#allocation2 + $0x170] sm:$0xff] %vm1501, %v1396
        %1549 = vst.msk [vmem:[#allocation2 + $0x178] sm:$0xff] %vm1501, %v1398
        %1550 = vst.msk [vmem:[#allocation2 + $0x180] sm:$0xff] %vm1501, %v1400
        %1551 = vst.msk [vmem:[#allocation2 + $0x188] sm:$0xff] %vm1501, %v1402
        %1552 = vst.msk [vmem:[#allocation2 + $0x190] sm:$0xff] %vm1501, %v1404
        %1553 = vst.msk [vmem:[#allocation2 + $0x198] sm:$0xff] %vm1501, %v1406
        %1554 = vst.msk [vmem:[#allocation2 + $0x1a0] sm:$0xff] %vm1501, %v1408
        %1555 = vst.msk [vmem:[#allocation2 + $0x1a8] sm:$0xff] %vm1501, %v1410
        %1556 = vst.msk [vmem:[#allocation2 + $0x1b0] sm:$0xff] %vm1501, %v1412
        %1557 = vst.msk [vmem:[#allocation2 + $0x1b8] sm:$0xff] %vm1501, %v1414
        %1558 = vst.msk [vmem:[#allocation2 + $0x1c0] sm:$0xff] %vm1501, %v1416
        %1559 = vst.msk [vmem:[#allocation2 + $0x1c8] sm:$0xff] %vm1501, %v1418
        %1560 = vst.msk [vmem:[#allocation2 + $0x1d0] sm:$0xff] %vm1501, %v1420
        %1561 = vst.msk [vmem:[#allocation2 + $0x1d8] sm:$0xff] %vm1501, %v1422
        %1562 = vst.msk [vmem:[#allocation2 + $0x1e0] sm:$0xff] %vm1501, %v1424
        %1563 = vst.msk [vmem:[#allocation2 + $0x1e8] sm:$0xff] %vm1501, %v1426
        %1564 = vst.msk [vmem:[#allocation2 + $0x1f0] sm:$0xff] %vm1501, %v1428
        %1565 = vst.msk [vmem:[#allocation2 + $0x1f8] sm:$0xff] %vm1501, %v1430
        %1566 = vst.msk [vmem:[#allocation2 + $0x200] sm:$0xff] %vm1501, %v1432
        %1567 = vst.msk [vmem:[#allocation2 + $0x208] sm:$0xff] %vm1501, %v1434
        %v1568 = vld [vmem:[%s232 + $0x19] sm:$0xff]
        %v1569 = vld [vmem:[%s232 + $0x21] sm:$0xff]
        %v1570 = vld [vmem:[%s232 + $0x29] sm:$0xff]
        %v1571 = vld [vmem:[%s232 + $0x31] sm:$0xff]
        %v1572 = vld [vmem:[%s232 + $0x39] sm:$0xff]
        %v1573 = vld [vmem:[%s232 + $0x41] sm:$0xff]
        %v1574 = vld [vmem:[%s232 + $0x49] sm:$0xff]
        %v1575 = vld [vmem:[%s232 + $0x51] sm:$0xff]
        %v1576 = vld [vmem:[%s232 + $0x59] sm:$0xff]
        %v1577 = vld [vmem:[%s232 + $0x61] sm:$0xff]
        %v1578 = vld [vmem:[%s232 + $0x69] sm:$0xff]
        %v1579 = vld [vmem:[%s232 + $0x71] sm:$0xff]
        %v1580 = vld [vmem:[%s232 + $0x79] sm:$0xff]
        %v1581 = vld [vmem:[%s232 + $0x81] sm:$0xff]
        %v1582 = vld [vmem:[%s232 + $0x89] sm:$0xff]
        %v1583 = vld [vmem:[%s232 + $0x91] sm:$0xff]
        %v1584 = vld [vmem:[%s232 + $0x99] sm:$0xff]
        %v1585 = vld [vmem:[%s232 + $0xa1] sm:$0xff]
        %v1586 = vld [vmem:[%s232 + $0xa9] sm:$0xff]
        %v1587 = vld [vmem:[%s232 + $0xb1] sm:$0xff]
        %v1588 = vld [vmem:[%s232 + $0xb9] sm:$0xff]
        %v1589 = vld [vmem:[%s232 + $0xc1] sm:$0xff]
        %v1590 = vld [vmem:[%s232 + $0xc9] sm:$0xff]
        %v1591 = vld [vmem:[%s232 + $0xd1] sm:$0xff]
        %v1592 = vld [vmem:[%s232 + $0xd9] sm:$0xff]
        %v1593 = vld [vmem:[%s232 + $0xe1] sm:$0xff]
        %v1594 = vld [vmem:[%s232 + $0xe9] sm:$0xff]
        %v1595 = vld [vmem:[%s232 + $0xf1] sm:$0xff]
        %v1596 = vld [vmem:[%s232 + $0xf9] sm:$0xff]
        %v1597 = vld [vmem:[%s232 + $0x101] sm:$0xff]
        %v1598 = vld [vmem:[%s232 + $0x109] sm:$0xff]
        %v1599 = vld [vmem:[%s232 + $0x111] sm:$0xff]
        %v1600 = vld [vmem:[%s232 + $0x119] sm:$0xff]
        %v1601 = vld [vmem:[%s232 + $0x121] sm:$0xff]
        %v1602 = vld [vmem:[%s232 + $0x129] sm:$0xff]
        %v1603 = vld [vmem:[%s232 + $0x131] sm:$0xff]
        %v1604 = vld [vmem:[%s232 + $0x139] sm:$0xff]
        %v1605 = vld [vmem:[%s232 + $0x141] sm:$0xff]
        %v1606 = vld [vmem:[%s232 + $0x149] sm:$0xff]
        %v1607 = vld [vmem:[%s232 + $0x151] sm:$0xff]
        %v1608 = vld [vmem:[%s232 + $0x159] sm:$0xff]
        %v1609 = vld [vmem:[%s232 + $0x161] sm:$0xff]
        %v1610 = vld [vmem:[%s232 + $0x169] sm:$0xff]
        %v1611 = vld [vmem:[%s232 + $0x171] sm:$0xff]
        %v1612 = vld [vmem:[%s232 + $0x179] sm:$0xff]
        %v1613 = vld [vmem:[%s232 + $0x181] sm:$0xff]
        %v1614 = vld [vmem:[%s232 + $0x189] sm:$0xff]
        %v1615 = vld [vmem:[%s232 + $0x191] sm:$0xff]
        %v1616 = vld [vmem:[%s232 + $0x199] sm:$0xff]
        %v1617 = vld [vmem:[%s232 + $0x1a1] sm:$0xff]
        %v1618 = vld [vmem:[%s232 + $0x1a9] sm:$0xff]
        %v1619 = vld [vmem:[%s232 + $0x1b1] sm:$0xff]
        %v1620 = vld [vmem:[%s232 + $0x1b9] sm:$0xff]
        %v1621 = vld [vmem:[%s232 + $0x1c1] sm:$0xff]
        %v1622 = vld [vmem:[%s232 + $0x1c9] sm:$0xff]
        %v1623 = vld [vmem:[%s232 + $0x1d1] sm:$0xff]
        %v1624 = vld [vmem:[%s232 + $0x1d9] sm:$0xff]
        %v1625 = vld [vmem:[%s232 + $0x1e1] sm:$0xff]
        %v1626 = vld [vmem:[%s232 + $0x1e9] sm:$0xff]
        %v1627 = vld [vmem:[%s232 + $0x1f1] sm:$0xff]
        %v1628 = vld [vmem:[%s232 + $0x1f9] sm:$0xff]
        %v1629 = vld [vmem:[%s232 + $0x201] sm:$0xff]
        %v1630 = vld [vmem:[%s232 + $0x209] sm:$0xff]
        %v1631 = vld [vmem:[%s232 + $0x211] sm:$0xff]
        %v1632 = vld [vmem:[%s232 + $0x219] sm:$0xff]
        %v1633 = vld [vmem:[%s232 + $0x221] sm:$0xff]
        %1700 = vrot.lane.b32.xlu0 %v1568, 12
        %v1701 = vpop.permute.xlu0 %1700
        %1702 = vrot.lane.b32.xlu0 %v1569, 12
        %v1703 = vpop.permute.xlu0 %1702
        %1704 = vrot.lane.b32.xlu0 %v1570, 12
        %v1705 = vpop.permute.xlu0 %1704
        %1706 = vrot.lane.b32.xlu0 %v1571, 12
        %v1707 = vpop.permute.xlu0 %1706
        %1708 = vrot.lane.b32.xlu0 %v1572, 12
        %v1709 = vpop.permute.xlu0 %1708
        %1710 = vrot.lane.b32.xlu0 %v1573, 12
        %v1711 = vpop.permute.xlu0 %1710
        %1712 = vrot.lane.b32.xlu0 %v1574, 12
        %v1713 = vpop.permute.xlu0 %1712
        %1714 = vrot.lane.b32.xlu0 %v1575, 12
        %v1715 = vpop.permute.xlu0 %1714
        %1716 = vrot.lane.b32.xlu0 %v1576, 12
        %v1717 = vpop.permute.xlu0 %1716
        %1718 = vrot.lane.b32.xlu0 %v1577, 12
        %v1719 = vpop.permute.xlu0 %1718
        %1720 = vrot.lane.b32.xlu0 %v1578, 12
        %v1721 = vpop.permute.xlu0 %1720
        %1722 = vrot.lane.b32.xlu0 %v1579, 12
        %v1723 = vpop.permute.xlu0 %1722
        %1724 = vrot.lane.b32.xlu0 %v1580, 12
        %v1725 = vpop.permute.xlu0 %1724
        %1726 = vrot.lane.b32.xlu0 %v1581, 12
        %v1727 = vpop.permute.xlu0 %1726
        %1728 = vrot.lane.b32.xlu0 %v1582, 12
        %v1729 = vpop.permute.xlu0 %1728
        %1730 = vrot.lane.b32.xlu0 %v1583, 12
        %v1731 = vpop.permute.xlu0 %1730
        %1732 = vrot.lane.b32.xlu0 %v1584, 12
        %v1733 = vpop.permute.xlu0 %1732
        %1734 = vrot.lane.b32.xlu0 %v1585, 12
        %v1735 = vpop.permute.xlu0 %1734
        %1736 = vrot.lane.b32.xlu0 %v1586, 12
        %v1737 = vpop.permute.xlu0 %1736
        %1738 = vrot.lane.b32.xlu0 %v1587, 12
        %v1739 = vpop.permute.xlu0 %1738
        %1740 = vrot.lane.b32.xlu0 %v1588, 12
        %v1741 = vpop.permute.xlu0 %1740
        %1742 = vrot.lane.b32.xlu0 %v1589, 12
        %v1743 = vpop.permute.xlu0 %1742
        %1744 = vrot.lane.b32.xlu0 %v1590, 12
        %v1745 = vpop.permute.xlu0 %1744
        %1746 = vrot.lane.b32.xlu0 %v1591, 12
        %v1747 = vpop.permute.xlu0 %1746
        %1748 = vrot.lane.b32.xlu0 %v1592, 12
        %v1749 = vpop.permute.xlu0 %1748
        %1750 = vrot.lane.b32.xlu0 %v1593, 12
        %v1751 = vpop.permute.xlu0 %1750
        %1752 = vrot.lane.b32.xlu0 %v1594, 12
        %v1753 = vpop.permute.xlu0 %1752
        %1754 = vrot.lane.b32.xlu0 %v1595, 12
        %v1755 = vpop.permute.xlu0 %1754
        %1756 = vrot.lane.b32.xlu0 %v1596, 12
        %v1757 = vpop.permute.xlu0 %1756
        %1758 = vrot.lane.b32.xlu0 %v1597, 12
        %v1759 = vpop.permute.xlu0 %1758
        %1760 = vrot.lane.b32.xlu0 %v1598, 12
        %v1761 = vpop.permute.xlu0 %1760
        %1762 = vrot.lane.b32.xlu0 %v1599, 12
        %v1763 = vpop.permute.xlu0 %1762
        %1764 = vrot.lane.b32.xlu0 %v1600, 12
        %v1765 = vpop.permute.xlu0 %1764
        %1766 = vrot.lane.b32.xlu0 %v1601, 12
        %v1767 = vpop.permute.xlu0 %1766
        %1768 = vrot.lane.b32.xlu0 %v1602, 12
        %v1769 = vpop.permute.xlu0 %1768
        %1770 = vrot.lane.b32.xlu0 %v1603, 12
        %v1771 = vpop.permute.xlu0 %1770
        %1772 = vrot.lane.b32.xlu0 %v1604, 12
        %v1773 = vpop.permute.xlu0 %1772
        %1774 = vrot.lane.b32.xlu0 %v1605, 12
        %v1775 = vpop.permute.xlu0 %1774
        %1776 = vrot.lane.b32.xlu0 %v1606, 12
        %v1777 = vpop.permute.xlu0 %1776
        %1778 = vrot.lane.b32.xlu0 %v1607, 12
        %v1779 = vpop.permute.xlu0 %1778
        %1780 = vrot.lane.b32.xlu0 %v1608, 12
        %v1781 = vpop.permute.xlu0 %1780
        %1782 = vrot.lane.b32.xlu0 %v1609, 12
        %v1783 = vpop.permute.xlu0 %1782
        %1784 = vrot.lane.b32.xlu0 %v1610, 12
        %v1785 = vpop.permute.xlu0 %1784
        %1786 = vrot.lane.b32.xlu0 %v1611, 12
        %v1787 = vpop.permute.xlu0 %1786
        %1788 = vrot.lane.b32.xlu0 %v1612, 12
        %v1789 = vpop.permute.xlu0 %1788
        %1790 = vrot.lane.b32.xlu0 %v1613, 12
        %v1791 = vpop.permute.xlu0 %1790
        %1792 = vrot.lane.b32.xlu0 %v1614, 12
        %v1793 = vpop.permute.xlu0 %1792
        %1794 = vrot.lane.b32.xlu0 %v1615, 12
        %v1795 = vpop.permute.xlu0 %1794
        %1796 = vrot.lane.b32.xlu0 %v1616, 12
        %v1797 = vpop.permute.xlu0 %1796
        %1798 = vrot.lane.b32.xlu0 %v1617, 12
        %v1799 = vpop.permute.xlu0 %1798
        %1800 = vrot.lane.b32.xlu0 %v1618, 12
        %v1801 = vpop.permute.xlu0 %1800
        %1802 = vrot.lane.b32.xlu0 %v1619, 12
        %v1803 = vpop.permute.xlu0 %1802
        %1804 = vrot.lane.b32.xlu0 %v1620, 12
        %v1805 = vpop.permute.xlu0 %1804
        %1806 = vrot.lane.b32.xlu0 %v1621, 12
        %v1807 = vpop.permute.xlu0 %1806
        %1808 = vrot.lane.b32.xlu0 %v1622, 12
        %v1809 = vpop.permute.xlu0 %1808
        %1810 = vrot.lane.b32.xlu0 %v1623, 12
        %v1811 = vpop.permute.xlu0 %1810
        %1812 = vrot.lane.b32.xlu0 %v1624, 12
        %v1813 = vpop.permute.xlu0 %1812
        %1814 = vrot.lane.b32.xlu0 %v1625, 12
        %v1815 = vpop.permute.xlu0 %1814
        %1816 = vrot.lane.b32.xlu0 %v1626, 12
        %v1817 = vpop.permute.xlu0 %1816
        %1818 = vrot.lane.b32.xlu0 %v1627, 12
        %v1819 = vpop.permute.xlu0 %1818
        %1820 = vrot.lane.b32.xlu0 %v1628, 12
        %v1821 = vpop.permute.xlu0 %1820
        %1822 = vrot.lane.b32.xlu0 %v1629, 12
        %v1823 = vpop.permute.xlu0 %1822
        %1824 = vrot.lane.b32.xlu0 %v1630, 12
        %v1825 = vpop.permute.xlu0 %1824
        %1826 = vrot.lane.b32.xlu0 %v1631, 12
        %v1827 = vpop.permute.xlu0 %1826
        %1828 = vrot.lane.b32.xlu0 %v1632, 12
        %v1829 = vpop.permute.xlu0 %1828
        %1830 = vrot.lane.b32.xlu0 %v1633, 12
        %v1831 = vpop.permute.xlu0 %1830
        %vm1898 = vcmask 121952
        %1899 = vst.msk [vmem:[#allocation2] sm:$0xff] %vm1898, %v1701
        %1900 = vst.msk [vmem:[#allocation2 + $0x8] sm:$0xff] %vm1898, %v1703
        %1901 = vst.msk [vmem:[#allocation2 + $0x10] sm:$0xff] %vm1898, %v1705
        %1902 = vst.msk [vmem:[#allocation2 + $0x18] sm:$0xff] %vm1898, %v1707
        %1903 = vst.msk [vmem:[#allocation2 + $0x20] sm:$0xff] %vm1898, %v1709
        %1904 = vst.msk [vmem:[#allocation2 + $0x28] sm:$0xff] %vm1898, %v1711
        %1905 = vst.msk [vmem:[#allocation2 + $0x30] sm:$0xff] %vm1898, %v1713
        %1906 = vst.msk [vmem:[#allocation2 + $0x38] sm:$0xff] %vm1898, %v1715
        %1907 = vst.msk [vmem:[#allocation2 + $0x40] sm:$0xff] %vm1898, %v1717
        %1908 = vst.msk [vmem:[#allocation2 + $0x48] sm:$0xff] %vm1898, %v1719
        %1909 = vst.msk [vmem:[#allocation2 + $0x50] sm:$0xff] %vm1898, %v1721
        %1910 = vst.msk [vmem:[#allocation2 + $0x58] sm:$0xff] %vm1898, %v1723
        %1911 = vst.msk [vmem:[#allocation2 + $0x60] sm:$0xff] %vm1898, %v1725
        %1912 = vst.msk [vmem:[#allocation2 + $0x68] sm:$0xff] %vm1898, %v1727
        %1913 = vst.msk [vmem:[#allocation2 + $0x70] sm:$0xff] %vm1898, %v1729
        %1914 = vst.msk [vmem:[#allocation2 + $0x78] sm:$0xff] %vm1898, %v1731
        %1915 = vst.msk [vmem:[#allocation2 + $0x80] sm:$0xff] %vm1898, %v1733
        %1916 = vst.msk [vmem:[#allocation2 + $0x88] sm:$0xff] %vm1898, %v1735
        %1917 = vst.msk [vmem:[#allocation2 + $0x90] sm:$0xff] %vm1898, %v1737
        %1918 = vst.msk [vmem:[#allocation2 + $0x98] sm:$0xff] %vm1898, %v1739
        %1919 = vst.msk [vmem:[#allocation2 + $0xa0] sm:$0xff] %vm1898, %v1741
        %1920 = vst.msk [vmem:[#allocation2 + $0xa8] sm:$0xff] %vm1898, %v1743
        %1921 = vst.msk [vmem:[#allocation2 + $0xb0] sm:$0xff] %vm1898, %v1745
        %1922 = vst.msk [vmem:[#allocation2 + $0xb8] sm:$0xff] %vm1898, %v1747
        %1923 = vst.msk [vmem:[#allocation2 + $0xc0] sm:$0xff] %vm1898, %v1749
        %1924 = vst.msk [vmem:[#allocation2 + $0xc8] sm:$0xff] %vm1898, %v1751
        %1925 = vst.msk [vmem:[#allocation2 + $0xd0] sm:$0xff] %vm1898, %v1753
        %1926 = vst.msk [vmem:[#allocation2 + $0xd8] sm:$0xff] %vm1898, %v1755
        %1927 = vst.msk [vmem:[#allocation2 + $0xe0] sm:$0xff] %vm1898, %v1757
        %1928 = vst.msk [vmem:[#allocation2 + $0xe8] sm:$0xff] %vm1898, %v1759
        %1929 = vst.msk [vmem:[#allocation2 + $0xf0] sm:$0xff] %vm1898, %v1761
        %1930 = vst.msk [vmem:[#allocation2 + $0xf8] sm:$0xff] %vm1898, %v1763
        %1931 = vst.msk [vmem:[#allocation2 + $0x100] sm:$0xff] %vm1898, %v1765
        %1932 = vst.msk [vmem:[#allocation2 + $0x108] sm:$0xff] %vm1898, %v1767
        %1933 = vst.msk [vmem:[#allocation2 + $0x110] sm:$0xff] %vm1898, %v1769
        %1934 = vst.msk [vmem:[#allocation2 + $0x118] sm:$0xff] %vm1898, %v1771
        %1935 = vst.msk [vmem:[#allocation2 + $0x120] sm:$0xff] %vm1898, %v1773
        %1936 = vst.msk [vmem:[#allocation2 + $0x128] sm:$0xff] %vm1898, %v1775
        %1937 = vst.msk [vmem:[#allocation2 + $0x130] sm:$0xff] %vm1898, %v1777
        %1938 = vst.msk [vmem:[#allocation2 + $0x138] sm:$0xff] %vm1898, %v1779
        %1939 = vst.msk [vmem:[#allocation2 + $0x140] sm:$0xff] %vm1898, %v1781
        %1940 = vst.msk [vmem:[#allocation2 + $0x148] sm:$0xff] %vm1898, %v1783
        %1941 = vst.msk [vmem:[#allocation2 + $0x150] sm:$0xff] %vm1898, %v1785
        %1942 = vst.msk [vmem:[#allocation2 + $0x158] sm:$0xff] %vm1898, %v1787
        %1943 = vst.msk [vmem:[#allocation2 + $0x160] sm:$0xff] %vm1898, %v1789
        %1944 = vst.msk [vmem:[#allocation2 + $0x168] sm:$0xff] %vm1898, %v1791
        %1945 = vst.msk [vmem:[#allocation2 + $0x170] sm:$0xff] %vm1898, %v1793
        %1946 = vst.msk [vmem:[#allocation2 + $0x178] sm:$0xff] %vm1898, %v1795
        %1947 = vst.msk [vmem:[#allocation2 + $0x180] sm:$0xff] %vm1898, %v1797
        %1948 = vst.msk [vmem:[#allocation2 + $0x188] sm:$0xff] %vm1898, %v1799
        %1949 = vst.msk [vmem:[#allocation2 + $0x190] sm:$0xff] %vm1898, %v1801
        %1950 = vst.msk [vmem:[#allocation2 + $0x198] sm:$0xff] %vm1898, %v1803
        %1951 = vst.msk [vmem:[#allocation2 + $0x1a0] sm:$0xff] %vm1898, %v1805
        %1952 = vst.msk [vmem:[#allocation2 + $0x1a8] sm:$0xff] %vm1898, %v1807
        %1953 = vst.msk [vmem:[#allocation2 + $0x1b0] sm:$0xff] %vm1898, %v1809
        %1954 = vst.msk [vmem:[#allocation2 + $0x1b8] sm:$0xff] %vm1898, %v1811
        %1955 = vst.msk [vmem:[#allocation2 + $0x1c0] sm:$0xff] %vm1898, %v1813
        %1956 = vst.msk [vmem:[#allocation2 + $0x1c8] sm:$0xff] %vm1898, %v1815
        %1957 = vst.msk [vmem:[#allocation2 + $0x1d0] sm:$0xff] %vm1898, %v1817
        %1958 = vst.msk [vmem:[#allocation2 + $0x1d8] sm:$0xff] %vm1898, %v1819
        %1959 = vst.msk [vmem:[#allocation2 + $0x1e0] sm:$0xff] %vm1898, %v1821
        %1960 = vst.msk [vmem:[#allocation2 + $0x1e8] sm:$0xff] %vm1898, %v1823
        %1961 = vst.msk [vmem:[#allocation2 + $0x1f0] sm:$0xff] %vm1898, %v1825
        %1962 = vst.msk [vmem:[#allocation2 + $0x1f8] sm:$0xff] %vm1898, %v1827
        %1963 = vst.msk [vmem:[#allocation2 + $0x200] sm:$0xff] %vm1898, %v1829
        %1964 = vst.msk [vmem:[#allocation2 + $0x208] sm:$0xff] %vm1898, %v1831
        %v1965 = vld [vmem:[%s232 + $0x1a] sm:$0xff]
        %v1966 = vld [vmem:[%s232 + $0x22] sm:$0xff]
        %v1967 = vld [vmem:[%s232 + $0x2a] sm:$0xff]
        %v1968 = vld [vmem:[%s232 + $0x32] sm:$0xff]
        %v1969 = vld [vmem:[%s232 + $0x3a] sm:$0xff]
        %v1970 = vld [vmem:[%s232 + $0x42] sm:$0xff]
        %v1971 = vld [vmem:[%s232 + $0x4a] sm:$0xff]
        %v1972 = vld [vmem:[%s232 + $0x52] sm:$0xff]
        %v1973 = vld [vmem:[%s232 + $0x5a] sm:$0xff]
        %v1974 = vld [vmem:[%s232 + $0x62] sm:$0xff]
        %v1975 = vld [vmem:[%s232 + $0x6a] sm:$0xff]
        %v1976 = vld [vmem:[%s232 + $0x72] sm:$0xff]
        %v1977 = vld [vmem:[%s232 + $0x7a] sm:$0xff]
        %v1978 = vld [vmem:[%s232 + $0x82] sm:$0xff]
        %v1979 = vld [vmem:[%s232 + $0x8a] sm:$0xff]
        %v1980 = vld [vmem:[%s232 + $0x92] sm:$0xff]
        %v1981 = vld [vmem:[%s232 + $0x9a] sm:$0xff]
        %v1982 = vld [vmem:[%s232 + $0xa2] sm:$0xff]
        %v1983 = vld [vmem:[%s232 + $0xaa] sm:$0xff]
        %v1984 = vld [vmem:[%s232 + $0xb2] sm:$0xff]
        %v1985 = vld [vmem:[%s232 + $0xba] sm:$0xff]
        %v1986 = vld [vmem:[%s232 + $0xc2] sm:$0xff]
        %v1987 = vld [vmem:[%s232 + $0xca] sm:$0xff]
        %v1988 = vld [vmem:[%s232 + $0xd2] sm:$0xff]
        %v1989 = vld [vmem:[%s232 + $0xda] sm:$0xff]
        %v1990 = vld [vmem:[%s232 + $0xe2] sm:$0xff]
        %v1991 = vld [vmem:[%s232 + $0xea] sm:$0xff]
        %v1992 = vld [vmem:[%s232 + $0xf2] sm:$0xff]
        %v1993 = vld [vmem:[%s232 + $0xfa] sm:$0xff]
        %v1994 = vld [vmem:[%s232 + $0x102] sm:$0xff]
        %v1995 = vld [vmem:[%s232 + $0x10a] sm:$0xff]
        %v1996 = vld [vmem:[%s232 + $0x112] sm:$0xff]
        %v1997 = vld [vmem:[%s232 + $0x11a] sm:$0xff]
        %v1998 = vld [vmem:[%s232 + $0x122] sm:$0xff]
        %v1999 = vld [vmem:[%s232 + $0x12a] sm:$0xff]
        %v2000 = vld [vmem:[%s232 + $0x132] sm:$0xff]
        %v2001 = vld [vmem:[%s232 + $0x13a] sm:$0xff]
        %v2002 = vld [vmem:[%s232 + $0x142] sm:$0xff]
        %v2003 = vld [vmem:[%s232 + $0x14a] sm:$0xff]
        %v2004 = vld [vmem:[%s232 + $0x152] sm:$0xff]
        %v2005 = vld [vmem:[%s232 + $0x15a] sm:$0xff]
        %v2006 = vld [vmem:[%s232 + $0x162] sm:$0xff]
        %v2007 = vld [vmem:[%s232 + $0x16a] sm:$0xff]
        %v2008 = vld [vmem:[%s232 + $0x172] sm:$0xff]
        %v2009 = vld [vmem:[%s232 + $0x17a] sm:$0xff]
        %v2010 = vld [vmem:[%s232 + $0x182] sm:$0xff]
        %v2011 = vld [vmem:[%s232 + $0x18a] sm:$0xff]
        %v2012 = vld [vmem:[%s232 + $0x192] sm:$0xff]
        %v2013 = vld [vmem:[%s232 + $0x19a] sm:$0xff]
        %v2014 = vld [vmem:[%s232 + $0x1a2] sm:$0xff]
        %v2015 = vld [vmem:[%s232 + $0x1aa] sm:$0xff]
        %v2016 = vld [vmem:[%s232 + $0x1b2] sm:$0xff]
        %v2017 = vld [vmem:[%s232 + $0x1ba] sm:$0xff]
        %v2018 = vld [vmem:[%s232 + $0x1c2] sm:$0xff]
        %v2019 = vld [vmem:[%s232 + $0x1ca] sm:$0xff]
        %v2020 = vld [vmem:[%s232 + $0x1d2] sm:$0xff]
        %v2021 = vld [vmem:[%s232 + $0x1da] sm:$0xff]
        %v2022 = vld [vmem:[%s232 + $0x1e2] sm:$0xff]
        %v2023 = vld [vmem:[%s232 + $0x1ea] sm:$0xff]
        %v2024 = vld [vmem:[%s232 + $0x1f2] sm:$0xff]
        %v2025 = vld [vmem:[%s232 + $0x1fa] sm:$0xff]
        %v2026 = vld [vmem:[%s232 + $0x202] sm:$0xff]
        %v2027 = vld [vmem:[%s232 + $0x20a] sm:$0xff]
        %v2028 = vld [vmem:[%s232 + $0x212] sm:$0xff]
        %v2029 = vld [vmem:[%s232 + $0x21a] sm:$0xff]
        %v2030 = vld [vmem:[%s232 + $0x222] sm:$0xff]
        %2097 = vrot.lane.b32.xlu0 %v1965, 15
        %v2098 = vpop.permute.xlu0 %2097
        %2099 = vrot.lane.b32.xlu0 %v1966, 15
        %v2100 = vpop.permute.xlu0 %2099
        %2101 = vrot.lane.b32.xlu0 %v1967, 15
        %v2102 = vpop.permute.xlu0 %2101
        %2103 = vrot.lane.b32.xlu0 %v1968, 15
        %v2104 = vpop.permute.xlu0 %2103
        %2105 = vrot.lane.b32.xlu0 %v1969, 15
        %v2106 = vpop.permute.xlu0 %2105
        %2107 = vrot.lane.b32.xlu0 %v1970, 15
        %v2108 = vpop.permute.xlu0 %2107
        %2109 = vrot.lane.b32.xlu0 %v1971, 15
        %v2110 = vpop.permute.xlu0 %2109
        %2111 = vrot.lane.b32.xlu0 %v1972, 15
        %v2112 = vpop.permute.xlu0 %2111
        %2113 = vrot.lane.b32.xlu0 %v1973, 15
        %v2114 = vpop.permute.xlu0 %2113
        %2115 = vrot.lane.b32.xlu0 %v1974, 15
        %v2116 = vpop.permute.xlu0 %2115
        %2117 = vrot.lane.b32.xlu0 %v1975, 15
        %v2118 = vpop.permute.xlu0 %2117
        %2119 = vrot.lane.b32.xlu0 %v1976, 15
        %v2120 = vpop.permute.xlu0 %2119
        %2121 = vrot.lane.b32.xlu0 %v1977, 15
        %v2122 = vpop.permute.xlu0 %2121
        %2123 = vrot.lane.b32.xlu0 %v1978, 15
        %v2124 = vpop.permute.xlu0 %2123
        %2125 = vrot.lane.b32.xlu0 %v1979, 15
        %v2126 = vpop.permute.xlu0 %2125
        %2127 = vrot.lane.b32.xlu0 %v1980, 15
        %v2128 = vpop.permute.xlu0 %2127
        %2129 = vrot.lane.b32.xlu0 %v1981, 15
        %v2130 = vpop.permute.xlu0 %2129
        %2131 = vrot.lane.b32.xlu0 %v1982, 15
        %v2132 = vpop.permute.xlu0 %2131
        %2133 = vrot.lane.b32.xlu0 %v1983, 15
        %v2134 = vpop.permute.xlu0 %2133
        %2135 = vrot.lane.b32.xlu0 %v1984, 15
        %v2136 = vpop.permute.xlu0 %2135
        %2137 = vrot.lane.b32.xlu0 %v1985, 15
        %v2138 = vpop.permute.xlu0 %2137
        %2139 = vrot.lane.b32.xlu0 %v1986, 15
        %v2140 = vpop.permute.xlu0 %2139
        %2141 = vrot.lane.b32.xlu0 %v1987, 15
        %v2142 = vpop.permute.xlu0 %2141
        %2143 = vrot.lane.b32.xlu0 %v1988, 15
        %v2144 = vpop.permute.xlu0 %2143
        %2145 = vrot.lane.b32.xlu0 %v1989, 15
        %v2146 = vpop.permute.xlu0 %2145
        %2147 = vrot.lane.b32.xlu0 %v1990, 15
        %v2148 = vpop.permute.xlu0 %2147
        %2149 = vrot.lane.b32.xlu0 %v1991, 15
        %v2150 = vpop.permute.xlu0 %2149
        %2151 = vrot.lane.b32.xlu0 %v1992, 15
        %v2152 = vpop.permute.xlu0 %2151
        %2153 = vrot.lane.b32.xlu0 %v1993, 15
        %v2154 = vpop.permute.xlu0 %2153
        %2155 = vrot.lane.b32.xlu0 %v1994, 15
        %v2156 = vpop.permute.xlu0 %2155
        %2157 = vrot.lane.b32.xlu0 %v1995, 15
        %v2158 = vpop.permute.xlu0 %2157
        %2159 = vrot.lane.b32.xlu0 %v1996, 15
        %v2160 = vpop.permute.xlu0 %2159
        %2161 = vrot.lane.b32.xlu0 %v1997, 15
        %v2162 = vpop.permute.xlu0 %2161
        %2163 = vrot.lane.b32.xlu0 %v1998, 15
        %v2164 = vpop.permute.xlu0 %2163
        %2165 = vrot.lane.b32.xlu0 %v1999, 15
        %v2166 = vpop.permute.xlu0 %2165
        %2167 = vrot.lane.b32.xlu0 %v2000, 15
        %v2168 = vpop.permute.xlu0 %2167
        %2169 = vrot.lane.b32.xlu0 %v2001, 15
        %v2170 = vpop.permute.xlu0 %2169
        %2171 = vrot.lane.b32.xlu0 %v2002, 15
        %v2172 = vpop.permute.xlu0 %2171
        %2173 = vrot.lane.b32.xlu0 %v2003, 15
        %v2174 = vpop.permute.xlu0 %2173
        %2175 = vrot.lane.b32.xlu0 %v2004, 15
        %v2176 = vpop.permute.xlu0 %2175
        %2177 = vrot.lane.b32.xlu0 %v2005, 15
        %v2178 = vpop.permute.xlu0 %2177
        %2179 = vrot.lane.b32.xlu0 %v2006, 15
        %v2180 = vpop.permute.xlu0 %2179
        %2181 = vrot.lane.b32.xlu0 %v2007, 15
        %v2182 = vpop.permute.xlu0 %2181
        %2183 = vrot.lane.b32.xlu0 %v2008, 15
        %v2184 = vpop.permute.xlu0 %2183
        %2185 = vrot.lane.b32.xlu0 %v2009, 15
        %v2186 = vpop.permute.xlu0 %2185
        %2187 = vrot.lane.b32.xlu0 %v2010, 15
        %v2188 = vpop.permute.xlu0 %2187
        %2189 = vrot.lane.b32.xlu0 %v2011, 15
        %v2190 = vpop.permute.xlu0 %2189
        %2191 = vrot.lane.b32.xlu0 %v2012, 15
        %v2192 = vpop.permute.xlu0 %2191
        %2193 = vrot.lane.b32.xlu0 %v2013, 15
        %v2194 = vpop.permute.xlu0 %2193
        %2195 = vrot.lane.b32.xlu0 %v2014, 15
        %v2196 = vpop.permute.xlu0 %2195
        %2197 = vrot.lane.b32.xlu0 %v2015, 15
        %v2198 = vpop.permute.xlu0 %2197
        %2199 = vrot.lane.b32.xlu0 %v2016, 15
        %v2200 = vpop.permute.xlu0 %2199
        %2201 = vrot.lane.b32.xlu0 %v2017, 15
        %v2202 = vpop.permute.xlu0 %2201
        %2203 = vrot.lane.b32.xlu0 %v2018, 15
        %v2204 = vpop.permute.xlu0 %2203
        %2205 = vrot.lane.b32.xlu0 %v2019, 15
        %v2206 = vpop.permute.xlu0 %2205
        %2207 = vrot.lane.b32.xlu0 %v2020, 15
        %v2208 = vpop.permute.xlu0 %2207
        %2209 = vrot.lane.b32.xlu0 %v2021, 15
        %v2210 = vpop.permute.xlu0 %2209
        %2211 = vrot.lane.b32.xlu0 %v2022, 15
        %v2212 = vpop.permute.xlu0 %2211
        %2213 = vrot.lane.b32.xlu0 %v2023, 15
        %v2214 = vpop.permute.xlu0 %2213
        %2215 = vrot.lane.b32.xlu0 %v2024, 15
        %v2216 = vpop.permute.xlu0 %2215
        %2217 = vrot.lane.b32.xlu0 %v2025, 15
        %v2218 = vpop.permute.xlu0 %2217
        %2219 = vrot.lane.b32.xlu0 %v2026, 15
        %v2220 = vpop.permute.xlu0 %2219
        %2221 = vrot.lane.b32.xlu0 %v2027, 15
        %v2222 = vpop.permute.xlu0 %2221
        %2223 = vrot.lane.b32.xlu0 %v2028, 15
        %v2224 = vpop.permute.xlu0 %2223
        %2225 = vrot.lane.b32.xlu0 %v2029, 15
        %v2226 = vpop.permute.xlu0 %2225
        %2227 = vrot.lane.b32.xlu0 %v2030, 15
        %v2228 = vpop.permute.xlu0 %2227
        %vm2295 = vcmask 146552
        %2296 = vst.msk [vmem:[#allocation2] sm:$0xff] %vm2295, %v2098
        %2297 = vst.msk [vmem:[#allocation2 + $0x8] sm:$0xff] %vm2295, %v2100
        %2298 = vst.msk [vmem:[#allocation2 + $0x10] sm:$0xff] %vm2295, %v2102
        %2299 = vst.msk [vmem:[#allocation2 + $0x18] sm:$0xff] %vm2295, %v2104
        %2300 = vst.msk [vmem:[#allocation2 + $0x20] sm:$0xff] %vm2295, %v2106
        %2301 = vst.msk [vmem:[#allocation2 + $0x28] sm:$0xff] %vm2295, %v2108
        %2302 = vst.msk [vmem:[#allocation2 + $0x30] sm:$0xff] %vm2295, %v2110
        %2303 = vst.msk [vmem:[#allocation2 + $0x38] sm:$0xff] %vm2295, %v2112
        %2304 = vst.msk [vmem:[#allocation2 + $0x40] sm:$0xff] %vm2295, %v2114
        %2305 = vst.msk [vmem:[#allocation2 + $0x48] sm:$0xff] %vm2295, %v2116
        %2306 = vst.msk [vmem:[#allocation2 + $0x50] sm:$0xff] %vm2295, %v2118
        %2307 = vst.msk [vmem:[#allocation2 + $0x58] sm:$0xff] %vm2295, %v2120
        %2308 = vst.msk [vmem:[#allocation2 + $0x60] sm:$0xff] %vm2295, %v2122
        %2309 = vst.msk [vmem:[#allocation2 + $0x68] sm:$0xff] %vm2295, %v2124
        %2310 = vst.msk [vmem:[#allocation2 + $0x70] sm:$0xff] %vm2295, %v2126
        %2311 = vst.msk [vmem:[#allocation2 + $0x78] sm:$0xff] %vm2295, %v2128
        %2312 = vst.msk [vmem:[#allocation2 + $0x80] sm:$0xff] %vm2295, %v2130
        %2313 = vst.msk [vmem:[#allocation2 + $0x88] sm:$0xff] %vm2295, %v2132
        %2314 = vst.msk [vmem:[#allocation2 + $0x90] sm:$0xff] %vm2295, %v2134
        %2315 = vst.msk [vmem:[#allocation2 + $0x98] sm:$0xff] %vm2295, %v2136
        %2316 = vst.msk [vmem:[#allocation2 + $0xa0] sm:$0xff] %vm2295, %v2138
        %2317 = vst.msk [vmem:[#allocation2 + $0xa8] sm:$0xff] %vm2295, %v2140
        %2318 = vst.msk [vmem:[#allocation2 + $0xb0] sm:$0xff] %vm2295, %v2142
        %2319 = vst.msk [vmem:[#allocation2 + $0xb8] sm:$0xff] %vm2295, %v2144
        %2320 = vst.msk [vmem:[#allocation2 + $0xc0] sm:$0xff] %vm2295, %v2146
        %2321 = vst.msk [vmem:[#allocation2 + $0xc8] sm:$0xff] %vm2295, %v2148
        %2322 = vst.msk [vmem:[#allocation2 + $0xd0] sm:$0xff] %vm2295, %v2150
        %2323 = vst.msk [vmem:[#allocation2 + $0xd8] sm:$0xff] %vm2295, %v2152
        %2324 = vst.msk [vmem:[#allocation2 + $0xe0] sm:$0xff] %vm2295, %v2154
        %2325 = vst.msk [vmem:[#allocation2 + $0xe8] sm:$0xff] %vm2295, %v2156
        %2326 = vst.msk [vmem:[#allocation2 + $0xf0] sm:$0xff] %vm2295, %v2158
        %2327 = vst.msk [vmem:[#allocation2 + $0xf8] sm:$0xff] %vm2295, %v2160
        %2328 = vst.msk [vmem:[#allocation2 + $0x100] sm:$0xff] %vm2295, %v2162
        %2329 = vst.msk [vmem:[#allocation2 + $0x108] sm:$0xff] %vm2295, %v2164
        %2330 = vst.msk [vmem:[#allocation2 + $0x110] sm:$0xff] %vm2295, %v2166
        %2331 = vst.msk [vmem:[#allocation2 + $0x118] sm:$0xff] %vm2295, %v2168
        %2332 = vst.msk [vmem:[#allocation2 + $0x120] sm:$0xff] %vm2295, %v2170
        %2333 = vst.msk [vmem:[#allocation2 + $0x128] sm:$0xff] %vm2295, %v2172
        %2334 = vst.msk [vmem:[#allocation2 + $0x130] sm:$0xff] %vm2295, %v2174
        %2335 = vst.msk [vmem:[#allocation2 + $0x138] sm:$0xff] %vm2295, %v2176
        %2336 = vst.msk [vmem:[#allocation2 + $0x140] sm:$0xff] %vm2295, %v2178
        %2337 = vst.msk [vmem:[#allocation2 + $0x148] sm:$0xff] %vm2295, %v2180
        %2338 = vst.msk [vmem:[#allocation2 + $0x150] sm:$0xff] %vm2295, %v2182
        %2339 = vst.msk [vmem:[#allocation2 + $0x158] sm:$0xff] %vm2295, %v2184
        %2340 = vst.msk [vmem:[#allocation2 + $0x160] sm:$0xff] %vm2295, %v2186
        %2341 = vst.msk [vmem:[#allocation2 + $0x168] sm:$0xff] %vm2295, %v2188
        %2342 = vst.msk [vmem:[#allocation2 + $0x170] sm:$0xff] %vm2295, %v2190
        %2343 = vst.msk [vmem:[#allocation2 + $0x178] sm:$0xff] %vm2295, %v2192
        %2344 = vst.msk [vmem:[#allocation2 + $0x180] sm:$0xff] %vm2295, %v2194
        %2345 = vst.msk [vmem:[#allocation2 + $0x188] sm:$0xff] %vm2295, %v2196
        %2346 = vst.msk [vmem:[#allocation2 + $0x190] sm:$0xff] %vm2295, %v2198
        %2347 = vst.msk [vmem:[#allocation2 + $0x198] sm:$0xff] %vm2295, %v2200
        %2348 = vst.msk [vmem:[#allocation2 + $0x1a0] sm:$0xff] %vm2295, %v2202
        %2349 = vst.msk [vmem:[#allocation2 + $0x1a8] sm:$0xff] %vm2295, %v2204
        %2350 = vst.msk [vmem:[#allocation2 + $0x1b0] sm:$0xff] %vm2295, %v2206
        %2351 = vst.msk [vmem:[#allocation2 + $0x1b8] sm:$0xff] %vm2295, %v2208
        %2352 = vst.msk [vmem:[#allocation2 + $0x1c0] sm:$0xff] %vm2295, %v2210
        %2353 = vst.msk [vmem:[#allocation2 + $0x1c8] sm:$0xff] %vm2295, %v2212
        %2354 = vst.msk [vmem:[#allocation2 + $0x1d0] sm:$0xff] %vm2295, %v2214
        %2355 = vst.msk [vmem:[#allocation2 + $0x1d8] sm:$0xff] %vm2295, %v2216
        %2356 = vst.msk [vmem:[#allocation2 + $0x1e0] sm:$0xff] %vm2295, %v2218
        %2357 = vst.msk [vmem:[#allocation2 + $0x1e8] sm:$0xff] %vm2295, %v2220
        %2358 = vst.msk [vmem:[#allocation2 + $0x1f0] sm:$0xff] %vm2295, %v2222
        %2359 = vst.msk [vmem:[#allocation2 + $0x1f8] sm:$0xff] %vm2295, %v2224
        %2360 = vst.msk [vmem:[#allocation2 + $0x200] sm:$0xff] %vm2295, %v2226
        %2361 = vst.msk [vmem:[#allocation2 + $0x208] sm:$0xff] %vm2295, %v2228
        %v2362 = vld [vmem:[%s232 + $0x30] sm:$0xff]
        %v2363 = vld [vmem:[%s232 + $0x38] sm:$0xff]
        %v2364 = vld [vmem:[%s232 + $0x40] sm:$0xff]
        %v2365 = vld [vmem:[%s232 + $0x48] sm:$0xff]
        %v2366 = vld [vmem:[%s232 + $0x50] sm:$0xff]
        %v2367 = vld [vmem:[%s232 + $0x58] sm:$0xff]
        %v2368 = vld [vmem:[%s232 + $0x60] sm:$0xff]
        %v2369 = vld [vmem:[%s232 + $0x68] sm:$0xff]
        %v2370 = vld [vmem:[%s232 + $0x70] sm:$0xff]
        %v2371 = vld [vmem:[%s232 + $0x78] sm:$0xff]
        %v2372 = vld [vmem:[%s232 + $0x80] sm:$0xff]
        %v2373 = vld [vmem:[%s232 + $0x88] sm:$0xff]
        %v2374 = vld [vmem:[%s232 + $0x90] sm:$0xff]
        %v2375 = vld [vmem:[%s232 + $0x98] sm:$0xff]
        %v2376 = vld [vmem:[%s232 + $0xa0] sm:$0xff]
        %v2377 = vld [vmem:[%s232 + $0xa8] sm:$0xff]
        %v2378 = vld [vmem:[%s232 + $0xb0] sm:$0xff]
        %v2379 = vld [vmem:[%s232 + $0xb8] sm:$0xff]
        %v2380 = vld [vmem:[%s232 + $0xc0] sm:$0xff]
        %v2381 = vld [vmem:[%s232 + $0xc8] sm:$0xff]
        %v2382 = vld [vmem:[%s232 + $0xd0] sm:$0xff]
        %v2383 = vld [vmem:[%s232 + $0xd8] sm:$0xff]
        %v2384 = vld [vmem:[%s232 + $0xe0] sm:$0xff]
        %v2385 = vld [vmem:[%s232 + $0xe8] sm:$0xff]
        %v2386 = vld [vmem:[%s232 + $0xf0] sm:$0xff]
        %v2387 = vld [vmem:[%s232 + $0xf8] sm:$0xff]
        %v2388 = vld [vmem:[%s232 + $0x100] sm:$0xff]
        %v2389 = vld [vmem:[%s232 + $0x108] sm:$0xff]
        %v2390 = vld [vmem:[%s232 + $0x110] sm:$0xff]
        %v2391 = vld [vmem:[%s232 + $0x118] sm:$0xff]
        %v2392 = vld [vmem:[%s232 + $0x120] sm:$0xff]
        %v2393 = vld [vmem:[%s232 + $0x128] sm:$0xff]
        %v2394 = vld [vmem:[%s232 + $0x130] sm:$0xff]
        %v2395 = vld [vmem:[%s232 + $0x138] sm:$0xff]
        %v2396 = vld [vmem:[%s232 + $0x140] sm:$0xff]
        %v2397 = vld [vmem:[%s232 + $0x148] sm:$0xff]
        %v2398 = vld [vmem:[%s232 + $0x150] sm:$0xff]
        %v2399 = vld [vmem:[%s232 + $0x158] sm:$0xff]
        %v2400 = vld [vmem:[%s232 + $0x160] sm:$0xff]
        %v2401 = vld [vmem:[%s232 + $0x168] sm:$0xff]
        %v2402 = vld [vmem:[%s232 + $0x170] sm:$0xff]
        %v2403 = vld [vmem:[%s232 + $0x178] sm:$0xff]
        %v2404 = vld [vmem:[%s232 + $0x180] sm:$0xff]
        %v2405 = vld [vmem:[%s232 + $0x188] sm:$0xff]
        %v2406 = vld [vmem:[%s232 + $0x190] sm:$0xff]
        %v2407 = vld [vmem:[%s232 + $0x198] sm:$0xff]
        %v2408 = vld [vmem:[%s232 + $0x1a0] sm:$0xff]
        %v2409 = vld [vmem:[%s232 + $0x1a8] sm:$0xff]
        %v2410 = vld [vmem:[%s232 + $0x1b0] sm:$0xff]
        %v2411 = vld [vmem:[%s232 + $0x1b8] sm:$0xff]
        %v2412 = vld [vmem:[%s232 + $0x1c0] sm:$0xff]
        %v2413 = vld [vmem:[%s232 + $0x1c8] sm:$0xff]
        %v2414 = vld [vmem:[%s232 + $0x1d0] sm:$0xff]
        %v2415 = vld [vmem:[%s232 + $0x1d8] sm:$0xff]
        %v2416 = vld [vmem:[%s232 + $0x1e0] sm:$0xff]
        %v2417 = vld [vmem:[%s232 + $0x1e8] sm:$0xff]
        %v2418 = vld [vmem:[%s232 + $0x1f0] sm:$0xff]
        %v2419 = vld [vmem:[%s232 + $0x1f8] sm:$0xff]
        %v2420 = vld [vmem:[%s232 + $0x200] sm:$0xff]
        %v2421 = vld [vmem:[%s232 + $0x208] sm:$0xff]
        %v2422 = vld [vmem:[%s232 + $0x210] sm:$0xff]
        %v2423 = vld [vmem:[%s232 + $0x218] sm:$0xff]
        %v2424 = vld [vmem:[%s232 + $0x220] sm:$0xff]
        %v2425 = vld [vmem:[%s232 + $0x228] sm:$0xff]
        %v2426 = vld [vmem:[%s232 + $0x230] sm:$0xff]
        %v2427 = vld [vmem:[%s232 + $0x238] sm:$0xff]
        %2494 = vrot.lane.b32.xlu0 %v2362, 18
        %v2495 = vpop.permute.xlu0 %2494
        %2496 = vrot.lane.b32.xlu0 %v2363, 18
        %v2497 = vpop.permute.xlu0 %2496
        %2498 = vrot.lane.b32.xlu0 %v2364, 18
        %v2499 = vpop.permute.xlu0 %2498
        %2500 = vrot.lane.b32.xlu0 %v2365, 18
        %v2501 = vpop.permute.xlu0 %2500
        %2502 = vrot.lane.b32.xlu0 %v2366, 18
        %v2503 = vpop.permute.xlu0 %2502
        %2504 = vrot.lane.b32.xlu0 %v2367, 18
        %v2505 = vpop.permute.xlu0 %2504
        %2506 = vrot.lane.b32.xlu0 %v2368, 18
        %v2507 = vpop.permute.xlu0 %2506
        %2508 = vrot.lane.b32.xlu0 %v2369, 18
        %v2509 = vpop.permute.xlu0 %2508
        %2510 = vrot.lane.b32.xlu0 %v2370, 18
        %v2511 = vpop.permute.xlu0 %2510
        %2512 = vrot.lane.b32.xlu0 %v2371, 18
        %v2513 = vpop.permute.xlu0 %2512
        %2514 = vrot.lane.b32.xlu0 %v2372, 18
        %v2515 = vpop.permute.xlu0 %2514
        %2516 = vrot.lane.b32.xlu0 %v2373, 18
        %v2517 = vpop.permute.xlu0 %2516
        %2518 = vrot.lane.b32.xlu0 %v2374, 18
        %v2519 = vpop.permute.xlu0 %2518
        %2520 = vrot.lane.b32.xlu0 %v2375, 18
        %v2521 = vpop.permute.xlu0 %2520
        %2522 = vrot.lane.b32.xlu0 %v2376, 18
        %v2523 = vpop.permute.xlu0 %2522
        %2524 = vrot.lane.b32.xlu0 %v2377, 18
        %v2525 = vpop.permute.xlu0 %2524
        %2526 = vrot.lane.b32.xlu0 %v2378, 18
        %v2527 = vpop.permute.xlu0 %2526
        %2528 = vrot.lane.b32.xlu0 %v2379, 18
        %v2529 = vpop.permute.xlu0 %2528
        %2530 = vrot.lane.b32.xlu0 %v2380, 18
        %v2531 = vpop.permute.xlu0 %2530
        %2532 = vrot.lane.b32.xlu0 %v2381, 18
        %v2533 = vpop.permute.xlu0 %2532
        %2534 = vrot.lane.b32.xlu0 %v2382, 18
        %v2535 = vpop.permute.xlu0 %2534
        %2536 = vrot.lane.b32.xlu0 %v2383, 18
        %v2537 = vpop.permute.xlu0 %2536
        %2538 = vrot.lane.b32.xlu0 %v2384, 18
        %v2539 = vpop.permute.xlu0 %2538
        %2540 = vrot.lane.b32.xlu0 %v2385, 18
        %v2541 = vpop.permute.xlu0 %2540
        %2542 = vrot.lane.b32.xlu0 %v2386, 18
        %v2543 = vpop.permute.xlu0 %2542
        %2544 = vrot.lane.b32.xlu0 %v2387, 18
        %v2545 = vpop.permute.xlu0 %2544
        %2546 = vrot.lane.b32.xlu0 %v2388, 18
        %v2547 = vpop.permute.xlu0 %2546
        %2548 = vrot.lane.b32.xlu0 %v2389, 18
        %v2549 = vpop.permute.xlu0 %2548
        %2550 = vrot.lane.b32.xlu0 %v2390, 18
        %v2551 = vpop.permute.xlu0 %2550
        %2552 = vrot.lane.b32.xlu0 %v2391, 18
        %v2553 = vpop.permute.xlu0 %2552
        %2554 = vrot.lane.b32.xlu0 %v2392, 18
        %v2555 = vpop.permute.xlu0 %2554
        %2556 = vrot.lane.b32.xlu0 %v2393, 18
        %v2557 = vpop.permute.xlu0 %2556
        %2558 = vrot.lane.b32.xlu0 %v2394, 18
        %v2559 = vpop.permute.xlu0 %2558
        %2560 = vrot.lane.b32.xlu0 %v2395, 18
        %v2561 = vpop.permute.xlu0 %2560
        %2562 = vrot.lane.b32.xlu0 %v2396, 18
        %v2563 = vpop.permute.xlu0 %2562
        %2564 = vrot.lane.b32.xlu0 %v2397, 18
        %v2565 = vpop.permute.xlu0 %2564
        %2566 = vrot.lane.b32.xlu0 %v2398, 18
        %v2567 = vpop.permute.xlu0 %2566
        %2568 = vrot.lane.b32.xlu0 %v2399, 18
        %v2569 = vpop.permute.xlu0 %2568
        %2570 = vrot.lane.b32.xlu0 %v2400, 18
        %v2571 = vpop.permute.xlu0 %2570
        %2572 = vrot.lane.b32.xlu0 %v2401, 18
        %v2573 = vpop.permute.xlu0 %2572
        %2574 = vrot.lane.b32.xlu0 %v2402, 18
        %v2575 = vpop.permute.xlu0 %2574
        %2576 = vrot.lane.b32.xlu0 %v2403, 18
        %v2577 = vpop.permute.xlu0 %2576
        %2578 = vrot.lane.b32.xlu0 %v2404, 18
        %v2579 = vpop.permute.xlu0 %2578
        %2580 = vrot.lane.b32.xlu0 %v2405, 18
        %v2581 = vpop.permute.xlu0 %2580
        %2582 = vrot.lane.b32.xlu0 %v2406, 18
        %v2583 = vpop.permute.xlu0 %2582
        %2584 = vrot.lane.b32.xlu0 %v2407, 18
        %v2585 = vpop.permute.xlu0 %2584
        %2586 = vrot.lane.b32.xlu0 %v2408, 18
        %v2587 = vpop.permute.xlu0 %2586
        %2588 = vrot.lane.b32.xlu0 %v2409, 18
        %v2589 = vpop.permute.xlu0 %2588
        %2590 = vrot.lane.b32.xlu0 %v2410, 18
        %v2591 = vpop.permute.xlu0 %2590
        %2592 = vrot.lane.b32.xlu0 %v2411, 18
        %v2593 = vpop.permute.xlu0 %2592
        %2594 = vrot.lane.b32.xlu0 %v2412, 18
        %v2595 = vpop.permute.xlu0 %2594
        %2596 = vrot.lane.b32.xlu0 %v2413, 18
        %v2597 = vpop.permute.xlu0 %2596
        %2598 = vrot.lane.b32.xlu0 %v2414, 18
        %v2599 = vpop.permute.xlu0 %2598
        %2600 = vrot.lane.b32.xlu0 %v2415, 18
        %v2601 = vpop.permute.xlu0 %2600
        %2602 = vrot.lane.b32.xlu0 %v2416, 18
        %v2603 = vpop.permute.xlu0 %2602
        %2604 = vrot.lane.b32.xlu0 %v2417, 18
        %v2605 = vpop.permute.xlu0 %2604
        %2606 = vrot.lane.b32.xlu0 %v2418, 18
        %v2607 = vpop.permute.xlu0 %2606
        %2608 = vrot.lane.b32.xlu0 %v2419, 18
        %v2609 = vpop.permute.xlu0 %2608
        %2610 = vrot.lane.b32.xlu0 %v2420, 18
        %v2611 = vpop.permute.xlu0 %2610
        %2612 = vrot.lane.b32.xlu0 %v2421, 18
        %v2613 = vpop.permute.xlu0 %2612
        %2614 = vrot.lane.b32.xlu0 %v2422, 18
        %v2615 = vpop.permute.xlu0 %2614
        %2616 = vrot.lane.b32.xlu0 %v2423, 18
        %v2617 = vpop.permute.xlu0 %2616
        %2618 = vrot.lane.b32.xlu0 %v2424, 18
        %v2619 = vpop.permute.xlu0 %2618
        %2620 = vrot.lane.b32.xlu0 %v2425, 18
        %v2621 = vpop.permute.xlu0 %2620
        %2622 = vrot.lane.b32.xlu0 %v2426, 18
        %v2623 = vpop.permute.xlu0 %2622
        %2624 = vrot.lane.b32.xlu0 %v2427, 18
        %v2625 = vpop.permute.xlu0 %2624
        %vm2692 = vcmask 171152
        %2693 = vst.msk [vmem:[#allocation2] sm:$0xff] %vm2692, %v2495
        %2694 = vst.msk [vmem:[#allocation2 + $0x8] sm:$0xff] %vm2692, %v2497
        %2695 = vst.msk [vmem:[#allocation2 + $0x10] sm:$0xff] %vm2692, %v2499
        %2696 = vst.msk [vmem:[#allocation2 + $0x18] sm:$0xff] %vm2692, %v2501
        %2697 = vst.msk [vmem:[#allocation2 + $0x20] sm:$0xff] %vm2692, %v2503
        %2698 = vst.msk [vmem:[#allocation2 + $0x28] sm:$0xff] %vm2692, %v2505
        %2699 = vst.msk [vmem:[#allocation2 + $0x30] sm:$0xff] %vm2692, %v2507
        %2700 = vst.msk [vmem:[#allocation2 + $0x38] sm:$0xff] %vm2692, %v2509
        %2701 = vst.msk [vmem:[#allocation2 + $0x40] sm:$0xff] %vm2692, %v2511
        %2702 = vst.msk [vmem:[#allocation2 + $0x48] sm:$0xff] %vm2692, %v2513
        %2703 = vst.msk [vmem:[#allocation2 + $0x50] sm:$0xff] %vm2692, %v2515
        %2704 = vst.msk [vmem:[#allocation2 + $0x58] sm:$0xff] %vm2692, %v2517
        %2705 = vst.msk [vmem:[#allocation2 + $0x60] sm:$0xff] %vm2692, %v2519
        %2706 = vst.msk [vmem:[#allocation2 + $0x68] sm:$0xff] %vm2692, %v2521
        %2707 = vst.msk [vmem:[#allocation2 + $0x70] sm:$0xff] %vm2692, %v2523
        %2708 = vst.msk [vmem:[#allocation2 + $0x78] sm:$0xff] %vm2692, %v2525
        %2709 = vst.msk [vmem:[#allocation2 + $0x80] sm:$0xff] %vm2692, %v2527
        %2710 = vst.msk [vmem:[#allocation2 + $0x88] sm:$0xff] %vm2692, %v2529
        %2711 = vst.msk [vmem:[#allocation2 + $0x90] sm:$0xff] %vm2692, %v2531
        %2712 = vst.msk [vmem:[#allocation2 + $0x98] sm:$0xff] %vm2692, %v2533
        %2713 = vst.msk [vmem:[#allocation2 + $0xa0] sm:$0xff] %vm2692, %v2535
        %2714 = vst.msk [vmem:[#allocation2 + $0xa8] sm:$0xff] %vm2692, %v2537
        %2715 = vst.msk [vmem:[#allocation2 + $0xb0] sm:$0xff] %vm2692, %v2539
        %2716 = vst.msk [vmem:[#allocation2 + $0xb8] sm:$0xff] %vm2692, %v2541
        %2717 = vst.msk [vmem:[#allocation2 + $0xc0] sm:$0xff] %vm2692, %v2543
        %2718 = vst.msk [vmem:[#allocation2 + $0xc8] sm:$0xff] %vm2692, %v2545
        %2719 = vst.msk [vmem:[#allocation2 + $0xd0] sm:$0xff] %vm2692, %v2547
        %2720 = vst.msk [vmem:[#allocation2 + $0xd8] sm:$0xff] %vm2692, %v2549
        %2721 = vst.msk [vmem:[#allocation2 + $0xe0] sm:$0xff] %vm2692, %v2551
        %2722 = vst.msk [vmem:[#allocation2 + $0xe8] sm:$0xff] %vm2692, %v2553
        %2723 = vst.msk [vmem:[#allocation2 + $0xf0] sm:$0xff] %vm2692, %v2555
        %2724 = vst.msk [vmem:[#allocation2 + $0xf8] sm:$0xff] %vm2692, %v2557
        %2725 = vst.msk [vmem:[#allocation2 + $0x100] sm:$0xff] %vm2692, %v2559
        %2726 = vst.msk [vmem:[#allocation2 + $0x108] sm:$0xff] %vm2692, %v2561
        %2727 = vst.msk [vmem:[#allocation2 + $0x110] sm:$0xff] %vm2692, %v2563
        %2728 = vst.msk [vmem:[#allocation2 + $0x118] sm:$0xff] %vm2692, %v2565
        %2729 = vst.msk [vmem:[#allocation2 + $0x120] sm:$0xff] %vm2692, %v2567
        %2730 = vst.msk [vmem:[#allocation2 + $0x128] sm:$0xff] %vm2692, %v2569
        %2731 = vst.msk [vmem:[#allocation2 + $0x130] sm:$0xff] %vm2692, %v2571
        %2732 = vst.msk [vmem:[#allocation2 + $0x138] sm:$0xff] %vm2692, %v2573
        %2733 = vst.msk [vmem:[#allocation2 + $0x140] sm:$0xff] %vm2692, %v2575
        %2734 = vst.msk [vmem:[#allocation2 + $0x148] sm:$0xff] %vm2692, %v2577
        %2735 = vst.msk [vmem:[#allocation2 + $0x150] sm:$0xff] %vm2692, %v2579
        %2736 = vst.msk [vmem:[#allocation2 + $0x158] sm:$0xff] %vm2692, %v2581
        %2737 = vst.msk [vmem:[#allocation2 + $0x160] sm:$0xff] %vm2692, %v2583
        %2738 = vst.msk [vmem:[#allocation2 + $0x168] sm:$0xff] %vm2692, %v2585
        %2739 = vst.msk [vmem:[#allocation2 + $0x170] sm:$0xff] %vm2692, %v2587
        %2740 = vst.msk [vmem:[#allocation2 + $0x178] sm:$0xff] %vm2692, %v2589
        %2741 = vst.msk [vmem:[#allocation2 + $0x180] sm:$0xff] %vm2692, %v2591
        %2742 = vst.msk [vmem:[#allocation2 + $0x188] sm:$0xff] %vm2692, %v2593
        %2743 = vst.msk [vmem:[#allocation2 + $0x190] sm:$0xff] %vm2692, %v2595
        %2744 = vst.msk [vmem:[#allocation2 + $0x198] sm:$0xff] %vm2692, %v2597
        %2745 = vst.msk [vmem:[#allocation2 + $0x1a0] sm:$0xff] %vm2692, %v2599
        %2746 = vst.msk [vmem:[#allocation2 + $0x1a8] sm:$0xff] %vm2692, %v2601
        %2747 = vst.msk [vmem:[#allocation2 + $0x1b0] sm:$0xff] %vm2692, %v2603
        %2748 = vst.msk [vmem:[#allocation2 + $0x1b8] sm:$0xff] %vm2692, %v2605
        %2749 = vst.msk [vmem:[#allocation2 + $0x1c0] sm:$0xff] %vm2692, %v2607
        %2750 = vst.msk [vmem:[#allocation2 + $0x1c8] sm:$0xff] %vm2692, %v2609
        %2751 = vst.msk [vmem:[#allocation2 + $0x1d0] sm:$0xff] %vm2692, %v2611
        %2752 = vst.msk [vmem:[#allocation2 + $0x1d8] sm:$0xff] %vm2692, %v2613
        %2753 = vst.msk [vmem:[#allocation2 + $0x1e0] sm:$0xff] %vm2692, %v2615
        %2754 = vst.msk [vmem:[#allocation2 + $0x1e8] sm:$0xff] %vm2692, %v2617
        %2755 = vst.msk [vmem:[#allocation2 + $0x1f0] sm:$0xff] %vm2692, %v2619
        %2756 = vst.msk [vmem:[#allocation2 + $0x1f8] sm:$0xff] %vm2692, %v2621
        %2757 = vst.msk [vmem:[#allocation2 + $0x200] sm:$0xff] %vm2692, %v2623
        %2758 = vst.msk [vmem:[#allocation2 + $0x208] sm:$0xff] %vm2692, %v2625
        %v2759 = vld [vmem:[%s232 + $0x31] sm:$0xff]
        %v2760 = vld [vmem:[%s232 + $0x39] sm:$0xff]
        %v2761 = vld [vmem:[%s232 + $0x41] sm:$0xff]
        %v2762 = vld [vmem:[%s232 + $0x49] sm:$0xff]
        %v2763 = vld [vmem:[%s232 + $0x51] sm:$0xff]
        %v2764 = vld [vmem:[%s232 + $0x59] sm:$0xff]
        %v2765 = vld [vmem:[%s232 + $0x61] sm:$0xff]
        %v2766 = vld [vmem:[%s232 + $0x69] sm:$0xff]
        %v2767 = vld [vmem:[%s232 + $0x71] sm:$0xff]
        %v2768 = vld [vmem:[%s232 + $0x79] sm:$0xff]
        %v2769 = vld [vmem:[%s232 + $0x81] sm:$0xff]
        %v2770 = vld [vmem:[%s232 + $0x89] sm:$0xff]
        %v2771 = vld [vmem:[%s232 + $0x91] sm:$0xff]
        %v2772 = vld [vmem:[%s232 + $0x99] sm:$0xff]
        %v2773 = vld [vmem:[%s232 + $0xa1] sm:$0xff]
        %v2774 = vld [vmem:[%s232 + $0xa9] sm:$0xff]
        %v2775 = vld [vmem:[%s232 + $0xb1] sm:$0xff]
        %v2776 = vld [vmem:[%s232 + $0xb9] sm:$0xff]
        %v2777 = vld [vmem:[%s232 + $0xc1] sm:$0xff]
        %v2778 = vld [vmem:[%s232 + $0xc9] sm:$0xff]
        %v2779 = vld [vmem:[%s232 + $0xd1] sm:$0xff]
        %v2780 = vld [vmem:[%s232 + $0xd9] sm:$0xff]
        %v2781 = vld [vmem:[%s232 + $0xe1] sm:$0xff]
        %v2782 = vld [vmem:[%s232 + $0xe9] sm:$0xff]
        %v2783 = vld [vmem:[%s232 + $0xf1] sm:$0xff]
        %v2784 = vld [vmem:[%s232 + $0xf9] sm:$0xff]
        %v2785 = vld [vmem:[%s232 + $0x101] sm:$0xff]
        %v2786 = vld [vmem:[%s232 + $0x109] sm:$0xff]
        %v2787 = vld [vmem:[%s232 + $0x111] sm:$0xff]
        %v2788 = vld [vmem:[%s232 + $0x119] sm:$0xff]
        %v2789 = vld [vmem:[%s232 + $0x121] sm:$0xff]
        %v2790 = vld [vmem:[%s232 + $0x129] sm:$0xff]
        %v2791 = vld [vmem:[%s232 + $0x131] sm:$0xff]
        %v2792 = vld [vmem:[%s232 + $0x139] sm:$0xff]
        %v2793 = vld [vmem:[%s232 + $0x141] sm:$0xff]
        %v2794 = vld [vmem:[%s232 + $0x149] sm:$0xff]
        %v2795 = vld [vmem:[%s232 + $0x151] sm:$0xff]
        %v2796 = vld [vmem:[%s232 + $0x159] sm:$0xff]
        %v2797 = vld [vmem:[%s232 + $0x161] sm:$0xff]
        %v2798 = vld [vmem:[%s232 + $0x169] sm:$0xff]
        %v2799 = vld [vmem:[%s232 + $0x171] sm:$0xff]
        %v2800 = vld [vmem:[%s232 + $0x179] sm:$0xff]
        %v2801 = vld [vmem:[%s232 + $0x181] sm:$0xff]
        %v2802 = vld [vmem:[%s232 + $0x189] sm:$0xff]
        %v2803 = vld [vmem:[%s232 + $0x191] sm:$0xff]
        %v2804 = vld [vmem:[%s232 + $0x199] sm:$0xff]
        %v2805 = vld [vmem:[%s232 + $0x1a1] sm:$0xff]
        %v2806 = vld [vmem:[%s232 + $0x1a9] sm:$0xff]
        %v2807 = vld [vmem:[%s232 + $0x1b1] sm:$0xff]
        %v2808 = vld [vmem:[%s232 + $0x1b9] sm:$0xff]
        %v2809 = vld [vmem:[%s232 + $0x1c1] sm:$0xff]
        %v2810 = vld [vmem:[%s232 + $0x1c9] sm:$0xff]
        %v2811 = vld [vmem:[%s232 + $0x1d1] sm:$0xff]
        %v2812 = vld [vmem:[%s232 + $0x1d9] sm:$0xff]
        %v2813 = vld [vmem:[%s232 + $0x1e1] sm:$0xff]
        %v2814 = vld [vmem:[%s232 + $0x1e9] sm:$0xff]
        %v2815 = vld [vmem:[%s232 + $0x1f1] sm:$0xff]
        %v2816 = vld [vmem:[%s232 + $0x1f9] sm:$0xff]
        %v2817 = vld [vmem:[%s232 + $0x201] sm:$0xff]
        %v2818 = vld [vmem:[%s232 + $0x209] sm:$0xff]
        %v2819 = vld [vmem:[%s232 + $0x211] sm:$0xff]
        %v2820 = vld [vmem:[%s232 + $0x219] sm:$0xff]
        %v2821 = vld [vmem:[%s232 + $0x221] sm:$0xff]
        %v2822 = vld [vmem:[%s232 + $0x229] sm:$0xff]
        %v2823 = vld [vmem:[%s232 + $0x231] sm:$0xff]
        %v2824 = vld [vmem:[%s232 + $0x239] sm:$0xff]
        %2891 = vrot.lane.b32.xlu0 %v2759, 21
        %v2892 = vpop.permute.xlu0 %2891
        %2893 = vrot.lane.b32.xlu0 %v2760, 21
        %v2894 = vpop.permute.xlu0 %2893
        %2895 = vrot.lane.b32.xlu0 %v2761, 21
        %v2896 = vpop.permute.xlu0 %2895
        %2897 = vrot.lane.b32.xlu0 %v2762, 21
        %v2898 = vpop.permute.xlu0 %2897
        %2899 = vrot.lane.b32.xlu0 %v2763, 21
        %v2900 = vpop.permute.xlu0 %2899
        %2901 = vrot.lane.b32.xlu0 %v2764, 21
        %v2902 = vpop.permute.xlu0 %2901
        %2903 = vrot.lane.b32.xlu0 %v2765, 21
        %v2904 = vpop.permute.xlu0 %2903
        %2905 = vrot.lane.b32.xlu0 %v2766, 21
        %v2906 = vpop.permute.xlu0 %2905
        %2907 = vrot.lane.b32.xlu0 %v2767, 21
        %v2908 = vpop.permute.xlu0 %2907
        %2909 = vrot.lane.b32.xlu0 %v2768, 21
        %v2910 = vpop.permute.xlu0 %2909
        %2911 = vrot.lane.b32.xlu0 %v2769, 21
        %v2912 = vpop.permute.xlu0 %2911
        %2913 = vrot.lane.b32.xlu0 %v2770, 21
        %v2914 = vpop.permute.xlu0 %2913
        %2915 = vrot.lane.b32.xlu0 %v2771, 21
        %v2916 = vpop.permute.xlu0 %2915
        %2917 = vrot.lane.b32.xlu0 %v2772, 21
        %v2918 = vpop.permute.xlu0 %2917
        %2919 = vrot.lane.b32.xlu0 %v2773, 21
        %v2920 = vpop.permute.xlu0 %2919
        %2921 = vrot.lane.b32.xlu0 %v2774, 21
        %v2922 = vpop.permute.xlu0 %2921
        %2923 = vrot.lane.b32.xlu0 %v2775, 21
        %v2924 = vpop.permute.xlu0 %2923
        %2925 = vrot.lane.b32.xlu0 %v2776, 21
        %v2926 = vpop.permute.xlu0 %2925
        %2927 = vrot.lane.b32.xlu0 %v2777, 21
        %v2928 = vpop.permute.xlu0 %2927
        %2929 = vrot.lane.b32.xlu0 %v2778, 21
        %v2930 = vpop.permute.xlu0 %2929
        %2931 = vrot.lane.b32.xlu0 %v2779, 21
        %v2932 = vpop.permute.xlu0 %2931
        %2933 = vrot.lane.b32.xlu0 %v2780, 21
        %v2934 = vpop.permute.xlu0 %2933
        %2935 = vrot.lane.b32.xlu0 %v2781, 21
        %v2936 = vpop.permute.xlu0 %2935
        %2937 = vrot.lane.b32.xlu0 %v2782, 21
        %v2938 = vpop.permute.xlu0 %2937
        %2939 = vrot.lane.b32.xlu0 %v2783, 21
        %v2940 = vpop.permute.xlu0 %2939
        %2941 = vrot.lane.b32.xlu0 %v2784, 21
        %v2942 = vpop.permute.xlu0 %2941
        %2943 = vrot.lane.b32.xlu0 %v2785, 21
        %v2944 = vpop.permute.xlu0 %2943
        %2945 = vrot.lane.b32.xlu0 %v2786, 21
        %v2946 = vpop.permute.xlu0 %2945
        %2947 = vrot.lane.b32.xlu0 %v2787, 21
        %v2948 = vpop.permute.xlu0 %2947
        %2949 = vrot.lane.b32.xlu0 %v2788, 21
        %v2950 = vpop.permute.xlu0 %2949
        %2951 = vrot.lane.b32.xlu0 %v2789, 21
        %v2952 = vpop.permute.xlu0 %2951
        %2953 = vrot.lane.b32.xlu0 %v2790, 21
        %v2954 = vpop.permute.xlu0 %2953
        %2955 = vrot.lane.b32.xlu0 %v2791, 21
        %v2956 = vpop.permute.xlu0 %2955
        %2957 = vrot.lane.b32.xlu0 %v2792, 21
        %v2958 = vpop.permute.xlu0 %2957
        %2959 = vrot.lane.b32.xlu0 %v2793, 21
        %v2960 = vpop.permute.xlu0 %2959
        %2961 = vrot.lane.b32.xlu0 %v2794, 21
        %v2962 = vpop.permute.xlu0 %2961
        %2963 = vrot.lane.b32.xlu0 %v2795, 21
        %v2964 = vpop.permute.xlu0 %2963
        %2965 = vrot.lane.b32.xlu0 %v2796, 21
        %v2966 = vpop.permute.xlu0 %2965
        %2967 = vrot.lane.b32.xlu0 %v2797, 21
        %v2968 = vpop.permute.xlu0 %2967
        %2969 = vrot.lane.b32.xlu0 %v2798, 21
        %v2970 = vpop.permute.xlu0 %2969
        %2971 = vrot.lane.b32.xlu0 %v2799, 21
        %v2972 = vpop.permute.xlu0 %2971
        %2973 = vrot.lane.b32.xlu0 %v2800, 21
        %v2974 = vpop.permute.xlu0 %2973
        %2975 = vrot.lane.b32.xlu0 %v2801, 21
        %v2976 = vpop.permute.xlu0 %2975
        %2977 = vrot.lane.b32.xlu0 %v2802, 21
        %v2978 = vpop.permute.xlu0 %2977
        %2979 = vrot.lane.b32.xlu0 %v2803, 21
        %v2980 = vpop.permute.xlu0 %2979
        %2981 = vrot.lane.b32.xlu0 %v2804, 21
        %v2982 = vpop.permute.xlu0 %2981
        %2983 = vrot.lane.b32.xlu0 %v2805, 21
        %v2984 = vpop.permute.xlu0 %2983
        %2985 = vrot.lane.b32.xlu0 %v2806, 21
        %v2986 = vpop.permute.xlu0 %2985
        %2987 = vrot.lane.b32.xlu0 %v2807, 21
        %v2988 = vpop.permute.xlu0 %2987
        %2989 = vrot.lane.b32.xlu0 %v2808, 21
        %v2990 = vpop.permute.xlu0 %2989
        %2991 = vrot.lane.b32.xlu0 %v2809, 21
        %v2992 = vpop.permute.xlu0 %2991
        %2993 = vrot.lane.b32.xlu0 %v2810, 21
        %v2994 = vpop.permute.xlu0 %2993
        %2995 = vrot.lane.b32.xlu0 %v2811, 21
        %v2996 = vpop.permute.xlu0 %2995
        %2997 = vrot.lane.b32.xlu0 %v2812, 21
        %v2998 = vpop.permute.xlu0 %2997
        %2999 = vrot.lane.b32.xlu0 %v2813, 21
        %v3000 = vpop.permute.xlu0 %2999
        %3001 = vrot.lane.b32.xlu0 %v2814, 21
        %v3002 = vpop.permute.xlu0 %3001
        %3003 = vrot.lane.b32.xlu0 %v2815, 21
        %v3004 = vpop.permute.xlu0 %3003
        %3005 = vrot.lane.b32.xlu0 %v2816, 21
        %v3006 = vpop.permute.xlu0 %3005
        %3007 = vrot.lane.b32.xlu0 %v2817, 21
        %v3008 = vpop.permute.xlu0 %3007
        %3009 = vrot.lane.b32.xlu0 %v2818, 21
        %v3010 = vpop.permute.xlu0 %3009
        %3011 = vrot.lane.b32.xlu0 %v2819, 21
        %v3012 = vpop.permute.xlu0 %3011
        %3013 = vrot.lane.b32.xlu0 %v2820, 21
        %v3014 = vpop.permute.xlu0 %3013
        %3015 = vrot.lane.b32.xlu0 %v2821, 21
        %v3016 = vpop.permute.xlu0 %3015
        %3017 = vrot.lane.b32.xlu0 %v2822, 21
        %v3018 = vpop.permute.xlu0 %3017
        %3019 = vrot.lane.b32.xlu0 %v2823, 21
        %v3020 = vpop.permute.xlu0 %3019
        %3021 = vrot.lane.b32.xlu0 %v2824, 21
        %v3022 = vpop.permute.xlu0 %3021
        %vm3089 = vcmask 195752
        %3090 = vst.msk [vmem:[#allocation2] sm:$0xff] %vm3089, %v2892
        %3091 = vst.msk [vmem:[#allocation2 + $0x8] sm:$0xff] %vm3089, %v2894
        %3092 = vst.msk [vmem:[#allocation2 + $0x10] sm:$0xff] %vm3089, %v2896
        %3093 = vst.msk [vmem:[#allocation2 + $0x18] sm:$0xff] %vm3089, %v2898
        %3094 = vst.msk [vmem:[#allocation2 + $0x20] sm:$0xff] %vm3089, %v2900
        %3095 = vst.msk [vmem:[#allocation2 + $0x28] sm:$0xff] %vm3089, %v2902
        %3096 = vst.msk [vmem:[#allocation2 + $0x30] sm:$0xff] %vm3089, %v2904
        %3097 = vst.msk [vmem:[#allocation2 + $0x38] sm:$0xff] %vm3089, %v2906
        %3098 = vst.msk [vmem:[#allocation2 + $0x40] sm:$0xff] %vm3089, %v2908
        %3099 = vst.msk [vmem:[#allocation2 + $0x48] sm:$0xff] %vm3089, %v2910
        %3100 = vst.msk [vmem:[#allocation2 + $0x50] sm:$0xff] %vm3089, %v2912
        %3101 = vst.msk [vmem:[#allocation2 + $0x58] sm:$0xff] %vm3089, %v2914
        %3102 = vst.msk [vmem:[#allocation2 + $0x60] sm:$0xff] %vm3089, %v2916
        %3103 = vst.msk [vmem:[#allocation2 + $0x68] sm:$0xff] %vm3089, %v2918
        %3104 = vst.msk [vmem:[#allocation2 + $0x70] sm:$0xff] %vm3089, %v2920
        %3105 = vst.msk [vmem:[#allocation2 + $0x78] sm:$0xff] %vm3089, %v2922
        %3106 = vst.msk [vmem:[#allocation2 + $0x80] sm:$0xff] %vm3089, %v2924
        %3107 = vst.msk [vmem:[#allocation2 + $0x88] sm:$0xff] %vm3089, %v2926
        %3108 = vst.msk [vmem:[#allocation2 + $0x90] sm:$0xff] %vm3089, %v2928
        %3109 = vst.msk [vmem:[#allocation2 + $0x98] sm:$0xff] %vm3089, %v2930
        %3110 = vst.msk [vmem:[#allocation2 + $0xa0] sm:$0xff] %vm3089, %v2932
        %3111 = vst.msk [vmem:[#allocation2 + $0xa8] sm:$0xff] %vm3089, %v2934
        %3112 = vst.msk [vmem:[#allocation2 + $0xb0] sm:$0xff] %vm3089, %v2936
        %3113 = vst.msk [vmem:[#allocation2 + $0xb8] sm:$0xff] %vm3089, %v2938
        %3114 = vst.msk [vmem:[#allocation2 + $0xc0] sm:$0xff] %vm3089, %v2940
        %3115 = vst.msk [vmem:[#allocation2 + $0xc8] sm:$0xff] %vm3089, %v2942
        %3116 = vst.msk [vmem:[#allocation2 + $0xd0] sm:$0xff] %vm3089, %v2944
        %3117 = vst.msk [vmem:[#allocation2 + $0xd8] sm:$0xff] %vm3089, %v2946
        %3118 = vst.msk [vmem:[#allocation2 + $0xe0] sm:$0xff] %vm3089, %v2948
        %3119 = vst.msk [vmem:[#allocation2 + $0xe8] sm:$0xff] %vm3089, %v2950
        %3120 = vst.msk [vmem:[#allocation2 + $0xf0] sm:$0xff] %vm3089, %v2952
        %3121 = vst.msk [vmem:[#allocation2 + $0xf8] sm:$0xff] %vm3089, %v2954
        %3122 = vst.msk [vmem:[#allocation2 + $0x100] sm:$0xff] %vm3089, %v2956
        %3123 = vst.msk [vmem:[#allocation2 + $0x108] sm:$0xff] %vm3089, %v2958
        %3124 = vst.msk [vmem:[#allocation2 + $0x110] sm:$0xff] %vm3089, %v2960
        %3125 = vst.msk [vmem:[#allocation2 + $0x118] sm:$0xff] %vm3089, %v2962
        %3126 = vst.msk [vmem:[#allocation2 + $0x120] sm:$0xff] %vm3089, %v2964
        %3127 = vst.msk [vmem:[#allocation2 + $0x128] sm:$0xff] %vm3089, %v2966
        %3128 = vst.msk [vmem:[#allocation2 + $0x130] sm:$0xff] %vm3089, %v2968
        %3129 = vst.msk [vmem:[#allocation2 + $0x138] sm:$0xff] %vm3089, %v2970
        %3130 = vst.msk [vmem:[#allocation2 + $0x140] sm:$0xff] %vm3089, %v2972
        %3131 = vst.msk [vmem:[#allocation2 + $0x148] sm:$0xff] %vm3089, %v2974
        %3132 = vst.msk [vmem:[#allocation2 + $0x150] sm:$0xff] %vm3089, %v2976
        %3133 = vst.msk [vmem:[#allocation2 + $0x158] sm:$0xff] %vm3089, %v2978
        %3134 = vst.msk [vmem:[#allocation2 + $0x160] sm:$0xff] %vm3089, %v2980
        %3135 = vst.msk [vmem:[#allocation2 + $0x168] sm:$0xff] %vm3089, %v2982
        %3136 = vst.msk [vmem:[#allocation2 + $0x170] sm:$0xff] %vm3089, %v2984
        %3137 = vst.msk [vmem:[#allocation2 + $0x178] sm:$0xff] %vm3089, %v2986
        %3138 = vst.msk [vmem:[#allocation2 + $0x180] sm:$0xff] %vm3089, %v2988
        %3139 = vst.msk [vmem:[#allocation2 + $0x188] sm:$0xff] %vm3089, %v2990
        %3140 = vst.msk [vmem:[#allocation2 + $0x190] sm:$0xff] %vm3089, %v2992
        %3141 = vst.msk [vmem:[#allocation2 + $0x198] sm:$0xff] %vm3089, %v2994
        %3142 = vst.msk [vmem:[#allocation2 + $0x1a0] sm:$0xff] %vm3089, %v2996
        %3143 = vst.msk [vmem:[#allocation2 + $0x1a8] sm:$0xff] %vm3089, %v2998
        %3144 = vst.msk [vmem:[#allocation2 + $0x1b0] sm:$0xff] %vm3089, %v3000
        %3145 = vst.msk [vmem:[#allocation2 + $0x1b8] sm:$0xff] %vm3089, %v3002
        %3146 = vst.msk [vmem:[#allocation2 + $0x1c0] sm:$0xff] %vm3089, %v3004
        %3147 = vst.msk [vmem:[#allocation2 + $0x1c8] sm:$0xff] %vm3089, %v3006
        %3148 = vst.msk [vmem:[#allocation2 + $0x1d0] sm:$0xff] %vm3089, %v3008
        %3149 = vst.msk [vmem:[#allocation2 + $0x1d8] sm:$0xff] %vm3089, %v3010
        %3150 = vst.msk [vmem:[#allocation2 + $0x1e0] sm:$0xff] %vm3089, %v3012
        %3151 = vst.msk [vmem:[#allocation2 + $0x1e8] sm:$0xff] %vm3089, %v3014
        %3152 = vst.msk [vmem:[#allocation2 + $0x1f0] sm:$0xff] %vm3089, %v3016
        %3153 = vst.msk [vmem:[#allocation2 + $0x1f8] sm:$0xff] %vm3089, %v3018
        %3154 = vst.msk [vmem:[#allocation2 + $0x200] sm:$0xff] %vm3089, %v3020
        %3155 = vst.msk [vmem:[#allocation2 + $0x208] sm:$0xff] %vm3089, %v3022
        %v3156 = vld [vmem:[%s232 + $0x32] sm:$0xff]
        %v3157 = vld [vmem:[%s232 + $0x3a] sm:$0xff]
        %v3158 = vld [vmem:[%s232 + $0x42] sm:$0xff]
        %v3159 = vld [vmem:[%s232 + $0x4a] sm:$0xff]
        %v3160 = vld [vmem:[%s232 + $0x52] sm:$0xff]
        %v3161 = vld [vmem:[%s232 + $0x5a] sm:$0xff]
        %v3162 = vld [vmem:[%s232 + $0x62] sm:$0xff]
        %v3163 = vld [vmem:[%s232 + $0x6a] sm:$0xff]
        %v3164 = vld [vmem:[%s232 + $0x72] sm:$0xff]
        %v3165 = vld [vmem:[%s232 + $0x7a] sm:$0xff]
        %v3166 = vld [vmem:[%s232 + $0x82] sm:$0xff]
        %v3167 = vld [vmem:[%s232 + $0x8a] sm:$0xff]
        %v3168 = vld [vmem:[%s232 + $0x92] sm:$0xff]
        %v3169 = vld [vmem:[%s232 + $0x9a] sm:$0xff]
        %v3170 = vld [vmem:[%s232 + $0xa2] sm:$0xff]
        %v3171 = vld [vmem:[%s232 + $0xaa] sm:$0xff]
        %v3172 = vld [vmem:[%s232 + $0xb2] sm:$0xff]
        %v3173 = vld [vmem:[%s232 + $0xba] sm:$0xff]
        %v3174 = vld [vmem:[%s232 + $0xc2] sm:$0xff]
        %v3175 = vld [vmem:[%s232 + $0xca] sm:$0xff]
        %v3176 = vld [vmem:[%s232 + $0xd2] sm:$0xff]
        %v3177 = vld [vmem:[%s232 + $0xda] sm:$0xff]
        %v3178 = vld [vmem:[%s232 + $0xe2] sm:$0xff]
        %v3179 = vld [vmem:[%s232 + $0xea] sm:$0xff]
        %v3180 = vld [vmem:[%s232 + $0xf2] sm:$0xff]
        %v3181 = vld [vmem:[%s232 + $0xfa] sm:$0xff]
        %v3182 = vld [vmem:[%s232 + $0x102] sm:$0xff]
        %v3183 = vld [vmem:[%s232 + $0x10a] sm:$0xff]
        %v3184 = vld [vmem:[%s232 + $0x112] sm:$0xff]
        %v3185 = vld [vmem:[%s232 + $0x11a] sm:$0xff]
        %v3186 = vld [vmem:[%s232 + $0x122] sm:$0xff]
        %v3187 = vld [vmem:[%s232 + $0x12a] sm:$0xff]
        %v3188 = vld [vmem:[%s232 + $0x132] sm:$0xff]
        %v3189 = vld [vmem:[%s232 + $0x13a] sm:$0xff]
        %v3190 = vld [vmem:[%s232 + $0x142] sm:$0xff]
        %v3191 = vld [vmem:[%s232 + $0x14a] sm:$0xff]
        %v3192 = vld [vmem:[%s232 + $0x152] sm:$0xff]
        %v3193 = vld [vmem:[%s232 + $0x15a] sm:$0xff]
        %v3194 = vld [vmem:[%s232 + $0x162] sm:$0xff]
        %v3195 = vld [vmem:[%s232 + $0x16a] sm:$0xff]
        %v3196 = vld [vmem:[%s232 + $0x172] sm:$0xff]
        %v3197 = vld [vmem:[%s232 + $0x17a] sm:$0xff]
        %v3198 = vld [vmem:[%s232 + $0x182] sm:$0xff]
        %v3199 = vld [vmem:[%s232 + $0x18a] sm:$0xff]
        %v3200 = vld [vmem:[%s232 + $0x192] sm:$0xff]
        %v3201 = vld [vmem:[%s232 + $0x19a] sm:$0xff]
        %v3202 = vld [vmem:[%s232 + $0x1a2] sm:$0xff]
        %v3203 = vld [vmem:[%s232 + $0x1aa] sm:$0xff]
        %v3204 = vld [vmem:[%s232 + $0x1b2] sm:$0xff]
        %v3205 = vld [vmem:[%s232 + $0x1ba] sm:$0xff]
        %v3206 = vld [vmem:[%s232 + $0x1c2] sm:$0xff]
        %v3207 = vld [vmem:[%s232 + $0x1ca] sm:$0xff]
        %v3208 = vld [vmem:[%s232 + $0x1d2] sm:$0xff]
        %v3209 = vld [vmem:[%s232 + $0x1da] sm:$0xff]
        %v3210 = vld [vmem:[%s232 + $0x1e2] sm:$0xff]
        %v3211 = vld [vmem:[%s232 + $0x1ea] sm:$0xff]
        %v3212 = vld [vmem:[%s232 + $0x1f2] sm:$0xff]
        %v3213 = vld [vmem:[%s232 + $0x1fa] sm:$0xff]
        %v3214 = vld [vmem:[%s232 + $0x202] sm:$0xff]
        %v3215 = vld [vmem:[%s232 + $0x20a] sm:$0xff]
        %v3216 = vld [vmem:[%s232 + $0x212] sm:$0xff]
        %v3217 = vld [vmem:[%s232 + $0x21a] sm:$0xff]
        %v3218 = vld [vmem:[%s232 + $0x222] sm:$0xff]
        %v3219 = vld [vmem:[%s232 + $0x22a] sm:$0xff]
        %v3220 = vld [vmem:[%s232 + $0x232] sm:$0xff]
        %v3221 = vld [vmem:[%s232 + $0x23a] sm:$0xff]
        %3288 = vrot.lane.b32.xlu0 %v3156, 24
        %v3289 = vpop.permute.xlu0 %3288
        %3290 = vrot.lane.b32.xlu0 %v3157, 24
        %v3291 = vpop.permute.xlu0 %3290
        %3292 = vrot.lane.b32.xlu0 %v3158, 24
        %v3293 = vpop.permute.xlu0 %3292
        %3294 = vrot.lane.b32.xlu0 %v3159, 24
        %v3295 = vpop.permute.xlu0 %3294
        %3296 = vrot.lane.b32.xlu0 %v3160, 24
        %v3297 = vpop.permute.xlu0 %3296
        %3298 = vrot.lane.b32.xlu0 %v3161, 24
        %v3299 = vpop.permute.xlu0 %3298
        %3300 = vrot.lane.b32.xlu0 %v3162, 24
        %v3301 = vpop.permute.xlu0 %3300
        %3302 = vrot.lane.b32.xlu0 %v3163, 24
        %v3303 = vpop.permute.xlu0 %3302
        %3304 = vrot.lane.b32.xlu0 %v3164, 24
        %v3305 = vpop.permute.xlu0 %3304
        %3306 = vrot.lane.b32.xlu0 %v3165, 24
        %v3307 = vpop.permute.xlu0 %3306
        %3308 = vrot.lane.b32.xlu0 %v3166, 24
        %v3309 = vpop.permute.xlu0 %3308
        %3310 = vrot.lane.b32.xlu0 %v3167, 24
        %v3311 = vpop.permute.xlu0 %3310
        %3312 = vrot.lane.b32.xlu0 %v3168, 24
        %v3313 = vpop.permute.xlu0 %3312
        %3314 = vrot.lane.b32.xlu0 %v3169, 24
        %v3315 = vpop.permute.xlu0 %3314
        %3316 = vrot.lane.b32.xlu0 %v3170, 24
        %v3317 = vpop.permute.xlu0 %3316
        %3318 = vrot.lane.b32.xlu0 %v3171, 24
        %v3319 = vpop.permute.xlu0 %3318
        %3320 = vrot.lane.b32.xlu0 %v3172, 24
        %v3321 = vpop.permute.xlu0 %3320
        %3322 = vrot.lane.b32.xlu0 %v3173, 24
        %v3323 = vpop.permute.xlu0 %3322
        %3324 = vrot.lane.b32.xlu0 %v3174, 24
        %v3325 = vpop.permute.xlu0 %3324
        %3326 = vrot.lane.b32.xlu0 %v3175, 24
        %v3327 = vpop.permute.xlu0 %3326
        %3328 = vrot.lane.b32.xlu0 %v3176, 24
        %v3329 = vpop.permute.xlu0 %3328
        %3330 = vrot.lane.b32.xlu0 %v3177, 24
        %v3331 = vpop.permute.xlu0 %3330
        %3332 = vrot.lane.b32.xlu0 %v3178, 24
        %v3333 = vpop.permute.xlu0 %3332
        %3334 = vrot.lane.b32.xlu0 %v3179, 24
        %v3335 = vpop.permute.xlu0 %3334
        %3336 = vrot.lane.b32.xlu0 %v3180, 24
        %v3337 = vpop.permute.xlu0 %3336
        %3338 = vrot.lane.b32.xlu0 %v3181, 24
        %v3339 = vpop.permute.xlu0 %3338
        %3340 = vrot.lane.b32.xlu0 %v3182, 24
        %v3341 = vpop.permute.xlu0 %3340
        %3342 = vrot.lane.b32.xlu0 %v3183, 24
        %v3343 = vpop.permute.xlu0 %3342
        %3344 = vrot.lane.b32.xlu0 %v3184, 24
        %v3345 = vpop.permute.xlu0 %3344
        %3346 = vrot.lane.b32.xlu0 %v3185, 24
        %v3347 = vpop.permute.xlu0 %3346
        %3348 = vrot.lane.b32.xlu0 %v3186, 24
        %v3349 = vpop.permute.xlu0 %3348
        %3350 = vrot.lane.b32.xlu0 %v3187, 24
        %v3351 = vpop.permute.xlu0 %3350
        %3352 = vrot.lane.b32.xlu0 %v3188, 24
        %v3353 = vpop.permute.xlu0 %3352
        %3354 = vrot.lane.b32.xlu0 %v3189, 24
        %v3355 = vpop.permute.xlu0 %3354
        %3356 = vrot.lane.b32.xlu0 %v3190, 24
        %v3357 = vpop.permute.xlu0 %3356
        %3358 = vrot.lane.b32.xlu0 %v3191, 24
        %v3359 = vpop.permute.xlu0 %3358
        %3360 = vrot.lane.b32.xlu0 %v3192, 24
        %v3361 = vpop.permute.xlu0 %3360
        %3362 = vrot.lane.b32.xlu0 %v3193, 24
        %v3363 = vpop.permute.xlu0 %3362
        %3364 = vrot.lane.b32.xlu0 %v3194, 24
        %v3365 = vpop.permute.xlu0 %3364
        %3366 = vrot.lane.b32.xlu0 %v3195, 24
        %v3367 = vpop.permute.xlu0 %3366
        %3368 = vrot.lane.b32.xlu0 %v3196, 24
        %v3369 = vpop.permute.xlu0 %3368
        %3370 = vrot.lane.b32.xlu0 %v3197, 24
        %v3371 = vpop.permute.xlu0 %3370
        %3372 = vrot.lane.b32.xlu0 %v3198, 24
        %v3373 = vpop.permute.xlu0 %3372
        %3374 = vrot.lane.b32.xlu0 %v3199, 24
        %v3375 = vpop.permute.xlu0 %3374
        %3376 = vrot.lane.b32.xlu0 %v3200, 24
        %v3377 = vpop.permute.xlu0 %3376
        %3378 = vrot.lane.b32.xlu0 %v3201, 24
        %v3379 = vpop.permute.xlu0 %3378
        %3380 = vrot.lane.b32.xlu0 %v3202, 24
        %v3381 = vpop.permute.xlu0 %3380
        %3382 = vrot.lane.b32.xlu0 %v3203, 24
        %v3383 = vpop.permute.xlu0 %3382
        %3384 = vrot.lane.b32.xlu0 %v3204, 24
        %v3385 = vpop.permute.xlu0 %3384
        %3386 = vrot.lane.b32.xlu0 %v3205, 24
        %v3387 = vpop.permute.xlu0 %3386
        %3388 = vrot.lane.b32.xlu0 %v3206, 24
        %v3389 = vpop.permute.xlu0 %3388
        %3390 = vrot.lane.b32.xlu0 %v3207, 24
        %v3391 = vpop.permute.xlu0 %3390
        %3392 = vrot.lane.b32.xlu0 %v3208, 24
        %v3393 = vpop.permute.xlu0 %3392
        %3394 = vrot.lane.b32.xlu0 %v3209, 24
        %v3395 = vpop.permute.xlu0 %3394
        %3396 = vrot.lane.b32.xlu0 %v3210, 24
        %v3397 = vpop.permute.xlu0 %3396
        %3398 = vrot.lane.b32.xlu0 %v3211, 24
        %v3399 = vpop.permute.xlu0 %3398
        %3400 = vrot.lane.b32.xlu0 %v3212, 24
        %v3401 = vpop.permute.xlu0 %3400
        %3402 = vrot.lane.b32.xlu0 %v3213, 24
        %v3403 = vpop.permute.xlu0 %3402
        %3404 = vrot.lane.b32.xlu0 %v3214, 24
        %v3405 = vpop.permute.xlu0 %3404
        %3406 = vrot.lane.b32.xlu0 %v3215, 24
        %v3407 = vpop.permute.xlu0 %3406
        %3408 = vrot.lane.b32.xlu0 %v3216, 24
        %v3409 = vpop.permute.xlu0 %3408
        %3410 = vrot.lane.b32.xlu0 %v3217, 24
        %v3411 = vpop.permute.xlu0 %3410
        %3412 = vrot.lane.b32.xlu0 %v3218, 24
        %v3413 = vpop.permute.xlu0 %3412
        %3414 = vrot.lane.b32.xlu0 %v3219, 24
        %v3415 = vpop.permute.xlu0 %3414
        %3416 = vrot.lane.b32.xlu0 %v3220, 24
        %v3417 = vpop.permute.xlu0 %3416
        %3418 = vrot.lane.b32.xlu0 %v3221, 24
        %v3419 = vpop.permute.xlu0 %3418
        %vm3486 = vcmask 220352
        %3487 = vst.msk [vmem:[#allocation2] sm:$0xff] %vm3486, %v3289
        %3488 = vst.msk [vmem:[#allocation2 + $0x8] sm:$0xff] %vm3486, %v3291
        %3489 = vst.msk [vmem:[#allocation2 + $0x10] sm:$0xff] %vm3486, %v3293
        %3490 = vst.msk [vmem:[#allocation2 + $0x18] sm:$0xff] %vm3486, %v3295
        %3491 = vst.msk [vmem:[#allocation2 + $0x20] sm:$0xff] %vm3486, %v3297
        %3492 = vst.msk [vmem:[#allocation2 + $0x28] sm:$0xff] %vm3486, %v3299
        %3493 = vst.msk [vmem:[#allocation2 + $0x30] sm:$0xff] %vm3486, %v3301
        %3494 = vst.msk [vmem:[#allocation2 + $0x38] sm:$0xff] %vm3486, %v3303
        %3495 = vst.msk [vmem:[#allocation2 + $0x40] sm:$0xff] %vm3486, %v3305
        %3496 = vst.msk [vmem:[#allocation2 + $0x48] sm:$0xff] %vm3486, %v3307
        %3497 = vst.msk [vmem:[#allocation2 + $0x50] sm:$0xff] %vm3486, %v3309
        %3498 = vst.msk [vmem:[#allocation2 + $0x58] sm:$0xff] %vm3486, %v3311
        %3499 = vst.msk [vmem:[#allocation2 + $0x60] sm:$0xff] %vm3486, %v3313
        %3500 = vst.msk [vmem:[#allocation2 + $0x68] sm:$0xff] %vm3486, %v3315
        %3501 = vst.msk [vmem:[#allocation2 + $0x70] sm:$0xff] %vm3486, %v3317
        %3502 = vst.msk [vmem:[#allocation2 + $0x78] sm:$0xff] %vm3486, %v3319
        %3503 = vst.msk [vmem:[#allocation2 + $0x80] sm:$0xff] %vm3486, %v3321
        %3504 = vst.msk [vmem:[#allocation2 + $0x88] sm:$0xff] %vm3486, %v3323
        %3505 = vst.msk [vmem:[#allocation2 + $0x90] sm:$0xff] %vm3486, %v3325
        %3506 = vst.msk [vmem:[#allocation2 + $0x98] sm:$0xff] %vm3486, %v3327
        %3507 = vst.msk [vmem:[#allocation2 + $0xa0] sm:$0xff] %vm3486, %v3329
        %3508 = vst.msk [vmem:[#allocation2 + $0xa8] sm:$0xff] %vm3486, %v3331
        %3509 = vst.msk [vmem:[#allocation2 + $0xb0] sm:$0xff] %vm3486, %v3333
        %3510 = vst.msk [vmem:[#allocation2 + $0xb8] sm:$0xff] %vm3486, %v3335
        %3511 = vst.msk [vmem:[#allocation2 + $0xc0] sm:$0xff] %vm3486, %v3337
        %3512 = vst.msk [vmem:[#allocation2 + $0xc8] sm:$0xff] %vm3486, %v3339
        %3513 = vst.msk [vmem:[#allocation2 + $0xd0] sm:$0xff] %vm3486, %v3341
        %3514 = vst.msk [vmem:[#allocation2 + $0xd8] sm:$0xff] %vm3486, %v3343
        %3515 = vst.msk [vmem:[#allocation2 + $0xe0] sm:$0xff] %vm3486, %v3345
        %3516 = vst.msk [vmem:[#allocation2 + $0xe8] sm:$0xff] %vm3486, %v3347
        %3517 = vst.msk [vmem:[#allocation2 + $0xf0] sm:$0xff] %vm3486, %v3349
        %3518 = vst.msk [vmem:[#allocation2 + $0xf8] sm:$0xff] %vm3486, %v3351
        %3519 = vst.msk [vmem:[#allocation2 + $0x100] sm:$0xff] %vm3486, %v3353
        %3520 = vst.msk [vmem:[#allocation2 + $0x108] sm:$0xff] %vm3486, %v3355
        %3521 = vst.msk [vmem:[#allocation2 + $0x110] sm:$0xff] %vm3486, %v3357
        %3522 = vst.msk [vmem:[#allocation2 + $0x118] sm:$0xff] %vm3486, %v3359
        %3523 = vst.msk [vmem:[#allocation2 + $0x120] sm:$0xff] %vm3486, %v3361
        %3524 = vst.msk [vmem:[#allocation2 + $0x128] sm:$0xff] %vm3486, %v3363
        %3525 = vst.msk [vmem:[#allocation2 + $0x130] sm:$0xff] %vm3486, %v3365
        %3526 = vst.msk [vmem:[#allocation2 + $0x138] sm:$0xff] %vm3486, %v3367
        %3527 = vst.msk [vmem:[#allocation2 + $0x140] sm:$0xff] %vm3486, %v3369
        %3528 = vst.msk [vmem:[#allocation2 + $0x148] sm:$0xff] %vm3486, %v3371
        %3529 = vst.msk [vmem:[#allocation2 + $0x150] sm:$0xff] %vm3486, %v3373
        %3530 = vst.msk [vmem:[#allocation2 + $0x158] sm:$0xff] %vm3486, %v3375
        %3531 = vst.msk [vmem:[#allocation2 + $0x160] sm:$0xff] %vm3486, %v3377
        %3532 = vst.msk [vmem:[#allocation2 + $0x168] sm:$0xff] %vm3486, %v3379
        %3533 = vst.msk [vmem:[#allocation2 + $0x170] sm:$0xff] %vm3486, %v3381
        %3534 = vst.msk [vmem:[#allocation2 + $0x178] sm:$0xff] %vm3486, %v3383
        %3535 = vst.msk [vmem:[#allocation2 + $0x180] sm:$0xff] %vm3486, %v3385
        %3536 = vst.msk [vmem:[#allocation2 + $0x188] sm:$0xff] %vm3486, %v3387
        %3537 = vst.msk [vmem:[#allocation2 + $0x190] sm:$0xff] %vm3486, %v3389
        %3538 = vst.msk [vmem:[#allocation2 + $0x198] sm:$0xff] %vm3486, %v3391
        %3539 = vst.msk [vmem:[#allocation2 + $0x1a0] sm:$0xff] %vm3486, %v3393
        %3540 = vst.msk [vmem:[#allocation2 + $0x1a8] sm:$0xff] %vm3486, %v3395
        %3541 = vst.msk [vmem:[#allocation2 + $0x1b0] sm:$0xff] %vm3486, %v3397
        %3542 = vst.msk [vmem:[#allocation2 + $0x1b8] sm:$0xff] %vm3486, %v3399
        %3543 = vst.msk [vmem:[#allocation2 + $0x1c0] sm:$0xff] %vm3486, %v3401
        %3544 = vst.msk [vmem:[#allocation2 + $0x1c8] sm:$0xff] %vm3486, %v3403
        %3545 = vst.msk [vmem:[#allocation2 + $0x1d0] sm:$0xff] %vm3486, %v3405
        %3546 = vst.msk [vmem:[#allocation2 + $0x1d8] sm:$0xff] %vm3486, %v3407
        %3547 = vst.msk [vmem:[#allocation2 + $0x1e0] sm:$0xff] %vm3486, %v3409
        %3548 = vst.msk [vmem:[#allocation2 + $0x1e8] sm:$0xff] %vm3486, %v3411
        %3549 = vst.msk [vmem:[#allocation2 + $0x1f0] sm:$0xff] %vm3486, %v3413
        %3550 = vst.msk [vmem:[#allocation2 + $0x1f8] sm:$0xff] %vm3486, %v3415
        %3551 = vst.msk [vmem:[#allocation2 + $0x200] sm:$0xff] %vm3486, %v3417
        %3552 = vst.msk [vmem:[#allocation2 + $0x208] sm:$0xff] %vm3486, %v3419
        %v3553 = vld [vmem:[#allocation2] sm:$0xff]
        %v3554 = vld [vmem:[#allocation2 + $0x8] sm:$0xff]
        %v3555 = vld [vmem:[#allocation2 + $0x10] sm:$0xff]
        %v3556 = vld [vmem:[#allocation2 + $0x18] sm:$0xff]
        %v3557 = vld [vmem:[#allocation2 + $0x20] sm:$0xff]
        %v3558 = vld [vmem:[#allocation2 + $0x28] sm:$0xff]
        %v3559 = vld [vmem:[#allocation2 + $0x30] sm:$0xff]
        %v3560 = vld [vmem:[#allocation2 + $0x38] sm:$0xff]
        %v3561 = vld [vmem:[#allocation2 + $0x40] sm:$0xff]
        %v3562 = vld [vmem:[#allocation2 + $0x48] sm:$0xff]
        %v3563 = vld [vmem:[#allocation2 + $0x50] sm:$0xff]
        %v3564 = vld [vmem:[#allocation2 + $0x58] sm:$0xff]
        %v3565 = vld [vmem:[#allocation2 + $0x60] sm:$0xff]
        %v3566 = vld [vmem:[#allocation2 + $0x68] sm:$0xff]
        %v3567 = vld [vmem:[#allocation2 + $0x70] sm:$0xff]
        %v3568 = vld [vmem:[#allocation2 + $0x78] sm:$0xff]
        %v3569 = vld [vmem:[#allocation2 + $0x80] sm:$0xff]
        %v3570 = vld [vmem:[#allocation2 + $0x88] sm:$0xff]
        %v3571 = vld [vmem:[#allocation2 + $0x90] sm:$0xff]
        %v3572 = vld [vmem:[#allocation2 + $0x98] sm:$0xff]
        %v3573 = vld [vmem:[#allocation2 + $0xa0] sm:$0xff]
        %v3574 = vld [vmem:[#allocation2 + $0xa8] sm:$0xff]
        %vm3575 = vcmask 220160
        %v3577 = vsel %vm3575, %v3553, 0
        %v3580 = vsel %vm3575, %v3554, 0
        %v3583 = vsel %vm3575, %v3555, 0
        %v3586 = vsel %vm3575, %v3556, 0
        %v3589 = vsel %vm3575, %v3557, 0
        %v3592 = vsel %vm3575, %v3558, 0
        %v3595 = vsel %vm3575, %v3559, 0
        %v3598 = vsel %vm3575, %v3560, 0
        %v3601 = vsel %vm3575, %v3561, 0
        %v3604 = vsel %vm3575, %v3562, 0
        %v3607 = vsel %vm3575, %v3563, 0
        %v3610 = vsel %vm3575, %v3564, 0
        %v3613 = vsel %vm3575, %v3565, 0
        %v3616 = vsel %vm3575, %v3566, 0
        %v3619 = vsel %vm3575, %v3567, 0
        %v3622 = vsel %vm3575, %v3568, 0
        %v3625 = vsel %vm3575, %v3569, 0
        %v3628 = vsel %vm3575, %v3570, 0
        %v3631 = vsel %vm3575, %v3571, 0
        %v3634 = vsel %vm3575, %v3572, 0
        %v3637 = vsel %vm3575, %v3573, 0
        %v3640 = vsel %vm3575, %v3574, 0
        %vm3642 = vcmask 1042432
        %v3644 = vsel %vm3642, %v241, 0
        %3646 = vmatprep.subr.mxu0 0.0
        %3647 = vmatpush1.msra.mxu0 %v238
        %3648 = vmatprep.subr.mxu0 0.0
        %3649 = vmatpush1.msra.mxu0 %v239
        %3650 = vmatprep.subr.mxu0 0.0
        %3651 = vmatpush1.msra.mxu0 %v240
        %3652 = vmatprep.subr.mxu0 0.0
        %3653 = vmatpush1.msra.mxu0 %v3644
        %3654 = vmatprep.subr.mxu0 0.0
        %3655 = vmatpush1.msra.mxu0 0.0
        %3656 = vmatprep.subr.mxu0 0.0
        %3657 = vmatpush1.msra.mxu0 0.0
        %3658 = vmatprep.subr.mxu0 0.0
        %3659 = vmatpush1.msra.mxu0 0.0
        %3660 = vmatprep.subr.mxu0 0.0
        %3661 = vmatpush1.msra.mxu0 0.0
        %3662 = vmatprep.subr.mxu0 0.0
        %3663 = vmatpush1.msra.mxu0 0.0
        %3664 = vmatprep.subr.mxu0 0.0
        %3665 = vmatpush1.msra.mxu0 0.0
        %3666 = vmatprep.subr.mxu0 0.0
        %3667 = vmatpush1.msra.mxu0 0.0
        %3668 = vmatprep.subr.mxu0 0.0
        %3669 = vmatpush1.msra.mxu0 0.0
        %3670 = vmatprep.subr.mxu0 0.0
        %3671 = vmatpush1.msra.mxu0 0.0
        %3672 = vmatprep.subr.mxu0 0.0
        %3673 = vmatpush1.msra.mxu0 0.0
        %3674 = vmatprep.subr.mxu0 0.0
        %3675 = vmatpush1.msra.mxu0 0.0
        %3676 = vmatprep.subr.mxu0 0.0
        %3677 = vmatpush1.msra.mxu0 0.0
        %3678 = vmatprep.subr.mxu0 0.0
        %3679 = vmatpush1.msra.mxu0 0.0
        %3680 = vmatprep.subr.mxu0 0.0
        %3681 = vmatpush1.msra.mxu0 0.0
        %3682 = vmatprep.subr.mxu0 0.0
        %3683 = vmatpush1.msra.mxu0 0.0
        %3684 = vmatprep.subr.mxu0 0.0
        %3685 = vmatpush1.msra.mxu0 0.0
        %3686 = vmatprep.subr.mxu0 0.0
        %3687 = vmatpush1.msra.mxu0 0.0
        %3688 = vmatprep.subr.mxu0 0.0
        %3689 = vmatpush1.msra.mxu0 0.0
        %3690 = vmatprep.subr.mxu0 0.0
        %3691 = vmatpush1.msra.mxu0 0.0
        %3692 = vmatprep.subr.mxu0 0.0
        %3693 = vmatpush1.msra.mxu0 0.0
        %3694 = vmatprep.subr.mxu0 0.0
        %3695 = vmatpush1.msra.mxu0 0.0
        %3696 = vmatprep.subr.mxu0 0.0
        %3697 = vmatpush1.msra.mxu0 0.0
        %3698 = vmatprep.subr.mxu0 0.0
        %3699 = vmatpush1.msra.mxu0 0.0
        %3700 = vmatprep.subr.mxu0 0.0
        %3701 = vmatpush1.msra.mxu0 0.0
        %3702 = vmatprep.subr.mxu0 0.0
        %3703 = vmatpush1.msra.mxu0 0.0
        %3704 = vmatprep.subr.mxu0 0.0
        %3705 = vmatpush1.msra.mxu0 0.0
        %3706 = vmatprep.subr.mxu0 0.0
        %3707 = vmatpush1.msra.mxu0 0.0
        %3708 = vmatprep.subr.mxu0 0.0
        %3709 = vmatpush1.msra.mxu0 0.0
        %3710 = vmatprep.mubr.f32.mxu0 0.0
        %3711 = vmatmul.mubr.f32.gmra.mrb[0].mxu0 %v3577
        %v3712 = vpop.f32.mrb[0].mxu0
        %v3713 = vadd.f32 0.0, %v3712
        %v3714 = vpop.f32.mrb[0].mxu0
        %3715 = vmatprep.mubr.f32.mxu0 0.0
        %3716 = vmatmul.mubr.f32.gmra.mrb[0].mxu0 %v3580
        %v3717 = vpop.f32.mrb[0].mxu0
        %v3718 = vadd.f32 0.0, %v3717
        %v3719 = vpop.f32.mrb[0].mxu0
        %3720 = vmatprep.mubr.f32.mxu0 0.0
        %3721 = vmatmul.mubr.f32.gmra.mrb[0].mxu0 %v3583
        %v3722 = vpop.f32.mrb[0].mxu0
        %v3723 = vadd.f32 0.0, %v3722
        %v3724 = vpop.f32.mrb[0].mxu0
        %3725 = vmatprep.mubr.f32.mxu0 0.0
        %3726 = vmatmul.mubr.f32.gmra.mrb[0].mxu0 %v3586
        %v3727 = vpop.f32.mrb[0].mxu0
        %v3728 = vadd.f32 0.0, %v3727
        %v3729 = vpop.f32.mrb[0].mxu0
        %3730 = vmatprep.mubr.f32.mxu0 0.0
        %3731 = vmatmul.mubr.f32.gmra.mrb[0].mxu0 %v3589
        %v3732 = vpop.f32.mrb[0].mxu0
        %v3733 = vadd.f32 0.0, %v3732
        %v3734 = vpop.f32.mrb[0].mxu0
        %3735 = vmatprep.mubr.f32.mxu0 0.0
        %3736 = vmatmul.mubr.f32.gmra.mrb[0].mxu0 %v3592
        %v3737 = vpop.f32.mrb[0].mxu0
        %v3738 = vadd.f32 0.0, %v3737
        %v3739 = vpop.f32.mrb[0].mxu0
        %3740 = vmatprep.mubr.f32.mxu0 0.0
        %3741 = vmatmul.mubr.f32.gmra.mrb[0].mxu0 %v3595
        %v3742 = vpop.f32.mrb[0].mxu0
        %v3743 = vadd.f32 0.0, %v3742
        %v3744 = vpop.f32.mrb[0].mxu0
        %3745 = vmatprep.mubr.f32.mxu0 0.0
        %3746 = vmatmul.mubr.f32.gmra.mrb[0].mxu0 %v3598
        %v3747 = vpop.f32.mrb[0].mxu0
        %v3748 = vadd.f32 0.0, %v3747
        %v3749 = vpop.f32.mrb[0].mxu0
        %3750 = vmatprep.mubr.f32.mxu0 0.0
        %3751 = vmatmul.mubr.f32.gmra.mrb[0].mxu0 %v3601
        %v3752 = vpop.f32.mrb[0].mxu0
        %v3753 = vadd.f32 0.0, %v3752
        %v3754 = vpop.f32.mrb[0].mxu0
        %3755 = vmatprep.mubr.f32.mxu0 0.0
        %3756 = vmatmul.mubr.f32.gmra.mrb[0].mxu0 %v3604
        %v3757 = vpop.f32.mrb[0].mxu0
        %v3758 = vadd.f32 0.0, %v3757
        %v3759 = vpop.f32.mrb[0].mxu0
        %3760 = vmatprep.mubr.f32.mxu0 0.0
        %3761 = vmatmul.mubr.f32.gmra.mrb[0].mxu0 %v3607
        %v3762 = vpop.f32.mrb[0].mxu0
        %v3763 = vadd.f32 0.0, %v3762
        %v3764 = vpop.f32.mrb[0].mxu0
        %3765 = vmatprep.mubr.f32.mxu0 0.0
        %3766 = vmatmul.mubr.f32.gmra.mrb[0].mxu0 %v3610
        %v3767 = vpop.f32.mrb[0].mxu0
        %v3768 = vadd.f32 0.0, %v3767
        %v3769 = vpop.f32.mrb[0].mxu0
        %3770 = vmatprep.mubr.f32.mxu0 0.0
        %3771 = vmatmul.mubr.f32.gmra.mrb[0].mxu0 %v3613
        %v3772 = vpop.f32.mrb[0].mxu0
        %v3773 = vadd.f32 0.0, %v3772
        %v3774 = vpop.f32.mrb[0].mxu0
        %3775 = vmatprep.mubr.f32.mxu0 0.0
        %3776 = vmatmul.mubr.f32.gmra.mrb[0].mxu0 %v3616
        %v3777 = vpop.f32.mrb[0].mxu0
        %v3778 = vadd.f32 0.0, %v3777
        %v3779 = vpop.f32.mrb[0].mxu0
        %3780 = vmatprep.mubr.f32.mxu0 0.0
        %3781 = vmatmul.mubr.f32.gmra.mrb[0].mxu0 %v3619
        %v3782 = vpop.f32.mrb[0].mxu0
        %v3783 = vadd.f32 0.0, %v3782
        %v3784 = vpop.f32.mrb[0].mxu0
        %3785 = vmatprep.mubr.f32.mxu0 0.0
        %3786 = vmatmul.mubr.f32.gmra.mrb[0].mxu0 %v3622
        %v3787 = vpop.f32.mrb[0].mxu0
        %v3788 = vadd.f32 0.0, %v3787
        %v3789 = vpop.f32.mrb[0].mxu0
        %3790 = vmatprep.mubr.f32.mxu0 0.0
        %3791 = vmatmul.mubr.f32.gmra.mrb[0].mxu0 %v3625
        %v3792 = vpop.f32.mrb[0].mxu0
        %v3793 = vadd.f32 0.0, %v3792
        %v3794 = vpop.f32.mrb[0].mxu0
        %3795 = vmatprep.mubr.f32.mxu0 0.0
        %3796 = vmatmul.mubr.f32.gmra.mrb[0].mxu0 %v3628
        %v3797 = vpop.f32.mrb[0].mxu0
        %v3798 = vadd.f32 0.0, %v3797
        %v3799 = vpop.f32.mrb[0].mxu0
        %3800 = vmatprep.mubr.f32.mxu0 0.0
        %3801 = vmatmul.mubr.f32.gmra.mrb[0].mxu0 %v3631
        %v3802 = vpop.f32.mrb[0].mxu0
        %v3803 = vadd.f32 0.0, %v3802
        %v3804 = vpop.f32.mrb[0].mxu0
        %3805 = vmatprep.mubr.f32.mxu0 0.0
        %3806 = vmatmul.mubr.f32.gmra.mrb[0].mxu0 %v3634
        %v3807 = vpop.f32.mrb[0].mxu0
        %v3808 = vadd.f32 0.0, %v3807
        %v3809 = vpop.f32.mrb[0].mxu0
        %3810 = vmatprep.mubr.f32.mxu0 0.0
        %3811 = vmatmul.mubr.f32.gmra.mrb[0].mxu0 %v3637
        %v3812 = vpop.f32.mrb[0].mxu0
        %v3813 = vadd.f32 0.0, %v3812
        %v3814 = vpop.f32.mrb[0].mxu0
        %3815 = vmatprep.mubr.f32.mxu0 0.0
        %3816 = vmatmul.mubr.f32.gmra.mrb[0].mxu0 %v3640
        %v3817 = vpop.f32.mrb[0].mxu0
        %v3818 = vadd.f32 0.0, %v3817
        %v3819 = vpop.f32.mrb[0].mxu0
        %3820 = vdwg.mxu0
        %vm3821 = vcmask 523264
        %3822 = vst.msk [vmem:[#allocation3] sm:$0xff] %vm3821, %v3713
        %3823 = vst.msk [vmem:[#allocation3 + $0x8] sm:$0xff] %vm3821, %v3718
        %3824 = vst.msk [vmem:[#allocation3 + $0x10] sm:$0xff] %vm3821, %v3723
        %3825 = vst.msk [vmem:[#allocation3 + $0x18] sm:$0xff] %vm3821, %v3728
        %3826 = vst.msk [vmem:[#allocation3 + $0x20] sm:$0xff] %vm3821, %v3733
        %3827 = vst.msk [vmem:[#allocation3 + $0x28] sm:$0xff] %vm3821, %v3738
        %3828 = vst.msk [vmem:[#allocation3 + $0x30] sm:$0xff] %vm3821, %v3743
        %3829 = vst.msk [vmem:[#allocation3 + $0x38] sm:$0xff] %vm3821, %v3748
        %3830 = vst.msk [vmem:[#allocation3 + $0x40] sm:$0xff] %vm3821, %v3753
        %3831 = vst.msk [vmem:[#allocation3 + $0x48] sm:$0xff] %vm3821, %v3758
        %3832 = vst.msk [vmem:[#allocation3 + $0x50] sm:$0xff] %vm3821, %v3763
        %3833 = vst.msk [vmem:[#allocation3 + $0x58] sm:$0xff] %vm3821, %v3768
        %3834 = vst.msk [vmem:[#allocation3 + $0x60] sm:$0xff] %vm3821, %v3773
        %3835 = vst.msk [vmem:[#allocation3 + $0x68] sm:$0xff] %vm3821, %v3778
        %3836 = vst.msk [vmem:[#allocation3 + $0x70] sm:$0xff] %vm3821, %v3783
        %3837 = vst.msk [vmem:[#allocation3 + $0x78] sm:$0xff] %vm3821, %v3788
        %3838 = vst.msk [vmem:[#allocation3 + $0x80] sm:$0xff] %vm3821, %v3793
        %3839 = vst.msk [vmem:[#allocation3 + $0x88] sm:$0xff] %vm3821, %v3798
        %3840 = vst.msk [vmem:[#allocation3 + $0x90] sm:$0xff] %vm3821, %v3803
        %3841 = vst.msk [vmem:[#allocation3 + $0x98] sm:$0xff] %vm3821, %v3808
        %3842 = vst.msk [vmem:[#allocation3 + $0xa0] sm:$0xff] %vm3821, %v3813
        %3843 = vst.msk [vmem:[#allocation3 + $0xa8] sm:$0xff] %vm3821, %v3818
        %v3844 = vld [vmem:[#allocation2 + $0xb0] sm:$0xff]
        %v3845 = vld [vmem:[#allocation2 + $0xb8] sm:$0xff]
        %v3846 = vld [vmem:[#allocation2 + $0xc0] sm:$0xff]
        %v3847 = vld [vmem:[#allocation2 + $0xc8] sm:$0xff]
        %v3848 = vld [vmem:[#allocation2 + $0xd0] sm:$0xff]
        %v3849 = vld [vmem:[#allocation2 + $0xd8] sm:$0xff]
        %v3850 = vld [vmem:[#allocation2 + $0xe0] sm:$0xff]
        %v3851 = vld [vmem:[#allocation2 + $0xe8] sm:$0xff]
        %v3852 = vld [vmem:[#allocation2 + $0xf0] sm:$0xff]
        %v3853 = vld [vmem:[#allocation2 + $0xf8] sm:$0xff]
        %v3854 = vld [vmem:[#allocation2 + $0x100] sm:$0xff]
        %v3855 = vld [vmem:[#allocation2 + $0x108] sm:$0xff]
        %v3856 = vld [vmem:[#allocation2 + $0x110] sm:$0xff]
        %v3857 = vld [vmem:[#allocation2 + $0x118] sm:$0xff]
        %v3858 = vld [vmem:[#allocation2 + $0x120] sm:$0xff]
        %v3859 = vld [vmem:[#allocation2 + $0x128] sm:$0xff]
        %v3860 = vld [vmem:[#allocation2 + $0x130] sm:$0xff]
        %v3861 = vld [vmem:[#allocation2 + $0x138] sm:$0xff]
        %v3862 = vld [vmem:[#allocation2 + $0x140] sm:$0xff]
        %v3863 = vld [vmem:[#allocation2 + $0x148] sm:$0xff]
        %v3864 = vld [vmem:[#allocation2 + $0x150] sm:$0xff]
        %v3865 = vld [vmem:[#allocation2 + $0x158] sm:$0xff]
        %v3867 = vsel %vm3575, %v3844, 0
        %v3870 = vsel %vm3575, %v3845, 0
        %v3873 = vsel %vm3575, %v3846, 0
        %v3876 = vsel %vm3575, %v3847, 0
        %v3879 = vsel %vm3575, %v3848, 0
        %v3882 = vsel %vm3575, %v3849, 0
        %v3885 = vsel %vm3575, %v3850, 0
        %v3888 = vsel %vm3575, %v3851, 0
        %v3891 = vsel %vm3575, %v3852, 0
        %v3894 = vsel %vm3575, %v3853, 0
        %v3897 = vsel %vm3575, %v3854, 0
        %v3900 = vsel %vm3575, %v3855, 0
        %v3903 = vsel %vm3575, %v3856, 0
        %v3906 = vsel %vm3575, %v3857, 0
        %v3909 = vsel %vm3575, %v3858, 0
        %v3912 = vsel %vm3575, %v3859, 0
        %v3915 = vsel %vm3575, %v3860, 0
        %v3918 = vsel %vm3575, %v3861, 0
        %v3921 = vsel %vm3575, %v3862, 0
        %v3924 = vsel %vm3575, %v3863, 0
        %v3927 = vsel %vm3575, %v3864, 0
        %v3930 = vsel %vm3575, %v3865, 0
        %3932 = vmatprep.subr.mxu0 0.0
        %3933 = vmatpush1.msra.mxu0 %v238
        %3934 = vmatprep.subr.mxu0 0.0
        %3935 = vmatpush1.msra.mxu0 %v239
        %3936 = vmatprep.subr.mxu0 0.0
        %3937 = vmatpush1.msra.mxu0 %v240
        %3938 = vmatprep.subr.mxu0 0.0
        %3939 = vmatpush1.msra.mxu0 %v3644
        %3940 = vmatprep.subr.mxu0 0.0
        %3941 = vmatpush1.msra.mxu0 0.0
        %3942 = vmatprep.subr.mxu0 0.0
        %3943 = vmatpush1.msra.mxu0 0.0
        %3944 = vmatprep.subr.mxu0 0.0
        %3945 = vmatpush1.msra.mxu0 0.0
        %3946 = vmatprep.subr.mxu0 0.0
        %3947 = vmatpush1.msra.mxu0 0.0
        %3948 = vmatprep.subr.mxu0 0.0
        %3949 = vmatpush1.msra.mxu0 0.0
        %3950 = vmatprep.subr.mxu0 0.0
        %3951 = vmatpush1.msra.mxu0 0.0
        %3952 = vmatprep.subr.mxu0 0.0
        %3953 = vmatpush1.msra.mxu0 0.0
        %3954 = vmatprep.subr.mxu0 0.0
        %3955 = vmatpush1.msra.mxu0 0.0
        %3956 = vmatprep.subr.mxu0 0.0
        %3957 = vmatpush1.msra.mxu0 0.0
        %3958 = vmatprep.subr.mxu0 0.0
        %3959 = vmatpush1.msra.mxu0 0.0
        %3960 = vmatprep.subr.mxu0 0.0
        %3961 = vmatpush1.msra.mxu0 0.0
        %3962 = vmatprep.subr.mxu0 0.0
        %3963 = vmatpush1.msra.mxu0 0.0
        %3964 = vmatprep.subr.mxu0 0.0
        %3965 = vmatpush1.msra.mxu0 0.0
        %3966 = vmatprep.subr.mxu0 0.0
        %3967 = vmatpush1.msra.mxu0 0.0
        %3968 = vmatprep.subr.mxu0 0.0
        %3969 = vmatpush1.msra.mxu0 0.0
        %3970 = vmatprep.subr.mxu0 0.0
        %3971 = vmatpush1.msra.mxu0 0.0
        %3972 = vmatprep.subr.mxu0 0.0
        %3973 = vmatpush1.msra.mxu0 0.0
        %3974 = vmatprep.subr.mxu0 0.0
        %3975 = vmatpush1.msra.mxu0 0.0
        %3976 = vmatprep.subr.mxu0 0.0
        %3977 = vmatpush1.msra.mxu0 0.0
        %3978 = vmatprep.subr.mxu0 0.0
        %3979 = vmatpush1.msra.mxu0 0.0
        %3980 = vmatprep.subr.mxu0 0.0
        %3981 = vmatpush1.msra.mxu0 0.0
        %3982 = vmatprep.subr.mxu0 0.0
        %3983 = vmatpush1.msra.mxu0 0.0
        %3984 = vmatprep.subr.mxu0 0.0
        %3985 = vmatpush1.msra.mxu0 0.0
        %3986 = vmatprep.subr.mxu0 0.0
        %3987 = vmatpush1.msra.mxu0 0.0
        %3988 = vmatprep.subr.mxu0 0.0
        %3989 = vmatpush1.msra.mxu0 0.0
        %3990 = vmatprep.subr.mxu0 0.0
        %3991 = vmatpush1.msra.mxu0 0.0
        %3992 = vmatprep.subr.mxu0 0.0
        %3993 = vmatpush1.msra.mxu0 0.0
        %3994 = vmatprep.subr.mxu0 0.0
        %3995 = vmatpush1.msra.mxu0 0.0
        %3996 = vmatprep.mubr.f32.mxu0 0.0
        %3997 = vmatmul.mubr.f32.gmra.mrb[0].mxu0 %v3867
        %v3998 = vpop.f32.mrb[0].mxu0
        %v3999 = vadd.f32 0.0, %v3998
        %v4000 = vpop.f32.mrb[0].mxu0
        %4001 = vmatprep.mubr.f32.mxu0 0.0
        %4002 = vmatmul.mubr.f32.gmra.mrb[0].mxu0 %v3870
        %v4003 = vpop.f32.mrb[0].mxu0
        %v4004 = vadd.f32 0.0, %v4003
        %v4005 = vpop.f32.mrb[0].mxu0
        %4006 = vmatprep.mubr.f32.mxu0 0.0
        %4007 = vmatmul.mubr.f32.gmra.mrb[0].mxu0 %v3873
        %v4008 = vpop.f32.mrb[0].mxu0
        %v4009 = vadd.f32 0.0, %v4008
        %v4010 = vpop.f32.mrb[0].mxu0
        %4011 = vmatprep.mubr.f32.mxu0 0.0
        %4012 = vmatmul.mubr.f32.gmra.mrb[0].mxu0 %v3876
        %v4013 = vpop.f32.mrb[0].mxu0
        %v4014 = vadd.f32 0.0, %v4013
        %v4015 = vpop.f32.mrb[0].mxu0
        %4016 = vmatprep.mubr.f32.mxu0 0.0
        %4017 = vmatmul.mubr.f32.gmra.mrb[0].mxu0 %v3879
        %v4018 = vpop.f32.mrb[0].mxu0
        %v4019 = vadd.f32 0.0, %v4018
        %v4020 = vpop.f32.mrb[0].mxu0
        %4021 = vmatprep.mubr.f32.mxu0 0.0
        %4022 = vmatmul.mubr.f32.gmra.mrb[0].mxu0 %v3882
        %v4023 = vpop.f32.mrb[0].mxu0
        %v4024 = vadd.f32 0.0, %v4023
        %v4025 = vpop.f32.mrb[0].mxu0
        %4026 = vmatprep.mubr.f32.mxu0 0.0
        %4027 = vmatmul.mubr.f32.gmra.mrb[0].mxu0 %v3885
        %v4028 = vpop.f32.mrb[0].mxu0
        %v4029 = vadd.f32 0.0, %v4028
        %v4030 = vpop.f32.mrb[0].mxu0
        %4031 = vmatprep.mubr.f32.mxu0 0.0
        %4032 = vmatmul.mubr.f32.gmra.mrb[0].mxu0 %v3888
        %v4033 = vpop.f32.mrb[0].mxu0
        %v4034 = vadd.f32 0.0, %v4033
        %v4035 = vpop.f32.mrb[0].mxu0
        %4036 = vmatprep.mubr.f32.mxu0 0.0
        %4037 = vmatmul.mubr.f32.gmra.mrb[0].mxu0 %v3891
        %v4038 = vpop.f32.mrb[0].mxu0
        %v4039 = vadd.f32 0.0, %v4038
        %v4040 = vpop.f32.mrb[0].mxu0
        %4041 = vmatprep.mubr.f32.mxu0 0.0
        %4042 = vmatmul.mubr.f32.gmra.mrb[0].mxu0 %v3894
        %v4043 = vpop.f32.mrb[0].mxu0
        %v4044 = vadd.f32 0.0, %v4043
        %v4045 = vpop.f32.mrb[0].mxu0
        %4046 = vmatprep.mubr.f32.mxu0 0.0
        %4047 = vmatmul.mubr.f32.gmra.mrb[0].mxu0 %v3897
        %v4048 = vpop.f32.mrb[0].mxu0
        %v4049 = vadd.f32 0.0, %v4048
        %v4050 = vpop.f32.mrb[0].mxu0
        %4051 = vmatprep.mubr.f32.mxu0 0.0
        %4052 = vmatmul.mubr.f32.gmra.mrb[0].mxu0 %v3900
        %v4053 = vpop.f32.mrb[0].mxu0
        %v4054 = vadd.f32 0.0, %v4053
        %v4055 = vpop.f32.mrb[0].mxu0
        %4056 = vmatprep.mubr.f32.mxu0 0.0
        %4057 = vmatmul.mubr.f32.gmra.mrb[0].mxu0 %v3903
        %v4058 = vpop.f32.mrb[0].mxu0
        %v4059 = vadd.f32 0.0, %v4058
        %v4060 = vpop.f32.mrb[0].mxu0
        %4061 = vmatprep.mubr.f32.mxu0 0.0
        %4062 = vmatmul.mubr.f32.gmra.mrb[0].mxu0 %v3906
        %v4063 = vpop.f32.mrb[0].mxu0
        %v4064 = vadd.f32 0.0, %v4063
        %v4065 = vpop.f32.mrb[0].mxu0
        %4066 = vmatprep.mubr.f32.mxu0 0.0
        %4067 = vmatmul.mubr.f32.gmra.mrb[0].mxu0 %v3909
        %v4068 = vpop.f32.mrb[0].mxu0
        %v4069 = vadd.f32 0.0, %v4068
        %v4070 = vpop.f32.mrb[0].mxu0
        %4071 = vmatprep.mubr.f32.mxu0 0.0
        %4072 = vmatmul.mubr.f32.gmra.mrb[0].mxu0 %v3912
        %v4073 = vpop.f32.mrb[0].mxu0
        %v4074 = vadd.f32 0.0, %v4073
        %v4075 = vpop.f32.mrb[0].mxu0
        %4076 = vmatprep.mubr.f32.mxu0 0.0
        %4077 = vmatmul.mubr.f32.gmra.mrb[0].mxu0 %v3915
        %v4078 = vpop.f32.mrb[0].mxu0
        %v4079 = vadd.f32 0.0, %v4078
        %v4080 = vpop.f32.mrb[0].mxu0
        %4081 = vmatprep.mubr.f32.mxu0 0.0
        %4082 = vmatmul.mubr.f32.gmra.mrb[0].mxu0 %v3918
        %v4083 = vpop.f32.mrb[0].mxu0
        %v4084 = vadd.f32 0.0, %v4083
        %v4085 = vpop.f32.mrb[0].mxu0
        %4086 = vmatprep.mubr.f32.mxu0 0.0
        %4087 = vmatmul.mubr.f32.gmra.mrb[0].mxu0 %v3921
        %v4088 = vpop.f32.mrb[0].mxu0
        %v4089 = vadd.f32 0.0, %v4088
        %v4090 = vpop.f32.mrb[0].mxu0
        %4091 = vmatprep.mubr.f32.mxu0 0.0
        %4092 = vmatmul.mubr.f32.gmra.mrb[0].mxu0 %v3924
        %v4093 = vpop.f32.mrb[0].mxu0
        %v4094 = vadd.f32 0.0, %v4093
        %v4095 = vpop.f32.mrb[0].mxu0
        %4096 = vmatprep.mubr.f32.mxu0 0.0
        %4097 = vmatmul.mubr.f32.gmra.mrb[0].mxu0 %v3927
        %v4098 = vpop.f32.mrb[0].mxu0
        %v4099 = vadd.f32 0.0, %v4098
        %v4100 = vpop.f32.mrb[0].mxu0
        %4101 = vmatprep.mubr.f32.mxu0 0.0
        %4102 = vmatmul.mubr.f32.gmra.mrb[0].mxu0 %v3930
        %v4103 = vpop.f32.mrb[0].mxu0
        %v4104 = vadd.f32 0.0, %v4103
        %v4105 = vpop.f32.mrb[0].mxu0
        %4106 = vdwg.mxu0
        %4107 = vst.msk [vmem:[#allocation3 + $0xb0] sm:$0xff] %vm3821, %v3999
        %4108 = vst.msk [vmem:[#allocation3 + $0xb8] sm:$0xff] %vm3821, %v4004
        %4109 = vst.msk [vmem:[#allocation3 + $0xc0] sm:$0xff] %vm3821, %v4009
        %4110 = vst.msk [vmem:[#allocation3 + $0xc8] sm:$0xff] %vm3821, %v4014
        %4111 = vst.msk [vmem:[#allocation3 + $0xd0] sm:$0xff] %vm3821, %v4019
        %4112 = vst.msk [vmem:[#allocation3 + $0xd8] sm:$0xff] %vm3821, %v4024
        %4113 = vst.msk [vmem:[#allocation3 + $0xe0] sm:$0xff] %vm3821, %v4029
        %4114 = vst.msk [vmem:[#allocation3 + $0xe8] sm:$0xff] %vm3821, %v4034
        %4115 = vst.msk [vmem:[#allocation3 + $0xf0] sm:$0xff] %vm3821, %v4039
        %4116 = vst.msk [vmem:[#allocation3 + $0xf8] sm:$0xff] %vm3821, %v4044
        %4117 = vst.msk [vmem:[#allocation3 + $0x100] sm:$0xff] %vm3821, %v4049
        %4118 = vst.msk [vmem:[#allocation3 + $0x108] sm:$0xff] %vm3821, %v4054
        %4119 = vst.msk [vmem:[#allocation3 + $0x110] sm:$0xff] %vm3821, %v4059
        %4120 = vst.msk [vmem:[#allocation3 + $0x118] sm:$0xff] %vm3821, %v4064
        %4121 = vst.msk [vmem:[#allocation3 + $0x120] sm:$0xff] %vm3821, %v4069
        %4122 = vst.msk [vmem:[#allocation3 + $0x128] sm:$0xff] %vm3821, %v4074
        %4123 = vst.msk [vmem:[#allocation3 + $0x130] sm:$0xff] %vm3821, %v4079
        %4124 = vst.msk [vmem:[#allocation3 + $0x138] sm:$0xff] %vm3821, %v4084
        %4125 = vst.msk [vmem:[#allocation3 + $0x140] sm:$0xff] %vm3821, %v4089
        %4126 = vst.msk [vmem:[#allocation3 + $0x148] sm:$0xff] %vm3821, %v4094
        %4127 = vst.msk [vmem:[#allocation3 + $0x150] sm:$0xff] %vm3821, %v4099
        %4128 = vst.msk [vmem:[#allocation3 + $0x158] sm:$0xff] %vm3821, %v4104
        %v4129 = vld [vmem:[#allocation2 + $0x160] sm:$0xff]
        %v4130 = vld [vmem:[#allocation2 + $0x168] sm:$0xff]
        %v4131 = vld [vmem:[#allocation2 + $0x170] sm:$0xff]
        %v4132 = vld [vmem:[#allocation2 + $0x178] sm:$0xff]
        %v4133 = vld [vmem:[#allocation2 + $0x180] sm:$0xff]
        %v4134 = vld [vmem:[#allocation2 + $0x188] sm:$0xff]
        %v4135 = vld [vmem:[#allocation2 + $0x190] sm:$0xff]
        %v4136 = vld [vmem:[#allocation2 + $0x198] sm:$0xff]
        %v4137 = vld [vmem:[#allocation2 + $0x1a0] sm:$0xff]
        %v4138 = vld [vmem:[#allocation2 + $0x1a8] sm:$0xff]
        %v4139 = vld [vmem:[#allocation2 + $0x1b0] sm:$0xff]
        %v4140 = vld [vmem:[#allocation2 + $0x1b8] sm:$0xff]
        %v4141 = vld [vmem:[#allocation2 + $0x1c0] sm:$0xff]
        %v4142 = vld [vmem:[#allocation2 + $0x1c8] sm:$0xff]
        %v4143 = vld [vmem:[#allocation2 + $0x1d0] sm:$0xff]
        %v4144 = vld [vmem:[#allocation2 + $0x1d8] sm:$0xff]
        %v4145 = vld [vmem:[#allocation2 + $0x1e0] sm:$0xff]
        %v4146 = vld [vmem:[#allocation2 + $0x1e8] sm:$0xff]
        %v4147 = vld [vmem:[#allocation2 + $0x1f0] sm:$0xff]
        %v4148 = vld [vmem:[#allocation2 + $0x1f8] sm:$0xff]
        %v4149 = vld [vmem:[#allocation2 + $0x200] sm:$0xff]
        %v4150 = vld [vmem:[#allocation2 + $0x208] sm:$0xff]
        %v4152 = vsel %vm3575, %v4129, 0
        %v4155 = vsel %vm3575, %v4130, 0
        %v4158 = vsel %vm3575, %v4131, 0
        %v4161 = vsel %vm3575, %v4132, 0
        %v4164 = vsel %vm3575, %v4133, 0
        %v4167 = vsel %vm3575, %v4134, 0
        %v4170 = vsel %vm3575, %v4135, 0
        %v4173 = vsel %vm3575, %v4136, 0
        %v4176 = vsel %vm3575, %v4137, 0
        %v4179 = vsel %vm3575, %v4138, 0
        %v4182 = vsel %vm3575, %v4139, 0
        %v4185 = vsel %vm3575, %v4140, 0
        %v4188 = vsel %vm3575, %v4141, 0
        %v4191 = vsel %vm3575, %v4142, 0
        %v4194 = vsel %vm3575, %v4143, 0
        %v4197 = vsel %vm3575, %v4144, 0
        %v4200 = vsel %vm3575, %v4145, 0
        %v4203 = vsel %vm3575, %v4146, 0
        %v4206 = vsel %vm3575, %v4147, 0
        %v4209 = vsel %vm3575, %v4148, 0
        %v4212 = vsel %vm3575, %v4149, 0
        %v4215 = vsel %vm3575, %v4150, 0
        %4217 = vmatprep.subr.mxu0 0.0
        %4218 = vmatpush1.msra.mxu0 %v238
        %4219 = vmatprep.subr.mxu0 0.0
        %4220 = vmatpush1.msra.mxu0 %v239
        %4221 = vmatprep.subr.mxu0 0.0
        %4222 = vmatpush1.msra.mxu0 %v240
        %4223 = vmatprep.subr.mxu0 0.0
        %4224 = vmatpush1.msra.mxu0 %v3644
        %4225 = vmatprep.subr.mxu0 0.0
        %4226 = vmatpush1.msra.mxu0 0.0
        %4227 = vmatprep.subr.mxu0 0.0
        %4228 = vmatpush1.msra.mxu0 0.0
        %4229 = vmatprep.subr.mxu0 0.0
        %4230 = vmatpush1.msra.mxu0 0.0
        %4231 = vmatprep.subr.mxu0 0.0
        %4232 = vmatpush1.msra.mxu0 0.0
        %4233 = vmatprep.subr.mxu0 0.0
        %4234 = vmatpush1.msra.mxu0 0.0
        %4235 = vmatprep.subr.mxu0 0.0
        %4236 = vmatpush1.msra.mxu0 0.0
        %4237 = vmatprep.subr.mxu0 0.0
        %4238 = vmatpush1.msra.mxu0 0.0
        %4239 = vmatprep.subr.mxu0 0.0
        %4240 = vmatpush1.msra.mxu0 0.0
        %4241 = vmatprep.subr.mxu0 0.0
        %4242 = vmatpush1.msra.mxu0 0.0
        %4243 = vmatprep.subr.mxu0 0.0
        %4244 = vmatpush1.msra.mxu0 0.0
        %4245 = vmatprep.subr.mxu0 0.0
        %4246 = vmatpush1.msra.mxu0 0.0
        %4247 = vmatprep.subr.mxu0 0.0
        %4248 = vmatpush1.msra.mxu0 0.0
        %4249 = vmatprep.subr.mxu0 0.0
        %4250 = vmatpush1.msra.mxu0 0.0
        %4251 = vmatprep.subr.mxu0 0.0
        %4252 = vmatpush1.msra.mxu0 0.0
        %4253 = vmatprep.subr.mxu0 0.0
        %4254 = vmatpush1.msra.mxu0 0.0
        %4255 = vmatprep.subr.mxu0 0.0
        %4256 = vmatpush1.msra.mxu0 0.0
        %4257 = vmatprep.subr.mxu0 0.0
        %4258 = vmatpush1.msra.mxu0 0.0
        %4259 = vmatprep.subr.mxu0 0.0
        %4260 = vmatpush1.msra.mxu0 0.0
        %4261 = vmatprep.subr.mxu0 0.0
        %4262 = vmatpush1.msra.mxu0 0.0
        %4263 = vmatprep.subr.mxu0 0.0
        %4264 = vmatpush1.msra.mxu0 0.0
        %4265 = vmatprep.subr.mxu0 0.0
        %4266 = vmatpush1.msra.mxu0 0.0
        %4267 = vmatprep.subr.mxu0 0.0
        %4268 = vmatpush1.msra.mxu0 0.0
        %4269 = vmatprep.subr.mxu0 0.0
        %4270 = vmatpush1.msra.mxu0 0.0
        %4271 = vmatprep.subr.mxu0 0.0
        %4272 = vmatpush1.msra.mxu0 0.0
        %4273 = vmatprep.subr.mxu0 0.0
        %4274 = vmatpush1.msra.mxu0 0.0
        %4275 = vmatprep.subr.mxu0 0.0
        %4276 = vmatpush1.msra.mxu0 0.0
        %4277 = vmatprep.subr.mxu0 0.0
        %4278 = vmatpush1.msra.mxu0 0.0
        %4279 = vmatprep.subr.mxu0 0.0
        %4280 = vmatpush1.msra.mxu0 0.0
        %4281 = vmatprep.mubr.f32.mxu0 0.0
        %4282 = vmatmul.mubr.f32.gmra.mrb[0].mxu0 %v4152
        %v4283 = vpop.f32.mrb[0].mxu0
        %v4284 = vadd.f32 0.0, %v4283
        %v4285 = vpop.f32.mrb[0].mxu0
        %4286 = vmatprep.mubr.f32.mxu0 0.0
        %4287 = vmatmul.mubr.f32.gmra.mrb[0].mxu0 %v4155
        %v4288 = vpop.f32.mrb[0].mxu0
        %v4289 = vadd.f32 0.0, %v4288
        %v4290 = vpop.f32.mrb[0].mxu0
        %4291 = vmatprep.mubr.f32.mxu0 0.0
        %4292 = vmatmul.mubr.f32.gmra.mrb[0].mxu0 %v4158
        %v4293 = vpop.f32.mrb[0].mxu0
        %v4294 = vadd.f32 0.0, %v4293
        %v4295 = vpop.f32.mrb[0].mxu0
        %4296 = vmatprep.mubr.f32.mxu0 0.0
        %4297 = vmatmul.mubr.f32.gmra.mrb[0].mxu0 %v4161
        %v4298 = vpop.f32.mrb[0].mxu0
        %v4299 = vadd.f32 0.0, %v4298
        %v4300 = vpop.f32.mrb[0].mxu0
        %4301 = vmatprep.mubr.f32.mxu0 0.0
        %4302 = vmatmul.mubr.f32.gmra.mrb[0].mxu0 %v4164
        %v4303 = vpop.f32.mrb[0].mxu0
        %v4304 = vadd.f32 0.0, %v4303
        %v4305 = vpop.f32.mrb[0].mxu0
        %4306 = vmatprep.mubr.f32.mxu0 0.0
        %4307 = vmatmul.mubr.f32.gmra.mrb[0].mxu0 %v4167
        %v4308 = vpop.f32.mrb[0].mxu0
        %v4309 = vadd.f32 0.0, %v4308
        %v4310 = vpop.f32.mrb[0].mxu0
        %4311 = vmatprep.mubr.f32.mxu0 0.0
        %4312 = vmatmul.mubr.f32.gmra.mrb[0].mxu0 %v4170
        %v4313 = vpop.f32.mrb[0].mxu0
        %v4314 = vadd.f32 0.0, %v4313
        %v4315 = vpop.f32.mrb[0].mxu0
        %4316 = vmatprep.mubr.f32.mxu0 0.0
        %4317 = vmatmul.mubr.f32.gmra.mrb[0].mxu0 %v4173
        %v4318 = vpop.f32.mrb[0].mxu0
        %v4319 = vadd.f32 0.0, %v4318
        %v4320 = vpop.f32.mrb[0].mxu0
        %4321 = vmatprep.mubr.f32.mxu0 0.0
        %4322 = vmatmul.mubr.f32.gmra.mrb[0].mxu0 %v4176
        %v4323 = vpop.f32.mrb[0].mxu0
        %v4324 = vadd.f32 0.0, %v4323
        %v4325 = vpop.f32.mrb[0].mxu0
        %4326 = vmatprep.mubr.f32.mxu0 0.0
        %4327 = vmatmul.mubr.f32.gmra.mrb[0].mxu0 %v4179
        %v4328 = vpop.f32.mrb[0].mxu0
        %v4329 = vadd.f32 0.0, %v4328
        %v4330 = vpop.f32.mrb[0].mxu0
        %4331 = vmatprep.mubr.f32.mxu0 0.0
        %4332 = vmatmul.mubr.f32.gmra.mrb[0].mxu0 %v4182
        %v4333 = vpop.f32.mrb[0].mxu0
        %v4334 = vadd.f32 0.0, %v4333
        %v4335 = vpop.f32.mrb[0].mxu0
        %4336 = vmatprep.mubr.f32.mxu0 0.0
        %4337 = vmatmul.mubr.f32.gmra.mrb[0].mxu0 %v4185
        %v4338 = vpop.f32.mrb[0].mxu0
        %v4339 = vadd.f32 0.0, %v4338
        %v4340 = vpop.f32.mrb[0].mxu0
        %4341 = vmatprep.mubr.f32.mxu0 0.0
        %4342 = vmatmul.mubr.f32.gmra.mrb[0].mxu0 %v4188
        %v4343 = vpop.f32.mrb[0].mxu0
        %v4344 = vadd.f32 0.0, %v4343
        %v4345 = vpop.f32.mrb[0].mxu0
        %4346 = vmatprep.mubr.f32.mxu0 0.0
        %4347 = vmatmul.mubr.f32.gmra.mrb[0].mxu0 %v4191
        %v4348 = vpop.f32.mrb[0].mxu0
        %v4349 = vadd.f32 0.0, %v4348
        %v4350 = vpop.f32.mrb[0].mxu0
        %4351 = vmatprep.mubr.f32.mxu0 0.0
        %4352 = vmatmul.mubr.f32.gmra.mrb[0].mxu0 %v4194
        %v4353 = vpop.f32.mrb[0].mxu0
        %v4354 = vadd.f32 0.0, %v4353
        %v4355 = vpop.f32.mrb[0].mxu0
        %4356 = vmatprep.mubr.f32.mxu0 0.0
        %4357 = vmatmul.mubr.f32.gmra.mrb[0].mxu0 %v4197
        %v4358 = vpop.f32.mrb[0].mxu0
        %v4359 = vadd.f32 0.0, %v4358
        %v4360 = vpop.f32.mrb[0].mxu0
        %4361 = vmatprep.mubr.f32.mxu0 0.0
        %4362 = vmatmul.mubr.f32.gmra.mrb[0].mxu0 %v4200
        %v4363 = vpop.f32.mrb[0].mxu0
        %v4364 = vadd.f32 0.0, %v4363
        %v4365 = vpop.f32.mrb[0].mxu0
        %4366 = vmatprep.mubr.f32.mxu0 0.0
        %4367 = vmatmul.mubr.f32.gmra.mrb[0].mxu0 %v4203
        %v4368 = vpop.f32.mrb[0].mxu0
        %v4369 = vadd.f32 0.0, %v4368
        %v4370 = vpop.f32.mrb[0].mxu0
        %4371 = vmatprep.mubr.f32.mxu0 0.0
        %4372 = vmatmul.mubr.f32.gmra.mrb[0].mxu0 %v4206
        %v4373 = vpop.f32.mrb[0].mxu0
        %v4374 = vadd.f32 0.0, %v4373
        %v4375 = vpop.f32.mrb[0].mxu0
        %4376 = vmatprep.mubr.f32.mxu0 0.0
        %4377 = vmatmul.mubr.f32.gmra.mrb[0].mxu0 %v4209
        %v4378 = vpop.f32.mrb[0].mxu0
        %v4379 = vadd.f32 0.0, %v4378
        %v4380 = vpop.f32.mrb[0].mxu0
        %4381 = vmatprep.mubr.f32.mxu0 0.0
        %4382 = vmatmul.mubr.f32.gmra.mrb[0].mxu0 %v4212
        %v4383 = vpop.f32.mrb[0].mxu0
        %v4384 = vadd.f32 0.0, %v4383
        %v4385 = vpop.f32.mrb[0].mxu0
        %4386 = vmatprep.mubr.f32.mxu0 0.0
        %4387 = vmatmul.mubr.f32.gmra.mrb[0].mxu0 %v4215
        %v4388 = vpop.f32.mrb[0].mxu0
        %v4389 = vadd.f32 0.0, %v4388
        %v4390 = vpop.f32.mrb[0].mxu0
        %4391 = vdwg.mxu0
        %4392 = vst.msk [vmem:[#allocation3 + $0x160] sm:$0xff] %vm3821, %v4284
        %4393 = vst.msk [vmem:[#allocation3 + $0x168] sm:$0xff] %vm3821, %v4289
        %4394 = vst.msk [vmem:[#allocation3 + $0x170] sm:$0xff] %vm3821, %v4294
        %4395 = vst.msk [vmem:[#allocation3 + $0x178] sm:$0xff] %vm3821, %v4299
        %4396 = vst.msk [vmem:[#allocation3 + $0x180] sm:$0xff] %vm3821, %v4304
        %4397 = vst.msk [vmem:[#allocation3 + $0x188] sm:$0xff] %vm3821, %v4309
        %4398 = vst.msk [vmem:[#allocation3 + $0x190] sm:$0xff] %vm3821, %v4314
        %4399 = vst.msk [vmem:[#allocation3 + $0x198] sm:$0xff] %vm3821, %v4319
        %4400 = vst.msk [vmem:[#allocation3 + $0x1a0] sm:$0xff] %vm3821, %v4324
        %4401 = vst.msk [vmem:[#allocation3 + $0x1a8] sm:$0xff] %vm3821, %v4329
        %4402 = vst.msk [vmem:[#allocation3 + $0x1b0] sm:$0xff] %vm3821, %v4334
        %4403 = vst.msk [vmem:[#allocation3 + $0x1b8] sm:$0xff] %vm3821, %v4339
        %4404 = vst.msk [vmem:[#allocation3 + $0x1c0] sm:$0xff] %vm3821, %v4344
        %4405 = vst.msk [vmem:[#allocation3 + $0x1c8] sm:$0xff] %vm3821, %v4349
        %4406 = vst.msk [vmem:[#allocation3 + $0x1d0] sm:$0xff] %vm3821, %v4354
        %4407 = vst.msk [vmem:[#allocation3 + $0x1d8] sm:$0xff] %vm3821, %v4359
        %4408 = vst.msk [vmem:[#allocation3 + $0x1e0] sm:$0xff] %vm3821, %v4364
        %4409 = vst.msk [vmem:[#allocation3 + $0x1e8] sm:$0xff] %vm3821, %v4369
        %4410 = vst.msk [vmem:[#allocation3 + $0x1f0] sm:$0xff] %vm3821, %v4374
        %4411 = vst.msk [vmem:[#allocation3 + $0x1f8] sm:$0xff] %vm3821, %v4379
        %4412 = vst.msk [vmem:[#allocation3 + $0x200] sm:$0xff] %vm3821, %v4384
        %4413 = vst.msk [vmem:[#allocation3 + $0x208] sm:$0xff] %vm3821, %v4389
        %v4414 = vld [vmem:[#allocation3] ss:$2 sm:$0xff]
        %s4415 = scalar_lea.vmem [#allocation3], 16
        %v4416 = vld [vmem:[%s4415] ss:$2 sm:$0xff]
        %s4417 = scalar_lea.vmem [#allocation3], 32
        %v4418 = vld [vmem:[%s4417] ss:$2 sm:$0xff]
        %s4419 = scalar_lea.vmem [#allocation3], 48
        %v4420 = vld [vmem:[%s4419] ss:$2 sm:$0xff]
        %s4421 = scalar_lea.vmem [#allocation3], 64
        %v4422 = vld [vmem:[%s4421] ss:$2 sm:$0xff]
        %s4423 = scalar_lea.vmem [#allocation3], 80
        %v4424 = vld [vmem:[%s4423] ss:$2 sm:$0xff]
        %s4425 = scalar_lea.vmem [#allocation3], 96
        %v4426 = vld [vmem:[%s4425] ss:$2 sm:$0xff]
        %s4427 = scalar_lea.vmem [#allocation3], 112
        %v4428 = vld [vmem:[%s4427] ss:$2 sm:$0xff]
        %s4429 = scalar_lea.vmem [#allocation3], 128
        %v4430 = vld [vmem:[%s4429] ss:$2 sm:$0xff]
        %s4431 = scalar_lea.vmem [#allocation3], 144
        %v4432 = vld [vmem:[%s4431] ss:$2 sm:$0xff]
        %s4433 = scalar_lea.vmem [#allocation3], 160
        %v4434 = vld [vmem:[%s4433] ss:$2 sm:$0xff]
        %s4435 = scalar_lea.vmem [#allocation3], 176
        %v4436 = vld [vmem:[%s4435] ss:$2 sm:$0xff]
        %s4437 = scalar_lea.vmem [#allocation3], 192
        %v4438 = vld [vmem:[%s4437] ss:$2 sm:$0xff]
        %s4439 = scalar_lea.vmem [#allocation3], 208
        %v4440 = vld [vmem:[%s4439] ss:$2 sm:$0xff]
        %s4441 = scalar_lea.vmem [#allocation3], 224
        %v4442 = vld [vmem:[%s4441] ss:$2 sm:$0xff]
        %s4443 = scalar_lea.vmem [#allocation3], 240
        %v4444 = vld [vmem:[%s4443] ss:$2 sm:$0xff]
        %s4445 = scalar_lea.vmem [#allocation3], 256
        %v4446 = vld [vmem:[%s4445] ss:$2 sm:$0xff]
        %s4447 = scalar_lea.vmem [#allocation3], 272
        %v4448 = vld [vmem:[%s4447] ss:$2 sm:$0xff]
        %s4449 = scalar_lea.vmem [#allocation3], 288
        %v4450 = vld [vmem:[%s4449] ss:$2 sm:$0xff]
        %s4451 = scalar_lea.vmem [#allocation3], 304
        %v4452 = vld [vmem:[%s4451] ss:$2 sm:$0xff]
        %s4453 = scalar_lea.vmem [#allocation3], 320
        %v4454 = vld [vmem:[%s4453] ss:$2 sm:$0xff]
        %s4455 = scalar_lea.vmem [#allocation3], 336
        %v4456 = vld [vmem:[%s4455] ss:$2 sm:$0xff]
        %s4457 = scalar_lea.vmem [#allocation3], 352
        %v4458 = vld [vmem:[%s4457] ss:$2 sm:$0xff]
        %s4459 = scalar_lea.vmem [#allocation3], 368
        %v4460 = vld [vmem:[%s4459] ss:$2 sm:$0xff]
        %s4461 = scalar_lea.vmem [#allocation3], 384
        %v4462 = vld [vmem:[%s4461] ss:$2 sm:$0xff]
        %s4463 = scalar_lea.vmem [#allocation3], 400
        %v4464 = vld [vmem:[%s4463] ss:$2 sm:$0xff]
        %s4465 = scalar_lea.vmem [#allocation3], 416
        %v4466 = vld [vmem:[%s4465] ss:$2 sm:$0xff]
        %s4467 = scalar_lea.vmem [#allocation3], 432
        %v4468 = vld [vmem:[%s4467] ss:$2 sm:$0xff]
        %s4469 = scalar_lea.vmem [#allocation3], 448
        %v4470 = vld [vmem:[%s4469] ss:$2 sm:$0xff]
        %s4471 = scalar_lea.vmem [#allocation3], 464
        %v4472 = vld [vmem:[%s4471] ss:$2 sm:$0xff]
        %s4473 = scalar_lea.vmem [#allocation3], 480
        %v4474 = vld [vmem:[%s4473] ss:$2 sm:$0xff]
        %s4475 = scalar_lea.vmem [#allocation3], 496
        %v4476 = vld [vmem:[%s4475] ss:$2 sm:$0xff]
        %s4477 = scalar_lea.vmem [#allocation3], 512
        %v4478 = vld [vmem:[%s4477] ss:$2 sm:$0xff]
        %s4479 = scalar_lea.vmem [#allocation3], 1
        %v4480 = vld [vmem:[%s4479] ss:$2 sm:$0xff]
        %s4481 = scalar_lea.vmem [#allocation3], 17
        %v4482 = vld [vmem:[%s4481] ss:$2 sm:$0xff]
        %s4483 = scalar_lea.vmem [#allocation3], 33
        %v4484 = vld [vmem:[%s4483] ss:$2 sm:$0xff]
        %s4485 = scalar_lea.vmem [#allocation3], 49
        %v4486 = vld [vmem:[%s4485] ss:$2 sm:$0xff]
        %s4487 = scalar_lea.vmem [#allocation3], 65
        %v4488 = vld [vmem:[%s4487] ss:$2 sm:$0xff]
        %s4489 = scalar_lea.vmem [#allocation3], 81
        %v4490 = vld [vmem:[%s4489] ss:$2 sm:$0xff]
        %s4491 = scalar_lea.vmem [#allocation3], 97
        %v4492 = vld [vmem:[%s4491] ss:$2 sm:$0xff]
        %s4493 = scalar_lea.vmem [#allocation3], 113
        %v4494 = vld [vmem:[%s4493] ss:$2 sm:$0xff]
        %s4495 = scalar_lea.vmem [#allocation3], 129
        %v4496 = vld [vmem:[%s4495] ss:$2 sm:$0xff]
        %s4497 = scalar_lea.vmem [#allocation3], 145
        %v4498 = vld [vmem:[%s4497] ss:$2 sm:$0xff]
        %s4499 = scalar_lea.vmem [#allocation3], 161
        %v4500 = vld [vmem:[%s4499] ss:$2 sm:$0xff]
        %s4501 = scalar_lea.vmem [#allocation3], 177
        %v4502 = vld [vmem:[%s4501] ss:$2 sm:$0xff]
        %s4503 = scalar_lea.vmem [#allocation3], 193
        %v4504 = vld [vmem:[%s4503] ss:$2 sm:$0xff]
        %s4505 = scalar_lea.vmem [#allocation3], 209
        %v4506 = vld [vmem:[%s4505] ss:$2 sm:$0xff]
        %s4507 = scalar_lea.vmem [#allocation3], 225
        %v4508 = vld [vmem:[%s4507] ss:$2 sm:$0xff]
        %s4509 = scalar_lea.vmem [#allocation3], 241
        %v4510 = vld [vmem:[%s4509] ss:$2 sm:$0xff]
        %s4511 = scalar_lea.vmem [#allocation3], 257
        %v4512 = vld [vmem:[%s4511] ss:$2 sm:$0xff]
        %s4513 = scalar_lea.vmem [#allocation3], 273
        %v4514 = vld [vmem:[%s4513] ss:$2 sm:$0xff]
        %s4515 = scalar_lea.vmem [#allocation3], 289
        %v4516 = vld [vmem:[%s4515] ss:$2 sm:$0xff]
        %s4517 = scalar_lea.vmem [#allocation3], 305
        %v4518 = vld [vmem:[%s4517] ss:$2 sm:$0xff]
        %s4519 = scalar_lea.vmem [#allocation3], 321
        %v4520 = vld [vmem:[%s4519] ss:$2 sm:$0xff]
        %s4521 = scalar_lea.vmem [#allocation3], 337
        %v4522 = vld [vmem:[%s4521] ss:$2 sm:$0xff]
        %s4523 = scalar_lea.vmem [#allocation3], 353
        %v4524 = vld [vmem:[%s4523] ss:$2 sm:$0xff]
        %s4525 = scalar_lea.vmem [#allocation3], 369
        %v4526 = vld [vmem:[%s4525] ss:$2 sm:$0xff]
        %s4527 = scalar_lea.vmem [#allocation3], 385
        %v4528 = vld [vmem:[%s4527] ss:$2 sm:$0xff]
        %s4529 = scalar_lea.vmem [#allocation3], 401
        %v4530 = vld [vmem:[%s4529] ss:$2 sm:$0xff]
        %s4531 = scalar_lea.vmem [#allocation3], 417
        %v4532 = vld [vmem:[%s4531] ss:$2 sm:$0xff]
        %s4533 = scalar_lea.vmem [#allocation3], 433
        %v4534 = vld [vmem:[%s4533] ss:$2 sm:$0xff]
        %s4535 = scalar_lea.vmem [#allocation3], 449
        %v4536 = vld [vmem:[%s4535] ss:$2 sm:$0xff]
        %s4537 = scalar_lea.vmem [#allocation3], 465
        %v4538 = vld [vmem:[%s4537] ss:$2 sm:$0xff]
        %s4539 = scalar_lea.vmem [#allocation3], 481
        %v4540 = vld [vmem:[%s4539] ss:$2 sm:$0xff]
        %s4541 = scalar_lea.vmem [#allocation3], 497
        %v4542 = vld [vmem:[%s4541] ss:$2 sm:$0xff]
        %s4543 = scalar_lea.vmem [#allocation3], 513
        %v4544 = vld [vmem:[%s4543] ss:$2 sm:$0xff]
        %v4545 = vmax.f32 %v4414, %v4480
        %v4546 = vmax.f32 %v4416, %v4482
        %v4547 = vmax.f32 %v4418, %v4484
        %v4548 = vmax.f32 %v4420, %v4486
        %v4549 = vmax.f32 %v4422, %v4488
        %v4550 = vmax.f32 %v4424, %v4490
        %v4551 = vmax.f32 %v4426, %v4492
        %v4552 = vmax.f32 %v4428, %v4494
        %v4553 = vmax.f32 %v4430, %v4496
        %v4554 = vmax.f32 %v4432, %v4498
        %v4555 = vmax.f32 %v4434, %v4500
        %v4556 = vmax.f32 %v4436, %v4502
        %v4557 = vmax.f32 %v4438, %v4504
        %v4558 = vmax.f32 %v4440, %v4506
        %v4559 = vmax.f32 %v4442, %v4508
        %v4560 = vmax.f32 %v4444, %v4510
        %v4561 = vmax.f32 %v4446, %v4512
        %v4562 = vmax.f32 %v4448, %v4514
        %v4563 = vmax.f32 %v4450, %v4516
        %v4564 = vmax.f32 %v4452, %v4518
        %v4565 = vmax.f32 %v4454, %v4520
        %v4566 = vmax.f32 %v4456, %v4522
        %v4567 = vmax.f32 %v4458, %v4524
        %v4568 = vmax.f32 %v4460, %v4526
        %v4569 = vmax.f32 %v4462, %v4528
        %v4570 = vmax.f32 %v4464, %v4530
        %v4571 = vmax.f32 %v4466, %v4532
        %v4572 = vmax.f32 %v4468, %v4534
        %v4573 = vmax.f32 %v4470, %v4536
        %v4574 = vmax.f32 %v4472, %v4538
        %v4575 = vmax.f32 %v4474, %v4540
        %v4576 = vmax.f32 %v4476, %v4542
        %v4577 = vmax.f32 %v4478, %v4544
        %4578 = vst.msk [vmem:[#allocation4] sm:$0xff] %vm3821, %v4545
        %4579 = vst.msk [vmem:[#allocation4 + $0x8] sm:$0xff] %vm3821, %v4546
        %4580 = vst.msk [vmem:[#allocation4 + $0x10] sm:$0xff] %vm3821, %v4547
        %4581 = vst.msk [vmem:[#allocation4 + $0x18] sm:$0xff] %vm3821, %v4548
        %4582 = vst.msk [vmem:[#allocation4 + $0x20] sm:$0xff] %vm3821, %v4549
        %4583 = vst.msk [vmem:[#allocation4 + $0x28] sm:$0xff] %vm3821, %v4550
        %4584 = vst.msk [vmem:[#allocation4 + $0x30] sm:$0xff] %vm3821, %v4551
        %4585 = vst.msk [vmem:[#allocation4 + $0x38] sm:$0xff] %vm3821, %v4552
        %4586 = vst.msk [vmem:[#allocation4 + $0x40] sm:$0xff] %vm3821, %v4553
        %4587 = vst.msk [vmem:[#allocation4 + $0x48] sm:$0xff] %vm3821, %v4554
        %4588 = vst.msk [vmem:[#allocation4 + $0x50] sm:$0xff] %vm3821, %v4555
        %4589 = vst.msk [vmem:[#allocation4 + $0x58] sm:$0xff] %vm3821, %v4556
        %4590 = vst.msk [vmem:[#allocation4 + $0x60] sm:$0xff] %vm3821, %v4557
        %4591 = vst.msk [vmem:[#allocation4 + $0x68] sm:$0xff] %vm3821, %v4558
        %4592 = vst.msk [vmem:[#allocation4 + $0x70] sm:$0xff] %vm3821, %v4559
        %4593 = vst.msk [vmem:[#allocation4 + $0x78] sm:$0xff] %vm3821, %v4560
        %4594 = vst.msk [vmem:[#allocation4 + $0x80] sm:$0xff] %vm3821, %v4561
        %4595 = vst.msk [vmem:[#allocation4 + $0x88] sm:$0xff] %vm3821, %v4562
        %4596 = vst.msk [vmem:[#allocation4 + $0x90] sm:$0xff] %vm3821, %v4563
        %4597 = vst.msk [vmem:[#allocation4 + $0x98] sm:$0xff] %vm3821, %v4564
        %4598 = vst.msk [vmem:[#allocation4 + $0xa0] sm:$0xff] %vm3821, %v4565
        %4599 = vst.msk [vmem:[#allocation4 + $0xa8] sm:$0xff] %vm3821, %v4566
        %4600 = vst.msk [vmem:[#allocation4 + $0xb0] sm:$0xff] %vm3821, %v4567
        %4601 = vst.msk [vmem:[#allocation4 + $0xb8] sm:$0xff] %vm3821, %v4568
        %4602 = vst.msk [vmem:[#allocation4 + $0xc0] sm:$0xff] %vm3821, %v4569
        %4603 = vst.msk [vmem:[#allocation4 + $0xc8] sm:$0xff] %vm3821, %v4570
        %4604 = vst.msk [vmem:[#allocation4 + $0xd0] sm:$0xff] %vm3821, %v4571
        %4605 = vst.msk [vmem:[#allocation4 + $0xd8] sm:$0xff] %vm3821, %v4572
        %4606 = vst.msk [vmem:[#allocation4 + $0xe0] sm:$0xff] %vm3821, %v4573
        %4607 = vst.msk [vmem:[#allocation4 + $0xe8] sm:$0xff] %vm3821, %v4574
        %4608 = vst.msk [vmem:[#allocation4 + $0xf0] sm:$0xff] %vm3821, %v4575
        %4609 = vst.msk [vmem:[#allocation4 + $0xf8] sm:$0xff] %vm3821, %v4576
        %4610 = vst.msk [vmem:[#allocation4 + $0x100] sm:$0xff] %vm3821, %v4577
        %v4611 = vld [vmem:[#allocation4] sm:$0xff]
        %v4612 = vld [vmem:[#allocation4 + $0x8] sm:$0x7]
        %v4613 = vld [vmem:[#allocation4 + $0xc] sm:$0xff]
        %v4614 = vld [vmem:[#allocation4 + $0x14] sm:$0x7]
        %v4615 = vmax.f32 %v4611, %v4613
        %v4616 = vmax.f32 %v4612, %v4614
        %v4618 = vlaneseq
        %v4619 = vshrl.u32 %v4618, 7
        %v4620 = vsub.s32 0, %v4619
        %v4621 = vrot.slane %v242, %v4620
        %v4623 = vadd.f32 %v4615, %v4621
        %v4624 = vadd.f32 %v4616, %v4621
        %v4626 = vlaneseq
        %v4627 = vshrl.u32 %v4626, 7
        %v4628 = vsub.s32 0, %v4627
        %v4629 = vrot.slane %v243, %v4628
        %v4631 = vmax.f32 %v4623, %v4629
        %v4632 = vmax.f32 %v4624, %v4629
        %4633 = vst.msk [vmem:[%s237] sm:$0xff] %vm3821, %v4631
        %vm4634 = vcmask 518144
        %4635 = vst.msk [vmem:[%s237 + $0x8] sm:$0x7] %vm4634, %v4632
        %v4636 = vld [vmem:[#allocation4 + $0x18] sm:$0xff]
        %v4637 = vld [vmem:[#allocation4 + $0x20] sm:$0x7]
        %v4638 = vld [vmem:[#allocation4 + $0x24] sm:$0xff]
        %v4639 = vld [vmem:[#allocation4 + $0x2c] sm:$0x7]
        %v4640 = vmax.f32 %v4636, %v4638
        %v4641 = vmax.f32 %v4637, %v4639
        %v4642 = vadd.f32 %v4640, %v4621
        %v4643 = vadd.f32 %v4641, %v4621
        %v4644 = vmax.f32 %v4642, %v4629
        %v4645 = vmax.f32 %v4643, %v4629
        %4646 = vst.msk [vmem:[%s237 + $0xb] sm:$0xff] %vm3821, %v4644
        %4647 = vst.msk [vmem:[%s237 + $0x13] sm:$0x7] %vm4634, %v4645
        %v4648 = vld [vmem:[#allocation4 + $0x30] sm:$0xff]
        %v4649 = vld [vmem:[#allocation4 + $0x38] sm:$0x7]
        %v4650 = vld [vmem:[#allocation4 + $0x3c] sm:$0xff]
        %v4651 = vld [vmem:[#allocation4 + $0x44] sm:$0x7]
        %v4652 = vmax.f32 %v4648, %v4650
        %v4653 = vmax.f32 %v4649, %v4651
        %v4654 = vadd.f32 %v4652, %v4621
        %v4655 = vadd.f32 %v4653, %v4621
        %v4656 = vmax.f32 %v4654, %v4629
        %v4657 = vmax.f32 %v4655, %v4629
        %4658 = vst.msk [vmem:[%s237 + $0x16] sm:$0xff] %vm3821, %v4656
        %4659 = vst.msk [vmem:[%s237 + $0x1e] sm:$0x7] %vm4634, %v4657
        %v4660 = vld [vmem:[#allocation4 + $0x48] sm:$0xff]
        %v4661 = vld [vmem:[#allocation4 + $0x50] sm:$0x7]
        %v4662 = vld [vmem:[#allocation4 + $0x54] sm:$0xff]
        %v4663 = vld [vmem:[#allocation4 + $0x5c] sm:$0x7]
        %v4664 = vmax.f32 %v4660, %v4662
        %v4665 = vmax.f32 %v4661, %v4663
        %v4666 = vadd.f32 %v4664, %v4621
        %v4667 = vadd.f32 %v4665, %v4621
        %v4668 = vmax.f32 %v4666, %v4629
        %v4669 = vmax.f32 %v4667, %v4629
        %4670 = vst.msk [vmem:[%s237 + $0x21] sm:$0xff] %vm3821, %v4668
        %4671 = vst.msk [vmem:[%s237 + $0x29] sm:$0x7] %vm4634, %v4669
        %v4672 = vld [vmem:[#allocation4 + $0x60] sm:$0xff]
        %v4673 = vld [vmem:[#allocation4 + $0x68] sm:$0x7]
        %v4674 = vld [vmem:[#allocation4 + $0x6c] sm:$0xff]
        %v4675 = vld [vmem:[#allocation4 + $0x74] sm:$0x7]
        %v4676 = vmax.f32 %v4672, %v4674
        %v4677 = vmax.f32 %v4673, %v4675
        %v4678 = vadd.f32 %v4676, %v4621
        %v4679 = vadd.f32 %v4677, %v4621
        %v4680 = vmax.f32 %v4678, %v4629
        %v4681 = vmax.f32 %v4679, %v4629
        %4682 = vst.msk [vmem:[%s237 + $0x2c] sm:$0xff] %vm3821, %v4680
        %4683 = vst.msk [vmem:[%s237 + $0x34] sm:$0x7] %vm4634, %v4681
        %v4684 = vld [vmem:[#allocation4 + $0x78] sm:$0xff]
        %v4685 = vld [vmem:[#allocation4 + $0x80] sm:$0x7]
        %v4686 = vld [vmem:[#allocation4 + $0x84] sm:$0xff]
        %v4687 = vld [vmem:[#allocation4 + $0x8c] sm:$0x7]
        %v4688 = vmax.f32 %v4684, %v4686
        %v4689 = vmax.f32 %v4685, %v4687
        %v4690 = vadd.f32 %v4688, %v4621
        %v4691 = vadd.f32 %v4689, %v4621
        %v4692 = vmax.f32 %v4690, %v4629
        %v4693 = vmax.f32 %v4691, %v4629
        %4694 = vst.msk [vmem:[%s237 + $0x37] sm:$0xff] %vm3821, %v4692
        %4695 = vst.msk [vmem:[%s237 + $0x3f] sm:$0x7] %vm4634, %v4693
        %v4696 = vld [vmem:[#allocation4 + $0x90] sm:$0xff]
        %v4697 = vld [vmem:[#allocation4 + $0x98] sm:$0x7]
        %v4698 = vld [vmem:[#allocation4 + $0x9c] sm:$0xff]
        %v4699 = vld [vmem:[#allocation4 + $0xa4] sm:$0x7]
        %v4700 = vmax.f32 %v4696, %v4698
        %v4701 = vmax.f32 %v4697, %v4699
        %v4702 = vadd.f32 %v4700, %v4621
        %v4703 = vadd.f32 %v4701, %v4621
        %v4704 = vmax.f32 %v4702, %v4629
        %v4705 = vmax.f32 %v4703, %v4629
        %4706 = vst.msk [vmem:[%s237 + $0x42] sm:$0xff] %vm3821, %v4704
        %4707 = vst.msk [vmem:[%s237 + $0x4a] sm:$0x7] %vm4634, %v4705
        %v4708 = vld [vmem:[#allocation4 + $0xa8] sm:$0xff]
        %v4709 = vld [vmem:[#allocation4 + $0xb0] sm:$0x7]
        %v4710 = vld [vmem:[#allocation4 + $0xb4] sm:$0xff]
        %v4711 = vld [vmem:[#allocation4 + $0xbc] sm:$0x7]
        %v4712 = vmax.f32 %v4708, %v4710
        %v4713 = vmax.f32 %v4709, %v4711
        %v4714 = vadd.f32 %v4712, %v4621
        %v4715 = vadd.f32 %v4713, %v4621
        %v4716 = vmax.f32 %v4714, %v4629
        %v4717 = vmax.f32 %v4715, %v4629
        %4718 = vst.msk [vmem:[%s237 + $0x4d] sm:$0xff] %vm3821, %v4716
        %4719 = vst.msk [vmem:[%s237 + $0x55] sm:$0x7] %vm4634, %v4717
        %v4720 = vld [vmem:[#allocation4 + $0xc0] sm:$0xff]
        %v4721 = vld [vmem:[#allocation4 + $0xc8] sm:$0x7]
        %v4722 = vld [vmem:[#allocation4 + $0xcc] sm:$0xff]
        %v4723 = vld [vmem:[#allocation4 + $0xd4] sm:$0x7]
        %v4724 = vmax.f32 %v4720, %v4722
        %v4725 = vmax.f32 %v4721, %v4723
        %v4726 = vadd.f32 %v4724, %v4621
        %v4727 = vadd.f32 %v4725, %v4621
        %v4728 = vmax.f32 %v4726, %v4629
        %v4729 = vmax.f32 %v4727, %v4629
        %4730 = vst.msk [vmem:[%s237 + $0x58] sm:$0xff] %vm3821, %v4728
        %4731 = vst.msk [vmem:[%s237 + $0x60] sm:$0x7] %vm4634, %v4729
        %v4732 = vld [vmem:[#allocation4 + $0xd8] sm:$0xff]
        %v4733 = vld [vmem:[#allocation4 + $0xe0] sm:$0x7]
        %v4734 = vld [vmem:[#allocation4 + $0xe4] sm:$0xff]
        %v4735 = vld [vmem:[#allocation4 + $0xec] sm:$0x7]
        %v4736 = vmax.f32 %v4732, %v4734
        %v4737 = vmax.f32 %v4733, %v4735
        %v4738 = vadd.f32 %v4736, %v4621
        %v4739 = vadd.f32 %v4737, %v4621
        %v4740 = vmax.f32 %v4738, %v4629
        %v4741 = vmax.f32 %v4739, %v4629
        %4742 = vst.msk [vmem:[%s237 + $0x63] sm:$0xff] %vm3821, %v4740
        %4743 = vst.msk [vmem:[%s237 + $0x6b] sm:$0x7] %vm4634, %v4741
        %v4744 = vld [vmem:[#allocation4 + $0xf0] sm:$0xff]
        %v4745 = vld [vmem:[#allocation4 + $0xf8] sm:$0x7]
        %v4746 = vld [vmem:[#allocation4 + $0xfc] sm:$0xff]
        %v4747 = vld [vmem:[#allocation4 + $0x104] sm:$0x7]
        %v4748 = vmax.f32 %v4744, %v4746
        %v4749 = vmax.f32 %v4745, %v4747
        %v4750 = vadd.f32 %v4748, %v4621
        %v4751 = vadd.f32 %v4749, %v4621
        %v4752 = vmax.f32 %v4750, %v4629
        %v4753 = vmax.f32 %v4751, %v4629
        %4754 = vst.msk [vmem:[%s237 + $0x6e] sm:$0xff] %vm3821, %v4752
        %4755 = vst.msk [vmem:[%s237 + $0x76] sm:$0x7] %vm4634, %v4753
        %p4756 = scmp.lt.s32.totalorder %s17, 1
        %s4757 = scalar_select %p4756, %s17, 1
        %s4758 = smul.addr %s4757, 16
        %s4759 = smul.addr %s4758, 8
        %s4760 = scalar_lea.vmem %s4, %s4759
        // Predicated region
        $region49: #{cnn24_forward.2} parent=35 // pred_check
          %p4761 = pneg %p124
        $region50: #{cnn24_forward.2} parent=35 // pred_check_branch
          %4763 = sbr.rel (%p4761) target = $region52
        $region51: #{cnn24_forward.2} parent=35 // pred_region
          _
        $region52: #{cnn24_forward.2} parent=35 // pred_fallthru
          _
      $region36: #{cnn24_forward.2} parent=5 // pred_fallthru
        _
      %p4764 = scmp.le.s32.totalorder 2, %s12
      // Predicated region
      $region53: #{cnn24_forward.2} parent=5 // pred_check
        %p4765 = pneg %p4764
      $region54: #{cnn24_forward.2} parent=5 // pred_check_branch
        %4767 = sbr.rel (%p4765) target = $region56
      $region55: #{cnn24_forward.2} parent=5 // pred_region
        %s4768 = ssub.s32 %s12, 2
        // Predicated region
        $region57: #{cnn24_forward.2} parent=55 // pred_check
          %p4769 = pneg %p130
        $region58: #{cnn24_forward.2} parent=55 // pred_check_branch
          %4771 = sbr.rel (%p4769) target = $region60
        $region59: #{cnn24_forward.2} parent=55 // pred_region
          %p4772 = scmp.lt.s32.totalorder %s18, 1
          %s4773 = scalar_select %p4772, %s18, 1
          %s4774 = smul.addr %s4773, 16
          %s4775 = smul.addr %s4774, 8
          %s4776 = scalar_lea.vmem %s4, %s4775
        $region60: #{cnn24_forward.2} parent=55 // pred_fallthru
          _
      $region56: #{cnn24_forward.2} parent=5 // pred_fallthru
        _
    $region6: #{cnn24_forward.2} parent=1 // loop_footer
      %s16 = sadd.s32 1, %s12
    $region7: #{cnn24_forward.2} parent=1 // loop_footer_branch
      %11 = sbr.rel target = $region3
    $region8: #{cnn24_forward.2} parent=1 // loop_exit
      _
    %4777 = vsyncpa [#allocation6], 1
    %s4778 = scalar_lea.sflag [#allocation6], 1
    %4779 = vsyncpa %s4778, 1
    %4780 = vsyncpa [#allocation8], 1

</llo_original>
